<compile_context>
chip_gen: v7x
topology: tpu7x:2x2x1
jax: 0.10.0
libtpu: 0.0.40
codegen_flags: <defaults>
</compile_context>

<pallas_src>
import jax
import jax.numpy as jnp
import numpy as np
from jax.experimental import pallas as pl
from jax.experimental.pallas import tpu as pltpu


def _round_up(x, m):
    return ((x + m - 1) // m) * m


# --------------------------------------------------------------------------------------
# Kernel
# --------------------------------------------------------------------------------------
def _make_kernel(*, n_mid, d_in, output_scale, matmul_dtype, first_on_vpu, last_on_vpu):
    """Fused transposed-layout MLP kernel.

    Ref layout (per grid step (b, n)):
      xyz_ref      : [1, d_in, tile_n]    f32   (points on the 128-lane axis)
      w_first_ref  : [hidden, d_in]       f32 (VPU path) or matmul_dtype (MXU path)
      w_mid_ref[i] : [hidden, hidden]     matmul_dtype
      w_last_ref   : [hidden, out_dim] f32 (VPU path) or [out_dim, hidden] matmul_dtype
      fb_hid_ref   : [1, hidden, n_hid]   f32   (b + lat @ Wm + bm of every hidden layer)
      fb_last_ref  : [1, out_dim, 1]      f32
      out_ref      : [1, out_dim, tile_n]
    """

    def kernel(xyz_ref, w_first_ref, *rest):
        w_mid_refs = rest[:n_mid]
        w_last_ref, fb_hid_ref, fb_last_ref, out_ref = rest[n_mid:]

        x = xyz_ref[0]                                             # [d_in, tile_n] f32
        wf = w_first_ref[...]

        # -- layer 0 -------------------------------------------------------------------
        if first_on_vpu:
            # K = d_in is degenerate for the MXU: do d_in broadcast-FMAs on the VPU,
            # entirely in f32 (also removes the bf16 cast of xyz).
            acc = wf[:, 0:1] * x[0:1, :]
            for i in range(1, d_in):
                acc = acc + wf[:, i:i + 1] * x[i:i + 1, :]
        else:
            acc = jnp.dot(wf, x.astype(matmul_dtype),
                          preferred_element_type=jnp.float32)
        h = jnp.maximum(acc + fb_hid_ref[0, :, 0:1], 0.0)          # bias + relu in f32

        # -- hidden layers on the MXU (bf16 operands, f32 accumulation) ------------------
        for li in range(n_mid):
            acc = jnp.dot(w_mid_refs[li][...], h.astype(matmul_dtype),
                          preferred_element_type=jnp.float32)
            h = jnp.maximum(acc + fb_hid_ref[0, :, li + 1:li + 2], 0.0)

        # -- last layer -------------------------------------------------------------------
        if last_on_vpu:
            # out_dim == 1: an M=1 MXU push is mostly waste -> VPU multiply + feature
            # reduction (VALU/XLU have slack), fully in f32.
            acc = jnp.sum(w_last_ref[...] * h, axis=0, keepdims=True)    # [1, tile_n]
        else:
            acc = jnp.dot(w_last_ref[...], h.astype(matmul_dtype),
                          preferred_element_type=jnp.float32)
        res = acc + fb_last_ref[0]                                  # [out_dim, tile_n]
        if output_scale is not None:
            # applied post-matmul in f32 -> exact for arbitrary scales
            res = res * jnp.float32(output_scale)
        out_ref[0] = res.astype(out_ref.dtype)                      # lane-dense store

    return kernel


# --------------------------------------------------------------------------------------
# Parameter preparation (lat/xyz independent -> hoist out of repeated forward calls)
# --------------------------------------------------------------------------------------
def prepare_params(params, matmul_dtype=jnp.bfloat16):
    """params: list of (W[in,out], b[1,out], Wm[latent,out], bm[1,out]) per layer."""
    n_layers = len(params)
    assert n_layers >= 2
    d_in = params[0][0].shape[0]
    hiddens = [p[0].shape[1] for p in params[:-1]]
    assert all(h == hiddens[0] for h in hiddens), "hidden layers must share one width"
    hidden = hiddens[0]
    out_dim = params[-1][0].shape[1]

    first_on_vpu = d_in <= 8          # tiny contraction -> VPU broadcast-FMAs
    last_on_vpu = out_dim == 1        # M=1 -> VPU multiply + reduce

    if first_on_vpu:
        w_first = jnp.transpose(params[0][0], (1, 0))                       # [hid, d_in] f32
    else:
        w_first = jnp.transpose(params[0][0], (1, 0)).astype(matmul_dtype)
    w_mids = tuple(jnp.transpose(params[i][0], (1, 0)).astype(matmul_dtype)
                   for i in range(1, n_layers - 1))                          # [hid, hid]
    if last_on_vpu:
        w_last = params[-1][0]                                               # [hid, 1] f32
    else:
        w_last = jnp.transpose(params[-1][0], (1, 0)).astype(matmul_dtype)   # [out, hid]

    # Packed bias / modulation weights -> a single fused-bias einsum per forward call
    # and a single small DMA per batch element inside the kernel.
    wm_hidden = jnp.stack([params[i][2] for i in range(n_layers - 1)], axis=-1)  # [lat,hid,n_h]
    b_hidden = jnp.stack([(params[i][1] + params[i][3]).reshape(-1)
                          for i in range(n_layers - 1)], axis=-1)                # [hid, n_h]
    wm_last = params[-1][2]                                                      # [lat, out]
    b_last = (params[-1][1] + params[-1][3]).reshape(-1)                         # [out]

    return dict(
        n_layers=n_layers, d_in=d_in, hidden=hidden, out_dim=out_dim,
        matmul_dtype=matmul_dtype, first_on_vpu=first_on_vpu, last_on_vpu=last_on_vpu,
        w_first=w_first, w_mids=w_mids, w_last=w_last,
        wm_hidden=wm_hidden, b_hidden=b_hidden, wm_last=wm_last, b_last=b_last,
    )


# --------------------------------------------------------------------------------------
# Forward
# --------------------------------------------------------------------------------------
def latent_modulated_forward(lat, xyz, prepared, *, output_scale=None,
                             tile_n=None, max_tile=1024):
    """lat: [B, 1, latent] f32; xyz: [B, N, d_in] f32 -> [B, N, out_dim] f32."""
    B, N, d_in = xyz.shape
    assert d_in == prepared["d_in"], (d_in, prepared["d_in"])
    hidden, out_dim = prepared["hidden"], prepared["out_dim"]
    n_layers = prepared["n_layers"]
    n_hidden = n_layers - 1
    n_mid = n_layers - 2

    # ---- tile / grid sizing --------------------------------------------------------------
    # Large lane tiles (multiple of 256: MXU friendly on v6e/v7x, also multiple of 128 for
    # v5e) so the ~0.35us per-grid-step overhead is amortized.  Ragged N -> pad + slice.
    if tile_n is None:
        n_tiles = max(1, -(-N // max_tile))                  # cdiv
        tile_n = _round_up(-(-N // n_tiles), 256)
    else:
        assert tile_n % 128 == 0, tile_n
        n_tiles = -(-N // tile_n)
    N_pad = n_tiles * tile_n

    # ---- (lat, xyz)-dependent prep: tiny XLA ops -----------------------------------------
    lat2 = lat.reshape(B, -1).astype(jnp.float32)
    fb_hidden = prepared["b_hidden"][None] + jnp.einsum(
        "bl,lhk->bhk", lat2, prepared["wm_hidden"])                       # [B, hid, n_hidden]
    fb_last = (prepared["b_last"][None] + lat2 @ prepared["wm_last"])[:, :, None]  # [B,out,1]

    xyz_t = jnp.transpose(xyz, (0, 2, 1)).astype(jnp.float32)             # [B, d_in, N]
    if N_pad != N:
        xyz_t = jnp.pad(xyz_t, ((0, 0), (0, 0), (0, N_pad - N)))

    # ---- kernel + specs ----------------------------------------------------------------
    kernel = _make_kernel(n_mid=n_mid, d_in=d_in, output_scale=output_scale,
                          matmul_dtype=prepared["matmul_dtype"],
                          first_on_vpu=prepared["first_on_vpu"],
                          last_on_vpu=prepared["last_on_vpu"])

    w_first, w_mids, w_last = prepared["w_first"], prepared["w_mids"], prepared["w_last"]
    flat_inputs = [xyz_t, w_first, *w_mids, w_last, fb_hidden, fb_last]

    def _spec(shape, index_map, pm):
        if pm is None:
            return pl.BlockSpec(shape, index_map)
        return pl.BlockSpec(shape, index_map, pipeline_mode=pm)

    def _in_specs(single_buffer):
        # Weights never change across the grid; the fused biases only change with b (the
        # slow, outer grid axis) -> a single pipeline buffer is enough for them.
        pm = pl.Buffered(1) if single_buffer else None
        specs = [pl.BlockSpec((1, d_in, tile_n), lambda b, n: (b, 0, n))]   # xyz^T tile
        specs.append(_spec(w_first.shape, lambda b, n: (0, 0), pm))
        for w in w_mids:
            specs.append(_spec(w.shape, lambda b, n: (0, 0), pm))
        specs.append(_spec(w_last.shape, lambda b, n: (0, 0), pm))
        specs.append(_spec((1, hidden, n_hidden), lambda b, n: (b, 0, 0), pm))
        specs.append(_spec((1, out_dim, 1), lambda b, n: (b, 0, 0), pm))
        return specs

    out_specs = pl.BlockSpec((1, out_dim, tile_n), lambda b, n: (b, 0, n))
    out_shape = jax.ShapeDtypeStruct((B, out_dim, N_pad), xyz.dtype)
    compiler_params = pltpu.CompilerParams(
        dimension_semantics=("parallel", "parallel"),
        # Well below physical VMEM on every generation (v7x has only 64 MiB per TC);
        # this kernel's footprint is a few MiB.
        vmem_limit_bytes=32 * 1024 * 1024,
    )

    out_t = None
    for single_buffer in (True, False):
        try:
            out_t = pl.pallas_call(
                kernel,
                out_shape=out_shape,
                grid=(B, n_tiles),
                in_specs=_in_specs(single_buffer),
                out_specs=out_specs,
                compiler_params=compiler_params,
            )(*flat_inputs)
            out_t = jax.block_until_ready(out_t)
            break
        except Exception:
            if not single_buffer:
                raise
            # pl.Buffered(1) rejected by this Pallas build -> default double buffering.

    if N_pad != N:
        out_t = out_t[:, :, :N]
    if out_dim == 1:
        return jnp.reshape(out_t, (B, N, 1))       # size-1 axis: pure reshape, no HBM pass
    return jnp.transpose(out_t, (0, 2, 1))


# --------------------------------------------------------------------------------------
# Reference / test harness
# --------------------------------------------------------------------------------------
def init_params(key, feats_dim, hidden_dim, latent_dim, n_layers, output_dim):
    dims = [feats_dim] + [hidden_dim] * (n_layers - 1) + [output_dim]
    params = []
    for i in range(n_layers):
        key, k1, k2, k3, k4 = jax.random.split(key, 5)
        w = jax.random.normal(k1, (dims[i], dims[i + 1]), jnp.float32) / jnp.sqrt(dims[i])
        b = jax.random.normal(k2, (1, dims[i + 1]), jnp.float32) * 0.01
        wm = jax.random.normal(k3, (latent_dim, dims[i + 1]), jnp.float32) / jnp.sqrt(latent_dim)
        bm = jax.random.normal(k4, (1, dims[i + 1]), jnp.float32) * 0.01
        params.append((w, b, wm, bm))
    return params


def reference_forward(lat, xyz, params, output_scale=None, *, matmul_dtype=None,
                      first_f32=False, last_f32=False):
    """Pure-JAX reference of the PyTorch forward (eval mode).

    matmul_dtype=None -> exact f32 module semantics.  With matmul_dtype=bf16 and
    first_f32/last_f32 it mirrors the kernel's mixed-precision layer assignment.
    """
    out = xyz
    n_layers = len(params)
    for li, (w, b, wm, bm) in enumerate(params):
        fb = b + jnp.einsum("bol,lh->boh", lat, wm) + bm                     # [B, 1, out]
        f32_layer = (matmul_dtype is None) or (li == 0 and first_f32) or \
                    (li == n_layers - 1 and last_f32)
        if f32_layer:
            main = jnp.einsum("bnd,dh->bnh", out, w)
        else:
            main = jnp.einsum("bnd,dh->bnh", out.astype(matmul_dtype), w.astype(matmul_dtype),
                              preferred_element_type=jnp.float32)
        out = main + fb
        if li < n_layers - 1:
            out = jnp.maximum(out, 0.0)
    if output_scale is not None:
        out = out * jnp.float32(output_scale)
    return out


if __name__ == "__main__":
    B, N = 2, 512
    input_dim, latent_dim, hidden_dim, n_layers, output_dim = 3, 128, 256, 4, 1
    output_scale = 1.7     # applied in f32 inside the kernel -> exact for any scale

    key = jax.random.PRNGKey(0)
    key, k_lat, k_xyz, k_par = jax.random.split(key, 4)
    lat = jax.random.normal(k_lat, (B, 1, latent_dim), jnp.float32)
    xyz = jax.random.uniform(k_xyz, (B, N, input_dim), jnp.float32, minval=-1.0, maxval=1.0)
    params = init_params(k_par, input_dim, hidden_dim, latent_dim, n_layers, output_dim)

    prepared = prepare_params(params)   # hoisted: transposes / casts / bias packing
    out = latent_modulated_forward(lat, xyz, prepared, output_scale=output_scale)
    out = jax.block_until_ready(out)
    assert out.shape == (B, N, output_dim), out.shape

    # (1) matched-precision reference (bf16 middle matmuls, f32 first/last like the kernel)
    ref_m = reference_forward(lat, xyz, params, output_scale, matmul_dtype=jnp.bfloat16,
                              first_f32=True, last_f32=True)
    np.testing.assert_allclose(np.asarray(out), np.asarray(ref_m), rtol=2e-3, atol=2e-3)

    # (2) drift vs. exact f32 module semantics stays small (bf16 hidden layers only)
    ref_f32 = reference_forward(lat, xyz, params, output_scale)
    assert float(jnp.max(jnp.abs(out - ref_f32))) < 0.25

    # (3) ragged point count exercises the padding path
    N2 = 300
    xyz2 = xyz[:, :N2]
    out2 = jax.block_until_ready(
        latent_modulated_forward(lat, xyz2, prepared, output_scale=output_scale))
    assert out2.shape == (B, N2, output_dim), out2.shape
    ref2 = reference_forward(lat, xyz2, params, output_scale, matmul_dtype=jnp.bfloat16,
                             first_f32=True, last_f32=True)
    np.testing.assert_allclose(np.asarray(out2), np.asarray(ref2), rtol=2e-3, atol=2e-3)

    print("KERNEL_OK")
</pallas_src>

<mosaic_0001>
module attributes {stable_mosaic.version = 11 : i64} {
  func.func @kernel(%arg0: i32, %arg1: i32, %arg2: memref<1x3x512xf32, #tpu.memory_space<vmem>>, %arg3: memref<256x3xf32, #tpu.memory_space<vmem>>, %arg4: memref<256x256xbf16, #tpu.memory_space<vmem>>, %arg5: memref<256x256xbf16, #tpu.memory_space<vmem>>, %arg6: memref<256x1xf32, #tpu.memory_space<vmem>>, %arg7: memref<1x256x3xf32, #tpu.memory_space<vmem>>, %arg8: memref<1x1x1xf32, #tpu.memory_space<vmem>>, %arg9: memref<1x1x512xf32, #tpu.memory_space<vmem>>) attributes {dimension_semantics = [#tpu.dimension_semantics<parallel>, #tpu.dimension_semantics<parallel>], iteration_bounds = array<i64: 2, 1>, scalar_prefetch = 0 : i64, scratch_operands = 0 : i64, tpu.core_type = #tpu.core_type<tc>, window_params = [{transform_indices = @transform_0, window_bounds = array<i64: 1, 3, 512>}, {pipeline_mode = #tpu.pipeline_mode<synchronous>, transform_indices = @transform_1, window_bounds = array<i64: 256, 3>}, {pipeline_mode = #tpu.pipeline_mode<synchronous>, transform_indices = @transform_2, window_bounds = array<i64: 256, 256>}, {pipeline_mode = #tpu.pipeline_mode<synchronous>, transform_indices = @transform_3, window_bounds = array<i64: 256, 256>}, {pipeline_mode = #tpu.pipeline_mode<synchronous>, transform_indices = @transform_4, window_bounds = array<i64: 256, 1>}, {pipeline_mode = #tpu.pipeline_mode<synchronous>, transform_indices = @transform_5, window_bounds = array<i64: 1, 256, 3>}, {pipeline_mode = #tpu.pipeline_mode<synchronous>, transform_indices = @transform_6, window_bounds = array<i64: 1, 1, 1>}, {transform_indices = @transform_7, window_bounds = array<i64: 1, 1, 512>}]} {
    %c0 = arith.constant 0 : index
    %c0_0 = arith.constant 0 : index
    %c0_1 = arith.constant 0 : index
    %0 = vector.load %arg2[%c0, %c0_0, %c0_1] : memref<1x3x512xf32, #tpu.memory_space<vmem>>, vector<1x3x512xf32>
    %1 = vector.shape_cast %0 : vector<1x3x512xf32> to vector<3x512xf32>
    %c0_2 = arith.constant 0 : index
    %c0_3 = arith.constant 0 : index
    %2 = vector.load %arg3[%c0_2, %c0_3] : memref<256x3xf32, #tpu.memory_space<vmem>>, vector<256x3xf32>
    %3 = vector.extract_strided_slice %2 {offsets = [0, 0], sizes = [256, 1], strides = [1, 1]} : vector<256x3xf32> to vector<256x1xf32>
    %4 = vector.extract_strided_slice %1 {offsets = [0, 0], sizes = [1, 512], strides = [1, 1]} : vector<3x512xf32> to vector<1x512xf32>
    %5 = vector.broadcast %3 : vector<256x1xf32> to vector<256x512xf32>
    %6 = vector.broadcast %4 : vector<1x512xf32> to vector<256x512xf32>
    %7 = arith.mulf %5, %6 : vector<256x512xf32>
    %8 = vector.extract_strided_slice %2 {offsets = [0, 1], sizes = [256, 1], strides = [1, 1]} : vector<256x3xf32> to vector<256x1xf32>
    %9 = vector.extract_strided_slice %1 {offsets = [1, 0], sizes = [1, 512], strides = [1, 1]} : vector<3x512xf32> to vector<1x512xf32>
    %10 = vector.broadcast %8 : vector<256x1xf32> to vector<256x512xf32>
    %11 = vector.broadcast %9 : vector<1x512xf32> to vector<256x512xf32>
    %12 = arith.mulf %10, %11 : vector<256x512xf32>
    %13 = arith.addf %7, %12 : vector<256x512xf32>
    %14 = vector.extract_strided_slice %2 {offsets = [0, 2], sizes = [256, 1], strides = [1, 1]} : vector<256x3xf32> to vector<256x1xf32>
    %15 = vector.extract_strided_slice %1 {offsets = [2, 0], sizes = [1, 512], strides = [1, 1]} : vector<3x512xf32> to vector<1x512xf32>
    %16 = vector.broadcast %14 : vector<256x1xf32> to vector<256x512xf32>
    %17 = vector.broadcast %15 : vector<1x512xf32> to vector<256x512xf32>
    %18 = arith.mulf %16, %17 : vector<256x512xf32>
    %19 = arith.addf %13, %18 : vector<256x512xf32>
    %c0_4 = arith.constant 0 : index
    %c0_5 = arith.constant 0 : index
    %c0_6 = arith.constant 0 : index
    %20 = vector.load %arg7[%c0_4, %c0_5, %c0_6] : memref<1x256x3xf32, #tpu.memory_space<vmem>>, vector<1x256x1xf32>
    %21 = vector.shape_cast %20 : vector<1x256x1xf32> to vector<256x1xf32>
    %22 = vector.broadcast %21 : vector<256x1xf32> to vector<256x512xf32>
    %23 = arith.addf %19, %22 : vector<256x512xf32>
    %cst = arith.constant 0.000000e+00 : f32
    %24 = vector.broadcast %cst : f32 to vector<256x512xf32>
    %25 = arith.maximumf %23, %24 : vector<256x512xf32>
    %c0_7 = arith.constant 0 : index
    %c0_8 = arith.constant 0 : index
    %26 = vector.load %arg4[%c0_7, %c0_8] : memref<256x256xbf16, #tpu.memory_space<vmem>>, vector<256x256xbf16>
    %27 = arith.truncf %25 : vector<256x512xf32> to vector<256x512xbf16>
    %cst_9 = arith.constant dense<0.000000e+00> : vector<256x512xf32>
    %28 = tpu.matmul %26, %27, %cst_9 {dimension_numbers = #tpu.dot_dimension_numbers<[1], [0], [0], [1], [0, 0, 1, 1], [], []>} : vector<256x256xbf16>, vector<256x512xbf16>, vector<256x512xf32> -> vector<256x512xf32>
    %c0_10 = arith.constant 0 : index
    %c0_11 = arith.constant 0 : index
    %c1 = arith.constant 1 : index
    %29 = vector.load %arg7[%c0_10, %c0_11, %c1] : memref<1x256x3xf32, #tpu.memory_space<vmem>>, vector<1x256x1xf32>
    %30 = vector.shape_cast %29 : vector<1x256x1xf32> to vector<256x1xf32>
    %31 = vector.broadcast %30 : vector<256x1xf32> to vector<256x512xf32>
    %32 = arith.addf %28, %31 : vector<256x512xf32>
    %cst_12 = arith.constant 0.000000e+00 : f32
    %33 = vector.broadcast %cst_12 : f32 to vector<256x512xf32>
    %34 = arith.maximumf %32, %33 : vector<256x512xf32>
    %c0_13 = arith.constant 0 : index
    %c0_14 = arith.constant 0 : index
    %35 = vector.load %arg5[%c0_13, %c0_14] : memref<256x256xbf16, #tpu.memory_space<vmem>>, vector<256x256xbf16>
    %36 = arith.truncf %34 : vector<256x512xf32> to vector<256x512xbf16>
    %cst_15 = arith.constant dense<0.000000e+00> : vector<256x512xf32>
    %37 = tpu.matmul %35, %36, %cst_15 {dimension_numbers = #tpu.dot_dimension_numbers<[1], [0], [0], [1], [0, 0, 1, 1], [], []>} : vector<256x256xbf16>, vector<256x512xbf16>, vector<256x512xf32> -> vector<256x512xf32>
    %c0_16 = arith.constant 0 : index
    %c0_17 = arith.constant 0 : index
    %c2 = arith.constant 2 : index
    %38 = vector.load %arg7[%c0_16, %c0_17, %c2] : memref<1x256x3xf32, #tpu.memory_space<vmem>>, vector<1x256x1xf32>
    %39 = vector.shape_cast %38 : vector<1x256x1xf32> to vector<256x1xf32>
    %40 = vector.broadcast %39 : vector<256x1xf32> to vector<256x512xf32>
    %41 = arith.addf %37, %40 : vector<256x512xf32>
    %cst_18 = arith.constant 0.000000e+00 : f32
    %42 = vector.broadcast %cst_18 : f32 to vector<256x512xf32>
    %43 = arith.maximumf %41, %42 : vector<256x512xf32>
    %c0_19 = arith.constant 0 : index
    %c0_20 = arith.constant 0 : index
    %44 = vector.load %arg6[%c0_19, %c0_20] : memref<256x1xf32, #tpu.memory_space<vmem>>, vector<256x1xf32>
    %45 = vector.broadcast %44 : vector<256x1xf32> to vector<256x512xf32>
    %46 = arith.mulf %45, %43 : vector<256x512xf32>
    %cst_21 = arith.constant dense<0.000000e+00> : vector<512xf32>
    %47 = vector.multi_reduction <add>, %46, %cst_21 [0] : vector<256x512xf32> to vector<512xf32>
    %48 = vector.shape_cast %47 : vector<512xf32> to vector<1x512xf32>
    %c0_22 = arith.constant 0 : index
    %c0_23 = arith.constant 0 : index
    %c0_24 = arith.constant 0 : index
    %49 = vector.load %arg8[%c0_22, %c0_23, %c0_24] : memref<1x1x1xf32, #tpu.memory_space<vmem>>, vector<1x1x1xf32>
    %50 = vector.shape_cast %49 : vector<1x1x1xf32> to vector<1x1xf32>
    %51 = vector.broadcast %50 : vector<1x1xf32> to vector<1x512xf32>
    %52 = arith.addf %48, %51 : vector<1x512xf32>
    %cst_25 = arith.constant 1.700000e+00 : f32
    %53 = vector.broadcast %cst_25 : f32 to vector<1x512xf32>
    %54 = arith.mulf %52, %53 : vector<1x512xf32>
    %c0_26 = arith.constant 0 : index
    %c0_27 = arith.constant 0 : index
    %c0_28 = arith.constant 0 : index
    %55 = vector.load %arg9[%c0_26, %c0_27, %c0_28] : memref<1x1x512xf32, #tpu.memory_space<vmem>>, vector<1x1x512xf32>
    %56 = vector.shape_cast %55 : vector<1x1x512xf32> to vector<1x512xf32>
    %57 = vector.shape_cast %54 : vector<1x512xf32> to vector<1x1x512xf32>
    tpu.vector_store %arg9[%c0_26, %c0_27, %c0_28], %57 {strides = array<i32>} : memref<1x1x512xf32, #tpu.memory_space<vmem>>, vector<1x1x512xf32>,
    return
  }
  func.func @transform_0(%arg0: i32, %arg1: i32) -> (i32, i32, i32) {
    %c0_i32 = arith.constant 0 : i32
    %c0_i32_0 = arith.constant 0 : i32
    return %arg0, %c0_i32, %arg1 : i32, i32, i32
  }
  func.func @transform_1(%arg0: i32, %arg1: i32) -> (i32, i32) {
    %c0_i32 = arith.constant 0 : i32
    %c0_i32_0 = arith.constant 0 : i32
    %c0_i32_1 = arith.constant 0 : i32
    return %c0_i32, %c0_i32_0 : i32, i32
  }
  func.func @transform_2(%arg0: i32, %arg1: i32) -> (i32, i32) {
    %c0_i32 = arith.constant 0 : i32
    %c0_i32_0 = arith.constant 0 : i32
    %c0_i32_1 = arith.constant 0 : i32
    return %c0_i32, %c0_i32_0 : i32, i32
  }
  func.func @transform_3(%arg0: i32, %arg1: i32) -> (i32, i32) {
    %c0_i32 = arith.constant 0 : i32
    %c0_i32_0 = arith.constant 0 : i32
    %c0_i32_1 = arith.constant 0 : i32
    return %c0_i32, %c0_i32_0 : i32, i32
  }
  func.func @transform_4(%arg0: i32, %arg1: i32) -> (i32, i32) {
    %c0_i32 = arith.constant 0 : i32
    %c0_i32_0 = arith.constant 0 : i32
    %c0_i32_1 = arith.constant 0 : i32
    return %c0_i32, %c0_i32_0 : i32, i32
  }
  func.func @transform_5(%arg0: i32, %arg1: i32) -> (i32, i32, i32) {
    %c0_i32 = arith.constant 0 : i32
    %c0_i32_0 = arith.constant 0 : i32
    %c0_i32_1 = arith.constant 0 : i32
    return %arg0, %c0_i32, %c0_i32_0 : i32, i32, i32
  }
  func.func @transform_6(%arg0: i32, %arg1: i32) -> (i32, i32, i32) {
    %c0_i32 = arith.constant 0 : i32
    %c0_i32_0 = arith.constant 0 : i32
    %c0_i32_1 = arith.constant 0 : i32
    return %arg0, %c0_i32, %c0_i32_0 : i32, i32, i32
  }
  func.func @transform_7(%arg0: i32, %arg1: i32) -> (i32, i32, i32) {
    %c0_i32 = arith.constant 0 : i32
    %c0_i32_0 = arith.constant 0 : i32
    return %arg0, %c0_i32, %arg1 : i32, i32, i32
  }
}

module attributes {stable_mosaic.version = 11 : i64} {
  func.func @kernel(%arg0: i32, %arg1: i32, %arg2: memref<1x3x512xf32, #tpu.memory_space<vmem>>, %arg3: memref<256x3xf32, #tpu.memory_space<vmem>>, %arg4: memref<256x256xbf16, #tpu.memory_space<vmem>>, %arg5: memref<256x256xbf16, #tpu.memory_space<vmem>>, %arg6: memref<256x1xf32, #tpu.memory_space<vmem>>, %arg7: memref<1x256x3xf32, #tpu.memory_space<vmem>>, %arg8: memref<1x1x1xf32, #tpu.memory_space<vmem>>, %arg9: memref<1x1x512xf32, #tpu.memory_space<vmem>>) attributes {dimension_semantics = [#tpu.dimension_semantics<parallel>, #tpu.dimension_semantics<parallel>], iteration_bounds = array<i64: 2, 1>, scalar_prefetch = 0 : i64, scratch_operands = 0 : i64, tpu.core_type = #tpu.core_type<tc>, window_params = [{transform_indices = @transform_0, window_bounds = array<i64: 1, 3, 512>}, {pipeline_mode = #tpu.pipeline_mode<synchronous>, transform_indices = @transform_1, window_bounds = array<i64: 256, 3>}, {pipeline_mode = #tpu.pipeline_mode<synchronous>, transform_indices = @transform_2, window_bounds = array<i64: 256, 256>}, {pipeline_mode = #tpu.pipeline_mode<synchronous>, transform_indices = @transform_3, window_bounds = array<i64: 256, 256>}, {pipeline_mode = #tpu.pipeline_mode<synchronous>, transform_indices = @transform_4, window_bounds = array<i64: 256, 1>}, {transform_indices = @transform_5, window_bounds = array<i64: 1, 256, 3>}, {transform_indices = @transform_6, window_bounds = array<i64: 1, 1, 1>}, {transform_indices = @transform_7, window_bounds = array<i64: 1, 1, 512>}]} {
    %c0 = arith.constant 0 : index
    %c0_0 = arith.constant 0 : index
    %c0_1 = arith.constant 0 : index
    %0 = vector.load %arg2[%c0, %c0_0, %c0_1] : memref<1x3x512xf32, #tpu.memory_space<vmem>>, vector<1x3x512xf32>
    %1 = vector.shape_cast %0 : vector<1x3x512xf32> to vector<3x512xf32>
    %c0_2 = arith.constant 0 : index
    %c0_3 = arith.constant 0 : index
    %2 = vector.load %arg3[%c0_2, %c0_3] : memref<256x3xf32, #tpu.memory_space<vmem>>, vector<256x3xf32>
    %3 = vector.extract_strided_slice %2 {offsets = [0, 0], sizes = [256, 1], strides = [1, 1]} : vector<256x3xf32> to vector<256x1xf32>
    %4 = vector.extract_strided_slice %1 {offsets = [0, 0], sizes = [1, 512], strides = [1, 1]} : vector<3x512xf32> to vector<1x512xf32>
    %5 = vector.broadcast %3 : vector<256x1xf32> to vector<256x512xf32>
    %6 = vector.broadcast %4 : vector<1x512xf32> to vector<256x512xf32>
    %7 = arith.mulf %5, %6 : vector<256x512xf32>
    %8 = vector.extract_strided_slice %2 {offsets = [0, 1], sizes = [256, 1], strides = [1, 1]} : vector<256x3xf32> to vector<256x1xf32>
    %9 = vector.extract_strided_slice %1 {offsets = [1, 0], sizes = [1, 512], strides = [1, 1]} : vector<3x512xf32> to vector<1x512xf32>
    %10 = vector.broadcast %8 : vector<256x1xf32> to vector<256x512xf32>
    %11 = vector.broadcast %9 : vector<1x512xf32> to vector<256x512xf32>
    %12 = arith.mulf %10, %11 : vector<256x512xf32>
    %13 = arith.addf %7, %12 : vector<256x512xf32>
    %14 = vector.extract_strided_slice %2 {offsets = [0, 2], sizes = [256, 1], strides = [1, 1]} : vector<256x3xf32> to vector<256x1xf32>
    %15 = vector.extract_strided_slice %1 {offsets = [2, 0], sizes = [1, 512], strides = [1, 1]} : vector<3x512xf32> to vector<1x512xf32>
    %16 = vector.broadcast %14 : vector<256x1xf32> to vector<256x512xf32>
    %17 = vector.broadcast %15 : vector<1x512xf32> to vector<256x512xf32>
    %18 = arith.mulf %16, %17 : vector<256x512xf32>
    %19 = arith.addf %13, %18 : vector<256x512xf32>
    %c0_4 = arith.constant 0 : index
    %c0_5 = arith.constant 0 : index
    %c0_6 = arith.constant 0 : index
    %20 = vector.load %arg7[%c0_4, %c0_5, %c0_6] : memref<1x256x3xf32, #tpu.memory_space<vmem>>, vector<1x256x1xf32>
    %21 = vector.shape_cast %20 : vector<1x256x1xf32> to vector<256x1xf32>
    %22 = vector.broadcast %21 : vector<256x1xf32> to vector<256x512xf32>
    %23 = arith.addf %19, %22 : vector<256x512xf32>
    %cst = arith.constant 0.000000e+00 : f32
    %24 = vector.broadcast %cst : f32 to vector<256x512xf32>
    %25 = arith.maximumf %23, %24 : vector<256x512xf32>
    %c0_7 = arith.constant 0 : index
    %c0_8 = arith.constant 0 : index
    %26 = vector.load %arg4[%c0_7, %c0_8] : memref<256x256xbf16, #tpu.memory_space<vmem>>, vector<256x256xbf16>
    %27 = arith.truncf %25 : vector<256x512xf32> to vector<256x512xbf16>
    %cst_9 = arith.constant dense<0.000000e+00> : vector<256x512xf32>
    %28 = tpu.matmul %26, %27, %cst_9 {dimension_numbers = #tpu.dot_dimension_numbers<[1], [0], [0], [1], [0, 0, 1, 1], [], []>} : vector<256x256xbf16>, vector<256x512xbf16>, vector<256x512xf32> -> vector<256x512xf32>
    %c0_10 = arith.constant 0 : index
    %c0_11 = arith.constant 0 : index
    %c1 = arith.constant 1 : index
    %29 = vector.load %arg7[%c0_10, %c0_11, %c1] : memref<1x256x3xf32, #tpu.memory_space<vmem>>, vector<1x256x1xf32>
    %30 = vector.shape_cast %29 : vector<1x256x1xf32> to vector<256x1xf32>
    %31 = vector.broadcast %30 : vector<256x1xf32> to vector<256x512xf32>
    %32 = arith.addf %28, %31 : vector<256x512xf32>
    %cst_12 = arith.constant 0.000000e+00 : f32
    %33 = vector.broadcast %cst_12 : f32 to vector<256x512xf32>
    %34 = arith.maximumf %32, %33 : vector<256x512xf32>
    %c0_13 = arith.constant 0 : index
    %c0_14 = arith.constant 0 : index
    %35 = vector.load %arg5[%c0_13, %c0_14] : memref<256x256xbf16, #tpu.memory_space<vmem>>, vector<256x256xbf16>
    %36 = arith.truncf %34 : vector<256x512xf32> to vector<256x512xbf16>
    %cst_15 = arith.constant dense<0.000000e+00> : vector<256x512xf32>
    %37 = tpu.matmul %35, %36, %cst_15 {dimension_numbers = #tpu.dot_dimension_numbers<[1], [0], [0], [1], [0, 0, 1, 1], [], []>} : vector<256x256xbf16>, vector<256x512xbf16>, vector<256x512xf32> -> vector<256x512xf32>
    %c0_16 = arith.constant 0 : index
    %c0_17 = arith.constant 0 : index
    %c2 = arith.constant 2 : index
    %38 = vector.load %arg7[%c0_16, %c0_17, %c2] : memref<1x256x3xf32, #tpu.memory_space<vmem>>, vector<1x256x1xf32>
    %39 = vector.shape_cast %38 : vector<1x256x1xf32> to vector<256x1xf32>
    %40 = vector.broadcast %39 : vector<256x1xf32> to vector<256x512xf32>
    %41 = arith.addf %37, %40 : vector<256x512xf32>
    %cst_18 = arith.constant 0.000000e+00 : f32
    %42 = vector.broadcast %cst_18 : f32 to vector<256x512xf32>
    %43 = arith.maximumf %41, %42 : vector<256x512xf32>
    %c0_19 = arith.constant 0 : index
    %c0_20 = arith.constant 0 : index
    %44 = vector.load %arg6[%c0_19, %c0_20] : memref<256x1xf32, #tpu.memory_space<vmem>>, vector<256x1xf32>
    %45 = vector.broadcast %44 : vector<256x1xf32> to vector<256x512xf32>
    %46 = arith.mulf %45, %43 : vector<256x512xf32>
    %cst_21 = arith.constant dense<0.000000e+00> : vector<512xf32>
    %47 = vector.multi_reduction <add>, %46, %cst_21 [0] : vector<256x512xf32> to vector<512xf32>
    %48 = vector.shape_cast %47 : vector<512xf32> to vector<1x512xf32>
    %c0_22 = arith.constant 0 : index
    %c0_23 = arith.constant 0 : index
    %c0_24 = arith.constant 0 : index
    %49 = vector.load %arg8[%c0_22, %c0_23, %c0_24] : memref<1x1x1xf32, #tpu.memory_space<vmem>>, vector<1x1x1xf32>
    %50 = vector.shape_cast %49 : vector<1x1x1xf32> to vector<1x1xf32>
    %51 = vector.broadcast %50 : vector<1x1xf32> to vector<1x512xf32>
    %52 = arith.addf %48, %51 : vector<1x512xf32>
    %cst_25 = arith.constant 1.700000e+00 : f32
    %53 = vector.broadcast %cst_25 : f32 to vector<1x512xf32>
    %54 = arith.mulf %52, %53 : vector<1x512xf32>
    %c0_26 = arith.constant 0 : index
    %c0_27 = arith.constant 0 : index
    %c0_28 = arith.constant 0 : index
    %55 = vector.load %arg9[%c0_26, %c0_27, %c0_28] : memref<1x1x512xf32, #tpu.memory_space<vmem>>, vector<1x1x512xf32>
    %56 = vector.shape_cast %55 : vector<1x1x512xf32> to vector<1x512xf32>
    %57 = vector.shape_cast %54 : vector<1x512xf32> to vector<1x1x512xf32>
    tpu.vector_store %arg9[%c0_26, %c0_27, %c0_28], %57 {strides = array<i32>} : memref<1x1x512xf32, #tpu.memory_space<vmem>>, vector<1x1x512xf32>,
    return
  }
  func.func @transform_0(%arg0: i32, %arg1: i32) -> (i32, i32, i32) {
    %c0_i32 = arith.constant 0 : i32
    %c0_i32_0 = arith.constant 0 : i32
    return %arg0, %c0_i32, %arg1 : i32, i32, i32
  }
  func.func @transform_1(%arg0: i32, %arg1: i32) -> (i32, i32) {
    %c0_i32 = arith.constant 0 : i32
    %c0_i32_0 = arith.constant 0 : i32
    %c0_i32_1 = arith.constant 0 : i32
    return %c0_i32, %c0_i32_0 : i32, i32
  }
  func.func @transform_2(%arg0: i32, %arg1: i32) -> (i32, i32) {
    %c0_i32 = arith.constant 0 : i32
    %c0_i32_0 = arith.constant 0 : i32
    %c0_i32_1 = arith.constant 0 : i32
    return %c0_i32, %c0_i32_0 : i32, i32
  }
  func.func @transform_3(%arg0: i32, %arg1: i32) -> (i32, i32) {
    %c0_i32 = arith.constant 0 : i32
    %c0_i32_0 = arith.constant 0 : i32
    %c0_i32_1 = arith.constant 0 : i32
    return %c0_i32, %c0_i32_0 : i32, i32
  }
  func.func @transform_4(%arg0: i32, %arg1: i32) -> (i32, i32) {
    %c0_i32 = arith.constant 0 : i32
    %c0_i32_0 = arith.constant 0 : i32
    %c0_i32_1 = arith.constant 0 : i32
    return %c0_i32, %c0_i32_0 : i32, i32
  }
  func.func @transform_5(%arg0: i32, %arg1: i32) -> (i32, i32, i32) {
    %c0_i32 = arith.constant 0 : i32
    %c0_i32_0 = arith.constant 0 : i32
    %c0_i32_1 = arith.constant 0 : i32
    return %arg0, %c0_i32, %c0_i32_0 : i32, i32, i32
  }
  func.func @transform_6(%arg0: i32, %arg1: i32) -> (i32, i32, i32) {
    %c0_i32 = arith.constant 0 : i32
    %c0_i32_0 = arith.constant 0 : i32
    %c0_i32_1 = arith.constant 0 : i32
    return %arg0, %c0_i32, %c0_i32_0 : i32, i32, i32
  }
  func.func @transform_7(%arg0: i32, %arg1: i32) -> (i32, i32, i32) {
    %c0_i32 = arith.constant 0 : i32
    %c0_i32_0 = arith.constant 0 : i32
    return %arg0, %c0_i32, %arg1 : i32, i32, i32
  }
}

</mosaic_0001>

<llo_original>
// kernel: tpu_custom_call.1
$region0: #{tpu_custom_call.1}
  #allocation0 [shape = 'u32[]', space=smem, size = 0x4, offset = 0x4, fixed_abs, tag = 'smem constant byte address 0x4 - core index']
  #allocation1 [shape = 'u32[144,128]{1,0:T(1,128)}', space=vmem, size = 0x12000, scoped, tag = 'internal scratch']
  %s0 = inlined_call_operand.vmem [shape: f32[2,3,512], index: 0, kind: input, shape index: {}]
  %s1 = inlined_call_operand.vmem [shape: f32[256,3], index: 1, kind: input, shape index: {}]
  %s2 = inlined_call_operand.vmem [shape: bf16[256,256], index: 2, kind: input, shape index: {}]
  %s3 = inlined_call_operand.vmem [shape: bf16[256,256], index: 3, kind: input, shape index: {}]
  %s4 = inlined_call_operand.vmem [shape: f32[256,1], index: 4, kind: input, shape index: {}]
  %s5 = inlined_call_operand.vmem [shape: f32[2,256,3], index: 5, kind: input, shape index: {}]
  %s6 = inlined_call_operand.vmem [shape: f32[2,1,1], index: 6, kind: input, shape index: {}]
  %s7 = inlined_call_operand.hbm [shape: f32[2,1,512], index: 7, kind: output, shape index: {}]
  %s8 = sld [smem:[#allocation0]]
  $region61: #{tpu_custom_call.1} parent=0
    _
  %s10 = ssub.s32 1, %s8
  %s11 = scalar_select 0, %s10, %s8
  $region1: #{tpu_custom_call.1} parent=0
    #allocation2 [shape = 'u8[4096]{0}', space=vmem, size = 0x1000, scoped, tag = 'output window, operand 0']
    #allocation3 [shape = 's32[2]{0}', space=sflag, size = 0x8, scoped, tag = 'scoped memory for tpu_custom_call.1']
    %12 = vsyncpa [#allocation3], 0
    %s13 = scalar_lea.sflag [#allocation3], 1
    %14 = vsyncpa %s13, 0
    loop: start=0, step=1, limit=4
    $region2: #{tpu_custom_call.1} parent=1 // loop_pre_header
      _
    $region3: #{tpu_custom_call.1} parent=1 // loop_header
      %s16 = sphi 0, %s20
      %p17 = scmp.ge.s32.totalorder %s16, 4
      %s23 = sphi 0, %s35
      %s24 = sphi 0, %s31
      %s25 = sphi 0, %s23
      %s26 = sphi 0, %s24
      %s27 = sphi 0, %s25
      %s28 = sphi 0, %s26
      %s40 = sphi 0, %s42
      %s43 = sphi 0, %s40
      %s44 = sphi 0, %s43
      %s60 = sphi 0, %s44
      %s64 = sphi 0, %s64
      %s66 = sphi 0, %s64
      %s67 = sphi 0, %s66
      %s81 = sphi 0, %s67
      %s85 = sphi 0, %s85
      %s87 = sphi 0, %s85
      %s88 = sphi 0, %s87
      %s102 = sphi 0, %s88
      %s106 = sphi 0, %s106
      %s108 = sphi 0, %s106
      %s109 = sphi 0, %s108
      %s123 = sphi 0, %s109
      %s127 = sphi 0, %s127
      %s129 = sphi 0, %s127
      %s130 = sphi 0, %s129
      %s144 = sphi 0, %s130
      %s150 = sphi 0, %s152
      %s153 = sphi 0, %s150
      %s154 = sphi 0, %s153
      %s170 = sphi 0, %s154
      %s176 = sphi 0, %s178
      %s179 = sphi 0, %s176
      %s180 = sphi 0, %s179
      %s196 = sphi 0, %s180
      %s204 = sphi 0, %s206
      %s207 = sphi 0, %s204
      %s208 = sphi 0, %s207
      %s224 = sphi 0, %s208
    $region4: #{tpu_custom_call.1} parent=1 // loop_header_branch
      %19 = sbr.rel (%p17) target = $region8
    $region5: #{tpu_custom_call.1} parent=1 // loop_body
      %s21 = ssub.s32 %s16, 1
      %s22 = ssub.s32 %s16, 2
      %s29 = sadd.s32 1, %s24
      %p30 = scmp.ge.s32.totalorder %s29, 1
      %s31 = scalar_select %p30, 0, %s29
      %s32 = sadd.s32 1, %s23
      %s33 = scalar_select %p30, %s32, %s23
      %p34 = scmp.ge.s32.totalorder %s33, 2
      %s35 = scalar_select %p34, 0, %s33
      %s36 = ssub.s32 %s23, %s35
      %s37 = ssub.s32 %s24, %s31
      %s38 = sor.u32 %s36, %s37
      %p39 = scmp.eq.s32.totalorder %s38, 0
      %s41 = sadd.s32 %s40, 1
      %s42 = scalar_select %p39, %s40, %s41
      %p45 = pneg %p39
      %p46 = scmp.eq.s32.totalorder %s16, 1
      %p47 = por %p45, %p46
      %p48 = scmp.ne.s32.totalorder %s40, %s43
      %p49 = scmp.eq.s32.totalorder %s16, 0
      %p50 = por %p48, %p49
      %p51 = scmp.ne.s32.totalorder %s40, %s43
      %p52 = scmp.eq.s32.totalorder %s21, 1
      %p53 = por %p51, %p52
      %p54 = scmp.ne.s32.totalorder %s43, %s44
      %p55 = scmp.eq.s32.totalorder %s21, 0
      %p56 = por %p54, %p55
      %p57 = scmp.ne.s32.totalorder %s43, %s44
      %p58 = scmp.eq.s32.totalorder %s22, 1
      %p59 = por %p57, %p58
      %p61 = scmp.ne.s32.totalorder %s44, %s60
      %p62 = scmp.eq.s32.totalorder %s22, 0
      %p63 = por %p61, %p62
      %s65 = sadd.s32 %s64, 1
      %p68 = scmp.eq.s32.totalorder %s16, 1
      %p69 = scmp.ne.s32.totalorder %s64, %s66
      %p70 = scmp.eq.s32.totalorder %s16, 0
      %p71 = por %p69, %p70
      %p72 = scmp.ne.s32.totalorder %s64, %s66
      %p73 = scmp.eq.s32.totalorder %s21, 1
      %p74 = por %p72, %p73
      %p75 = scmp.ne.s32.totalorder %s66, %s67
      %p76 = scmp.eq.s32.totalorder %s21, 0
      %p77 = por %p75, %p76
      %p78 = scmp.ne.s32.totalorder %s66, %s67
      %p79 = scmp.eq.s32.totalorder %s22, 1
      %p80 = por %p78, %p79
      %p82 = scmp.ne.s32.totalorder %s67, %s81
      %p83 = scmp.eq.s32.totalorder %s22, 0
      %p84 = por %p82, %p83
      %s86 = sadd.s32 %s85, 1
      %p89 = scmp.eq.s32.totalorder %s16, 1
      %p90 = scmp.ne.s32.totalorder %s85, %s87
      %p91 = scmp.eq.s32.totalorder %s16, 0
      %p92 = por %p90, %p91
      %p93 = scmp.ne.s32.totalorder %s85, %s87
      %p94 = scmp.eq.s32.totalorder %s21, 1
      %p95 = por %p93, %p94
      %p96 = scmp.ne.s32.totalorder %s87, %s88
      %p97 = scmp.eq.s32.totalorder %s21, 0
      %p98 = por %p96, %p97
      %p99 = scmp.ne.s32.totalorder %s87, %s88
      %p100 = scmp.eq.s32.totalorder %s22, 1
      %p101 = por %p99, %p100
      %p103 = scmp.ne.s32.totalorder %s88, %s102
      %p104 = scmp.eq.s32.totalorder %s22, 0
      %p105 = por %p103, %p104
      %s107 = sadd.s32 %s106, 1
      %p110 = scmp.eq.s32.totalorder %s16, 1
      %p111 = scmp.ne.s32.totalorder %s106, %s108
      %p112 = scmp.eq.s32.totalorder %s16, 0
      %p113 = por %p111, %p112
      %p114 = scmp.ne.s32.totalorder %s106, %s108
      %p115 = scmp.eq.s32.totalorder %s21, 1
      %p116 = por %p114, %p115
      %p117 = scmp.ne.s32.totalorder %s108, %s109
      %p118 = scmp.eq.s32.totalorder %s21, 0
      %p119 = por %p117, %p118
      %p120 = scmp.ne.s32.totalorder %s108, %s109
      %p121 = scmp.eq.s32.totalorder %s22, 1
      %p122 = por %p120, %p121
      %p124 = scmp.ne.s32.totalorder %s109, %s123
      %p125 = scmp.eq.s32.totalorder %s22, 0
      %p126 = por %p124, %p125
      %s128 = sadd.s32 %s127, 1
      %p131 = scmp.eq.s32.totalorder %s16, 1
      %p132 = scmp.ne.s32.totalorder %s127, %s129
      %p133 = scmp.eq.s32.totalorder %s16, 0
      %p134 = por %p132, %p133
      %p135 = scmp.ne.s32.totalorder %s127, %s129
      %p136 = scmp.eq.s32.totalorder %s21, 1
      %p137 = por %p135, %p136
      %p138 = scmp.ne.s32.totalorder %s129, %s130
      %p139 = scmp.eq.s32.totalorder %s21, 0
      %p140 = por %p138, %p139
      %p141 = scmp.ne.s32.totalorder %s129, %s130
      %p142 = scmp.eq.s32.totalorder %s22, 1
      %p143 = por %p141, %p142
      %p145 = scmp.ne.s32.totalorder %s130, %s144
      %p146 = scmp.eq.s32.totalorder %s22, 0
      %p147 = por %p145, %p146
      %s148 = ssub.s32 %s23, %s35
      %p149 = scmp.eq.s32.totalorder %s148, 0
      %s151 = sadd.s32 %s150, 1
      %s152 = scalar_select %p149, %s150, %s151
      %p155 = pneg %p149
      %p156 = scmp.eq.s32.totalorder %s16, 1
      %p157 = por %p155, %p156
      %p158 = scmp.ne.s32.totalorder %s150, %s153
      %p159 = scmp.eq.s32.totalorder %s16, 0
      %p160 = por %p158, %p159
      %p161 = scmp.ne.s32.totalorder %s150, %s153
      %p162 = scmp.eq.s32.totalorder %s21, 1
      %p163 = por %p161, %p162
      %p164 = scmp.ne.s32.totalorder %s153, %s154
      %p165 = scmp.eq.s32.totalorder %s21, 0
      %p166 = por %p164, %p165
      %p167 = scmp.ne.s32.totalorder %s153, %s154
      %p168 = scmp.eq.s32.totalorder %s22, 1
      %p169 = por %p167, %p168
      %p171 = scmp.ne.s32.totalorder %s154, %s170
      %p172 = scmp.eq.s32.totalorder %s22, 0
      %p173 = por %p171, %p172
      %s174 = ssub.s32 %s23, %s35
      %p175 = scmp.eq.s32.totalorder %s174, 0
      %s177 = sadd.s32 %s176, 1
      %s178 = scalar_select %p175, %s176, %s177
      %p181 = pneg %p175
      %p182 = scmp.eq.s32.totalorder %s16, 1
      %p183 = por %p181, %p182
      %p184 = scmp.ne.s32.totalorder %s176, %s179
      %p185 = scmp.eq.s32.totalorder %s16, 0
      %p186 = por %p184, %p185
      %p187 = scmp.ne.s32.totalorder %s176, %s179
      %p188 = scmp.eq.s32.totalorder %s21, 1
      %p189 = por %p187, %p188
      %p190 = scmp.ne.s32.totalorder %s179, %s180
      %p191 = scmp.eq.s32.totalorder %s21, 0
      %p192 = por %p190, %p191
      %p193 = scmp.ne.s32.totalorder %s179, %s180
      %p194 = scmp.eq.s32.totalorder %s22, 1
      %p195 = por %p193, %p194
      %p197 = scmp.ne.s32.totalorder %s180, %s196
      %p198 = scmp.eq.s32.totalorder %s22, 0
      %p199 = por %p197, %p198
      %s200 = ssub.s32 %s23, %s35
      %s201 = ssub.s32 %s24, %s31
      %s202 = sor.u32 %s200, %s201
      %p203 = scmp.eq.s32.totalorder %s202, 0
      %s205 = sadd.s32 %s204, 1
      %s206 = scalar_select %p203, %s204, %s205
      %p209 = pneg %p203
      %p210 = scmp.eq.s32.totalorder %s16, 1
      %p211 = por %p209, %p210
      %p212 = scmp.ne.s32.totalorder %s204, %s207
      %p213 = scmp.eq.s32.totalorder %s16, 0
      %p214 = por %p212, %p213
      %p215 = scmp.ne.s32.totalorder %s204, %s207
      %p216 = scmp.eq.s32.totalorder %s21, 1
      %p217 = por %p215, %p216
      %p218 = scmp.ne.s32.totalorder %s207, %s208
      %p219 = scmp.eq.s32.totalorder %s21, 0
      %p220 = por %p218, %p219
      %p221 = scmp.ne.s32.totalorder %s207, %s208
      %p222 = scmp.eq.s32.totalorder %s22, 1
      %p223 = por %p221, %p222
      %p225 = scmp.ne.s32.totalorder %s208, %s224
      %p226 = scmp.eq.s32.totalorder %s22, 0
      %p227 = por %p225, %p226
      %p228 = scmp.le.s32.totalorder 1, %s16
      %p229 = scmp.lt.s32.totalorder %s16, 3
      %p230 = pnand %p228, %p229
      %p231 = pneg %p230
      // Predicated region
      $region9: #{tpu_custom_call.1} parent=5 // pred_check
        _
      $region10: #{tpu_custom_call.1} parent=5 // pred_check_branch
        %233 = sbr.rel (%p230) target = $region12
      $region11: #{tpu_custom_call.1} parent=5 // pred_region
        %s234 = ssub.s32 %s16, 1
        // Predicated region
        $region13: #{tpu_custom_call.1} parent=11 // pred_check
          %p235 = pneg %p77
        $region14: #{tpu_custom_call.1} parent=11 // pred_check_branch
          %237 = sbr.rel (%p235) target = $region16
        $region15: #{tpu_custom_call.1} parent=11 // pred_region
          _
        $region16: #{tpu_custom_call.1} parent=11 // pred_fallthru
          _
        // Predicated region
        $region17: #{tpu_custom_call.1} parent=11 // pred_check
          %p238 = pneg %p98
        $region18: #{tpu_custom_call.1} parent=11 // pred_check_branch
          %240 = sbr.rel (%p238) target = $region20
        $region19: #{tpu_custom_call.1} parent=11 // pred_region
          _
        $region20: #{tpu_custom_call.1} parent=11 // pred_fallthru
          _
        // Predicated region
        $region21: #{tpu_custom_call.1} parent=11 // pred_check
          %p241 = pneg %p119
        $region22: #{tpu_custom_call.1} parent=11 // pred_check_branch
          %243 = sbr.rel (%p241) target = $region24
        $region23: #{tpu_custom_call.1} parent=11 // pred_region
          _
        $region24: #{tpu_custom_call.1} parent=11 // pred_fallthru
          _
        // Predicated region
        $region25: #{tpu_custom_call.1} parent=11 // pred_check
          %p244 = pneg %p140
        $region26: #{tpu_custom_call.1} parent=11 // pred_check_branch
          %246 = sbr.rel (%p244) target = $region28
        $region27: #{tpu_custom_call.1} parent=11 // pred_region
          _
        $region28: #{tpu_custom_call.1} parent=11 // pred_fallthru
          _
        // Predicated region
        $region29: #{tpu_custom_call.1} parent=11 // pred_check
          %p247 = pneg %p166
        $region30: #{tpu_custom_call.1} parent=11 // pred_check_branch
          %249 = sbr.rel (%p247) target = $region32
        $region31: #{tpu_custom_call.1} parent=11 // pred_region
          %p250 = scmp.lt.s32.totalorder %s25, 1
          %s251 = scalar_select %p250, %s25, 1
          %s252 = smul.addr %s251, 32
          %s253 = smul.addr %s252, 8
          %s254 = scalar_lea.vmem %s5, %s253
        $region32: #{tpu_custom_call.1} parent=11 // pred_fallthru
          _
        // Predicated region
        $region33: #{tpu_custom_call.1} parent=11 // pred_check
          %p255 = pneg %p192
        $region34: #{tpu_custom_call.1} parent=11 // pred_check_branch
          %257 = sbr.rel (%p255) target = $region36
        $region35: #{tpu_custom_call.1} parent=11 // pred_region
          %p258 = scmp.lt.s32.totalorder %s25, 1
          %s259 = scalar_select %p258, %s25, 1
          %s260 = scalar_lea.vmem %s6, %s259
        $region36: #{tpu_custom_call.1} parent=11 // pred_fallthru
          _
      $region12: #{tpu_custom_call.1} parent=5 // pred_fallthru
        _
      %p261 = scmp.lt.s32.totalorder %s16, 2
      // Predicated region
      $region37: #{tpu_custom_call.1} parent=5 // pred_check
        %p262 = pneg %p261
      $region38: #{tpu_custom_call.1} parent=5 // pred_check_branch
        %264 = sbr.rel (%p262) target = $region40
      $region39: #{tpu_custom_call.1} parent=5 // pred_region
        // Predicated region
        $region41: #{tpu_custom_call.1} parent=39 // pred_check
          %p265 = pneg %p50
        $region42: #{tpu_custom_call.1} parent=39 // pred_check_branch
          %267 = sbr.rel (%p265) target = $region44
        $region43: #{tpu_custom_call.1} parent=39 // pred_region
          %s268 = smul.u32 4, %s24
          %p269 = scmp.lt.s32.totalorder %s23, 1
          %s270 = scalar_select %p269, %s23, 1
          %p271 = scmp.lt.s32.totalorder %s268, 3
          %s272 = scalar_select %p271, %s268, 3
          %s273 = smul.addr %s270, 4
          %s274 = sadd.s32 %s272, %s273
          %s275 = smul.addr %s274, 4
          %s276 = scalar_lea.vmem %s0, %s275
          %s277 = smul.u32 4, %s24
        $region44: #{tpu_custom_call.1} parent=39 // pred_fallthru
          _
      $region40: #{tpu_custom_call.1} parent=5 // pred_fallthru
        _
      %p278 = scmp.le.s32.totalorder 1, %s16
      %p279 = scmp.lt.s32.totalorder %s16, 3
      %p280 = pnand %p278, %p279
      %p281 = pneg %p280
      // Predicated region
      $region45: #{tpu_custom_call.1} parent=5 // pred_check
        _
      $region46: #{tpu_custom_call.1} parent=5 // pred_check_branch
        %283 = sbr.rel (%p280) target = $region48
      $region47: #{tpu_custom_call.1} parent=5 // pred_region
        %s284 = ssub.s32 %s16, 1
        %s285 = smul.u32 4, %s26
        %p286 = scmp.lt.s32.totalorder %s25, 1
        %s287 = scalar_select %p286, %s25, 1
        %p288 = scmp.lt.s32.totalorder %s285, 3
        %s289 = scalar_select %p288, %s285, 3
        %s290 = smul.addr %s287, 4
        %s291 = sadd.s32 %s289, %s290
        %s292 = smul.addr %s291, 4
        %s293 = scalar_lea.vmem %s0, %s292
        %p294 = pneg %p56
        %p295 = pneg %p53
        %p296 = pneg %p77
        %p297 = pneg %p74
        %p298 = pneg %p98
        %p299 = pneg %p95
        %p300 = pneg %p119
        %p301 = pneg %p116
        %p302 = pneg %p140
        %p303 = pneg %p137
        %p304 = scmp.lt.s32.totalorder %s25, 1
        %s305 = scalar_select %p304, %s25, 1
        %s306 = smul.addr %s305, 32
        %s307 = smul.addr %s306, 8
        %s308 = scalar_lea.vmem %s5, %s307
        %p309 = pneg %p166
        %p310 = pneg %p163
        %p311 = scmp.lt.s32.totalorder %s25, 1
        %s312 = scalar_select %p311, %s25, 1
        %s313 = scalar_lea.vmem %s6, %s312
        %p314 = pneg %p192
        %p315 = pneg %p189
        %p316 = pneg %p220
        %p317 = pneg %p217
        %s318 = sand.u32 %s207, 1
        %s319 = scalar_lea.sflag [#allocation3], %s318
        %s320 = sand.u32 %s207, 1
        %s321 = smul.addr %s320, 4
        %s322 = scalar_lea.vmem [#allocation2], %s321
        %s323 = smul.u32 4, %s26
        %p324 = scmp.lt.s32.totalorder %s25, 1
        %s325 = scalar_select %p324, %s25, 1
        %p326 = scmp.lt.s32.totalorder %s323, 3
        %s327 = scalar_select %p326, %s323, 3
        %s328 = smul.addr %s325, 4
        %s329 = sadd.s32 %s327, %s328
        %s330 = smul.addr %s329, 4
        %s331 = scalar_lea.vmem %s0, %s330
        %s332 = smul.u32 4, %s26
        %p333 = scmp.lt.s32.totalorder %s25, 1
        %s334 = scalar_select %p333, %s25, 1
        %s335 = smul.addr %s334, 32
        %s336 = smul.addr %s335, 8
        %s337 = scalar_lea.vmem %s5, %s336
        %p338 = scmp.lt.s32.totalorder %s25, 1
        %s339 = scalar_select %p338, %s25, 1
        %s340 = scalar_lea.vmem %s6, %s339
        %s341 = smul.u32 4, %s26
        %v342 = vld [vmem:[%s331] sm:$0x77]
        %v343 = vld [vmem:[%s331 + $0x8] sm:$0x77]
        %v344 = vld [vmem:[%s1] sm:$0xff]
        %v345 = vld [vmem:[%s1 + $0x8] sm:$0xff]
        %v346 = vld [vmem:[%s1 + $0x10] sm:$0xff]
        %v347 = vld [vmem:[%s1 + $0x18] sm:$0xff]
        %v348 = vld [vmem:[%s1 + $0x20] sm:$0xff]
        %v349 = vld [vmem:[%s1 + $0x28] sm:$0xff]
        %v350 = vld [vmem:[%s1 + $0x30] sm:$0xff]
        %v351 = vld [vmem:[%s1 + $0x38] sm:$0xff]
        %v352 = vld [vmem:[%s1 + $0x40] sm:$0xff]
        %v353 = vld [vmem:[%s1 + $0x48] sm:$0xff]
        %v354 = vld [vmem:[%s1 + $0x50] sm:$0xff]
        %v355 = vld [vmem:[%s1 + $0x58] sm:$0xff]
        %v356 = vld [vmem:[%s1 + $0x60] sm:$0xff]
        %v357 = vld [vmem:[%s1 + $0x68] sm:$0xff]
        %v358 = vld [vmem:[%s1 + $0x70] sm:$0xff]
        %v359 = vld [vmem:[%s1 + $0x78] sm:$0xff]
        %v360 = vld [vmem:[%s1 + $0x80] sm:$0xff]
        %v361 = vld [vmem:[%s1 + $0x88] sm:$0xff]
        %v362 = vld [vmem:[%s1 + $0x90] sm:$0xff]
        %v363 = vld [vmem:[%s1 + $0x98] sm:$0xff]
        %v364 = vld [vmem:[%s1 + $0xa0] sm:$0xff]
        %v365 = vld [vmem:[%s1 + $0xa8] sm:$0xff]
        %v366 = vld [vmem:[%s1 + $0xb0] sm:$0xff]
        %v367 = vld [vmem:[%s1 + $0xb8] sm:$0xff]
        %v368 = vld [vmem:[%s1 + $0xc0] sm:$0xff]
        %v369 = vld [vmem:[%s1 + $0xc8] sm:$0xff]
        %v370 = vld [vmem:[%s1 + $0xd0] sm:$0xff]
        %v371 = vld [vmem:[%s1 + $0xd8] sm:$0xff]
        %v372 = vld [vmem:[%s1 + $0xe0] sm:$0xff]
        %v373 = vld [vmem:[%s1 + $0xe8] sm:$0xff]
        %v374 = vld [vmem:[%s1 + $0xf0] sm:$0xff]
        %v375 = vld [vmem:[%s1 + $0xf8] sm:$0xff]
        %377 = vset.pattern.permute.xlu0 0
        %378 = vperm.xlu0 %377, %v344
        %v379 = vpop.permute.xlu0 %378
        %382 = vset.pattern.permute.xlu0 0
        %383 = vperm.xlu0 %382, %v345
        %v384 = vpop.permute.xlu0 %383
        %387 = vset.pattern.permute.xlu0 0
        %388 = vperm.xlu0 %387, %v346
        %v389 = vpop.permute.xlu0 %388
        %392 = vset.pattern.permute.xlu0 0
        %393 = vperm.xlu0 %392, %v347
        %v394 = vpop.permute.xlu0 %393
        %397 = vset.pattern.permute.xlu0 0
        %398 = vperm.xlu0 %397, %v348
        %v399 = vpop.permute.xlu0 %398
        %402 = vset.pattern.permute.xlu0 0
        %403 = vperm.xlu0 %402, %v349
        %v404 = vpop.permute.xlu0 %403
        %407 = vset.pattern.permute.xlu0 0
        %408 = vperm.xlu0 %407, %v350
        %v409 = vpop.permute.xlu0 %408
        %412 = vset.pattern.permute.xlu0 0
        %413 = vperm.xlu0 %412, %v351
        %v414 = vpop.permute.xlu0 %413
        %417 = vset.pattern.permute.xlu0 0
        %418 = vperm.xlu0 %417, %v352
        %v419 = vpop.permute.xlu0 %418
        %422 = vset.pattern.permute.xlu0 0
        %423 = vperm.xlu0 %422, %v353
        %v424 = vpop.permute.xlu0 %423
        %427 = vset.pattern.permute.xlu0 0
        %428 = vperm.xlu0 %427, %v354
        %v429 = vpop.permute.xlu0 %428
        %432 = vset.pattern.permute.xlu0 0
        %433 = vperm.xlu0 %432, %v355
        %v434 = vpop.permute.xlu0 %433
        %437 = vset.pattern.permute.xlu0 0
        %438 = vperm.xlu0 %437, %v356
        %v439 = vpop.permute.xlu0 %438
        %442 = vset.pattern.permute.xlu0 0
        %443 = vperm.xlu0 %442, %v357
        %v444 = vpop.permute.xlu0 %443
        %447 = vset.pattern.permute.xlu0 0
        %448 = vperm.xlu0 %447, %v358
        %v449 = vpop.permute.xlu0 %448
        %452 = vset.pattern.permute.xlu0 0
        %453 = vperm.xlu0 %452, %v359
        %v454 = vpop.permute.xlu0 %453
        %457 = vset.pattern.permute.xlu0 0
        %458 = vperm.xlu0 %457, %v360
        %v459 = vpop.permute.xlu0 %458
        %462 = vset.pattern.permute.xlu0 0
        %463 = vperm.xlu0 %462, %v361
        %v464 = vpop.permute.xlu0 %463
        %467 = vset.pattern.permute.xlu0 0
        %468 = vperm.xlu0 %467, %v362
        %v469 = vpop.permute.xlu0 %468
        %472 = vset.pattern.permute.xlu0 0
        %473 = vperm.xlu0 %472, %v363
        %v474 = vpop.permute.xlu0 %473
        %477 = vset.pattern.permute.xlu0 0
        %478 = vperm.xlu0 %477, %v364
        %v479 = vpop.permute.xlu0 %478
        %482 = vset.pattern.permute.xlu0 0
        %483 = vperm.xlu0 %482, %v365
        %v484 = vpop.permute.xlu0 %483
        %487 = vset.pattern.permute.xlu0 0
        %488 = vperm.xlu0 %487, %v366
        %v489 = vpop.permute.xlu0 %488
        %492 = vset.pattern.permute.xlu0 0
        %493 = vperm.xlu0 %492, %v367
        %v494 = vpop.permute.xlu0 %493
        %497 = vset.pattern.permute.xlu0 0
        %498 = vperm.xlu0 %497, %v368
        %v499 = vpop.permute.xlu0 %498
        %502 = vset.pattern.permute.xlu0 0
        %503 = vperm.xlu0 %502, %v369
        %v504 = vpop.permute.xlu0 %503
        %507 = vset.pattern.permute.xlu0 0
        %508 = vperm.xlu0 %507, %v370
        %v509 = vpop.permute.xlu0 %508
        %512 = vset.pattern.permute.xlu0 0
        %513 = vperm.xlu0 %512, %v371
        %v514 = vpop.permute.xlu0 %513
        %517 = vset.pattern.permute.xlu0 0
        %518 = vperm.xlu0 %517, %v372
        %v519 = vpop.permute.xlu0 %518
        %522 = vset.pattern.permute.xlu0 0
        %523 = vperm.xlu0 %522, %v373
        %v524 = vpop.permute.xlu0 %523
        %527 = vset.pattern.permute.xlu0 0
        %528 = vperm.xlu0 %527, %v374
        %v529 = vpop.permute.xlu0 %528
        %532 = vset.pattern.permute.xlu0 0
        %533 = vperm.xlu0 %532, %v375
        %v534 = vpop.permute.xlu0 %533
        %v538 = vlaneseq
        %v539 = vshrl.u32 %v538, 7
        %v540 = vsub.s32 0, %v539
        %v541 = vrot.slane %v342, %v540
        %v542 = vlaneseq
        %v543 = vshrl.u32 %v542, 7
        %v544 = vsub.s32 4, %v543
        %v545 = vrot.slane %v342, %v544
        %v546 = vlaneseq
        %v547 = vshrl.u32 %v546, 7
        %v548 = vsub.s32 0, %v547
        %v549 = vrot.slane %v343, %v548
        %v550 = vlaneseq
        %v551 = vshrl.u32 %v550, 7
        %v552 = vsub.s32 4, %v551
        %v553 = vrot.slane %v343, %v552
        %v558 = vlaneseq
        %v559 = vshrl.u32 %v558, 7
        %v560 = vsub.s32 0, %v559
        %v561 = vrot.slane %v541, %v560
        %v562 = vlaneseq
        %v563 = vshrl.u32 %v562, 7
        %v564 = vsub.s32 0, %v563
        %v565 = vrot.slane %v545, %v564
        %v566 = vlaneseq
        %v567 = vshrl.u32 %v566, 7
        %v568 = vsub.s32 0, %v567
        %v569 = vrot.slane %v549, %v568
        %v570 = vlaneseq
        %v571 = vshrl.u32 %v570, 7
        %v572 = vsub.s32 0, %v571
        %v573 = vrot.slane %v553, %v572
        %v574 = vmul.f32 %v379, %v561
        %v575 = vmul.f32 %v379, %v565
        %v576 = vmul.f32 %v379, %v569
        %v577 = vmul.f32 %v379, %v573
        %v578 = vmul.f32 %v384, %v561
        %v579 = vmul.f32 %v384, %v565
        %v580 = vmul.f32 %v384, %v569
        %v581 = vmul.f32 %v384, %v573
        %v582 = vmul.f32 %v389, %v561
        %v583 = vmul.f32 %v389, %v565
        %v584 = vmul.f32 %v389, %v569
        %v585 = vmul.f32 %v389, %v573
        %v586 = vmul.f32 %v394, %v561
        %v587 = vmul.f32 %v394, %v565
        %v588 = vmul.f32 %v394, %v569
        %v589 = vmul.f32 %v394, %v573
        %v590 = vmul.f32 %v399, %v561
        %v591 = vmul.f32 %v399, %v565
        %v592 = vmul.f32 %v399, %v569
        %v593 = vmul.f32 %v399, %v573
        %v594 = vmul.f32 %v404, %v561
        %v595 = vmul.f32 %v404, %v565
        %v596 = vmul.f32 %v404, %v569
        %v597 = vmul.f32 %v404, %v573
        %v598 = vmul.f32 %v409, %v561
        %v599 = vmul.f32 %v409, %v565
        %v600 = vmul.f32 %v409, %v569
        %v601 = vmul.f32 %v409, %v573
        %v602 = vmul.f32 %v414, %v561
        %v603 = vmul.f32 %v414, %v565
        %v604 = vmul.f32 %v414, %v569
        %v605 = vmul.f32 %v414, %v573
        %v606 = vmul.f32 %v419, %v561
        %v607 = vmul.f32 %v419, %v565
        %v608 = vmul.f32 %v419, %v569
        %v609 = vmul.f32 %v419, %v573
        %v610 = vmul.f32 %v424, %v561
        %v611 = vmul.f32 %v424, %v565
        %v612 = vmul.f32 %v424, %v569
        %v613 = vmul.f32 %v424, %v573
        %v614 = vmul.f32 %v429, %v561
        %v615 = vmul.f32 %v429, %v565
        %v616 = vmul.f32 %v429, %v569
        %v617 = vmul.f32 %v429, %v573
        %v618 = vmul.f32 %v434, %v561
        %v619 = vmul.f32 %v434, %v565
        %v620 = vmul.f32 %v434, %v569
        %v621 = vmul.f32 %v434, %v573
        %v622 = vmul.f32 %v439, %v561
        %v623 = vmul.f32 %v439, %v565
        %v624 = vmul.f32 %v439, %v569
        %v625 = vmul.f32 %v439, %v573
        %v626 = vmul.f32 %v444, %v561
        %v627 = vmul.f32 %v444, %v565
        %v628 = vmul.f32 %v444, %v569
        %v629 = vmul.f32 %v444, %v573
        %v630 = vmul.f32 %v449, %v561
        %v631 = vmul.f32 %v449, %v565
        %v632 = vmul.f32 %v449, %v569
        %v633 = vmul.f32 %v449, %v573
        %v634 = vmul.f32 %v454, %v561
        %v635 = vmul.f32 %v454, %v565
        %v636 = vmul.f32 %v454, %v569
        %v637 = vmul.f32 %v454, %v573
        %v638 = vmul.f32 %v459, %v561
        %v639 = vmul.f32 %v459, %v565
        %v640 = vmul.f32 %v459, %v569
        %v641 = vmul.f32 %v459, %v573
        %v642 = vmul.f32 %v464, %v561
        %v643 = vmul.f32 %v464, %v565
        %v644 = vmul.f32 %v464, %v569
        %v645 = vmul.f32 %v464, %v573
        %v646 = vmul.f32 %v469, %v561
        %v647 = vmul.f32 %v469, %v565
        %v648 = vmul.f32 %v469, %v569
        %v649 = vmul.f32 %v469, %v573
        %v650 = vmul.f32 %v474, %v561
        %v651 = vmul.f32 %v474, %v565
        %v652 = vmul.f32 %v474, %v569
        %v653 = vmul.f32 %v474, %v573
        %v654 = vmul.f32 %v479, %v561
        %v655 = vmul.f32 %v479, %v565
        %v656 = vmul.f32 %v479, %v569
        %v657 = vmul.f32 %v479, %v573
        %v658 = vmul.f32 %v484, %v561
        %v659 = vmul.f32 %v484, %v565
        %v660 = vmul.f32 %v484, %v569
        %v661 = vmul.f32 %v484, %v573
        %v662 = vmul.f32 %v489, %v561
        %v663 = vmul.f32 %v489, %v565
        %v664 = vmul.f32 %v489, %v569
        %v665 = vmul.f32 %v489, %v573
        %v666 = vmul.f32 %v494, %v561
        %v667 = vmul.f32 %v494, %v565
        %v668 = vmul.f32 %v494, %v569
        %v669 = vmul.f32 %v494, %v573
        %v670 = vmul.f32 %v499, %v561
        %v671 = vmul.f32 %v499, %v565
        %v672 = vmul.f32 %v499, %v569
        %v673 = vmul.f32 %v499, %v573
        %v674 = vmul.f32 %v504, %v561
        %v675 = vmul.f32 %v504, %v565
        %v676 = vmul.f32 %v504, %v569
        %v677 = vmul.f32 %v504, %v573
        %v678 = vmul.f32 %v509, %v561
        %v679 = vmul.f32 %v509, %v565
        %v680 = vmul.f32 %v509, %v569
        %v681 = vmul.f32 %v509, %v573
        %v682 = vmul.f32 %v514, %v561
        %v683 = vmul.f32 %v514, %v565
        %v684 = vmul.f32 %v514, %v569
        %v685 = vmul.f32 %v514, %v573
        %v686 = vmul.f32 %v519, %v561
        %v687 = vmul.f32 %v519, %v565
        %v688 = vmul.f32 %v519, %v569
        %v689 = vmul.f32 %v519, %v573
        %v690 = vmul.f32 %v524, %v561
        %v691 = vmul.f32 %v524, %v565
        %v692 = vmul.f32 %v524, %v569
        %v693 = vmul.f32 %v524, %v573
        %v694 = vmul.f32 %v529, %v561
        %v695 = vmul.f32 %v529, %v565
        %v696 = vmul.f32 %v529, %v569
        %v697 = vmul.f32 %v529, %v573
        %v698 = vmul.f32 %v534, %v561
        %v699 = vmul.f32 %v534, %v565
        %v700 = vmul.f32 %v534, %v569
        %v701 = vmul.f32 %v534, %v573
        %702 = vset.pattern.permute.xlu0 1
        %703 = vperm.xlu0 %702, %v344
        %v704 = vpop.permute.xlu0 %703
        %706 = vset.pattern.permute.xlu0 1
        %707 = vperm.xlu0 %706, %v345
        %v708 = vpop.permute.xlu0 %707
        %710 = vset.pattern.permute.xlu0 1
        %711 = vperm.xlu0 %710, %v346
        %v712 = vpop.permute.xlu0 %711
        %714 = vset.pattern.permute.xlu0 1
        %715 = vperm.xlu0 %714, %v347
        %v716 = vpop.permute.xlu0 %715
        %718 = vset.pattern.permute.xlu0 1
        %719 = vperm.xlu0 %718, %v348
        %v720 = vpop.permute.xlu0 %719
        %722 = vset.pattern.permute.xlu0 1
        %723 = vperm.xlu0 %722, %v349
        %v724 = vpop.permute.xlu0 %723
        %726 = vset.pattern.permute.xlu0 1
        %727 = vperm.xlu0 %726, %v350
        %v728 = vpop.permute.xlu0 %727
        %730 = vset.pattern.permute.xlu0 1
        %731 = vperm.xlu0 %730, %v351
        %v732 = vpop.permute.xlu0 %731
        %734 = vset.pattern.permute.xlu0 1
        %735 = vperm.xlu0 %734, %v352
        %v736 = vpop.permute.xlu0 %735
        %738 = vset.pattern.permute.xlu0 1
        %739 = vperm.xlu0 %738, %v353
        %v740 = vpop.permute.xlu0 %739
        %742 = vset.pattern.permute.xlu0 1
        %743 = vperm.xlu0 %742, %v354
        %v744 = vpop.permute.xlu0 %743
        %746 = vset.pattern.permute.xlu0 1
        %747 = vperm.xlu0 %746, %v355
        %v748 = vpop.permute.xlu0 %747
        %750 = vset.pattern.permute.xlu0 1
        %751 = vperm.xlu0 %750, %v356
        %v752 = vpop.permute.xlu0 %751
        %754 = vset.pattern.permute.xlu0 1
        %755 = vperm.xlu0 %754, %v357
        %v756 = vpop.permute.xlu0 %755
        %758 = vset.pattern.permute.xlu0 1
        %759 = vperm.xlu0 %758, %v358
        %v760 = vpop.permute.xlu0 %759
        %762 = vset.pattern.permute.xlu0 1
        %763 = vperm.xlu0 %762, %v359
        %v764 = vpop.permute.xlu0 %763
        %766 = vset.pattern.permute.xlu0 1
        %767 = vperm.xlu0 %766, %v360
        %v768 = vpop.permute.xlu0 %767
        %770 = vset.pattern.permute.xlu0 1
        %771 = vperm.xlu0 %770, %v361
        %v772 = vpop.permute.xlu0 %771
        %774 = vset.pattern.permute.xlu0 1
        %775 = vperm.xlu0 %774, %v362
        %v776 = vpop.permute.xlu0 %775
        %778 = vset.pattern.permute.xlu0 1
        %779 = vperm.xlu0 %778, %v363
        %v780 = vpop.permute.xlu0 %779
        %782 = vset.pattern.permute.xlu0 1
        %783 = vperm.xlu0 %782, %v364
        %v784 = vpop.permute.xlu0 %783
        %786 = vset.pattern.permute.xlu0 1
        %787 = vperm.xlu0 %786, %v365
        %v788 = vpop.permute.xlu0 %787
        %790 = vset.pattern.permute.xlu0 1
        %791 = vperm.xlu0 %790, %v366
        %v792 = vpop.permute.xlu0 %791
        %794 = vset.pattern.permute.xlu0 1
        %795 = vperm.xlu0 %794, %v367
        %v796 = vpop.permute.xlu0 %795
        %798 = vset.pattern.permute.xlu0 1
        %799 = vperm.xlu0 %798, %v368
        %v800 = vpop.permute.xlu0 %799
        %802 = vset.pattern.permute.xlu0 1
        %803 = vperm.xlu0 %802, %v369
        %v804 = vpop.permute.xlu0 %803
        %806 = vset.pattern.permute.xlu0 1
        %807 = vperm.xlu0 %806, %v370
        %v808 = vpop.permute.xlu0 %807
        %810 = vset.pattern.permute.xlu0 1
        %811 = vperm.xlu0 %810, %v371
        %v812 = vpop.permute.xlu0 %811
        %814 = vset.pattern.permute.xlu0 1
        %815 = vperm.xlu0 %814, %v372
        %v816 = vpop.permute.xlu0 %815
        %818 = vset.pattern.permute.xlu0 1
        %819 = vperm.xlu0 %818, %v373
        %v820 = vpop.permute.xlu0 %819
        %822 = vset.pattern.permute.xlu0 1
        %823 = vperm.xlu0 %822, %v374
        %v824 = vpop.permute.xlu0 %823
        %826 = vset.pattern.permute.xlu0 1
        %827 = vperm.xlu0 %826, %v375
        %v828 = vpop.permute.xlu0 %827
        %v830 = vlaneseq
        %v831 = vshrl.u32 %v830, 7
        %v832 = vsub.s32 1, %v831
        %v833 = vrot.slane %v342, %v832
        %v834 = vlaneseq
        %v835 = vshrl.u32 %v834, 7
        %v836 = vsub.s32 5, %v835
        %v837 = vrot.slane %v342, %v836
        %v838 = vlaneseq
        %v839 = vshrl.u32 %v838, 7
        %v840 = vsub.s32 1, %v839
        %v841 = vrot.slane %v343, %v840
        %v842 = vlaneseq
        %v843 = vshrl.u32 %v842, 7
        %v844 = vsub.s32 5, %v843
        %v845 = vrot.slane %v343, %v844
        %v850 = vlaneseq
        %v851 = vshrl.u32 %v850, 7
        %v852 = vsub.s32 1, %v851
        %v853 = vrot.slane %v833, %v852
        %v854 = vlaneseq
        %v855 = vshrl.u32 %v854, 7
        %v856 = vsub.s32 1, %v855
        %v857 = vrot.slane %v837, %v856
        %v858 = vlaneseq
        %v859 = vshrl.u32 %v858, 7
        %v860 = vsub.s32 1, %v859
        %v861 = vrot.slane %v841, %v860
        %v862 = vlaneseq
        %v863 = vshrl.u32 %v862, 7
        %v864 = vsub.s32 1, %v863
        %v865 = vrot.slane %v845, %v864
        %v866 = vmul.f32 %v704, %v853
        %v867 = vmul.f32 %v704, %v857
        %v868 = vmul.f32 %v704, %v861
        %v869 = vmul.f32 %v704, %v865
        %v870 = vmul.f32 %v708, %v853
        %v871 = vmul.f32 %v708, %v857
        %v872 = vmul.f32 %v708, %v861
        %v873 = vmul.f32 %v708, %v865
        %v874 = vmul.f32 %v712, %v853
        %v875 = vmul.f32 %v712, %v857
        %v876 = vmul.f32 %v712, %v861
        %v877 = vmul.f32 %v712, %v865
        %v878 = vmul.f32 %v716, %v853
        %v879 = vmul.f32 %v716, %v857
        %v880 = vmul.f32 %v716, %v861
        %v881 = vmul.f32 %v716, %v865
        %v882 = vmul.f32 %v720, %v853
        %v883 = vmul.f32 %v720, %v857
        %v884 = vmul.f32 %v720, %v861
        %v885 = vmul.f32 %v720, %v865
        %v886 = vmul.f32 %v724, %v853
        %v887 = vmul.f32 %v724, %v857
        %v888 = vmul.f32 %v724, %v861
        %v889 = vmul.f32 %v724, %v865
        %v890 = vmul.f32 %v728, %v853
        %v891 = vmul.f32 %v728, %v857
        %v892 = vmul.f32 %v728, %v861
        %v893 = vmul.f32 %v728, %v865
        %v894 = vmul.f32 %v732, %v853
        %v895 = vmul.f32 %v732, %v857
        %v896 = vmul.f32 %v732, %v861
        %v897 = vmul.f32 %v732, %v865
        %v898 = vmul.f32 %v736, %v853
        %v899 = vmul.f32 %v736, %v857
        %v900 = vmul.f32 %v736, %v861
        %v901 = vmul.f32 %v736, %v865
        %v902 = vmul.f32 %v740, %v853
        %v903 = vmul.f32 %v740, %v857
        %v904 = vmul.f32 %v740, %v861
        %v905 = vmul.f32 %v740, %v865
        %v906 = vmul.f32 %v744, %v853
        %v907 = vmul.f32 %v744, %v857
        %v908 = vmul.f32 %v744, %v861
        %v909 = vmul.f32 %v744, %v865
        %v910 = vmul.f32 %v748, %v853
        %v911 = vmul.f32 %v748, %v857
        %v912 = vmul.f32 %v748, %v861
        %v913 = vmul.f32 %v748, %v865
        %v914 = vmul.f32 %v752, %v853
        %v915 = vmul.f32 %v752, %v857
        %v916 = vmul.f32 %v752, %v861
        %v917 = vmul.f32 %v752, %v865
        %v918 = vmul.f32 %v756, %v853
        %v919 = vmul.f32 %v756, %v857
        %v920 = vmul.f32 %v756, %v861
        %v921 = vmul.f32 %v756, %v865
        %v922 = vmul.f32 %v760, %v853
        %v923 = vmul.f32 %v760, %v857
        %v924 = vmul.f32 %v760, %v861
        %v925 = vmul.f32 %v760, %v865
        %v926 = vmul.f32 %v764, %v853
        %v927 = vmul.f32 %v764, %v857
        %v928 = vmul.f32 %v764, %v861
        %v929 = vmul.f32 %v764, %v865
        %v930 = vmul.f32 %v768, %v853
        %v931 = vmul.f32 %v768, %v857
        %v932 = vmul.f32 %v768, %v861
        %v933 = vmul.f32 %v768, %v865
        %v934 = vmul.f32 %v772, %v853
        %v935 = vmul.f32 %v772, %v857
        %v936 = vmul.f32 %v772, %v861
        %v937 = vmul.f32 %v772, %v865
        %v938 = vmul.f32 %v776, %v853
        %v939 = vmul.f32 %v776, %v857
        %v940 = vmul.f32 %v776, %v861
        %v941 = vmul.f32 %v776, %v865
        %v942 = vmul.f32 %v780, %v853
        %v943 = vmul.f32 %v780, %v857
        %v944 = vmul.f32 %v780, %v861
        %v945 = vmul.f32 %v780, %v865
        %v946 = vmul.f32 %v784, %v853
        %v947 = vmul.f32 %v784, %v857
        %v948 = vmul.f32 %v784, %v861
        %v949 = vmul.f32 %v784, %v865
        %v950 = vmul.f32 %v788, %v853
        %v951 = vmul.f32 %v788, %v857
        %v952 = vmul.f32 %v788, %v861
        %v953 = vmul.f32 %v788, %v865
        %v954 = vmul.f32 %v792, %v853
        %v955 = vmul.f32 %v792, %v857
        %v956 = vmul.f32 %v792, %v861
        %v957 = vmul.f32 %v792, %v865
        %v958 = vmul.f32 %v796, %v853
        %v959 = vmul.f32 %v796, %v857
        %v960 = vmul.f32 %v796, %v861
        %v961 = vmul.f32 %v796, %v865
        %v962 = vmul.f32 %v800, %v853
        %v963 = vmul.f32 %v800, %v857
        %v964 = vmul.f32 %v800, %v861
        %v965 = vmul.f32 %v800, %v865
        %v966 = vmul.f32 %v804, %v853
        %v967 = vmul.f32 %v804, %v857
        %v968 = vmul.f32 %v804, %v861
        %v969 = vmul.f32 %v804, %v865
        %v970 = vmul.f32 %v808, %v853
        %v971 = vmul.f32 %v808, %v857
        %v972 = vmul.f32 %v808, %v861
        %v973 = vmul.f32 %v808, %v865
        %v974 = vmul.f32 %v812, %v853
        %v975 = vmul.f32 %v812, %v857
        %v976 = vmul.f32 %v812, %v861
        %v977 = vmul.f32 %v812, %v865
        %v978 = vmul.f32 %v816, %v853
        %v979 = vmul.f32 %v816, %v857
        %v980 = vmul.f32 %v816, %v861
        %v981 = vmul.f32 %v816, %v865
        %v982 = vmul.f32 %v820, %v853
        %v983 = vmul.f32 %v820, %v857
        %v984 = vmul.f32 %v820, %v861
        %v985 = vmul.f32 %v820, %v865
        %v986 = vmul.f32 %v824, %v853
        %v987 = vmul.f32 %v824, %v857
        %v988 = vmul.f32 %v824, %v861
        %v989 = vmul.f32 %v824, %v865
        %v990 = vmul.f32 %v828, %v853
        %v991 = vmul.f32 %v828, %v857
        %v992 = vmul.f32 %v828, %v861
        %v993 = vmul.f32 %v828, %v865
        %v994 = vadd.f32 %v574, %v866
        %v995 = vadd.f32 %v575, %v867
        %v996 = vadd.f32 %v576, %v868
        %v997 = vadd.f32 %v577, %v869
        %v998 = vadd.f32 %v578, %v870
        %v999 = vadd.f32 %v579, %v871
        %v1000 = vadd.f32 %v580, %v872
        %v1001 = vadd.f32 %v581, %v873
        %v1002 = vadd.f32 %v582, %v874
        %v1003 = vadd.f32 %v583, %v875
        %v1004 = vadd.f32 %v584, %v876
        %v1005 = vadd.f32 %v585, %v877
        %v1006 = vadd.f32 %v586, %v878
        %v1007 = vadd.f32 %v587, %v879
        %v1008 = vadd.f32 %v588, %v880
        %v1009 = vadd.f32 %v589, %v881
        %v1010 = vadd.f32 %v590, %v882
        %v1011 = vadd.f32 %v591, %v883
        %v1012 = vadd.f32 %v592, %v884
        %v1013 = vadd.f32 %v593, %v885
        %v1014 = vadd.f32 %v594, %v886
        %v1015 = vadd.f32 %v595, %v887
        %v1016 = vadd.f32 %v596, %v888
        %v1017 = vadd.f32 %v597, %v889
        %v1018 = vadd.f32 %v598, %v890
        %v1019 = vadd.f32 %v599, %v891
        %v1020 = vadd.f32 %v600, %v892
        %v1021 = vadd.f32 %v601, %v893
        %v1022 = vadd.f32 %v602, %v894
        %v1023 = vadd.f32 %v603, %v895
        %v1024 = vadd.f32 %v604, %v896
        %v1025 = vadd.f32 %v605, %v897
        %v1026 = vadd.f32 %v606, %v898
        %v1027 = vadd.f32 %v607, %v899
        %v1028 = vadd.f32 %v608, %v900
        %v1029 = vadd.f32 %v609, %v901
        %v1030 = vadd.f32 %v610, %v902
        %v1031 = vadd.f32 %v611, %v903
        %v1032 = vadd.f32 %v612, %v904
        %v1033 = vadd.f32 %v613, %v905
        %v1034 = vadd.f32 %v614, %v906
        %v1035 = vadd.f32 %v615, %v907
        %v1036 = vadd.f32 %v616, %v908
        %v1037 = vadd.f32 %v617, %v909
        %v1038 = vadd.f32 %v618, %v910
        %v1039 = vadd.f32 %v619, %v911
        %v1040 = vadd.f32 %v620, %v912
        %v1041 = vadd.f32 %v621, %v913
        %v1042 = vadd.f32 %v622, %v914
        %v1043 = vadd.f32 %v623, %v915
        %v1044 = vadd.f32 %v624, %v916
        %v1045 = vadd.f32 %v625, %v917
        %v1046 = vadd.f32 %v626, %v918
        %v1047 = vadd.f32 %v627, %v919
        %v1048 = vadd.f32 %v628, %v920
        %v1049 = vadd.f32 %v629, %v921
        %v1050 = vadd.f32 %v630, %v922
        %v1051 = vadd.f32 %v631, %v923
        %v1052 = vadd.f32 %v632, %v924
        %v1053 = vadd.f32 %v633, %v925
        %v1054 = vadd.f32 %v634, %v926
        %v1055 = vadd.f32 %v635, %v927
        %v1056 = vadd.f32 %v636, %v928
        %v1057 = vadd.f32 %v637, %v929
        %v1058 = vadd.f32 %v638, %v930
        %v1059 = vadd.f32 %v639, %v931
        %v1060 = vadd.f32 %v640, %v932
        %v1061 = vadd.f32 %v641, %v933
        %v1062 = vadd.f32 %v642, %v934
        %v1063 = vadd.f32 %v643, %v935
        %v1064 = vadd.f32 %v644, %v936
        %v1065 = vadd.f32 %v645, %v937
        %v1066 = vadd.f32 %v646, %v938
        %v1067 = vadd.f32 %v647, %v939
        %v1068 = vadd.f32 %v648, %v940
        %v1069 = vadd.f32 %v649, %v941
        %v1070 = vadd.f32 %v650, %v942
        %v1071 = vadd.f32 %v651, %v943
        %v1072 = vadd.f32 %v652, %v944
        %v1073 = vadd.f32 %v653, %v945
        %v1074 = vadd.f32 %v654, %v946
        %v1075 = vadd.f32 %v655, %v947
        %v1076 = vadd.f32 %v656, %v948
        %v1077 = vadd.f32 %v657, %v949
        %v1078 = vadd.f32 %v658, %v950
        %v1079 = vadd.f32 %v659, %v951
        %v1080 = vadd.f32 %v660, %v952
        %v1081 = vadd.f32 %v661, %v953
        %v1082 = vadd.f32 %v662, %v954
        %v1083 = vadd.f32 %v663, %v955
        %v1084 = vadd.f32 %v664, %v956
        %v1085 = vadd.f32 %v665, %v957
        %v1086 = vadd.f32 %v666, %v958
        %v1087 = vadd.f32 %v667, %v959
        %v1088 = vadd.f32 %v668, %v960
        %v1089 = vadd.f32 %v669, %v961
        %v1090 = vadd.f32 %v670, %v962
        %v1091 = vadd.f32 %v671, %v963
        %v1092 = vadd.f32 %v672, %v964
        %v1093 = vadd.f32 %v673, %v965
        %v1094 = vadd.f32 %v674, %v966
        %v1095 = vadd.f32 %v675, %v967
        %v1096 = vadd.f32 %v676, %v968
        %v1097 = vadd.f32 %v677, %v969
        %v1098 = vadd.f32 %v678, %v970
        %v1099 = vadd.f32 %v679, %v971
        %v1100 = vadd.f32 %v680, %v972
        %v1101 = vadd.f32 %v681, %v973
        %v1102 = vadd.f32 %v682, %v974
        %v1103 = vadd.f32 %v683, %v975
        %v1104 = vadd.f32 %v684, %v976
        %v1105 = vadd.f32 %v685, %v977
        %v1106 = vadd.f32 %v686, %v978
        %v1107 = vadd.f32 %v687, %v979
        %v1108 = vadd.f32 %v688, %v980
        %v1109 = vadd.f32 %v689, %v981
        %v1110 = vadd.f32 %v690, %v982
        %v1111 = vadd.f32 %v691, %v983
        %v1112 = vadd.f32 %v692, %v984
        %v1113 = vadd.f32 %v693, %v985
        %v1114 = vadd.f32 %v694, %v986
        %v1115 = vadd.f32 %v695, %v987
        %v1116 = vadd.f32 %v696, %v988
        %v1117 = vadd.f32 %v697, %v989
        %v1118 = vadd.f32 %v698, %v990
        %v1119 = vadd.f32 %v699, %v991
        %v1120 = vadd.f32 %v700, %v992
        %v1121 = vadd.f32 %v701, %v993
        %1122 = vset.pattern.permute.xlu0 2
        %1123 = vperm.xlu0 %1122, %v344
        %v1124 = vpop.permute.xlu0 %1123
        %1126 = vset.pattern.permute.xlu0 2
        %1127 = vperm.xlu0 %1126, %v345
        %v1128 = vpop.permute.xlu0 %1127
        %1130 = vset.pattern.permute.xlu0 2
        %1131 = vperm.xlu0 %1130, %v346
        %v1132 = vpop.permute.xlu0 %1131
        %1134 = vset.pattern.permute.xlu0 2
        %1135 = vperm.xlu0 %1134, %v347
        %v1136 = vpop.permute.xlu0 %1135
        %1138 = vset.pattern.permute.xlu0 2
        %1139 = vperm.xlu0 %1138, %v348
        %v1140 = vpop.permute.xlu0 %1139
        %1142 = vset.pattern.permute.xlu0 2
        %1143 = vperm.xlu0 %1142, %v349
        %v1144 = vpop.permute.xlu0 %1143
        %1146 = vset.pattern.permute.xlu0 2
        %1147 = vperm.xlu0 %1146, %v350
        %v1148 = vpop.permute.xlu0 %1147
        %1150 = vset.pattern.permute.xlu0 2
        %1151 = vperm.xlu0 %1150, %v351
        %v1152 = vpop.permute.xlu0 %1151
        %1154 = vset.pattern.permute.xlu0 2
        %1155 = vperm.xlu0 %1154, %v352
        %v1156 = vpop.permute.xlu0 %1155
        %1158 = vset.pattern.permute.xlu0 2
        %1159 = vperm.xlu0 %1158, %v353
        %v1160 = vpop.permute.xlu0 %1159
        %1162 = vset.pattern.permute.xlu0 2
        %1163 = vperm.xlu0 %1162, %v354
        %v1164 = vpop.permute.xlu0 %1163
        %1166 = vset.pattern.permute.xlu0 2
        %1167 = vperm.xlu0 %1166, %v355
        %v1168 = vpop.permute.xlu0 %1167
        %1170 = vset.pattern.permute.xlu0 2
        %1171 = vperm.xlu0 %1170, %v356
        %v1172 = vpop.permute.xlu0 %1171
        %1174 = vset.pattern.permute.xlu0 2
        %1175 = vperm.xlu0 %1174, %v357
        %v1176 = vpop.permute.xlu0 %1175
        %1178 = vset.pattern.permute.xlu0 2
        %1179 = vperm.xlu0 %1178, %v358
        %v1180 = vpop.permute.xlu0 %1179
        %1182 = vset.pattern.permute.xlu0 2
        %1183 = vperm.xlu0 %1182, %v359
        %v1184 = vpop.permute.xlu0 %1183
        %1186 = vset.pattern.permute.xlu0 2
        %1187 = vperm.xlu0 %1186, %v360
        %v1188 = vpop.permute.xlu0 %1187
        %1190 = vset.pattern.permute.xlu0 2
        %1191 = vperm.xlu0 %1190, %v361
        %v1192 = vpop.permute.xlu0 %1191
        %1194 = vset.pattern.permute.xlu0 2
        %1195 = vperm.xlu0 %1194, %v362
        %v1196 = vpop.permute.xlu0 %1195
        %1198 = vset.pattern.permute.xlu0 2
        %1199 = vperm.xlu0 %1198, %v363
        %v1200 = vpop.permute.xlu0 %1199
        %1202 = vset.pattern.permute.xlu0 2
        %1203 = vperm.xlu0 %1202, %v364
        %v1204 = vpop.permute.xlu0 %1203
        %1206 = vset.pattern.permute.xlu0 2
        %1207 = vperm.xlu0 %1206, %v365
        %v1208 = vpop.permute.xlu0 %1207
        %1210 = vset.pattern.permute.xlu0 2
        %1211 = vperm.xlu0 %1210, %v366
        %v1212 = vpop.permute.xlu0 %1211
        %1214 = vset.pattern.permute.xlu0 2
        %1215 = vperm.xlu0 %1214, %v367
        %v1216 = vpop.permute.xlu0 %1215
        %1218 = vset.pattern.permute.xlu0 2
        %1219 = vperm.xlu0 %1218, %v368
        %v1220 = vpop.permute.xlu0 %1219
        %1222 = vset.pattern.permute.xlu0 2
        %1223 = vperm.xlu0 %1222, %v369
        %v1224 = vpop.permute.xlu0 %1223
        %1226 = vset.pattern.permute.xlu0 2
        %1227 = vperm.xlu0 %1226, %v370
        %v1228 = vpop.permute.xlu0 %1227
        %1230 = vset.pattern.permute.xlu0 2
        %1231 = vperm.xlu0 %1230, %v371
        %v1232 = vpop.permute.xlu0 %1231
        %1234 = vset.pattern.permute.xlu0 2
        %1235 = vperm.xlu0 %1234, %v372
        %v1236 = vpop.permute.xlu0 %1235
        %1238 = vset.pattern.permute.xlu0 2
        %1239 = vperm.xlu0 %1238, %v373
        %v1240 = vpop.permute.xlu0 %1239
        %1242 = vset.pattern.permute.xlu0 2
        %1243 = vperm.xlu0 %1242, %v374
        %v1244 = vpop.permute.xlu0 %1243
        %1246 = vset.pattern.permute.xlu0 2
        %1247 = vperm.xlu0 %1246, %v375
        %v1248 = vpop.permute.xlu0 %1247
        %v1250 = vlaneseq
        %v1251 = vshrl.u32 %v1250, 7
        %v1252 = vsub.s32 2, %v1251
        %v1253 = vrot.slane %v342, %v1252
        %v1254 = vlaneseq
        %v1255 = vshrl.u32 %v1254, 7
        %v1256 = vsub.s32 6, %v1255
        %v1257 = vrot.slane %v342, %v1256
        %v1258 = vlaneseq
        %v1259 = vshrl.u32 %v1258, 7
        %v1260 = vsub.s32 2, %v1259
        %v1261 = vrot.slane %v343, %v1260
        %v1262 = vlaneseq
        %v1263 = vshrl.u32 %v1262, 7
        %v1264 = vsub.s32 6, %v1263
        %v1265 = vrot.slane %v343, %v1264
        %v1270 = vlaneseq
        %v1271 = vshrl.u32 %v1270, 7
        %v1272 = vsub.s32 2, %v1271
        %v1273 = vrot.slane %v1253, %v1272
        %v1274 = vlaneseq
        %v1275 = vshrl.u32 %v1274, 7
        %v1276 = vsub.s32 2, %v1275
        %v1277 = vrot.slane %v1257, %v1276
        %v1278 = vlaneseq
        %v1279 = vshrl.u32 %v1278, 7
        %v1280 = vsub.s32 2, %v1279
        %v1281 = vrot.slane %v1261, %v1280
        %v1282 = vlaneseq
        %v1283 = vshrl.u32 %v1282, 7
        %v1284 = vsub.s32 2, %v1283
        %v1285 = vrot.slane %v1265, %v1284
        %v1286 = vmul.f32 %v1124, %v1273
        %v1287 = vmul.f32 %v1124, %v1277
        %v1288 = vmul.f32 %v1124, %v1281
        %v1289 = vmul.f32 %v1124, %v1285
        %v1290 = vmul.f32 %v1128, %v1273
        %v1291 = vmul.f32 %v1128, %v1277
        %v1292 = vmul.f32 %v1128, %v1281
        %v1293 = vmul.f32 %v1128, %v1285
        %v1294 = vmul.f32 %v1132, %v1273
        %v1295 = vmul.f32 %v1132, %v1277
        %v1296 = vmul.f32 %v1132, %v1281
        %v1297 = vmul.f32 %v1132, %v1285
        %v1298 = vmul.f32 %v1136, %v1273
        %v1299 = vmul.f32 %v1136, %v1277
        %v1300 = vmul.f32 %v1136, %v1281
        %v1301 = vmul.f32 %v1136, %v1285
        %v1302 = vmul.f32 %v1140, %v1273
        %v1303 = vmul.f32 %v1140, %v1277
        %v1304 = vmul.f32 %v1140, %v1281
        %v1305 = vmul.f32 %v1140, %v1285
        %v1306 = vmul.f32 %v1144, %v1273
        %v1307 = vmul.f32 %v1144, %v1277
        %v1308 = vmul.f32 %v1144, %v1281
        %v1309 = vmul.f32 %v1144, %v1285
        %v1310 = vmul.f32 %v1148, %v1273
        %v1311 = vmul.f32 %v1148, %v1277
        %v1312 = vmul.f32 %v1148, %v1281
        %v1313 = vmul.f32 %v1148, %v1285
        %v1314 = vmul.f32 %v1152, %v1273
        %v1315 = vmul.f32 %v1152, %v1277
        %v1316 = vmul.f32 %v1152, %v1281
        %v1317 = vmul.f32 %v1152, %v1285
        %v1318 = vmul.f32 %v1156, %v1273
        %v1319 = vmul.f32 %v1156, %v1277
        %v1320 = vmul.f32 %v1156, %v1281
        %v1321 = vmul.f32 %v1156, %v1285
        %v1322 = vmul.f32 %v1160, %v1273
        %v1323 = vmul.f32 %v1160, %v1277
        %v1324 = vmul.f32 %v1160, %v1281
        %v1325 = vmul.f32 %v1160, %v1285
        %v1326 = vmul.f32 %v1164, %v1273
        %v1327 = vmul.f32 %v1164, %v1277
        %v1328 = vmul.f32 %v1164, %v1281
        %v1329 = vmul.f32 %v1164, %v1285
        %v1330 = vmul.f32 %v1168, %v1273
        %v1331 = vmul.f32 %v1168, %v1277
        %v1332 = vmul.f32 %v1168, %v1281
        %v1333 = vmul.f32 %v1168, %v1285
        %v1334 = vmul.f32 %v1172, %v1273
        %v1335 = vmul.f32 %v1172, %v1277
        %v1336 = vmul.f32 %v1172, %v1281
        %v1337 = vmul.f32 %v1172, %v1285
        %v1338 = vmul.f32 %v1176, %v1273
        %v1339 = vmul.f32 %v1176, %v1277
        %v1340 = vmul.f32 %v1176, %v1281
        %v1341 = vmul.f32 %v1176, %v1285
        %v1342 = vmul.f32 %v1180, %v1273
        %v1343 = vmul.f32 %v1180, %v1277
        %v1344 = vmul.f32 %v1180, %v1281
        %v1345 = vmul.f32 %v1180, %v1285
        %v1346 = vmul.f32 %v1184, %v1273
        %v1347 = vmul.f32 %v1184, %v1277
        %v1348 = vmul.f32 %v1184, %v1281
        %v1349 = vmul.f32 %v1184, %v1285
        %v1350 = vmul.f32 %v1188, %v1273
        %v1351 = vmul.f32 %v1188, %v1277
        %v1352 = vmul.f32 %v1188, %v1281
        %v1353 = vmul.f32 %v1188, %v1285
        %v1354 = vmul.f32 %v1192, %v1273
        %v1355 = vmul.f32 %v1192, %v1277
        %v1356 = vmul.f32 %v1192, %v1281
        %v1357 = vmul.f32 %v1192, %v1285
        %v1358 = vmul.f32 %v1196, %v1273
        %v1359 = vmul.f32 %v1196, %v1277
        %v1360 = vmul.f32 %v1196, %v1281
        %v1361 = vmul.f32 %v1196, %v1285
        %v1362 = vmul.f32 %v1200, %v1273
        %v1363 = vmul.f32 %v1200, %v1277
        %v1364 = vmul.f32 %v1200, %v1281
        %v1365 = vmul.f32 %v1200, %v1285
        %v1366 = vmul.f32 %v1204, %v1273
        %v1367 = vmul.f32 %v1204, %v1277
        %v1368 = vmul.f32 %v1204, %v1281
        %v1369 = vmul.f32 %v1204, %v1285
        %v1370 = vmul.f32 %v1208, %v1273
        %v1371 = vmul.f32 %v1208, %v1277
        %v1372 = vmul.f32 %v1208, %v1281
        %v1373 = vmul.f32 %v1208, %v1285
        %v1374 = vmul.f32 %v1212, %v1273
        %v1375 = vmul.f32 %v1212, %v1277
        %v1376 = vmul.f32 %v1212, %v1281
        %v1377 = vmul.f32 %v1212, %v1285
        %v1378 = vmul.f32 %v1216, %v1273
        %v1379 = vmul.f32 %v1216, %v1277
        %v1380 = vmul.f32 %v1216, %v1281
        %v1381 = vmul.f32 %v1216, %v1285
        %v1382 = vmul.f32 %v1220, %v1273
        %v1383 = vmul.f32 %v1220, %v1277
        %v1384 = vmul.f32 %v1220, %v1281
        %v1385 = vmul.f32 %v1220, %v1285
        %v1386 = vmul.f32 %v1224, %v1273
        %v1387 = vmul.f32 %v1224, %v1277
        %v1388 = vmul.f32 %v1224, %v1281
        %v1389 = vmul.f32 %v1224, %v1285
        %v1390 = vmul.f32 %v1228, %v1273
        %v1391 = vmul.f32 %v1228, %v1277
        %v1392 = vmul.f32 %v1228, %v1281
        %v1393 = vmul.f32 %v1228, %v1285
        %v1394 = vmul.f32 %v1232, %v1273
        %v1395 = vmul.f32 %v1232, %v1277
        %v1396 = vmul.f32 %v1232, %v1281
        %v1397 = vmul.f32 %v1232, %v1285
        %v1398 = vmul.f32 %v1236, %v1273
        %v1399 = vmul.f32 %v1236, %v1277
        %v1400 = vmul.f32 %v1236, %v1281
        %v1401 = vmul.f32 %v1236, %v1285
        %v1402 = vmul.f32 %v1240, %v1273
        %v1403 = vmul.f32 %v1240, %v1277
        %v1404 = vmul.f32 %v1240, %v1281
        %v1405 = vmul.f32 %v1240, %v1285
        %v1406 = vmul.f32 %v1244, %v1273
        %v1407 = vmul.f32 %v1244, %v1277
        %v1408 = vmul.f32 %v1244, %v1281
        %v1409 = vmul.f32 %v1244, %v1285
        %v1410 = vmul.f32 %v1248, %v1273
        %v1411 = vmul.f32 %v1248, %v1277
        %v1412 = vmul.f32 %v1248, %v1281
        %v1413 = vmul.f32 %v1248, %v1285
        %v1414 = vadd.f32 %v994, %v1286
        %v1415 = vadd.f32 %v995, %v1287
        %v1416 = vadd.f32 %v996, %v1288
        %v1417 = vadd.f32 %v997, %v1289
        %v1418 = vadd.f32 %v998, %v1290
        %v1419 = vadd.f32 %v999, %v1291
        %v1420 = vadd.f32 %v1000, %v1292
        %v1421 = vadd.f32 %v1001, %v1293
        %v1422 = vadd.f32 %v1002, %v1294
        %v1423 = vadd.f32 %v1003, %v1295
        %v1424 = vadd.f32 %v1004, %v1296
        %v1425 = vadd.f32 %v1005, %v1297
        %v1426 = vadd.f32 %v1006, %v1298
        %v1427 = vadd.f32 %v1007, %v1299
        %v1428 = vadd.f32 %v1008, %v1300
        %v1429 = vadd.f32 %v1009, %v1301
        %v1430 = vadd.f32 %v1010, %v1302
        %v1431 = vadd.f32 %v1011, %v1303
        %v1432 = vadd.f32 %v1012, %v1304
        %v1433 = vadd.f32 %v1013, %v1305
        %v1434 = vadd.f32 %v1014, %v1306
        %v1435 = vadd.f32 %v1015, %v1307
        %v1436 = vadd.f32 %v1016, %v1308
        %v1437 = vadd.f32 %v1017, %v1309
        %v1438 = vadd.f32 %v1018, %v1310
        %v1439 = vadd.f32 %v1019, %v1311
        %v1440 = vadd.f32 %v1020, %v1312
        %v1441 = vadd.f32 %v1021, %v1313
        %v1442 = vadd.f32 %v1022, %v1314
        %v1443 = vadd.f32 %v1023, %v1315
        %v1444 = vadd.f32 %v1024, %v1316
        %v1445 = vadd.f32 %v1025, %v1317
        %v1446 = vadd.f32 %v1026, %v1318
        %v1447 = vadd.f32 %v1027, %v1319
        %v1448 = vadd.f32 %v1028, %v1320
        %v1449 = vadd.f32 %v1029, %v1321
        %v1450 = vadd.f32 %v1030, %v1322
        %v1451 = vadd.f32 %v1031, %v1323
        %v1452 = vadd.f32 %v1032, %v1324
        %v1453 = vadd.f32 %v1033, %v1325
        %v1454 = vadd.f32 %v1034, %v1326
        %v1455 = vadd.f32 %v1035, %v1327
        %v1456 = vadd.f32 %v1036, %v1328
        %v1457 = vadd.f32 %v1037, %v1329
        %v1458 = vadd.f32 %v1038, %v1330
        %v1459 = vadd.f32 %v1039, %v1331
        %v1460 = vadd.f32 %v1040, %v1332
        %v1461 = vadd.f32 %v1041, %v1333
        %v1462 = vadd.f32 %v1042, %v1334
        %v1463 = vadd.f32 %v1043, %v1335
        %v1464 = vadd.f32 %v1044, %v1336
        %v1465 = vadd.f32 %v1045, %v1337
        %v1466 = vadd.f32 %v1046, %v1338
        %v1467 = vadd.f32 %v1047, %v1339
        %v1468 = vadd.f32 %v1048, %v1340
        %v1469 = vadd.f32 %v1049, %v1341
        %v1470 = vadd.f32 %v1050, %v1342
        %v1471 = vadd.f32 %v1051, %v1343
        %v1472 = vadd.f32 %v1052, %v1344
        %v1473 = vadd.f32 %v1053, %v1345
        %v1474 = vadd.f32 %v1054, %v1346
        %v1475 = vadd.f32 %v1055, %v1347
        %v1476 = vadd.f32 %v1056, %v1348
        %v1477 = vadd.f32 %v1057, %v1349
        %v1478 = vadd.f32 %v1058, %v1350
        %v1479 = vadd.f32 %v1059, %v1351
        %v1480 = vadd.f32 %v1060, %v1352
        %v1481 = vadd.f32 %v1061, %v1353
        %v1482 = vadd.f32 %v1062, %v1354
        %v1483 = vadd.f32 %v1063, %v1355
        %v1484 = vadd.f32 %v1064, %v1356
        %v1485 = vadd.f32 %v1065, %v1357
        %v1486 = vadd.f32 %v1066, %v1358
        %v1487 = vadd.f32 %v1067, %v1359
        %v1488 = vadd.f32 %v1068, %v1360
        %v1489 = vadd.f32 %v1069, %v1361
        %v1490 = vadd.f32 %v1070, %v1362
        %v1491 = vadd.f32 %v1071, %v1363
        %v1492 = vadd.f32 %v1072, %v1364
        %v1493 = vadd.f32 %v1073, %v1365
        %v1494 = vadd.f32 %v1074, %v1366
        %v1495 = vadd.f32 %v1075, %v1367
        %v1496 = vadd.f32 %v1076, %v1368
        %v1497 = vadd.f32 %v1077, %v1369
        %v1498 = vadd.f32 %v1078, %v1370
        %v1499 = vadd.f32 %v1079, %v1371
        %v1500 = vadd.f32 %v1080, %v1372
        %v1501 = vadd.f32 %v1081, %v1373
        %v1502 = vadd.f32 %v1082, %v1374
        %v1503 = vadd.f32 %v1083, %v1375
        %v1504 = vadd.f32 %v1084, %v1376
        %v1505 = vadd.f32 %v1085, %v1377
        %v1506 = vadd.f32 %v1086, %v1378
        %v1507 = vadd.f32 %v1087, %v1379
        %v1508 = vadd.f32 %v1088, %v1380
        %v1509 = vadd.f32 %v1089, %v1381
        %v1510 = vadd.f32 %v1090, %v1382
        %v1511 = vadd.f32 %v1091, %v1383
        %v1512 = vadd.f32 %v1092, %v1384
        %v1513 = vadd.f32 %v1093, %v1385
        %v1514 = vadd.f32 %v1094, %v1386
        %v1515 = vadd.f32 %v1095, %v1387
        %v1516 = vadd.f32 %v1096, %v1388
        %v1517 = vadd.f32 %v1097, %v1389
        %v1518 = vadd.f32 %v1098, %v1390
        %v1519 = vadd.f32 %v1099, %v1391
        %v1520 = vadd.f32 %v1100, %v1392
        %v1521 = vadd.f32 %v1101, %v1393
        %v1522 = vadd.f32 %v1102, %v1394
        %v1523 = vadd.f32 %v1103, %v1395
        %v1524 = vadd.f32 %v1104, %v1396
        %v1525 = vadd.f32 %v1105, %v1397
        %v1526 = vadd.f32 %v1106, %v1398
        %v1527 = vadd.f32 %v1107, %v1399
        %v1528 = vadd.f32 %v1108, %v1400
        %v1529 = vadd.f32 %v1109, %v1401
        %v1530 = vadd.f32 %v1110, %v1402
        %v1531 = vadd.f32 %v1111, %v1403
        %v1532 = vadd.f32 %v1112, %v1404
        %v1533 = vadd.f32 %v1113, %v1405
        %v1534 = vadd.f32 %v1114, %v1406
        %v1535 = vadd.f32 %v1115, %v1407
        %v1536 = vadd.f32 %v1116, %v1408
        %v1537 = vadd.f32 %v1117, %v1409
        %v1538 = vadd.f32 %v1118, %v1410
        %v1539 = vadd.f32 %v1119, %v1411
        %v1540 = vadd.f32 %v1120, %v1412
        %v1541 = vadd.f32 %v1121, %v1413
        %v1542 = vld [vmem:[%s337] sm:$0xff]
        %v1543 = vld [vmem:[%s337 + $0x8] sm:$0xff]
        %v1544 = vld [vmem:[%s337 + $0x10] sm:$0xff]
        %v1545 = vld [vmem:[%s337 + $0x18] sm:$0xff]
        %v1546 = vld [vmem:[%s337 + $0x20] sm:$0xff]
        %v1547 = vld [vmem:[%s337 + $0x28] sm:$0xff]
        %v1548 = vld [vmem:[%s337 + $0x30] sm:$0xff]
        %v1549 = vld [vmem:[%s337 + $0x38] sm:$0xff]
        %v1550 = vld [vmem:[%s337 + $0x40] sm:$0xff]
        %v1551 = vld [vmem:[%s337 + $0x48] sm:$0xff]
        %v1552 = vld [vmem:[%s337 + $0x50] sm:$0xff]
        %v1553 = vld [vmem:[%s337 + $0x58] sm:$0xff]
        %v1554 = vld [vmem:[%s337 + $0x60] sm:$0xff]
        %v1555 = vld [vmem:[%s337 + $0x68] sm:$0xff]
        %v1556 = vld [vmem:[%s337 + $0x70] sm:$0xff]
        %v1557 = vld [vmem:[%s337 + $0x78] sm:$0xff]
        %v1558 = vld [vmem:[%s337 + $0x80] sm:$0xff]
        %v1559 = vld [vmem:[%s337 + $0x88] sm:$0xff]
        %v1560 = vld [vmem:[%s337 + $0x90] sm:$0xff]
        %v1561 = vld [vmem:[%s337 + $0x98] sm:$0xff]
        %v1562 = vld [vmem:[%s337 + $0xa0] sm:$0xff]
        %v1563 = vld [vmem:[%s337 + $0xa8] sm:$0xff]
        %v1564 = vld [vmem:[%s337 + $0xb0] sm:$0xff]
        %v1565 = vld [vmem:[%s337 + $0xb8] sm:$0xff]
        %v1566 = vld [vmem:[%s337 + $0xc0] sm:$0xff]
        %v1567 = vld [vmem:[%s337 + $0xc8] sm:$0xff]
        %v1568 = vld [vmem:[%s337 + $0xd0] sm:$0xff]
        %v1569 = vld [vmem:[%s337 + $0xd8] sm:$0xff]
        %v1570 = vld [vmem:[%s337 + $0xe0] sm:$0xff]
        %v1571 = vld [vmem:[%s337 + $0xe8] sm:$0xff]
        %v1572 = vld [vmem:[%s337 + $0xf0] sm:$0xff]
        %v1573 = vld [vmem:[%s337 + $0xf8] sm:$0xff]
        %1575 = vset.pattern.permute.xlu0 0
        %1576 = vperm.xlu0 %1575, %v1542
        %v1577 = vpop.permute.xlu0 %1576
        %1580 = vset.pattern.permute.xlu0 0
        %1581 = vperm.xlu0 %1580, %v1543
        %v1582 = vpop.permute.xlu0 %1581
        %1585 = vset.pattern.permute.xlu0 0
        %1586 = vperm.xlu0 %1585, %v1544
        %v1587 = vpop.permute.xlu0 %1586
        %1590 = vset.pattern.permute.xlu0 0
        %1591 = vperm.xlu0 %1590, %v1545
        %v1592 = vpop.permute.xlu0 %1591
        %1595 = vset.pattern.permute.xlu0 0
        %1596 = vperm.xlu0 %1595, %v1546
        %v1597 = vpop.permute.xlu0 %1596
        %1600 = vset.pattern.permute.xlu0 0
        %1601 = vperm.xlu0 %1600, %v1547
        %v1602 = vpop.permute.xlu0 %1601
        %1605 = vset.pattern.permute.xlu0 0
        %1606 = vperm.xlu0 %1605, %v1548
        %v1607 = vpop.permute.xlu0 %1606
        %1610 = vset.pattern.permute.xlu0 0
        %1611 = vperm.xlu0 %1610, %v1549
        %v1612 = vpop.permute.xlu0 %1611
        %1615 = vset.pattern.permute.xlu0 0
        %1616 = vperm.xlu0 %1615, %v1550
        %v1617 = vpop.permute.xlu0 %1616
        %1620 = vset.pattern.permute.xlu0 0
        %1621 = vperm.xlu0 %1620, %v1551
        %v1622 = vpop.permute.xlu0 %1621
        %1625 = vset.pattern.permute.xlu0 0
        %1626 = vperm.xlu0 %1625, %v1552
        %v1627 = vpop.permute.xlu0 %1626
        %1630 = vset.pattern.permute.xlu0 0
        %1631 = vperm.xlu0 %1630, %v1553
        %v1632 = vpop.permute.xlu0 %1631
        %1635 = vset.pattern.permute.xlu0 0
        %1636 = vperm.xlu0 %1635, %v1554
        %v1637 = vpop.permute.xlu0 %1636
        %1640 = vset.pattern.permute.xlu0 0
        %1641 = vperm.xlu0 %1640, %v1555
        %v1642 = vpop.permute.xlu0 %1641
        %1645 = vset.pattern.permute.xlu0 0
        %1646 = vperm.xlu0 %1645, %v1556
        %v1647 = vpop.permute.xlu0 %1646
        %1650 = vset.pattern.permute.xlu0 0
        %1651 = vperm.xlu0 %1650, %v1557
        %v1652 = vpop.permute.xlu0 %1651
        %1655 = vset.pattern.permute.xlu0 0
        %1656 = vperm.xlu0 %1655, %v1558
        %v1657 = vpop.permute.xlu0 %1656
        %1660 = vset.pattern.permute.xlu0 0
        %1661 = vperm.xlu0 %1660, %v1559
        %v1662 = vpop.permute.xlu0 %1661
        %1665 = vset.pattern.permute.xlu0 0
        %1666 = vperm.xlu0 %1665, %v1560
        %v1667 = vpop.permute.xlu0 %1666
        %1670 = vset.pattern.permute.xlu0 0
        %1671 = vperm.xlu0 %1670, %v1561
        %v1672 = vpop.permute.xlu0 %1671
        %1675 = vset.pattern.permute.xlu0 0
        %1676 = vperm.xlu0 %1675, %v1562
        %v1677 = vpop.permute.xlu0 %1676
        %1680 = vset.pattern.permute.xlu0 0
        %1681 = vperm.xlu0 %1680, %v1563
        %v1682 = vpop.permute.xlu0 %1681
        %1685 = vset.pattern.permute.xlu0 0
        %1686 = vperm.xlu0 %1685, %v1564
        %v1687 = vpop.permute.xlu0 %1686
        %1690 = vset.pattern.permute.xlu0 0
        %1691 = vperm.xlu0 %1690, %v1565
        %v1692 = vpop.permute.xlu0 %1691
        %1695 = vset.pattern.permute.xlu0 0
        %1696 = vperm.xlu0 %1695, %v1566
        %v1697 = vpop.permute.xlu0 %1696
        %1700 = vset.pattern.permute.xlu0 0
        %1701 = vperm.xlu0 %1700, %v1567
        %v1702 = vpop.permute.xlu0 %1701
        %1705 = vset.pattern.permute.xlu0 0
        %1706 = vperm.xlu0 %1705, %v1568
        %v1707 = vpop.permute.xlu0 %1706
        %1710 = vset.pattern.permute.xlu0 0
        %1711 = vperm.xlu0 %1710, %v1569
        %v1712 = vpop.permute.xlu0 %1711
        %1715 = vset.pattern.permute.xlu0 0
        %1716 = vperm.xlu0 %1715, %v1570
        %v1717 = vpop.permute.xlu0 %1716
        %1720 = vset.pattern.permute.xlu0 0
        %1721 = vperm.xlu0 %1720, %v1571
        %v1722 = vpop.permute.xlu0 %1721
        %1725 = vset.pattern.permute.xlu0 0
        %1726 = vperm.xlu0 %1725, %v1572
        %v1727 = vpop.permute.xlu0 %1726
        %1730 = vset.pattern.permute.xlu0 0
        %1731 = vperm.xlu0 %1730, %v1573
        %v1732 = vpop.permute.xlu0 %1731
        %v1734 = vadd.f32 %v1414, %v1577
        %v1735 = vadd.f32 %v1415, %v1577
        %v1736 = vadd.f32 %v1416, %v1577
        %v1737 = vadd.f32 %v1417, %v1577
        %v1738 = vadd.f32 %v1418, %v1582
        %v1739 = vadd.f32 %v1419, %v1582
        %v1740 = vadd.f32 %v1420, %v1582
        %v1741 = vadd.f32 %v1421, %v1582
        %v1742 = vadd.f32 %v1422, %v1587
        %v1743 = vadd.f32 %v1423, %v1587
        %v1744 = vadd.f32 %v1424, %v1587
        %v1745 = vadd.f32 %v1425, %v1587
        %v1746 = vadd.f32 %v1426, %v1592
        %v1747 = vadd.f32 %v1427, %v1592
        %v1748 = vadd.f32 %v1428, %v1592
        %v1749 = vadd.f32 %v1429, %v1592
        %v1750 = vadd.f32 %v1430, %v1597
        %v1751 = vadd.f32 %v1431, %v1597
        %v1752 = vadd.f32 %v1432, %v1597
        %v1753 = vadd.f32 %v1433, %v1597
        %v1754 = vadd.f32 %v1434, %v1602
        %v1755 = vadd.f32 %v1435, %v1602
        %v1756 = vadd.f32 %v1436, %v1602
        %v1757 = vadd.f32 %v1437, %v1602
        %v1758 = vadd.f32 %v1438, %v1607
        %v1759 = vadd.f32 %v1439, %v1607
        %v1760 = vadd.f32 %v1440, %v1607
        %v1761 = vadd.f32 %v1441, %v1607
        %v1762 = vadd.f32 %v1442, %v1612
        %v1763 = vadd.f32 %v1443, %v1612
        %v1764 = vadd.f32 %v1444, %v1612
        %v1765 = vadd.f32 %v1445, %v1612
        %v1766 = vadd.f32 %v1446, %v1617
        %v1767 = vadd.f32 %v1447, %v1617
        %v1768 = vadd.f32 %v1448, %v1617
        %v1769 = vadd.f32 %v1449, %v1617
        %v1770 = vadd.f32 %v1450, %v1622
        %v1771 = vadd.f32 %v1451, %v1622
        %v1772 = vadd.f32 %v1452, %v1622
        %v1773 = vadd.f32 %v1453, %v1622
        %v1774 = vadd.f32 %v1454, %v1627
        %v1775 = vadd.f32 %v1455, %v1627
        %v1776 = vadd.f32 %v1456, %v1627
        %v1777 = vadd.f32 %v1457, %v1627
        %v1778 = vadd.f32 %v1458, %v1632
        %v1779 = vadd.f32 %v1459, %v1632
        %v1780 = vadd.f32 %v1460, %v1632
        %v1781 = vadd.f32 %v1461, %v1632
        %v1782 = vadd.f32 %v1462, %v1637
        %v1783 = vadd.f32 %v1463, %v1637
        %v1784 = vadd.f32 %v1464, %v1637
        %v1785 = vadd.f32 %v1465, %v1637
        %v1786 = vadd.f32 %v1466, %v1642
        %v1787 = vadd.f32 %v1467, %v1642
        %v1788 = vadd.f32 %v1468, %v1642
        %v1789 = vadd.f32 %v1469, %v1642
        %v1790 = vadd.f32 %v1470, %v1647
        %v1791 = vadd.f32 %v1471, %v1647
        %v1792 = vadd.f32 %v1472, %v1647
        %v1793 = vadd.f32 %v1473, %v1647
        %v1794 = vadd.f32 %v1474, %v1652
        %v1795 = vadd.f32 %v1475, %v1652
        %v1796 = vadd.f32 %v1476, %v1652
        %v1797 = vadd.f32 %v1477, %v1652
        %v1798 = vadd.f32 %v1478, %v1657
        %v1799 = vadd.f32 %v1479, %v1657
        %v1800 = vadd.f32 %v1480, %v1657
        %v1801 = vadd.f32 %v1481, %v1657
        %v1802 = vadd.f32 %v1482, %v1662
        %v1803 = vadd.f32 %v1483, %v1662
        %v1804 = vadd.f32 %v1484, %v1662
        %v1805 = vadd.f32 %v1485, %v1662
        %v1806 = vadd.f32 %v1486, %v1667
        %v1807 = vadd.f32 %v1487, %v1667
        %v1808 = vadd.f32 %v1488, %v1667
        %v1809 = vadd.f32 %v1489, %v1667
        %v1810 = vadd.f32 %v1490, %v1672
        %v1811 = vadd.f32 %v1491, %v1672
        %v1812 = vadd.f32 %v1492, %v1672
        %v1813 = vadd.f32 %v1493, %v1672
        %v1814 = vadd.f32 %v1494, %v1677
        %v1815 = vadd.f32 %v1495, %v1677
        %v1816 = vadd.f32 %v1496, %v1677
        %v1817 = vadd.f32 %v1497, %v1677
        %v1818 = vadd.f32 %v1498, %v1682
        %v1819 = vadd.f32 %v1499, %v1682
        %v1820 = vadd.f32 %v1500, %v1682
        %v1821 = vadd.f32 %v1501, %v1682
        %v1822 = vadd.f32 %v1502, %v1687
        %v1823 = vadd.f32 %v1503, %v1687
        %v1824 = vadd.f32 %v1504, %v1687
        %v1825 = vadd.f32 %v1505, %v1687
        %v1826 = vadd.f32 %v1506, %v1692
        %v1827 = vadd.f32 %v1507, %v1692
        %v1828 = vadd.f32 %v1508, %v1692
        %v1829 = vadd.f32 %v1509, %v1692
        %v1830 = vadd.f32 %v1510, %v1697
        %v1831 = vadd.f32 %v1511, %v1697
        %v1832 = vadd.f32 %v1512, %v1697
        %v1833 = vadd.f32 %v1513, %v1697
        %v1834 = vadd.f32 %v1514, %v1702
        %v1835 = vadd.f32 %v1515, %v1702
        %v1836 = vadd.f32 %v1516, %v1702
        %v1837 = vadd.f32 %v1517, %v1702
        %v1838 = vadd.f32 %v1518, %v1707
        %v1839 = vadd.f32 %v1519, %v1707
        %v1840 = vadd.f32 %v1520, %v1707
        %v1841 = vadd.f32 %v1521, %v1707
        %v1842 = vadd.f32 %v1522, %v1712
        %v1843 = vadd.f32 %v1523, %v1712
        %v1844 = vadd.f32 %v1524, %v1712
        %v1845 = vadd.f32 %v1525, %v1712
        %v1846 = vadd.f32 %v1526, %v1717
        %v1847 = vadd.f32 %v1527, %v1717
        %v1848 = vadd.f32 %v1528, %v1717
        %v1849 = vadd.f32 %v1529, %v1717
        %v1850 = vadd.f32 %v1530, %v1722
        %v1851 = vadd.f32 %v1531, %v1722
        %v1852 = vadd.f32 %v1532, %v1722
        %v1853 = vadd.f32 %v1533, %v1722
        %v1854 = vadd.f32 %v1534, %v1727
        %v1855 = vadd.f32 %v1535, %v1727
        %v1856 = vadd.f32 %v1536, %v1727
        %v1857 = vadd.f32 %v1537, %v1727
        %v1858 = vadd.f32 %v1538, %v1732
        %v1859 = vadd.f32 %v1539, %v1732
        %v1860 = vadd.f32 %v1540, %v1732
        %v1861 = vadd.f32 %v1541, %v1732
        %v1862 = vmax.f32 %v1734, 0.0
        %v1863 = vmax.f32 %v1735, 0.0
        %v1864 = vmax.f32 %v1736, 0.0
        %v1865 = vmax.f32 %v1737, 0.0
        %v1866 = vmax.f32 %v1738, 0.0
        %v1867 = vmax.f32 %v1739, 0.0
        %v1868 = vmax.f32 %v1740, 0.0
        %v1869 = vmax.f32 %v1741, 0.0
        %v1870 = vmax.f32 %v1742, 0.0
        %v1871 = vmax.f32 %v1743, 0.0
        %v1872 = vmax.f32 %v1744, 0.0
        %v1873 = vmax.f32 %v1745, 0.0
        %v1874 = vmax.f32 %v1746, 0.0
        %v1875 = vmax.f32 %v1747, 0.0
        %v1876 = vmax.f32 %v1748, 0.0
        %v1877 = vmax.f32 %v1749, 0.0
        %v1878 = vmax.f32 %v1750, 0.0
        %v1879 = vmax.f32 %v1751, 0.0
        %v1880 = vmax.f32 %v1752, 0.0
        %v1881 = vmax.f32 %v1753, 0.0
        %v1882 = vmax.f32 %v1754, 0.0
        %v1883 = vmax.f32 %v1755, 0.0
        %v1884 = vmax.f32 %v1756, 0.0
        %v1885 = vmax.f32 %v1757, 0.0
        %v1886 = vmax.f32 %v1758, 0.0
        %v1887 = vmax.f32 %v1759, 0.0
        %v1888 = vmax.f32 %v1760, 0.0
        %v1889 = vmax.f32 %v1761, 0.0
        %v1890 = vmax.f32 %v1762, 0.0
        %v1891 = vmax.f32 %v1763, 0.0
        %v1892 = vmax.f32 %v1764, 0.0
        %v1893 = vmax.f32 %v1765, 0.0
        %v1894 = vmax.f32 %v1766, 0.0
        %v1895 = vmax.f32 %v1767, 0.0
        %v1896 = vmax.f32 %v1768, 0.0
        %v1897 = vmax.f32 %v1769, 0.0
        %v1898 = vmax.f32 %v1770, 0.0
        %v1899 = vmax.f32 %v1771, 0.0
        %v1900 = vmax.f32 %v1772, 0.0
        %v1901 = vmax.f32 %v1773, 0.0
        %v1902 = vmax.f32 %v1774, 0.0
        %v1903 = vmax.f32 %v1775, 0.0
        %v1904 = vmax.f32 %v1776, 0.0
        %v1905 = vmax.f32 %v1777, 0.0
        %v1906 = vmax.f32 %v1778, 0.0
        %v1907 = vmax.f32 %v1779, 0.0
        %v1908 = vmax.f32 %v1780, 0.0
        %v1909 = vmax.f32 %v1781, 0.0
        %v1910 = vmax.f32 %v1782, 0.0
        %v1911 = vmax.f32 %v1783, 0.0
        %v1912 = vmax.f32 %v1784, 0.0
        %v1913 = vmax.f32 %v1785, 0.0
        %v1914 = vmax.f32 %v1786, 0.0
        %v1915 = vmax.f32 %v1787, 0.0
        %v1916 = vmax.f32 %v1788, 0.0
        %v1917 = vmax.f32 %v1789, 0.0
        %v1918 = vmax.f32 %v1790, 0.0
        %v1919 = vmax.f32 %v1791, 0.0
        %v1920 = vmax.f32 %v1792, 0.0
        %v1921 = vmax.f32 %v1793, 0.0
        %v1922 = vmax.f32 %v1794, 0.0
        %v1923 = vmax.f32 %v1795, 0.0
        %v1924 = vmax.f32 %v1796, 0.0
        %v1925 = vmax.f32 %v1797, 0.0
        %v1926 = vmax.f32 %v1798, 0.0
        %v1927 = vmax.f32 %v1799, 0.0
        %v1928 = vmax.f32 %v1800, 0.0
        %v1929 = vmax.f32 %v1801, 0.0
        %v1930 = vmax.f32 %v1802, 0.0
        %v1931 = vmax.f32 %v1803, 0.0
        %v1932 = vmax.f32 %v1804, 0.0
        %v1933 = vmax.f32 %v1805, 0.0
        %v1934 = vmax.f32 %v1806, 0.0
        %v1935 = vmax.f32 %v1807, 0.0
        %v1936 = vmax.f32 %v1808, 0.0
        %v1937 = vmax.f32 %v1809, 0.0
        %v1938 = vmax.f32 %v1810, 0.0
        %v1939 = vmax.f32 %v1811, 0.0
        %v1940 = vmax.f32 %v1812, 0.0
        %v1941 = vmax.f32 %v1813, 0.0
        %v1942 = vmax.f32 %v1814, 0.0
        %v1943 = vmax.f32 %v1815, 0.0
        %v1944 = vmax.f32 %v1816, 0.0
        %v1945 = vmax.f32 %v1817, 0.0
        %v1946 = vmax.f32 %v1818, 0.0
        %v1947 = vmax.f32 %v1819, 0.0
        %v1948 = vmax.f32 %v1820, 0.0
        %v1949 = vmax.f32 %v1821, 0.0
        %v1950 = vmax.f32 %v1822, 0.0
        %v1951 = vmax.f32 %v1823, 0.0
        %v1952 = vmax.f32 %v1824, 0.0
        %v1953 = vmax.f32 %v1825, 0.0
        %v1954 = vmax.f32 %v1826, 0.0
        %v1955 = vmax.f32 %v1827, 0.0
        %v1956 = vmax.f32 %v1828, 0.0
        %v1957 = vmax.f32 %v1829, 0.0
        %v1958 = vmax.f32 %v1830, 0.0
        %v1959 = vmax.f32 %v1831, 0.0
        %v1960 = vmax.f32 %v1832, 0.0
        %v1961 = vmax.f32 %v1833, 0.0
        %v1962 = vmax.f32 %v1834, 0.0
        %v1963 = vmax.f32 %v1835, 0.0
        %v1964 = vmax.f32 %v1836, 0.0
        %v1965 = vmax.f32 %v1837, 0.0
        %v1966 = vmax.f32 %v1838, 0.0
        %v1967 = vmax.f32 %v1839, 0.0
        %v1968 = vmax.f32 %v1840, 0.0
        %v1969 = vmax.f32 %v1841, 0.0
        %v1970 = vmax.f32 %v1842, 0.0
        %v1971 = vmax.f32 %v1843, 0.0
        %v1972 = vmax.f32 %v1844, 0.0
        %v1973 = vmax.f32 %v1845, 0.0
        %v1974 = vmax.f32 %v1846, 0.0
        %v1975 = vmax.f32 %v1847, 0.0
        %v1976 = vmax.f32 %v1848, 0.0
        %v1977 = vmax.f32 %v1849, 0.0
        %v1978 = vmax.f32 %v1850, 0.0
        %v1979 = vmax.f32 %v1851, 0.0
        %v1980 = vmax.f32 %v1852, 0.0
        %v1981 = vmax.f32 %v1853, 0.0
        %v1982 = vmax.f32 %v1854, 0.0
        %v1983 = vmax.f32 %v1855, 0.0
        %v1984 = vmax.f32 %v1856, 0.0
        %v1985 = vmax.f32 %v1857, 0.0
        %v1986 = vmax.f32 %v1858, 0.0
        %v1987 = vmax.f32 %v1859, 0.0
        %v1988 = vmax.f32 %v1860, 0.0
        %v1989 = vmax.f32 %v1861, 0.0
        %v1990 = vld [vmem:[%s2] sm:$0xff]
        %v1991 = vld [vmem:[%s2 + $0x8] sm:$0xff]
        %v1992 = vld [vmem:[%s2 + $0x10] sm:$0xff]
        %v1993 = vld [vmem:[%s2 + $0x18] sm:$0xff]
        %v1994 = vld [vmem:[%s2 + $0x20] sm:$0xff]
        %v1995 = vld [vmem:[%s2 + $0x28] sm:$0xff]
        %v1996 = vld [vmem:[%s2 + $0x30] sm:$0xff]
        %v1997 = vld [vmem:[%s2 + $0x38] sm:$0xff]
        %v1998 = vld [vmem:[%s2 + $0x40] sm:$0xff]
        %v1999 = vld [vmem:[%s2 + $0x48] sm:$0xff]
        %v2000 = vld [vmem:[%s2 + $0x50] sm:$0xff]
        %v2001 = vld [vmem:[%s2 + $0x58] sm:$0xff]
        %v2002 = vld [vmem:[%s2 + $0x60] sm:$0xff]
        %v2003 = vld [vmem:[%s2 + $0x68] sm:$0xff]
        %v2004 = vld [vmem:[%s2 + $0x70] sm:$0xff]
        %v2005 = vld [vmem:[%s2 + $0x78] sm:$0xff]
        %v2006 = vld [vmem:[%s2 + $0x80] sm:$0xff]
        %v2007 = vld [vmem:[%s2 + $0x88] sm:$0xff]
        %v2008 = vld [vmem:[%s2 + $0x90] sm:$0xff]
        %v2009 = vld [vmem:[%s2 + $0x98] sm:$0xff]
        %v2010 = vld [vmem:[%s2 + $0xa0] sm:$0xff]
        %v2011 = vld [vmem:[%s2 + $0xa8] sm:$0xff]
        %v2012 = vld [vmem:[%s2 + $0xb0] sm:$0xff]
        %v2013 = vld [vmem:[%s2 + $0xb8] sm:$0xff]
        %v2014 = vld [vmem:[%s2 + $0xc0] sm:$0xff]
        %v2015 = vld [vmem:[%s2 + $0xc8] sm:$0xff]
        %v2016 = vld [vmem:[%s2 + $0xd0] sm:$0xff]
        %v2017 = vld [vmem:[%s2 + $0xd8] sm:$0xff]
        %v2018 = vld [vmem:[%s2 + $0xe0] sm:$0xff]
        %v2019 = vld [vmem:[%s2 + $0xe8] sm:$0xff]
        %v2020 = vld [vmem:[%s2 + $0xf0] sm:$0xff]
        %v2021 = vld [vmem:[%s2 + $0xf8] sm:$0xff]
        %v2022 = vpack.c.bf16 %v1866, %v1862
        %v2023 = vpack.c.bf16 %v1867, %v1863
        %v2024 = vpack.c.bf16 %v1868, %v1864
        %v2025 = vpack.c.bf16 %v1869, %v1865
        %v2026 = vpack.c.bf16 %v1874, %v1870
        %v2027 = vpack.c.bf16 %v1875, %v1871
        %v2028 = vpack.c.bf16 %v1876, %v1872
        %v2029 = vpack.c.bf16 %v1877, %v1873
        %v2030 = vpack.c.bf16 %v1882, %v1878
        %v2031 = vpack.c.bf16 %v1883, %v1879
        %v2032 = vpack.c.bf16 %v1884, %v1880
        %v2033 = vpack.c.bf16 %v1885, %v1881
        %v2034 = vpack.c.bf16 %v1890, %v1886
        %v2035 = vpack.c.bf16 %v1891, %v1887
        %v2036 = vpack.c.bf16 %v1892, %v1888
        %v2037 = vpack.c.bf16 %v1893, %v1889
        %v2038 = vpack.c.bf16 %v1898, %v1894
        %v2039 = vpack.c.bf16 %v1899, %v1895
        %v2040 = vpack.c.bf16 %v1900, %v1896
        %v2041 = vpack.c.bf16 %v1901, %v1897
        %v2042 = vpack.c.bf16 %v1906, %v1902
        %v2043 = vpack.c.bf16 %v1907, %v1903
        %v2044 = vpack.c.bf16 %v1908, %v1904
        %v2045 = vpack.c.bf16 %v1909, %v1905
        %v2046 = vpack.c.bf16 %v1914, %v1910
        %v2047 = vpack.c.bf16 %v1915, %v1911
        %v2048 = vpack.c.bf16 %v1916, %v1912
        %v2049 = vpack.c.bf16 %v1917, %v1913
        %v2050 = vpack.c.bf16 %v1922, %v1918
        %v2051 = vpack.c.bf16 %v1923, %v1919
        %v2052 = vpack.c.bf16 %v1924, %v1920
        %v2053 = vpack.c.bf16 %v1925, %v1921
        %v2054 = vpack.c.bf16 %v1930, %v1926
        %v2055 = vpack.c.bf16 %v1931, %v1927
        %v2056 = vpack.c.bf16 %v1932, %v1928
        %v2057 = vpack.c.bf16 %v1933, %v1929
        %v2058 = vpack.c.bf16 %v1938, %v1934
        %v2059 = vpack.c.bf16 %v1939, %v1935
        %v2060 = vpack.c.bf16 %v1940, %v1936
        %v2061 = vpack.c.bf16 %v1941, %v1937
        %v2062 = vpack.c.bf16 %v1946, %v1942
        %v2063 = vpack.c.bf16 %v1947, %v1943
        %v2064 = vpack.c.bf16 %v1948, %v1944
        %v2065 = vpack.c.bf16 %v1949, %v1945
        %v2066 = vpack.c.bf16 %v1954, %v1950
        %v2067 = vpack.c.bf16 %v1955, %v1951
        %v2068 = vpack.c.bf16 %v1956, %v1952
        %v2069 = vpack.c.bf16 %v1957, %v1953
        %v2070 = vpack.c.bf16 %v1962, %v1958
        %v2071 = vpack.c.bf16 %v1963, %v1959
        %v2072 = vpack.c.bf16 %v1964, %v1960
        %v2073 = vpack.c.bf16 %v1965, %v1961
        %v2074 = vpack.c.bf16 %v1970, %v1966
        %v2075 = vpack.c.bf16 %v1971, %v1967
        %v2076 = vpack.c.bf16 %v1972, %v1968
        %v2077 = vpack.c.bf16 %v1973, %v1969
        %v2078 = vpack.c.bf16 %v1978, %v1974
        %v2079 = vpack.c.bf16 %v1979, %v1975
        %v2080 = vpack.c.bf16 %v1980, %v1976
        %v2081 = vpack.c.bf16 %v1981, %v1977
        %v2082 = vpack.c.bf16 %v1986, %v1982
        %v2083 = vpack.c.bf16 %v1987, %v1983
        %v2084 = vpack.c.bf16 %v1988, %v1984
        %v2085 = vpack.c.bf16 %v1989, %v1985
        %2086 = vset.pattern.permute.xlu0 1
        %2087 = vperm.xlu0 %2086, %v1542
        %v2088 = vpop.permute.xlu0 %2087
        %2090 = vset.pattern.permute.xlu0 1
        %2091 = vperm.xlu0 %2090, %v1543
        %v2092 = vpop.permute.xlu0 %2091
        %2094 = vset.pattern.permute.xlu0 1
        %2095 = vperm.xlu0 %2094, %v1544
        %v2096 = vpop.permute.xlu0 %2095
        %2098 = vset.pattern.permute.xlu0 1
        %2099 = vperm.xlu0 %2098, %v1545
        %v2100 = vpop.permute.xlu0 %2099
        %2102 = vset.pattern.permute.xlu0 1
        %2103 = vperm.xlu0 %2102, %v1546
        %v2104 = vpop.permute.xlu0 %2103
        %2106 = vset.pattern.permute.xlu0 1
        %2107 = vperm.xlu0 %2106, %v1547
        %v2108 = vpop.permute.xlu0 %2107
        %2110 = vset.pattern.permute.xlu0 1
        %2111 = vperm.xlu0 %2110, %v1548
        %v2112 = vpop.permute.xlu0 %2111
        %2114 = vset.pattern.permute.xlu0 1
        %2115 = vperm.xlu0 %2114, %v1549
        %v2116 = vpop.permute.xlu0 %2115
        %2118 = vset.pattern.permute.xlu0 1
        %2119 = vperm.xlu0 %2118, %v1550
        %v2120 = vpop.permute.xlu0 %2119
        %2122 = vset.pattern.permute.xlu0 1
        %2123 = vperm.xlu0 %2122, %v1551
        %v2124 = vpop.permute.xlu0 %2123
        %2126 = vset.pattern.permute.xlu0 1
        %2127 = vperm.xlu0 %2126, %v1552
        %v2128 = vpop.permute.xlu0 %2127
        %2130 = vset.pattern.permute.xlu0 1
        %2131 = vperm.xlu0 %2130, %v1553
        %v2132 = vpop.permute.xlu0 %2131
        %2134 = vset.pattern.permute.xlu0 1
        %2135 = vperm.xlu0 %2134, %v1554
        %v2136 = vpop.permute.xlu0 %2135
        %2138 = vset.pattern.permute.xlu0 1
        %2139 = vperm.xlu0 %2138, %v1555
        %v2140 = vpop.permute.xlu0 %2139
        %2142 = vset.pattern.permute.xlu0 1
        %2143 = vperm.xlu0 %2142, %v1556
        %v2144 = vpop.permute.xlu0 %2143
        %2146 = vset.pattern.permute.xlu0 1
        %2147 = vperm.xlu0 %2146, %v1557
        %v2148 = vpop.permute.xlu0 %2147
        %2150 = vset.pattern.permute.xlu0 1
        %2151 = vperm.xlu0 %2150, %v1558
        %v2152 = vpop.permute.xlu0 %2151
        %2154 = vset.pattern.permute.xlu0 1
        %2155 = vperm.xlu0 %2154, %v1559
        %v2156 = vpop.permute.xlu0 %2155
        %2158 = vset.pattern.permute.xlu0 1
        %2159 = vperm.xlu0 %2158, %v1560
        %v2160 = vpop.permute.xlu0 %2159
        %2162 = vset.pattern.permute.xlu0 1
        %2163 = vperm.xlu0 %2162, %v1561
        %v2164 = vpop.permute.xlu0 %2163
        %2166 = vset.pattern.permute.xlu0 1
        %2167 = vperm.xlu0 %2166, %v1562
        %v2168 = vpop.permute.xlu0 %2167
        %2170 = vset.pattern.permute.xlu0 1
        %2171 = vperm.xlu0 %2170, %v1563
        %v2172 = vpop.permute.xlu0 %2171
        %2174 = vset.pattern.permute.xlu0 1
        %2175 = vperm.xlu0 %2174, %v1564
        %v2176 = vpop.permute.xlu0 %2175
        %2178 = vset.pattern.permute.xlu0 1
        %2179 = vperm.xlu0 %2178, %v1565
        %v2180 = vpop.permute.xlu0 %2179
        %2182 = vset.pattern.permute.xlu0 1
        %2183 = vperm.xlu0 %2182, %v1566
        %v2184 = vpop.permute.xlu0 %2183
        %2186 = vset.pattern.permute.xlu0 1
        %2187 = vperm.xlu0 %2186, %v1567
        %v2188 = vpop.permute.xlu0 %2187
        %2190 = vset.pattern.permute.xlu0 1
        %2191 = vperm.xlu0 %2190, %v1568
        %v2192 = vpop.permute.xlu0 %2191
        %2194 = vset.pattern.permute.xlu0 1
        %2195 = vperm.xlu0 %2194, %v1569
        %v2196 = vpop.permute.xlu0 %2195
        %2198 = vset.pattern.permute.xlu0 1
        %2199 = vperm.xlu0 %2198, %v1570
        %v2200 = vpop.permute.xlu0 %2199
        %2202 = vset.pattern.permute.xlu0 1
        %2203 = vperm.xlu0 %2202, %v1571
        %v2204 = vpop.permute.xlu0 %2203
        %2206 = vset.pattern.permute.xlu0 1
        %2207 = vperm.xlu0 %2206, %v1572
        %v2208 = vpop.permute.xlu0 %2207
        %2210 = vset.pattern.permute.xlu0 1
        %2211 = vperm.xlu0 %2210, %v1573
        %v2212 = vpop.permute.xlu0 %2211
        %v2246 = vunpack.c.l.b16 %v1990
        %v2247 = vunpack.c.h.b16 %v1990
        %v2248 = vunpack.c.l.b16 %v1991
        %v2249 = vunpack.c.h.b16 %v1991
        %v2250 = vunpack.c.l.b16 %v1992
        %v2251 = vunpack.c.h.b16 %v1992
        %v2252 = vunpack.c.l.b16 %v1993
        %v2253 = vunpack.c.h.b16 %v1993
        %v2254 = vunpack.c.l.b16 %v1994
        %v2255 = vunpack.c.h.b16 %v1994
        %v2256 = vunpack.c.l.b16 %v1995
        %v2257 = vunpack.c.h.b16 %v1995
        %v2258 = vunpack.c.l.b16 %v1996
        %v2259 = vunpack.c.h.b16 %v1996
        %v2260 = vunpack.c.l.b16 %v1997
        %v2261 = vunpack.c.h.b16 %v1997
        %v2262 = vunpack.c.l.b16 %v1998
        %v2263 = vunpack.c.h.b16 %v1998
        %v2264 = vunpack.c.l.b16 %v1999
        %v2265 = vunpack.c.h.b16 %v1999
        %v2266 = vunpack.c.l.b16 %v2000
        %v2267 = vunpack.c.h.b16 %v2000
        %v2268 = vunpack.c.l.b16 %v2001
        %v2269 = vunpack.c.h.b16 %v2001
        %v2270 = vunpack.c.l.b16 %v2002
        %v2271 = vunpack.c.h.b16 %v2002
        %v2272 = vunpack.c.l.b16 %v2003
        %v2273 = vunpack.c.h.b16 %v2003
        %v2274 = vunpack.c.l.b16 %v2004
        %v2275 = vunpack.c.h.b16 %v2004
        %v2276 = vunpack.c.l.b16 %v2005
        %v2277 = vunpack.c.h.b16 %v2005
        %v2278 = vunpack.c.l.b16 %v2006
        %v2279 = vunpack.c.h.b16 %v2006
        %v2280 = vunpack.c.l.b16 %v2007
        %v2281 = vunpack.c.h.b16 %v2007
        %v2282 = vunpack.c.l.b16 %v2008
        %v2283 = vunpack.c.h.b16 %v2008
        %v2284 = vunpack.c.l.b16 %v2009
        %v2285 = vunpack.c.h.b16 %v2009
        %v2286 = vunpack.c.l.b16 %v2010
        %v2287 = vunpack.c.h.b16 %v2010
        %v2288 = vunpack.c.l.b16 %v2011
        %v2289 = vunpack.c.h.b16 %v2011
        %v2290 = vunpack.c.l.b16 %v2012
        %v2291 = vunpack.c.h.b16 %v2012
        %v2292 = vunpack.c.l.b16 %v2013
        %v2293 = vunpack.c.h.b16 %v2013
        %v2294 = vunpack.c.l.b16 %v2014
        %v2295 = vunpack.c.h.b16 %v2014
        %v2296 = vunpack.c.l.b16 %v2015
        %v2297 = vunpack.c.h.b16 %v2015
        %v2298 = vunpack.c.l.b16 %v2016
        %v2299 = vunpack.c.h.b16 %v2016
        %v2300 = vunpack.c.l.b16 %v2017
        %v2301 = vunpack.c.h.b16 %v2017
        %v2302 = vunpack.c.l.b16 %v2018
        %v2303 = vunpack.c.h.b16 %v2018
        %v2304 = vunpack.c.l.b16 %v2019
        %v2305 = vunpack.c.h.b16 %v2019
        %v2306 = vunpack.c.l.b16 %v2020
        %v2307 = vunpack.c.h.b16 %v2020
        %v2308 = vunpack.c.l.b16 %v2021
        %v2309 = vunpack.c.h.b16 %v2021
        %v2310 = vpack.c.b16 %v2248, %v2246
        %v2311 = vpack.c.b16 %v2249, %v2247
        %v2312 = vpack.c.b16 %v2252, %v2250
        %v2313 = vpack.c.b16 %v2253, %v2251
        %v2314 = vpack.c.b16 %v2256, %v2254
        %v2315 = vpack.c.b16 %v2257, %v2255
        %v2316 = vpack.c.b16 %v2260, %v2258
        %v2317 = vpack.c.b16 %v2261, %v2259
        %v2318 = vpack.c.b16 %v2264, %v2262
        %v2319 = vpack.c.b16 %v2265, %v2263
        %v2320 = vpack.c.b16 %v2268, %v2266
        %v2321 = vpack.c.b16 %v2269, %v2267
        %v2322 = vpack.c.b16 %v2272, %v2270
        %v2323 = vpack.c.b16 %v2273, %v2271
        %v2324 = vpack.c.b16 %v2276, %v2274
        %v2325 = vpack.c.b16 %v2277, %v2275
        %v2326 = vpack.c.b16 %v2280, %v2278
        %v2327 = vpack.c.b16 %v2281, %v2279
        %v2328 = vpack.c.b16 %v2284, %v2282
        %v2329 = vpack.c.b16 %v2285, %v2283
        %v2330 = vpack.c.b16 %v2288, %v2286
        %v2331 = vpack.c.b16 %v2289, %v2287
        %v2332 = vpack.c.b16 %v2292, %v2290
        %v2333 = vpack.c.b16 %v2293, %v2291
        %v2334 = vpack.c.b16 %v2296, %v2294
        %v2335 = vpack.c.b16 %v2297, %v2295
        %v2336 = vpack.c.b16 %v2300, %v2298
        %v2337 = vpack.c.b16 %v2301, %v2299
        %v2338 = vpack.c.b16 %v2304, %v2302
        %v2339 = vpack.c.b16 %v2305, %v2303
        %v2340 = vpack.c.b16 %v2308, %v2306
        %v2341 = vpack.c.b16 %v2309, %v2307
        %2374 = vmatprep.subr.bf16.mxu0 %v2023
        %2375 = vmatpush1.bf16.msra.mxu0 %v2022
        %2376 = vmatprep.subr.bf16.mxu0 %v2027
        %2377 = vmatpush1.bf16.msra.mxu0 %v2026
        %2378 = vmatprep.subr.bf16.mxu0 %v2031
        %2379 = vmatpush1.bf16.msra.mxu0 %v2030
        %2380 = vmatprep.subr.bf16.mxu0 %v2035
        %2381 = vmatpush1.bf16.msra.mxu0 %v2034
        %2382 = vmatprep.subr.bf16.mxu0 %v2039
        %2383 = vmatpush1.bf16.msra.mxu0 %v2038
        %2384 = vmatprep.subr.bf16.mxu0 %v2043
        %2385 = vmatpush1.bf16.msra.mxu0 %v2042
        %2386 = vmatprep.subr.bf16.mxu0 %v2047
        %2387 = vmatpush1.bf16.msra.mxu0 %v2046
        %2388 = vmatprep.subr.bf16.mxu0 %v2051
        %2389 = vmatpush1.bf16.msra.mxu0 %v2050
        %2390 = vmatprep.subr.bf16.mxu0 %v2055
        %2391 = vmatpush1.bf16.msra.mxu0 %v2054
        %2392 = vmatprep.subr.bf16.mxu0 %v2059
        %2393 = vmatpush1.bf16.msra.mxu0 %v2058
        %2394 = vmatprep.subr.bf16.mxu0 %v2063
        %2395 = vmatpush1.bf16.msra.mxu0 %v2062
        %2396 = vmatprep.subr.bf16.mxu0 %v2067
        %2397 = vmatpush1.bf16.msra.mxu0 %v2066
        %2398 = vmatprep.subr.bf16.mxu0 %v2071
        %2399 = vmatpush1.bf16.msra.mxu0 %v2070
        %2400 = vmatprep.subr.bf16.mxu0 %v2075
        %2401 = vmatpush1.bf16.msra.mxu0 %v2074
        %2402 = vmatprep.subr.bf16.mxu0 %v2079
        %2403 = vmatpush1.bf16.msra.mxu0 %v2078
        %2404 = vmatprep.subr.bf16.mxu0 %v2083
        %2405 = vmatpush1.bf16.msra.mxu0 %v2082
        %2406 = vmatprep.mubr.bf16.mxu0 %v2311
        %2407 = vmatmul.mubr.bf16.gmra.mrb[0].mxu0 %v2310
        %v2408 = vpop.f32.mrb[0].mxu0
        %v2409 = vadd.f32 %v2088, %v2408
        %v2410 = vpop.f32.mrb[0].mxu0
        %v2411 = vadd.f32 %v2088, %v2410
        %v2412 = vpop.f32.mrb[0].mxu0
        %v2413 = vadd.f32 %v2092, %v2412
        %v2414 = vpop.f32.mrb[0].mxu0
        %v2415 = vadd.f32 %v2092, %v2414
        %2416 = vmatprep.mubr.bf16.mxu0 %v2313
        %2417 = vmatmul.mubr.bf16.gmra.mrb[0].mxu0 %v2312
        %v2418 = vpop.f32.mrb[0].mxu0
        %v2419 = vadd.f32 %v2096, %v2418
        %v2420 = vpop.f32.mrb[0].mxu0
        %v2421 = vadd.f32 %v2096, %v2420
        %v2422 = vpop.f32.mrb[0].mxu0
        %v2423 = vadd.f32 %v2100, %v2422
        %v2424 = vpop.f32.mrb[0].mxu0
        %v2425 = vadd.f32 %v2100, %v2424
        %2426 = vmatprep.mubr.bf16.mxu0 %v2315
        %2427 = vmatmul.mubr.bf16.gmra.mrb[0].mxu0 %v2314
        %v2428 = vpop.f32.mrb[0].mxu0
        %v2429 = vadd.f32 %v2104, %v2428
        %v2430 = vpop.f32.mrb[0].mxu0
        %v2431 = vadd.f32 %v2104, %v2430
        %v2432 = vpop.f32.mrb[0].mxu0
        %v2433 = vadd.f32 %v2108, %v2432
        %v2434 = vpop.f32.mrb[0].mxu0
        %v2435 = vadd.f32 %v2108, %v2434
        %2436 = vmatprep.mubr.bf16.mxu0 %v2317
        %2437 = vmatmul.mubr.bf16.gmra.mrb[0].mxu0 %v2316
        %v2438 = vpop.f32.mrb[0].mxu0
        %v2439 = vadd.f32 %v2112, %v2438
        %v2440 = vpop.f32.mrb[0].mxu0
        %v2441 = vadd.f32 %v2112, %v2440
        %v2442 = vpop.f32.mrb[0].mxu0
        %v2443 = vadd.f32 %v2116, %v2442
        %v2444 = vpop.f32.mrb[0].mxu0
        %v2445 = vadd.f32 %v2116, %v2444
        %2446 = vmatprep.mubr.bf16.mxu0 %v2319
        %2447 = vmatmul.mubr.bf16.gmra.mrb[0].mxu0 %v2318
        %v2448 = vpop.f32.mrb[0].mxu0
        %v2449 = vadd.f32 %v2120, %v2448
        %v2450 = vpop.f32.mrb[0].mxu0
        %v2451 = vadd.f32 %v2120, %v2450
        %v2452 = vpop.f32.mrb[0].mxu0
        %v2453 = vadd.f32 %v2124, %v2452
        %v2454 = vpop.f32.mrb[0].mxu0
        %v2455 = vadd.f32 %v2124, %v2454
        %2456 = vmatprep.mubr.bf16.mxu0 %v2321
        %2457 = vmatmul.mubr.bf16.gmra.mrb[0].mxu0 %v2320
        %v2458 = vpop.f32.mrb[0].mxu0
        %v2459 = vadd.f32 %v2128, %v2458
        %v2460 = vpop.f32.mrb[0].mxu0
        %v2461 = vadd.f32 %v2128, %v2460
        %v2462 = vpop.f32.mrb[0].mxu0
        %v2463 = vadd.f32 %v2132, %v2462
        %v2464 = vpop.f32.mrb[0].mxu0
        %v2465 = vadd.f32 %v2132, %v2464
        %2466 = vmatprep.mubr.bf16.mxu0 %v2323
        %2467 = vmatmul.mubr.bf16.gmra.mrb[0].mxu0 %v2322
        %v2468 = vpop.f32.mrb[0].mxu0
        %v2469 = vadd.f32 %v2136, %v2468
        %v2470 = vpop.f32.mrb[0].mxu0
        %v2471 = vadd.f32 %v2136, %v2470
        %v2472 = vpop.f32.mrb[0].mxu0
        %v2473 = vadd.f32 %v2140, %v2472
        %v2474 = vpop.f32.mrb[0].mxu0
        %v2475 = vadd.f32 %v2140, %v2474
        %2476 = vmatprep.mubr.bf16.mxu0 %v2325
        %2477 = vmatmul.mubr.bf16.gmra.mrb[0].mxu0 %v2324
        %v2478 = vpop.f32.mrb[0].mxu0
        %v2479 = vadd.f32 %v2144, %v2478
        %v2480 = vpop.f32.mrb[0].mxu0
        %v2481 = vadd.f32 %v2144, %v2480
        %v2482 = vpop.f32.mrb[0].mxu0
        %v2483 = vadd.f32 %v2148, %v2482
        %v2484 = vpop.f32.mrb[0].mxu0
        %v2485 = vadd.f32 %v2148, %v2484
        %2486 = vmatprep.mubr.bf16.mxu0 %v2327
        %2487 = vmatmul.mubr.bf16.gmra.mrb[0].mxu0 %v2326
        %v2488 = vpop.f32.mrb[0].mxu0
        %v2489 = vadd.f32 %v2152, %v2488
        %v2490 = vpop.f32.mrb[0].mxu0
        %v2491 = vadd.f32 %v2152, %v2490
        %v2492 = vpop.f32.mrb[0].mxu0
        %v2493 = vadd.f32 %v2156, %v2492
        %v2494 = vpop.f32.mrb[0].mxu0
        %v2495 = vadd.f32 %v2156, %v2494
        %2496 = vmatprep.mubr.bf16.mxu0 %v2329
        %2497 = vmatmul.mubr.bf16.gmra.mrb[0].mxu0 %v2328
        %v2498 = vpop.f32.mrb[0].mxu0
        %v2499 = vadd.f32 %v2160, %v2498
        %v2500 = vpop.f32.mrb[0].mxu0
        %v2501 = vadd.f32 %v2160, %v2500
        %v2502 = vpop.f32.mrb[0].mxu0
        %v2503 = vadd.f32 %v2164, %v2502
        %v2504 = vpop.f32.mrb[0].mxu0
        %v2505 = vadd.f32 %v2164, %v2504
        %2506 = vmatprep.mubr.bf16.mxu0 %v2331
        %2507 = vmatmul.mubr.bf16.gmra.mrb[0].mxu0 %v2330
        %v2508 = vpop.f32.mrb[0].mxu0
        %v2509 = vadd.f32 %v2168, %v2508
        %v2510 = vpop.f32.mrb[0].mxu0
        %v2511 = vadd.f32 %v2168, %v2510
        %v2512 = vpop.f32.mrb[0].mxu0
        %v2513 = vadd.f32 %v2172, %v2512
        %v2514 = vpop.f32.mrb[0].mxu0
        %v2515 = vadd.f32 %v2172, %v2514
        %2516 = vmatprep.mubr.bf16.mxu0 %v2333
        %2517 = vmatmul.mubr.bf16.gmra.mrb[0].mxu0 %v2332
        %v2518 = vpop.f32.mrb[0].mxu0
        %v2519 = vadd.f32 %v2176, %v2518
        %v2520 = vpop.f32.mrb[0].mxu0
        %v2521 = vadd.f32 %v2176, %v2520
        %v2522 = vpop.f32.mrb[0].mxu0
        %v2523 = vadd.f32 %v2180, %v2522
        %v2524 = vpop.f32.mrb[0].mxu0
        %v2525 = vadd.f32 %v2180, %v2524
        %2526 = vmatprep.mubr.bf16.mxu0 %v2335
        %2527 = vmatmul.mubr.bf16.gmra.mrb[0].mxu0 %v2334
        %v2528 = vpop.f32.mrb[0].mxu0
        %v2529 = vadd.f32 %v2184, %v2528
        %v2530 = vpop.f32.mrb[0].mxu0
        %v2531 = vadd.f32 %v2184, %v2530
        %v2532 = vpop.f32.mrb[0].mxu0
        %v2533 = vadd.f32 %v2188, %v2532
        %v2534 = vpop.f32.mrb[0].mxu0
        %v2535 = vadd.f32 %v2188, %v2534
        %2536 = vmatprep.mubr.bf16.mxu0 %v2337
        %2537 = vmatmul.mubr.bf16.gmra.mrb[0].mxu0 %v2336
        %v2538 = vpop.f32.mrb[0].mxu0
        %v2539 = vadd.f32 %v2192, %v2538
        %v2540 = vpop.f32.mrb[0].mxu0
        %v2541 = vadd.f32 %v2192, %v2540
        %v2542 = vpop.f32.mrb[0].mxu0
        %v2543 = vadd.f32 %v2196, %v2542
        %v2544 = vpop.f32.mrb[0].mxu0
        %v2545 = vadd.f32 %v2196, %v2544
        %2546 = vmatprep.mubr.bf16.mxu0 %v2339
        %2547 = vmatmul.mubr.bf16.gmra.mrb[0].mxu0 %v2338
        %v2548 = vpop.f32.mrb[0].mxu0
        %v2549 = vadd.f32 %v2200, %v2548
        %v2550 = vpop.f32.mrb[0].mxu0
        %v2551 = vadd.f32 %v2200, %v2550
        %v2552 = vpop.f32.mrb[0].mxu0
        %v2553 = vadd.f32 %v2204, %v2552
        %v2554 = vpop.f32.mrb[0].mxu0
        %v2555 = vadd.f32 %v2204, %v2554
        %2556 = vmatprep.mubr.bf16.mxu0 %v2341
        %2557 = vmatmul.mubr.bf16.gmra.mrb[0].mxu0 %v2340
        %v2558 = vpop.f32.mrb[0].mxu0
        %v2559 = vadd.f32 %v2208, %v2558
        %v2560 = vpop.f32.mrb[0].mxu0
        %v2561 = vadd.f32 %v2208, %v2560
        %v2562 = vpop.f32.mrb[0].mxu0
        %v2563 = vadd.f32 %v2212, %v2562
        %v2564 = vpop.f32.mrb[0].mxu0
        %v2565 = vadd.f32 %v2212, %v2564
        %2566 = vdwg.mxu0
        %2567 = vmatprep.subr.bf16.mxu0 %v2025
        %2568 = vmatpush1.bf16.msra.mxu0 %v2024
        %2569 = vmatprep.subr.bf16.mxu0 %v2029
        %2570 = vmatpush1.bf16.msra.mxu0 %v2028
        %2571 = vmatprep.subr.bf16.mxu0 %v2033
        %2572 = vmatpush1.bf16.msra.mxu0 %v2032
        %2573 = vmatprep.subr.bf16.mxu0 %v2037
        %2574 = vmatpush1.bf16.msra.mxu0 %v2036
        %2575 = vmatprep.subr.bf16.mxu0 %v2041
        %2576 = vmatpush1.bf16.msra.mxu0 %v2040
        %2577 = vmatprep.subr.bf16.mxu0 %v2045
        %2578 = vmatpush1.bf16.msra.mxu0 %v2044
        %2579 = vmatprep.subr.bf16.mxu0 %v2049
        %2580 = vmatpush1.bf16.msra.mxu0 %v2048
        %2581 = vmatprep.subr.bf16.mxu0 %v2053
        %2582 = vmatpush1.bf16.msra.mxu0 %v2052
        %2583 = vmatprep.subr.bf16.mxu0 %v2057
        %2584 = vmatpush1.bf16.msra.mxu0 %v2056
        %2585 = vmatprep.subr.bf16.mxu0 %v2061
        %2586 = vmatpush1.bf16.msra.mxu0 %v2060
        %2587 = vmatprep.subr.bf16.mxu0 %v2065
        %2588 = vmatpush1.bf16.msra.mxu0 %v2064
        %2589 = vmatprep.subr.bf16.mxu0 %v2069
        %2590 = vmatpush1.bf16.msra.mxu0 %v2068
        %2591 = vmatprep.subr.bf16.mxu0 %v2073
        %2592 = vmatpush1.bf16.msra.mxu0 %v2072
        %2593 = vmatprep.subr.bf16.mxu0 %v2077
        %2594 = vmatpush1.bf16.msra.mxu0 %v2076
        %2595 = vmatprep.subr.bf16.mxu0 %v2081
        %2596 = vmatpush1.bf16.msra.mxu0 %v2080
        %2597 = vmatprep.subr.bf16.mxu0 %v2085
        %2598 = vmatpush1.bf16.msra.mxu0 %v2084
        %2599 = vmatprep.mubr.bf16.mxu0 %v2311
        %2600 = vmatmul.mubr.bf16.gmra.mrb[0].mxu0 %v2310
        %v2601 = vpop.f32.mrb[0].mxu0
        %v2602 = vadd.f32 %v2088, %v2601
        %v2603 = vpop.f32.mrb[0].mxu0
        %v2604 = vadd.f32 %v2088, %v2603
        %v2605 = vpop.f32.mrb[0].mxu0
        %v2606 = vadd.f32 %v2092, %v2605
        %v2607 = vpop.f32.mrb[0].mxu0
        %v2608 = vadd.f32 %v2092, %v2607
        %2609 = vmatprep.mubr.bf16.mxu0 %v2313
        %2610 = vmatmul.mubr.bf16.gmra.mrb[0].mxu0 %v2312
        %v2611 = vpop.f32.mrb[0].mxu0
        %v2612 = vadd.f32 %v2096, %v2611
        %v2613 = vpop.f32.mrb[0].mxu0
        %v2614 = vadd.f32 %v2096, %v2613
        %v2615 = vpop.f32.mrb[0].mxu0
        %v2616 = vadd.f32 %v2100, %v2615
        %v2617 = vpop.f32.mrb[0].mxu0
        %v2618 = vadd.f32 %v2100, %v2617
        %2619 = vmatprep.mubr.bf16.mxu0 %v2315
        %2620 = vmatmul.mubr.bf16.gmra.mrb[0].mxu0 %v2314
        %v2621 = vpop.f32.mrb[0].mxu0
        %v2622 = vadd.f32 %v2104, %v2621
        %v2623 = vpop.f32.mrb[0].mxu0
        %v2624 = vadd.f32 %v2104, %v2623
        %v2625 = vpop.f32.mrb[0].mxu0
        %v2626 = vadd.f32 %v2108, %v2625
        %v2627 = vpop.f32.mrb[0].mxu0
        %v2628 = vadd.f32 %v2108, %v2627
        %2629 = vmatprep.mubr.bf16.mxu0 %v2317
        %2630 = vmatmul.mubr.bf16.gmra.mrb[0].mxu0 %v2316
        %v2631 = vpop.f32.mrb[0].mxu0
        %v2632 = vadd.f32 %v2112, %v2631
        %v2633 = vpop.f32.mrb[0].mxu0
        %v2634 = vadd.f32 %v2112, %v2633
        %v2635 = vpop.f32.mrb[0].mxu0
        %v2636 = vadd.f32 %v2116, %v2635
        %v2637 = vpop.f32.mrb[0].mxu0
        %v2638 = vadd.f32 %v2116, %v2637
        %2639 = vmatprep.mubr.bf16.mxu0 %v2319
        %2640 = vmatmul.mubr.bf16.gmra.mrb[0].mxu0 %v2318
        %v2641 = vpop.f32.mrb[0].mxu0
        %v2642 = vadd.f32 %v2120, %v2641
        %v2643 = vpop.f32.mrb[0].mxu0
        %v2644 = vadd.f32 %v2120, %v2643
        %v2645 = vpop.f32.mrb[0].mxu0
        %v2646 = vadd.f32 %v2124, %v2645
        %v2647 = vpop.f32.mrb[0].mxu0
        %v2648 = vadd.f32 %v2124, %v2647
        %2649 = vmatprep.mubr.bf16.mxu0 %v2321
        %2650 = vmatmul.mubr.bf16.gmra.mrb[0].mxu0 %v2320
        %v2651 = vpop.f32.mrb[0].mxu0
        %v2652 = vadd.f32 %v2128, %v2651
        %v2653 = vpop.f32.mrb[0].mxu0
        %v2654 = vadd.f32 %v2128, %v2653
        %v2655 = vpop.f32.mrb[0].mxu0
        %v2656 = vadd.f32 %v2132, %v2655
        %v2657 = vpop.f32.mrb[0].mxu0
        %v2658 = vadd.f32 %v2132, %v2657
        %2659 = vmatprep.mubr.bf16.mxu0 %v2323
        %2660 = vmatmul.mubr.bf16.gmra.mrb[0].mxu0 %v2322
        %v2661 = vpop.f32.mrb[0].mxu0
        %v2662 = vadd.f32 %v2136, %v2661
        %v2663 = vpop.f32.mrb[0].mxu0
        %v2664 = vadd.f32 %v2136, %v2663
        %v2665 = vpop.f32.mrb[0].mxu0
        %v2666 = vadd.f32 %v2140, %v2665
        %v2667 = vpop.f32.mrb[0].mxu0
        %v2668 = vadd.f32 %v2140, %v2667
        %2669 = vmatprep.mubr.bf16.mxu0 %v2325
        %2670 = vmatmul.mubr.bf16.gmra.mrb[0].mxu0 %v2324
        %v2671 = vpop.f32.mrb[0].mxu0
        %v2672 = vadd.f32 %v2144, %v2671
        %v2673 = vpop.f32.mrb[0].mxu0
        %v2674 = vadd.f32 %v2144, %v2673
        %v2675 = vpop.f32.mrb[0].mxu0
        %v2676 = vadd.f32 %v2148, %v2675
        %v2677 = vpop.f32.mrb[0].mxu0
        %v2678 = vadd.f32 %v2148, %v2677
        %2679 = vmatprep.mubr.bf16.mxu0 %v2327
        %2680 = vmatmul.mubr.bf16.gmra.mrb[0].mxu0 %v2326
        %v2681 = vpop.f32.mrb[0].mxu0
        %v2682 = vadd.f32 %v2152, %v2681
        %v2683 = vpop.f32.mrb[0].mxu0
        %v2684 = vadd.f32 %v2152, %v2683
        %v2685 = vpop.f32.mrb[0].mxu0
        %v2686 = vadd.f32 %v2156, %v2685
        %v2687 = vpop.f32.mrb[0].mxu0
        %v2688 = vadd.f32 %v2156, %v2687
        %2689 = vmatprep.mubr.bf16.mxu0 %v2329
        %2690 = vmatmul.mubr.bf16.gmra.mrb[0].mxu0 %v2328
        %v2691 = vpop.f32.mrb[0].mxu0
        %v2692 = vadd.f32 %v2160, %v2691
        %v2693 = vpop.f32.mrb[0].mxu0
        %v2694 = vadd.f32 %v2160, %v2693
        %v2695 = vpop.f32.mrb[0].mxu0
        %v2696 = vadd.f32 %v2164, %v2695
        %v2697 = vpop.f32.mrb[0].mxu0
        %v2698 = vadd.f32 %v2164, %v2697
        %2699 = vmatprep.mubr.bf16.mxu0 %v2331
        %2700 = vmatmul.mubr.bf16.gmra.mrb[0].mxu0 %v2330
        %v2701 = vpop.f32.mrb[0].mxu0
        %v2702 = vadd.f32 %v2168, %v2701
        %v2703 = vpop.f32.mrb[0].mxu0
        %v2704 = vadd.f32 %v2168, %v2703
        %v2705 = vpop.f32.mrb[0].mxu0
        %v2706 = vadd.f32 %v2172, %v2705
        %v2707 = vpop.f32.mrb[0].mxu0
        %v2708 = vadd.f32 %v2172, %v2707
        %2709 = vmatprep.mubr.bf16.mxu0 %v2333
        %2710 = vmatmul.mubr.bf16.gmra.mrb[0].mxu0 %v2332
        %v2711 = vpop.f32.mrb[0].mxu0
        %v2712 = vadd.f32 %v2176, %v2711
        %v2713 = vpop.f32.mrb[0].mxu0
        %v2714 = vadd.f32 %v2176, %v2713
        %v2715 = vpop.f32.mrb[0].mxu0
        %v2716 = vadd.f32 %v2180, %v2715
        %v2717 = vpop.f32.mrb[0].mxu0
        %v2718 = vadd.f32 %v2180, %v2717
        %2719 = vmatprep.mubr.bf16.mxu0 %v2335
        %2720 = vmatmul.mubr.bf16.gmra.mrb[0].mxu0 %v2334
        %v2721 = vpop.f32.mrb[0].mxu0
        %v2722 = vadd.f32 %v2184, %v2721
        %v2723 = vpop.f32.mrb[0].mxu0
        %v2724 = vadd.f32 %v2184, %v2723
        %v2725 = vpop.f32.mrb[0].mxu0
        %v2726 = vadd.f32 %v2188, %v2725
        %v2727 = vpop.f32.mrb[0].mxu0
        %v2728 = vadd.f32 %v2188, %v2727
        %2729 = vmatprep.mubr.bf16.mxu0 %v2337
        %2730 = vmatmul.mubr.bf16.gmra.mrb[0].mxu0 %v2336
        %v2731 = vpop.f32.mrb[0].mxu0
        %v2732 = vadd.f32 %v2192, %v2731
        %v2733 = vpop.f32.mrb[0].mxu0
        %v2734 = vadd.f32 %v2192, %v2733
        %v2735 = vpop.f32.mrb[0].mxu0
        %v2736 = vadd.f32 %v2196, %v2735
        %v2737 = vpop.f32.mrb[0].mxu0
        %v2738 = vadd.f32 %v2196, %v2737
        %2739 = vmatprep.mubr.bf16.mxu0 %v2339
        %2740 = vmatmul.mubr.bf16.gmra.mrb[0].mxu0 %v2338
        %v2741 = vpop.f32.mrb[0].mxu0
        %v2742 = vadd.f32 %v2200, %v2741
        %v2743 = vpop.f32.mrb[0].mxu0
        %v2744 = vadd.f32 %v2200, %v2743
        %v2745 = vpop.f32.mrb[0].mxu0
        %v2746 = vadd.f32 %v2204, %v2745
        %v2747 = vpop.f32.mrb[0].mxu0
        %v2748 = vadd.f32 %v2204, %v2747
        %2749 = vmatprep.mubr.bf16.mxu0 %v2341
        %2750 = vmatmul.mubr.bf16.gmra.mrb[0].mxu0 %v2340
        %v2751 = vpop.f32.mrb[0].mxu0
        %v2752 = vadd.f32 %v2208, %v2751
        %v2753 = vpop.f32.mrb[0].mxu0
        %v2754 = vadd.f32 %v2208, %v2753
        %v2755 = vpop.f32.mrb[0].mxu0
        %v2756 = vadd.f32 %v2212, %v2755
        %v2757 = vpop.f32.mrb[0].mxu0
        %v2758 = vadd.f32 %v2212, %v2757
        %2759 = vdwg.mxu0
        %v2760 = vmax.f32 %v2409, 0.0
        %v2761 = vmax.f32 %v2411, 0.0
        %v2762 = vmax.f32 %v2602, 0.0
        %v2763 = vmax.f32 %v2604, 0.0
        %v2764 = vmax.f32 %v2413, 0.0
        %v2765 = vmax.f32 %v2415, 0.0
        %v2766 = vmax.f32 %v2606, 0.0
        %v2767 = vmax.f32 %v2608, 0.0
        %v2768 = vmax.f32 %v2419, 0.0
        %v2769 = vmax.f32 %v2421, 0.0
        %v2770 = vmax.f32 %v2612, 0.0
        %v2771 = vmax.f32 %v2614, 0.0
        %v2772 = vmax.f32 %v2423, 0.0
        %v2773 = vmax.f32 %v2425, 0.0
        %v2774 = vmax.f32 %v2616, 0.0
        %v2775 = vmax.f32 %v2618, 0.0
        %v2776 = vmax.f32 %v2429, 0.0
        %v2777 = vmax.f32 %v2431, 0.0
        %v2778 = vmax.f32 %v2622, 0.0
        %v2779 = vmax.f32 %v2624, 0.0
        %v2780 = vmax.f32 %v2433, 0.0
        %v2781 = vmax.f32 %v2435, 0.0
        %v2782 = vmax.f32 %v2626, 0.0
        %v2783 = vmax.f32 %v2628, 0.0
        %v2784 = vmax.f32 %v2439, 0.0
        %v2785 = vmax.f32 %v2441, 0.0
        %v2786 = vmax.f32 %v2632, 0.0
        %v2787 = vmax.f32 %v2634, 0.0
        %v2788 = vmax.f32 %v2443, 0.0
        %v2789 = vmax.f32 %v2445, 0.0
        %v2790 = vmax.f32 %v2636, 0.0
        %v2791 = vmax.f32 %v2638, 0.0
        %v2792 = vmax.f32 %v2449, 0.0
        %v2793 = vmax.f32 %v2451, 0.0
        %v2794 = vmax.f32 %v2642, 0.0
        %v2795 = vmax.f32 %v2644, 0.0
        %v2796 = vmax.f32 %v2453, 0.0
        %v2797 = vmax.f32 %v2455, 0.0
        %v2798 = vmax.f32 %v2646, 0.0
        %v2799 = vmax.f32 %v2648, 0.0
        %v2800 = vmax.f32 %v2459, 0.0
        %v2801 = vmax.f32 %v2461, 0.0
        %v2802 = vmax.f32 %v2652, 0.0
        %v2803 = vmax.f32 %v2654, 0.0
        %v2804 = vmax.f32 %v2463, 0.0
        %v2805 = vmax.f32 %v2465, 0.0
        %v2806 = vmax.f32 %v2656, 0.0
        %v2807 = vmax.f32 %v2658, 0.0
        %v2808 = vmax.f32 %v2469, 0.0
        %v2809 = vmax.f32 %v2471, 0.0
        %v2810 = vmax.f32 %v2662, 0.0
        %v2811 = vmax.f32 %v2664, 0.0
        %v2812 = vmax.f32 %v2473, 0.0
        %v2813 = vmax.f32 %v2475, 0.0
        %v2814 = vmax.f32 %v2666, 0.0
        %v2815 = vmax.f32 %v2668, 0.0
        %v2816 = vmax.f32 %v2479, 0.0
        %v2817 = vmax.f32 %v2481, 0.0
        %v2818 = vmax.f32 %v2672, 0.0
        %v2819 = vmax.f32 %v2674, 0.0
        %v2820 = vmax.f32 %v2483, 0.0
        %v2821 = vmax.f32 %v2485, 0.0
        %v2822 = vmax.f32 %v2676, 0.0
        %v2823 = vmax.f32 %v2678, 0.0
        %v2824 = vmax.f32 %v2489, 0.0
        %v2825 = vmax.f32 %v2491, 0.0
        %v2826 = vmax.f32 %v2682, 0.0
        %v2827 = vmax.f32 %v2684, 0.0
        %v2828 = vmax.f32 %v2493, 0.0
        %v2829 = vmax.f32 %v2495, 0.0
        %v2830 = vmax.f32 %v2686, 0.0
        %v2831 = vmax.f32 %v2688, 0.0
        %v2832 = vmax.f32 %v2499, 0.0
        %v2833 = vmax.f32 %v2501, 0.0
        %v2834 = vmax.f32 %v2692, 0.0
        %v2835 = vmax.f32 %v2694, 0.0
        %v2836 = vmax.f32 %v2503, 0.0
        %v2837 = vmax.f32 %v2505, 0.0
        %v2838 = vmax.f32 %v2696, 0.0
        %v2839 = vmax.f32 %v2698, 0.0
        %v2840 = vmax.f32 %v2509, 0.0
        %v2841 = vmax.f32 %v2511, 0.0
        %v2842 = vmax.f32 %v2702, 0.0
        %v2843 = vmax.f32 %v2704, 0.0
        %v2844 = vmax.f32 %v2513, 0.0
        %v2845 = vmax.f32 %v2515, 0.0
        %v2846 = vmax.f32 %v2706, 0.0
        %v2847 = vmax.f32 %v2708, 0.0
        %v2848 = vmax.f32 %v2519, 0.0
        %v2849 = vmax.f32 %v2521, 0.0
        %v2850 = vmax.f32 %v2712, 0.0
        %v2851 = vmax.f32 %v2714, 0.0
        %v2852 = vmax.f32 %v2523, 0.0
        %v2853 = vmax.f32 %v2525, 0.0
        %v2854 = vmax.f32 %v2716, 0.0
        %v2855 = vmax.f32 %v2718, 0.0
        %v2856 = vmax.f32 %v2529, 0.0
        %v2857 = vmax.f32 %v2531, 0.0
        %v2858 = vmax.f32 %v2722, 0.0
        %v2859 = vmax.f32 %v2724, 0.0
        %v2860 = vmax.f32 %v2533, 0.0
        %v2861 = vmax.f32 %v2535, 0.0
        %v2862 = vmax.f32 %v2726, 0.0
        %v2863 = vmax.f32 %v2728, 0.0
        %v2864 = vmax.f32 %v2539, 0.0
        %v2865 = vmax.f32 %v2541, 0.0
        %v2866 = vmax.f32 %v2732, 0.0
        %v2867 = vmax.f32 %v2734, 0.0
        %v2868 = vmax.f32 %v2543, 0.0
        %v2869 = vmax.f32 %v2545, 0.0
        %v2870 = vmax.f32 %v2736, 0.0
        %v2871 = vmax.f32 %v2738, 0.0
        %v2872 = vmax.f32 %v2549, 0.0
        %v2873 = vmax.f32 %v2551, 0.0
        %v2874 = vmax.f32 %v2742, 0.0
        %v2875 = vmax.f32 %v2744, 0.0
        %v2876 = vmax.f32 %v2553, 0.0
        %v2877 = vmax.f32 %v2555, 0.0
        %v2878 = vmax.f32 %v2746, 0.0
        %v2879 = vmax.f32 %v2748, 0.0
        %v2880 = vmax.f32 %v2559, 0.0
        %v2881 = vmax.f32 %v2561, 0.0
        %v2882 = vmax.f32 %v2752, 0.0
        %v2883 = vmax.f32 %v2754, 0.0
        %v2884 = vmax.f32 %v2563, 0.0
        %v2885 = vmax.f32 %v2565, 0.0
        %v2886 = vmax.f32 %v2756, 0.0
        %v2887 = vmax.f32 %v2758, 0.0
        %v2888 = vld [vmem:[%s3] sm:$0xff]
        %v2889 = vld [vmem:[%s3 + $0x8] sm:$0xff]
        %v2890 = vld [vmem:[%s3 + $0x10] sm:$0xff]
        %v2891 = vld [vmem:[%s3 + $0x18] sm:$0xff]
        %v2892 = vld [vmem:[%s3 + $0x20] sm:$0xff]
        %v2893 = vld [vmem:[%s3 + $0x28] sm:$0xff]
        %v2894 = vld [vmem:[%s3 + $0x30] sm:$0xff]
        %v2895 = vld [vmem:[%s3 + $0x38] sm:$0xff]
        %v2896 = vld [vmem:[%s3 + $0x40] sm:$0xff]
        %v2897 = vld [vmem:[%s3 + $0x48] sm:$0xff]
        %v2898 = vld [vmem:[%s3 + $0x50] sm:$0xff]
        %v2899 = vld [vmem:[%s3 + $0x58] sm:$0xff]
        %v2900 = vld [vmem:[%s3 + $0x60] sm:$0xff]
        %v2901 = vld [vmem:[%s3 + $0x68] sm:$0xff]
        %v2902 = vld [vmem:[%s3 + $0x70] sm:$0xff]
        %v2903 = vld [vmem:[%s3 + $0x78] sm:$0xff]
        %v2904 = vld [vmem:[%s3 + $0x80] sm:$0xff]
        %v2905 = vld [vmem:[%s3 + $0x88] sm:$0xff]
        %v2906 = vld [vmem:[%s3 + $0x90] sm:$0xff]
        %v2907 = vld [vmem:[%s3 + $0x98] sm:$0xff]
        %v2908 = vld [vmem:[%s3 + $0xa0] sm:$0xff]
        %v2909 = vld [vmem:[%s3 + $0xa8] sm:$0xff]
        %v2910 = vld [vmem:[%s3 + $0xb0] sm:$0xff]
        %v2911 = vld [vmem:[%s3 + $0xb8] sm:$0xff]
        %v2912 = vld [vmem:[%s3 + $0xc0] sm:$0xff]
        %v2913 = vld [vmem:[%s3 + $0xc8] sm:$0xff]
        %v2914 = vld [vmem:[%s3 + $0xd0] sm:$0xff]
        %v2915 = vld [vmem:[%s3 + $0xd8] sm:$0xff]
        %v2916 = vld [vmem:[%s3 + $0xe0] sm:$0xff]
        %v2917 = vld [vmem:[%s3 + $0xe8] sm:$0xff]
        %v2918 = vld [vmem:[%s3 + $0xf0] sm:$0xff]
        %v2919 = vld [vmem:[%s3 + $0xf8] sm:$0xff]
        %v2920 = vpack.c.bf16 %v2764, %v2760
        %v2921 = vpack.c.bf16 %v2765, %v2761
        %v2922 = vpack.c.bf16 %v2766, %v2762
        %v2923 = vpack.c.bf16 %v2767, %v2763
        %v2924 = vpack.c.bf16 %v2772, %v2768
        %v2925 = vpack.c.bf16 %v2773, %v2769
        %v2926 = vpack.c.bf16 %v2774, %v2770
        %v2927 = vpack.c.bf16 %v2775, %v2771
        %v2928 = vpack.c.bf16 %v2780, %v2776
        %v2929 = vpack.c.bf16 %v2781, %v2777
        %v2930 = vpack.c.bf16 %v2782, %v2778
        %v2931 = vpack.c.bf16 %v2783, %v2779
        %v2932 = vpack.c.bf16 %v2788, %v2784
        %v2933 = vpack.c.bf16 %v2789, %v2785
        %v2934 = vpack.c.bf16 %v2790, %v2786
        %v2935 = vpack.c.bf16 %v2791, %v2787
        %v2936 = vpack.c.bf16 %v2796, %v2792
        %v2937 = vpack.c.bf16 %v2797, %v2793
        %v2938 = vpack.c.bf16 %v2798, %v2794
        %v2939 = vpack.c.bf16 %v2799, %v2795
        %v2940 = vpack.c.bf16 %v2804, %v2800
        %v2941 = vpack.c.bf16 %v2805, %v2801
        %v2942 = vpack.c.bf16 %v2806, %v2802
        %v2943 = vpack.c.bf16 %v2807, %v2803
        %v2944 = vpack.c.bf16 %v2812, %v2808
        %v2945 = vpack.c.bf16 %v2813, %v2809
        %v2946 = vpack.c.bf16 %v2814, %v2810
        %v2947 = vpack.c.bf16 %v2815, %v2811
        %v2948 = vpack.c.bf16 %v2820, %v2816
        %v2949 = vpack.c.bf16 %v2821, %v2817
        %v2950 = vpack.c.bf16 %v2822, %v2818
        %v2951 = vpack.c.bf16 %v2823, %v2819
        %v2952 = vpack.c.bf16 %v2828, %v2824
        %v2953 = vpack.c.bf16 %v2829, %v2825
        %v2954 = vpack.c.bf16 %v2830, %v2826
        %v2955 = vpack.c.bf16 %v2831, %v2827
        %v2956 = vpack.c.bf16 %v2836, %v2832
        %v2957 = vpack.c.bf16 %v2837, %v2833
        %v2958 = vpack.c.bf16 %v2838, %v2834
        %v2959 = vpack.c.bf16 %v2839, %v2835
        %v2960 = vpack.c.bf16 %v2844, %v2840
        %v2961 = vpack.c.bf16 %v2845, %v2841
        %v2962 = vpack.c.bf16 %v2846, %v2842
        %v2963 = vpack.c.bf16 %v2847, %v2843
        %v2964 = vpack.c.bf16 %v2852, %v2848
        %v2965 = vpack.c.bf16 %v2853, %v2849
        %v2966 = vpack.c.bf16 %v2854, %v2850
        %v2967 = vpack.c.bf16 %v2855, %v2851
        %v2968 = vpack.c.bf16 %v2860, %v2856
        %v2969 = vpack.c.bf16 %v2861, %v2857
        %v2970 = vpack.c.bf16 %v2862, %v2858
        %v2971 = vpack.c.bf16 %v2863, %v2859
        %v2972 = vpack.c.bf16 %v2868, %v2864
        %v2973 = vpack.c.bf16 %v2869, %v2865
        %v2974 = vpack.c.bf16 %v2870, %v2866
        %v2975 = vpack.c.bf16 %v2871, %v2867
        %v2976 = vpack.c.bf16 %v2876, %v2872
        %v2977 = vpack.c.bf16 %v2877, %v2873
        %v2978 = vpack.c.bf16 %v2878, %v2874
        %v2979 = vpack.c.bf16 %v2879, %v2875
        %v2980 = vpack.c.bf16 %v2884, %v2880
        %v2981 = vpack.c.bf16 %v2885, %v2881
        %v2982 = vpack.c.bf16 %v2886, %v2882
        %v2983 = vpack.c.bf16 %v2887, %v2883
        %2984 = vset.pattern.permute.xlu0 2
        %2985 = vperm.xlu0 %2984, %v1542
        %v2986 = vpop.permute.xlu0 %2985
        %2988 = vset.pattern.permute.xlu0 2
        %2989 = vperm.xlu0 %2988, %v1543
        %v2990 = vpop.permute.xlu0 %2989
        %2992 = vset.pattern.permute.xlu0 2
        %2993 = vperm.xlu0 %2992, %v1544
        %v2994 = vpop.permute.xlu0 %2993
        %2996 = vset.pattern.permute.xlu0 2
        %2997 = vperm.xlu0 %2996, %v1545
        %v2998 = vpop.permute.xlu0 %2997
        %3000 = vset.pattern.permute.xlu0 2
        %3001 = vperm.xlu0 %3000, %v1546
        %v3002 = vpop.permute.xlu0 %3001
        %3004 = vset.pattern.permute.xlu0 2
        %3005 = vperm.xlu0 %3004, %v1547
        %v3006 = vpop.permute.xlu0 %3005
        %3008 = vset.pattern.permute.xlu0 2
        %3009 = vperm.xlu0 %3008, %v1548
        %v3010 = vpop.permute.xlu0 %3009
        %3012 = vset.pattern.permute.xlu0 2
        %3013 = vperm.xlu0 %3012, %v1549
        %v3014 = vpop.permute.xlu0 %3013
        %3016 = vset.pattern.permute.xlu0 2
        %3017 = vperm.xlu0 %3016, %v1550
        %v3018 = vpop.permute.xlu0 %3017
        %3020 = vset.pattern.permute.xlu0 2
        %3021 = vperm.xlu0 %3020, %v1551
        %v3022 = vpop.permute.xlu0 %3021
        %3024 = vset.pattern.permute.xlu0 2
        %3025 = vperm.xlu0 %3024, %v1552
        %v3026 = vpop.permute.xlu0 %3025
        %3028 = vset.pattern.permute.xlu0 2
        %3029 = vperm.xlu0 %3028, %v1553
        %v3030 = vpop.permute.xlu0 %3029
        %3032 = vset.pattern.permute.xlu0 2
        %3033 = vperm.xlu0 %3032, %v1554
        %v3034 = vpop.permute.xlu0 %3033
        %3036 = vset.pattern.permute.xlu0 2
        %3037 = vperm.xlu0 %3036, %v1555
        %v3038 = vpop.permute.xlu0 %3037
        %3040 = vset.pattern.permute.xlu0 2
        %3041 = vperm.xlu0 %3040, %v1556
        %v3042 = vpop.permute.xlu0 %3041
        %3044 = vset.pattern.permute.xlu0 2
        %3045 = vperm.xlu0 %3044, %v1557
        %v3046 = vpop.permute.xlu0 %3045
        %3048 = vset.pattern.permute.xlu0 2
        %3049 = vperm.xlu0 %3048, %v1558
        %v3050 = vpop.permute.xlu0 %3049
        %3052 = vset.pattern.permute.xlu0 2
        %3053 = vperm.xlu0 %3052, %v1559
        %v3054 = vpop.permute.xlu0 %3053
        %3056 = vset.pattern.permute.xlu0 2
        %3057 = vperm.xlu0 %3056, %v1560
        %v3058 = vpop.permute.xlu0 %3057
        %3060 = vset.pattern.permute.xlu0 2
        %3061 = vperm.xlu0 %3060, %v1561
        %v3062 = vpop.permute.xlu0 %3061
        %3064 = vset.pattern.permute.xlu0 2
        %3065 = vperm.xlu0 %3064, %v1562
        %v3066 = vpop.permute.xlu0 %3065
        %3068 = vset.pattern.permute.xlu0 2
        %3069 = vperm.xlu0 %3068, %v1563
        %v3070 = vpop.permute.xlu0 %3069
        %3072 = vset.pattern.permute.xlu0 2
        %3073 = vperm.xlu0 %3072, %v1564
        %v3074 = vpop.permute.xlu0 %3073
        %3076 = vset.pattern.permute.xlu0 2
        %3077 = vperm.xlu0 %3076, %v1565
        %v3078 = vpop.permute.xlu0 %3077
        %3080 = vset.pattern.permute.xlu0 2
        %3081 = vperm.xlu0 %3080, %v1566
        %v3082 = vpop.permute.xlu0 %3081
        %3084 = vset.pattern.permute.xlu0 2
        %3085 = vperm.xlu0 %3084, %v1567
        %v3086 = vpop.permute.xlu0 %3085
        %3088 = vset.pattern.permute.xlu0 2
        %3089 = vperm.xlu0 %3088, %v1568
        %v3090 = vpop.permute.xlu0 %3089
        %3092 = vset.pattern.permute.xlu0 2
        %3093 = vperm.xlu0 %3092, %v1569
        %v3094 = vpop.permute.xlu0 %3093
        %3096 = vset.pattern.permute.xlu0 2
        %3097 = vperm.xlu0 %3096, %v1570
        %v3098 = vpop.permute.xlu0 %3097
        %3100 = vset.pattern.permute.xlu0 2
        %3101 = vperm.xlu0 %3100, %v1571
        %v3102 = vpop.permute.xlu0 %3101
        %3104 = vset.pattern.permute.xlu0 2
        %3105 = vperm.xlu0 %3104, %v1572
        %v3106 = vpop.permute.xlu0 %3105
        %3108 = vset.pattern.permute.xlu0 2
        %3109 = vperm.xlu0 %3108, %v1573
        %v3110 = vpop.permute.xlu0 %3109
        %v3144 = vunpack.c.l.b16 %v2888
        %v3145 = vunpack.c.h.b16 %v2888
        %v3146 = vunpack.c.l.b16 %v2889
        %v3147 = vunpack.c.h.b16 %v2889
        %v3148 = vunpack.c.l.b16 %v2890
        %v3149 = vunpack.c.h.b16 %v2890
        %v3150 = vunpack.c.l.b16 %v2891
        %v3151 = vunpack.c.h.b16 %v2891
        %v3152 = vunpack.c.l.b16 %v2892
        %v3153 = vunpack.c.h.b16 %v2892
        %v3154 = vunpack.c.l.b16 %v2893
        %v3155 = vunpack.c.h.b16 %v2893
        %v3156 = vunpack.c.l.b16 %v2894
        %v3157 = vunpack.c.h.b16 %v2894
        %v3158 = vunpack.c.l.b16 %v2895
        %v3159 = vunpack.c.h.b16 %v2895
        %v3160 = vunpack.c.l.b16 %v2896
        %v3161 = vunpack.c.h.b16 %v2896
        %v3162 = vunpack.c.l.b16 %v2897
        %v3163 = vunpack.c.h.b16 %v2897
        %v3164 = vunpack.c.l.b16 %v2898
        %v3165 = vunpack.c.h.b16 %v2898
        %v3166 = vunpack.c.l.b16 %v2899
        %v3167 = vunpack.c.h.b16 %v2899
        %v3168 = vunpack.c.l.b16 %v2900
        %v3169 = vunpack.c.h.b16 %v2900
        %v3170 = vunpack.c.l.b16 %v2901
        %v3171 = vunpack.c.h.b16 %v2901
        %v3172 = vunpack.c.l.b16 %v2902
        %v3173 = vunpack.c.h.b16 %v2902
        %v3174 = vunpack.c.l.b16 %v2903
        %v3175 = vunpack.c.h.b16 %v2903
        %v3176 = vunpack.c.l.b16 %v2904
        %v3177 = vunpack.c.h.b16 %v2904
        %v3178 = vunpack.c.l.b16 %v2905
        %v3179 = vunpack.c.h.b16 %v2905
        %v3180 = vunpack.c.l.b16 %v2906
        %v3181 = vunpack.c.h.b16 %v2906
        %v3182 = vunpack.c.l.b16 %v2907
        %v3183 = vunpack.c.h.b16 %v2907
        %v3184 = vunpack.c.l.b16 %v2908
        %v3185 = vunpack.c.h.b16 %v2908
        %v3186 = vunpack.c.l.b16 %v2909
        %v3187 = vunpack.c.h.b16 %v2909
        %v3188 = vunpack.c.l.b16 %v2910
        %v3189 = vunpack.c.h.b16 %v2910
        %v3190 = vunpack.c.l.b16 %v2911
        %v3191 = vunpack.c.h.b16 %v2911
        %v3192 = vunpack.c.l.b16 %v2912
        %v3193 = vunpack.c.h.b16 %v2912
        %v3194 = vunpack.c.l.b16 %v2913
        %v3195 = vunpack.c.h.b16 %v2913
        %v3196 = vunpack.c.l.b16 %v2914
        %v3197 = vunpack.c.h.b16 %v2914
        %v3198 = vunpack.c.l.b16 %v2915
        %v3199 = vunpack.c.h.b16 %v2915
        %v3200 = vunpack.c.l.b16 %v2916
        %v3201 = vunpack.c.h.b16 %v2916
        %v3202 = vunpack.c.l.b16 %v2917
        %v3203 = vunpack.c.h.b16 %v2917
        %v3204 = vunpack.c.l.b16 %v2918
        %v3205 = vunpack.c.h.b16 %v2918
        %v3206 = vunpack.c.l.b16 %v2919
        %v3207 = vunpack.c.h.b16 %v2919
        %v3208 = vpack.c.b16 %v3146, %v3144
        %v3209 = vpack.c.b16 %v3147, %v3145
        %v3210 = vpack.c.b16 %v3150, %v3148
        %v3211 = vpack.c.b16 %v3151, %v3149
        %v3212 = vpack.c.b16 %v3154, %v3152
        %v3213 = vpack.c.b16 %v3155, %v3153
        %v3214 = vpack.c.b16 %v3158, %v3156
        %v3215 = vpack.c.b16 %v3159, %v3157
        %v3216 = vpack.c.b16 %v3162, %v3160
        %v3217 = vpack.c.b16 %v3163, %v3161
        %v3218 = vpack.c.b16 %v3166, %v3164
        %v3219 = vpack.c.b16 %v3167, %v3165
        %v3220 = vpack.c.b16 %v3170, %v3168
        %v3221 = vpack.c.b16 %v3171, %v3169
        %v3222 = vpack.c.b16 %v3174, %v3172
        %v3223 = vpack.c.b16 %v3175, %v3173
        %v3224 = vpack.c.b16 %v3178, %v3176
        %v3225 = vpack.c.b16 %v3179, %v3177
        %v3226 = vpack.c.b16 %v3182, %v3180
        %v3227 = vpack.c.b16 %v3183, %v3181
        %v3228 = vpack.c.b16 %v3186, %v3184
        %v3229 = vpack.c.b16 %v3187, %v3185
        %v3230 = vpack.c.b16 %v3190, %v3188
        %v3231 = vpack.c.b16 %v3191, %v3189
        %v3232 = vpack.c.b16 %v3194, %v3192
        %v3233 = vpack.c.b16 %v3195, %v3193
        %v3234 = vpack.c.b16 %v3198, %v3196
        %v3235 = vpack.c.b16 %v3199, %v3197
        %v3236 = vpack.c.b16 %v3202, %v3200
        %v3237 = vpack.c.b16 %v3203, %v3201
        %v3238 = vpack.c.b16 %v3206, %v3204
        %v3239 = vpack.c.b16 %v3207, %v3205
        %3272 = vmatprep.subr.bf16.mxu0 %v2921
        %3273 = vmatpush1.bf16.msra.mxu0 %v2920
        %3274 = vmatprep.subr.bf16.mxu0 %v2925
        %3275 = vmatpush1.bf16.msra.mxu0 %v2924
        %3276 = vmatprep.subr.bf16.mxu0 %v2929
        %3277 = vmatpush1.bf16.msra.mxu0 %v2928
        %3278 = vmatprep.subr.bf16.mxu0 %v2933
        %3279 = vmatpush1.bf16.msra.mxu0 %v2932
        %3280 = vmatprep.subr.bf16.mxu0 %v2937
        %3281 = vmatpush1.bf16.msra.mxu0 %v2936
        %3282 = vmatprep.subr.bf16.mxu0 %v2941
        %3283 = vmatpush1.bf16.msra.mxu0 %v2940
        %3284 = vmatprep.subr.bf16.mxu0 %v2945
        %3285 = vmatpush1.bf16.msra.mxu0 %v2944
        %3286 = vmatprep.subr.bf16.mxu0 %v2949
        %3287 = vmatpush1.bf16.msra.mxu0 %v2948
        %3288 = vmatprep.subr.bf16.mxu0 %v2953
        %3289 = vmatpush1.bf16.msra.mxu0 %v2952
        %3290 = vmatprep.subr.bf16.mxu0 %v2957
        %3291 = vmatpush1.bf16.msra.mxu0 %v2956
        %3292 = vmatprep.subr.bf16.mxu0 %v2961
        %3293 = vmatpush1.bf16.msra.mxu0 %v2960
        %3294 = vmatprep.subr.bf16.mxu0 %v2965
        %3295 = vmatpush1.bf16.msra.mxu0 %v2964
        %3296 = vmatprep.subr.bf16.mxu0 %v2969
        %3297 = vmatpush1.bf16.msra.mxu0 %v2968
        %3298 = vmatprep.subr.bf16.mxu0 %v2973
        %3299 = vmatpush1.bf16.msra.mxu0 %v2972
        %3300 = vmatprep.subr.bf16.mxu0 %v2977
        %3301 = vmatpush1.bf16.msra.mxu0 %v2976
        %3302 = vmatprep.subr.bf16.mxu0 %v2981
        %3303 = vmatpush1.bf16.msra.mxu0 %v2980
        %3304 = vmatprep.mubr.bf16.mxu0 %v3209
        %3305 = vmatmul.mubr.bf16.gmra.mrb[0].mxu0 %v3208
        %v3306 = vpop.f32.mrb[0].mxu0
        %v3307 = vadd.f32 %v2986, %v3306
        %v3308 = vpop.f32.mrb[0].mxu0
        %v3309 = vadd.f32 %v2986, %v3308
        %v3310 = vpop.f32.mrb[0].mxu0
        %v3311 = vadd.f32 %v2990, %v3310
        %v3312 = vpop.f32.mrb[0].mxu0
        %v3313 = vadd.f32 %v2990, %v3312
        %3314 = vmatprep.mubr.bf16.mxu0 %v3211
        %3315 = vmatmul.mubr.bf16.gmra.mrb[0].mxu0 %v3210
        %v3316 = vpop.f32.mrb[0].mxu0
        %v3317 = vadd.f32 %v2994, %v3316
        %v3318 = vpop.f32.mrb[0].mxu0
        %v3319 = vadd.f32 %v2994, %v3318
        %v3320 = vpop.f32.mrb[0].mxu0
        %v3321 = vadd.f32 %v2998, %v3320
        %v3322 = vpop.f32.mrb[0].mxu0
        %v3323 = vadd.f32 %v2998, %v3322
        %3324 = vmatprep.mubr.bf16.mxu0 %v3213
        %3325 = vmatmul.mubr.bf16.gmra.mrb[0].mxu0 %v3212
        %v3326 = vpop.f32.mrb[0].mxu0
        %v3327 = vadd.f32 %v3002, %v3326
        %v3328 = vpop.f32.mrb[0].mxu0
        %v3329 = vadd.f32 %v3002, %v3328
        %v3330 = vpop.f32.mrb[0].mxu0
        %v3331 = vadd.f32 %v3006, %v3330
        %v3332 = vpop.f32.mrb[0].mxu0
        %v3333 = vadd.f32 %v3006, %v3332
        %3334 = vmatprep.mubr.bf16.mxu0 %v3215
        %3335 = vmatmul.mubr.bf16.gmra.mrb[0].mxu0 %v3214
        %v3336 = vpop.f32.mrb[0].mxu0
        %v3337 = vadd.f32 %v3010, %v3336
        %v3338 = vpop.f32.mrb[0].mxu0
        %v3339 = vadd.f32 %v3010, %v3338
        %v3340 = vpop.f32.mrb[0].mxu0
        %v3341 = vadd.f32 %v3014, %v3340
        %v3342 = vpop.f32.mrb[0].mxu0
        %v3343 = vadd.f32 %v3014, %v3342
        %3344 = vmatprep.mubr.bf16.mxu0 %v3217
        %3345 = vmatmul.mubr.bf16.gmra.mrb[0].mxu0 %v3216
        %v3346 = vpop.f32.mrb[0].mxu0
        %v3347 = vadd.f32 %v3018, %v3346
        %v3348 = vpop.f32.mrb[0].mxu0
        %v3349 = vadd.f32 %v3018, %v3348
        %v3350 = vpop.f32.mrb[0].mxu0
        %v3351 = vadd.f32 %v3022, %v3350
        %v3352 = vpop.f32.mrb[0].mxu0
        %v3353 = vadd.f32 %v3022, %v3352
        %3354 = vmatprep.mubr.bf16.mxu0 %v3219
        %3355 = vmatmul.mubr.bf16.gmra.mrb[0].mxu0 %v3218
        %v3356 = vpop.f32.mrb[0].mxu0
        %v3357 = vadd.f32 %v3026, %v3356
        %v3358 = vpop.f32.mrb[0].mxu0
        %v3359 = vadd.f32 %v3026, %v3358
        %v3360 = vpop.f32.mrb[0].mxu0
        %v3361 = vadd.f32 %v3030, %v3360
        %v3362 = vpop.f32.mrb[0].mxu0
        %v3363 = vadd.f32 %v3030, %v3362
        %3364 = vmatprep.mubr.bf16.mxu0 %v3221
        %3365 = vmatmul.mubr.bf16.gmra.mrb[0].mxu0 %v3220
        %v3366 = vpop.f32.mrb[0].mxu0
        %v3367 = vadd.f32 %v3034, %v3366
        %v3368 = vpop.f32.mrb[0].mxu0
        %v3369 = vadd.f32 %v3034, %v3368
        %v3370 = vpop.f32.mrb[0].mxu0
        %v3371 = vadd.f32 %v3038, %v3370
        %v3372 = vpop.f32.mrb[0].mxu0
        %v3373 = vadd.f32 %v3038, %v3372
        %3374 = vmatprep.mubr.bf16.mxu0 %v3223
        %3375 = vmatmul.mubr.bf16.gmra.mrb[0].mxu0 %v3222
        %v3376 = vpop.f32.mrb[0].mxu0
        %v3377 = vadd.f32 %v3042, %v3376
        %v3378 = vpop.f32.mrb[0].mxu0
        %v3379 = vadd.f32 %v3042, %v3378
        %v3380 = vpop.f32.mrb[0].mxu0
        %v3381 = vadd.f32 %v3046, %v3380
        %v3382 = vpop.f32.mrb[0].mxu0
        %v3383 = vadd.f32 %v3046, %v3382
        %3384 = vmatprep.mubr.bf16.mxu0 %v3225
        %3385 = vmatmul.mubr.bf16.gmra.mrb[0].mxu0 %v3224
        %v3386 = vpop.f32.mrb[0].mxu0
        %v3387 = vadd.f32 %v3050, %v3386
        %v3388 = vpop.f32.mrb[0].mxu0
        %v3389 = vadd.f32 %v3050, %v3388
        %v3390 = vpop.f32.mrb[0].mxu0
        %v3391 = vadd.f32 %v3054, %v3390
        %v3392 = vpop.f32.mrb[0].mxu0
        %v3393 = vadd.f32 %v3054, %v3392
        %3394 = vmatprep.mubr.bf16.mxu0 %v3227
        %3395 = vmatmul.mubr.bf16.gmra.mrb[0].mxu0 %v3226
        %v3396 = vpop.f32.mrb[0].mxu0
        %v3397 = vadd.f32 %v3058, %v3396
        %v3398 = vpop.f32.mrb[0].mxu0
        %v3399 = vadd.f32 %v3058, %v3398
        %v3400 = vpop.f32.mrb[0].mxu0
        %v3401 = vadd.f32 %v3062, %v3400
        %v3402 = vpop.f32.mrb[0].mxu0
        %v3403 = vadd.f32 %v3062, %v3402
        %3404 = vmatprep.mubr.bf16.mxu0 %v3229
        %3405 = vmatmul.mubr.bf16.gmra.mrb[0].mxu0 %v3228
        %v3406 = vpop.f32.mrb[0].mxu0
        %v3407 = vadd.f32 %v3066, %v3406
        %v3408 = vpop.f32.mrb[0].mxu0
        %v3409 = vadd.f32 %v3066, %v3408
        %v3410 = vpop.f32.mrb[0].mxu0
        %v3411 = vadd.f32 %v3070, %v3410
        %v3412 = vpop.f32.mrb[0].mxu0
        %v3413 = vadd.f32 %v3070, %v3412
        %3414 = vmatprep.mubr.bf16.mxu0 %v3231
        %3415 = vmatmul.mubr.bf16.gmra.mrb[0].mxu0 %v3230
        %v3416 = vpop.f32.mrb[0].mxu0
        %v3417 = vadd.f32 %v3074, %v3416
        %v3418 = vpop.f32.mrb[0].mxu0
        %v3419 = vadd.f32 %v3074, %v3418
        %v3420 = vpop.f32.mrb[0].mxu0
        %v3421 = vadd.f32 %v3078, %v3420
        %v3422 = vpop.f32.mrb[0].mxu0
        %v3423 = vadd.f32 %v3078, %v3422
        %3424 = vmatprep.mubr.bf16.mxu0 %v3233
        %3425 = vmatmul.mubr.bf16.gmra.mrb[0].mxu0 %v3232
        %v3426 = vpop.f32.mrb[0].mxu0
        %v3427 = vadd.f32 %v3082, %v3426
        %v3428 = vpop.f32.mrb[0].mxu0
        %v3429 = vadd.f32 %v3082, %v3428
        %v3430 = vpop.f32.mrb[0].mxu0
        %v3431 = vadd.f32 %v3086, %v3430
        %v3432 = vpop.f32.mrb[0].mxu0
        %v3433 = vadd.f32 %v3086, %v3432
        %3434 = vmatprep.mubr.bf16.mxu0 %v3235
        %3435 = vmatmul.mubr.bf16.gmra.mrb[0].mxu0 %v3234
        %v3436 = vpop.f32.mrb[0].mxu0
        %v3437 = vadd.f32 %v3090, %v3436
        %v3438 = vpop.f32.mrb[0].mxu0
        %v3439 = vadd.f32 %v3090, %v3438
        %v3440 = vpop.f32.mrb[0].mxu0
        %v3441 = vadd.f32 %v3094, %v3440
        %v3442 = vpop.f32.mrb[0].mxu0
        %v3443 = vadd.f32 %v3094, %v3442
        %3444 = vmatprep.mubr.bf16.mxu0 %v3237
        %3445 = vmatmul.mubr.bf16.gmra.mrb[0].mxu0 %v3236
        %v3446 = vpop.f32.mrb[0].mxu0
        %v3447 = vadd.f32 %v3098, %v3446
        %v3448 = vpop.f32.mrb[0].mxu0
        %v3449 = vadd.f32 %v3098, %v3448
        %v3450 = vpop.f32.mrb[0].mxu0
        %v3451 = vadd.f32 %v3102, %v3450
        %v3452 = vpop.f32.mrb[0].mxu0
        %v3453 = vadd.f32 %v3102, %v3452
        %3454 = vmatprep.mubr.bf16.mxu0 %v3239
        %3455 = vmatmul.mubr.bf16.gmra.mrb[0].mxu0 %v3238
        %v3456 = vpop.f32.mrb[0].mxu0
        %v3457 = vadd.f32 %v3106, %v3456
        %v3458 = vpop.f32.mrb[0].mxu0
        %v3459 = vadd.f32 %v3106, %v3458
        %v3460 = vpop.f32.mrb[0].mxu0
        %v3461 = vadd.f32 %v3110, %v3460
        %v3462 = vpop.f32.mrb[0].mxu0
        %v3463 = vadd.f32 %v3110, %v3462
        %3464 = vdwg.mxu0
        %3465 = vmatprep.subr.bf16.mxu0 %v2923
        %3466 = vmatpush1.bf16.msra.mxu0 %v2922
        %3467 = vmatprep.subr.bf16.mxu0 %v2927
        %3468 = vmatpush1.bf16.msra.mxu0 %v2926
        %3469 = vmatprep.subr.bf16.mxu0 %v2931
        %3470 = vmatpush1.bf16.msra.mxu0 %v2930
        %3471 = vmatprep.subr.bf16.mxu0 %v2935
        %3472 = vmatpush1.bf16.msra.mxu0 %v2934
        %3473 = vmatprep.subr.bf16.mxu0 %v2939
        %3474 = vmatpush1.bf16.msra.mxu0 %v2938
        %3475 = vmatprep.subr.bf16.mxu0 %v2943
        %3476 = vmatpush1.bf16.msra.mxu0 %v2942
        %3477 = vmatprep.subr.bf16.mxu0 %v2947
        %3478 = vmatpush1.bf16.msra.mxu0 %v2946
        %3479 = vmatprep.subr.bf16.mxu0 %v2951
        %3480 = vmatpush1.bf16.msra.mxu0 %v2950
        %3481 = vmatprep.subr.bf16.mxu0 %v2955
        %3482 = vmatpush1.bf16.msra.mxu0 %v2954
        %3483 = vmatprep.subr.bf16.mxu0 %v2959
        %3484 = vmatpush1.bf16.msra.mxu0 %v2958
        %3485 = vmatprep.subr.bf16.mxu0 %v2963
        %3486 = vmatpush1.bf16.msra.mxu0 %v2962
        %3487 = vmatprep.subr.bf16.mxu0 %v2967
        %3488 = vmatpush1.bf16.msra.mxu0 %v2966
        %3489 = vmatprep.subr.bf16.mxu0 %v2971
        %3490 = vmatpush1.bf16.msra.mxu0 %v2970
        %3491 = vmatprep.subr.bf16.mxu0 %v2975
        %3492 = vmatpush1.bf16.msra.mxu0 %v2974
        %3493 = vmatprep.subr.bf16.mxu0 %v2979
        %3494 = vmatpush1.bf16.msra.mxu0 %v2978
        %3495 = vmatprep.subr.bf16.mxu0 %v2983
        %3496 = vmatpush1.bf16.msra.mxu0 %v2982
        %3497 = vmatprep.mubr.bf16.mxu0 %v3209
        %3498 = vmatmul.mubr.bf16.gmra.mrb[0].mxu0 %v3208
        %v3499 = vpop.f32.mrb[0].mxu0
        %v3500 = vadd.f32 %v2986, %v3499
        %v3501 = vpop.f32.mrb[0].mxu0
        %v3502 = vadd.f32 %v2986, %v3501
        %v3503 = vpop.f32.mrb[0].mxu0
        %v3504 = vadd.f32 %v2990, %v3503
        %v3505 = vpop.f32.mrb[0].mxu0
        %v3506 = vadd.f32 %v2990, %v3505
        %3507 = vmatprep.mubr.bf16.mxu0 %v3211
        %3508 = vmatmul.mubr.bf16.gmra.mrb[0].mxu0 %v3210
        %v3509 = vpop.f32.mrb[0].mxu0
        %v3510 = vadd.f32 %v2994, %v3509
        %v3511 = vpop.f32.mrb[0].mxu0
        %v3512 = vadd.f32 %v2994, %v3511
        %v3513 = vpop.f32.mrb[0].mxu0
        %v3514 = vadd.f32 %v2998, %v3513
        %v3515 = vpop.f32.mrb[0].mxu0
        %v3516 = vadd.f32 %v2998, %v3515
        %3517 = vmatprep.mubr.bf16.mxu0 %v3213
        %3518 = vmatmul.mubr.bf16.gmra.mrb[0].mxu0 %v3212
        %v3519 = vpop.f32.mrb[0].mxu0
        %v3520 = vadd.f32 %v3002, %v3519
        %v3521 = vpop.f32.mrb[0].mxu0
        %v3522 = vadd.f32 %v3002, %v3521
        %v3523 = vpop.f32.mrb[0].mxu0
        %v3524 = vadd.f32 %v3006, %v3523
        %v3525 = vpop.f32.mrb[0].mxu0
        %v3526 = vadd.f32 %v3006, %v3525
        %3527 = vmatprep.mubr.bf16.mxu0 %v3215
        %3528 = vmatmul.mubr.bf16.gmra.mrb[0].mxu0 %v3214
        %v3529 = vpop.f32.mrb[0].mxu0
        %v3530 = vadd.f32 %v3010, %v3529
        %v3531 = vpop.f32.mrb[0].mxu0
        %v3532 = vadd.f32 %v3010, %v3531
        %v3533 = vpop.f32.mrb[0].mxu0
        %v3534 = vadd.f32 %v3014, %v3533
        %v3535 = vpop.f32.mrb[0].mxu0
        %v3536 = vadd.f32 %v3014, %v3535
        %3537 = vmatprep.mubr.bf16.mxu0 %v3217
        %3538 = vmatmul.mubr.bf16.gmra.mrb[0].mxu0 %v3216
        %v3539 = vpop.f32.mrb[0].mxu0
        %v3540 = vadd.f32 %v3018, %v3539
        %v3541 = vpop.f32.mrb[0].mxu0
        %v3542 = vadd.f32 %v3018, %v3541
        %v3543 = vpop.f32.mrb[0].mxu0
        %v3544 = vadd.f32 %v3022, %v3543
        %v3545 = vpop.f32.mrb[0].mxu0
        %v3546 = vadd.f32 %v3022, %v3545
        %3547 = vmatprep.mubr.bf16.mxu0 %v3219
        %3548 = vmatmul.mubr.bf16.gmra.mrb[0].mxu0 %v3218
        %v3549 = vpop.f32.mrb[0].mxu0
        %v3550 = vadd.f32 %v3026, %v3549
        %v3551 = vpop.f32.mrb[0].mxu0
        %v3552 = vadd.f32 %v3026, %v3551
        %v3553 = vpop.f32.mrb[0].mxu0
        %v3554 = vadd.f32 %v3030, %v3553
        %v3555 = vpop.f32.mrb[0].mxu0
        %v3556 = vadd.f32 %v3030, %v3555
        %3557 = vmatprep.mubr.bf16.mxu0 %v3221
        %3558 = vmatmul.mubr.bf16.gmra.mrb[0].mxu0 %v3220
        %v3559 = vpop.f32.mrb[0].mxu0
        %v3560 = vadd.f32 %v3034, %v3559
        %v3561 = vpop.f32.mrb[0].mxu0
        %v3562 = vadd.f32 %v3034, %v3561
        %v3563 = vpop.f32.mrb[0].mxu0
        %v3564 = vadd.f32 %v3038, %v3563
        %v3565 = vpop.f32.mrb[0].mxu0
        %v3566 = vadd.f32 %v3038, %v3565
        %3567 = vmatprep.mubr.bf16.mxu0 %v3223
        %3568 = vmatmul.mubr.bf16.gmra.mrb[0].mxu0 %v3222
        %v3569 = vpop.f32.mrb[0].mxu0
        %v3570 = vadd.f32 %v3042, %v3569
        %v3571 = vpop.f32.mrb[0].mxu0
        %v3572 = vadd.f32 %v3042, %v3571
        %v3573 = vpop.f32.mrb[0].mxu0
        %v3574 = vadd.f32 %v3046, %v3573
        %v3575 = vpop.f32.mrb[0].mxu0
        %v3576 = vadd.f32 %v3046, %v3575
        %3577 = vmatprep.mubr.bf16.mxu0 %v3225
        %3578 = vmatmul.mubr.bf16.gmra.mrb[0].mxu0 %v3224
        %v3579 = vpop.f32.mrb[0].mxu0
        %v3580 = vadd.f32 %v3050, %v3579
        %v3581 = vpop.f32.mrb[0].mxu0
        %v3582 = vadd.f32 %v3050, %v3581
        %v3583 = vpop.f32.mrb[0].mxu0
        %v3584 = vadd.f32 %v3054, %v3583
        %v3585 = vpop.f32.mrb[0].mxu0
        %v3586 = vadd.f32 %v3054, %v3585
        %3587 = vmatprep.mubr.bf16.mxu0 %v3227
        %3588 = vmatmul.mubr.bf16.gmra.mrb[0].mxu0 %v3226
        %v3589 = vpop.f32.mrb[0].mxu0
        %v3590 = vadd.f32 %v3058, %v3589
        %v3591 = vpop.f32.mrb[0].mxu0
        %v3592 = vadd.f32 %v3058, %v3591
        %v3593 = vpop.f32.mrb[0].mxu0
        %v3594 = vadd.f32 %v3062, %v3593
        %v3595 = vpop.f32.mrb[0].mxu0
        %v3596 = vadd.f32 %v3062, %v3595
        %3597 = vmatprep.mubr.bf16.mxu0 %v3229
        %3598 = vmatmul.mubr.bf16.gmra.mrb[0].mxu0 %v3228
        %v3599 = vpop.f32.mrb[0].mxu0
        %v3600 = vadd.f32 %v3066, %v3599
        %v3601 = vpop.f32.mrb[0].mxu0
        %v3602 = vadd.f32 %v3066, %v3601
        %v3603 = vpop.f32.mrb[0].mxu0
        %v3604 = vadd.f32 %v3070, %v3603
        %v3605 = vpop.f32.mrb[0].mxu0
        %v3606 = vadd.f32 %v3070, %v3605
        %3607 = vmatprep.mubr.bf16.mxu0 %v3231
        %3608 = vmatmul.mubr.bf16.gmra.mrb[0].mxu0 %v3230
        %v3609 = vpop.f32.mrb[0].mxu0
        %v3610 = vadd.f32 %v3074, %v3609
        %v3611 = vpop.f32.mrb[0].mxu0
        %v3612 = vadd.f32 %v3074, %v3611
        %v3613 = vpop.f32.mrb[0].mxu0
        %v3614 = vadd.f32 %v3078, %v3613
        %v3615 = vpop.f32.mrb[0].mxu0
        %v3616 = vadd.f32 %v3078, %v3615
        %3617 = vmatprep.mubr.bf16.mxu0 %v3233
        %3618 = vmatmul.mubr.bf16.gmra.mrb[0].mxu0 %v3232
        %v3619 = vpop.f32.mrb[0].mxu0
        %v3620 = vadd.f32 %v3082, %v3619
        %v3621 = vpop.f32.mrb[0].mxu0
        %v3622 = vadd.f32 %v3082, %v3621
        %v3623 = vpop.f32.mrb[0].mxu0
        %v3624 = vadd.f32 %v3086, %v3623
        %v3625 = vpop.f32.mrb[0].mxu0
        %v3626 = vadd.f32 %v3086, %v3625
        %3627 = vmatprep.mubr.bf16.mxu0 %v3235
        %3628 = vmatmul.mubr.bf16.gmra.mrb[0].mxu0 %v3234
        %v3629 = vpop.f32.mrb[0].mxu0
        %v3630 = vadd.f32 %v3090, %v3629
        %v3631 = vpop.f32.mrb[0].mxu0
        %v3632 = vadd.f32 %v3090, %v3631
        %v3633 = vpop.f32.mrb[0].mxu0
        %v3634 = vadd.f32 %v3094, %v3633
        %v3635 = vpop.f32.mrb[0].mxu0
        %v3636 = vadd.f32 %v3094, %v3635
        %3637 = vmatprep.mubr.bf16.mxu0 %v3237
        %3638 = vmatmul.mubr.bf16.gmra.mrb[0].mxu0 %v3236
        %v3639 = vpop.f32.mrb[0].mxu0
        %v3640 = vadd.f32 %v3098, %v3639
        %v3641 = vpop.f32.mrb[0].mxu0
        %v3642 = vadd.f32 %v3098, %v3641
        %v3643 = vpop.f32.mrb[0].mxu0
        %v3644 = vadd.f32 %v3102, %v3643
        %v3645 = vpop.f32.mrb[0].mxu0
        %v3646 = vadd.f32 %v3102, %v3645
        %3647 = vmatprep.mubr.bf16.mxu0 %v3239
        %3648 = vmatmul.mubr.bf16.gmra.mrb[0].mxu0 %v3238
        %v3649 = vpop.f32.mrb[0].mxu0
        %v3650 = vadd.f32 %v3106, %v3649
        %v3651 = vpop.f32.mrb[0].mxu0
        %v3652 = vadd.f32 %v3106, %v3651
        %v3653 = vpop.f32.mrb[0].mxu0
        %v3654 = vadd.f32 %v3110, %v3653
        %v3655 = vpop.f32.mrb[0].mxu0
        %v3656 = vadd.f32 %v3110, %v3655
        %3657 = vdwg.mxu0
        %v3658 = vmax.f32 %v3307, 0.0
        %v3659 = vmax.f32 %v3309, 0.0
        %v3660 = vmax.f32 %v3500, 0.0
        %v3661 = vmax.f32 %v3502, 0.0
        %v3662 = vmax.f32 %v3311, 0.0
        %v3663 = vmax.f32 %v3313, 0.0
        %v3664 = vmax.f32 %v3504, 0.0
        %v3665 = vmax.f32 %v3506, 0.0
        %v3666 = vmax.f32 %v3317, 0.0
        %v3667 = vmax.f32 %v3319, 0.0
        %v3668 = vmax.f32 %v3510, 0.0
        %v3669 = vmax.f32 %v3512, 0.0
        %v3670 = vmax.f32 %v3321, 0.0
        %v3671 = vmax.f32 %v3323, 0.0
        %v3672 = vmax.f32 %v3514, 0.0
        %v3673 = vmax.f32 %v3516, 0.0
        %v3674 = vmax.f32 %v3327, 0.0
        %v3675 = vmax.f32 %v3329, 0.0
        %v3676 = vmax.f32 %v3520, 0.0
        %v3677 = vmax.f32 %v3522, 0.0
        %v3678 = vmax.f32 %v3331, 0.0
        %v3679 = vmax.f32 %v3333, 0.0
        %v3680 = vmax.f32 %v3524, 0.0
        %v3681 = vmax.f32 %v3526, 0.0
        %v3682 = vmax.f32 %v3337, 0.0
        %v3683 = vmax.f32 %v3339, 0.0
        %v3684 = vmax.f32 %v3530, 0.0
        %v3685 = vmax.f32 %v3532, 0.0
        %v3686 = vmax.f32 %v3341, 0.0
        %v3687 = vmax.f32 %v3343, 0.0
        %v3688 = vmax.f32 %v3534, 0.0
        %v3689 = vmax.f32 %v3536, 0.0
        %v3690 = vmax.f32 %v3347, 0.0
        %v3691 = vmax.f32 %v3349, 0.0
        %v3692 = vmax.f32 %v3540, 0.0
        %v3693 = vmax.f32 %v3542, 0.0
        %v3694 = vmax.f32 %v3351, 0.0
        %v3695 = vmax.f32 %v3353, 0.0
        %v3696 = vmax.f32 %v3544, 0.0
        %v3697 = vmax.f32 %v3546, 0.0
        %v3698 = vmax.f32 %v3357, 0.0
        %v3699 = vmax.f32 %v3359, 0.0
        %v3700 = vmax.f32 %v3550, 0.0
        %v3701 = vmax.f32 %v3552, 0.0
        %v3702 = vmax.f32 %v3361, 0.0
        %v3703 = vmax.f32 %v3363, 0.0
        %v3704 = vmax.f32 %v3554, 0.0
        %v3705 = vmax.f32 %v3556, 0.0
        %v3706 = vmax.f32 %v3367, 0.0
        %v3707 = vmax.f32 %v3369, 0.0
        %v3708 = vmax.f32 %v3560, 0.0
        %v3709 = vmax.f32 %v3562, 0.0
        %v3710 = vmax.f32 %v3371, 0.0
        %v3711 = vmax.f32 %v3373, 0.0
        %v3712 = vmax.f32 %v3564, 0.0
        %v3713 = vmax.f32 %v3566, 0.0
        %v3714 = vmax.f32 %v3377, 0.0
        %v3715 = vmax.f32 %v3379, 0.0
        %v3716 = vmax.f32 %v3570, 0.0
        %v3717 = vmax.f32 %v3572, 0.0
        %v3718 = vmax.f32 %v3381, 0.0
        %v3719 = vmax.f32 %v3383, 0.0
        %v3720 = vmax.f32 %v3574, 0.0
        %v3721 = vmax.f32 %v3576, 0.0
        %v3722 = vmax.f32 %v3387, 0.0
        %v3723 = vmax.f32 %v3389, 0.0
        %v3724 = vmax.f32 %v3580, 0.0
        %v3725 = vmax.f32 %v3582, 0.0
        %v3726 = vmax.f32 %v3391, 0.0
        %v3727 = vmax.f32 %v3393, 0.0
        %v3728 = vmax.f32 %v3584, 0.0
        %v3729 = vmax.f32 %v3586, 0.0
        %v3730 = vmax.f32 %v3397, 0.0
        %v3731 = vmax.f32 %v3399, 0.0
        %v3732 = vmax.f32 %v3590, 0.0
        %v3733 = vmax.f32 %v3592, 0.0
        %v3734 = vmax.f32 %v3401, 0.0
        %v3735 = vmax.f32 %v3403, 0.0
        %v3736 = vmax.f32 %v3594, 0.0
        %v3737 = vmax.f32 %v3596, 0.0
        %v3738 = vmax.f32 %v3407, 0.0
        %v3739 = vmax.f32 %v3409, 0.0
        %v3740 = vmax.f32 %v3600, 0.0
        %v3741 = vmax.f32 %v3602, 0.0
        %v3742 = vmax.f32 %v3411, 0.0
        %v3743 = vmax.f32 %v3413, 0.0
        %v3744 = vmax.f32 %v3604, 0.0
        %v3745 = vmax.f32 %v3606, 0.0
        %v3746 = vmax.f32 %v3417, 0.0
        %v3747 = vmax.f32 %v3419, 0.0
        %v3748 = vmax.f32 %v3610, 0.0
        %v3749 = vmax.f32 %v3612, 0.0
        %v3750 = vmax.f32 %v3421, 0.0
        %v3751 = vmax.f32 %v3423, 0.0
        %v3752 = vmax.f32 %v3614, 0.0
        %v3753 = vmax.f32 %v3616, 0.0
        %v3754 = vmax.f32 %v3427, 0.0
        %v3755 = vmax.f32 %v3429, 0.0
        %v3756 = vmax.f32 %v3620, 0.0
        %v3757 = vmax.f32 %v3622, 0.0
        %v3758 = vmax.f32 %v3431, 0.0
        %v3759 = vmax.f32 %v3433, 0.0
        %v3760 = vmax.f32 %v3624, 0.0
        %v3761 = vmax.f32 %v3626, 0.0
        %v3762 = vmax.f32 %v3437, 0.0
        %v3763 = vmax.f32 %v3439, 0.0
        %v3764 = vmax.f32 %v3630, 0.0
        %v3765 = vmax.f32 %v3632, 0.0
        %v3766 = vmax.f32 %v3441, 0.0
        %v3767 = vmax.f32 %v3443, 0.0
        %v3768 = vmax.f32 %v3634, 0.0
        %v3769 = vmax.f32 %v3636, 0.0
        %v3770 = vmax.f32 %v3447, 0.0
        %v3771 = vmax.f32 %v3449, 0.0
        %v3772 = vmax.f32 %v3640, 0.0
        %v3773 = vmax.f32 %v3642, 0.0
        %v3774 = vmax.f32 %v3451, 0.0
        %v3775 = vmax.f32 %v3453, 0.0
        %v3776 = vmax.f32 %v3644, 0.0
        %v3777 = vmax.f32 %v3646, 0.0
        %v3778 = vmax.f32 %v3457, 0.0
        %v3779 = vmax.f32 %v3459, 0.0
        %v3780 = vmax.f32 %v3650, 0.0
        %v3781 = vmax.f32 %v3652, 0.0
        %v3782 = vmax.f32 %v3461, 0.0
        %v3783 = vmax.f32 %v3463, 0.0
        %v3784 = vmax.f32 %v3654, 0.0
        %v3785 = vmax.f32 %v3656, 0.0
        %v3786 = vld [vmem:[%s4] sm:$0xff]
        %v3787 = vld [vmem:[%s4 + $0x8] sm:$0xff]
        %v3788 = vld [vmem:[%s4 + $0x10] sm:$0xff]
        %v3789 = vld [vmem:[%s4 + $0x18] sm:$0xff]
        %v3790 = vld [vmem:[%s4 + $0x20] sm:$0xff]
        %v3791 = vld [vmem:[%s4 + $0x28] sm:$0xff]
        %v3792 = vld [vmem:[%s4 + $0x30] sm:$0xff]
        %v3793 = vld [vmem:[%s4 + $0x38] sm:$0xff]
        %v3794 = vld [vmem:[%s4 + $0x40] sm:$0xff]
        %v3795 = vld [vmem:[%s4 + $0x48] sm:$0xff]
        %v3796 = vld [vmem:[%s4 + $0x50] sm:$0xff]
        %v3797 = vld [vmem:[%s4 + $0x58] sm:$0xff]
        %v3798 = vld [vmem:[%s4 + $0x60] sm:$0xff]
        %v3799 = vld [vmem:[%s4 + $0x68] sm:$0xff]
        %v3800 = vld [vmem:[%s4 + $0x70] sm:$0xff]
        %v3801 = vld [vmem:[%s4 + $0x78] sm:$0xff]
        %v3802 = vld [vmem:[%s4 + $0x80] sm:$0xff]
        %v3803 = vld [vmem:[%s4 + $0x88] sm:$0xff]
        %v3804 = vld [vmem:[%s4 + $0x90] sm:$0xff]
        %v3805 = vld [vmem:[%s4 + $0x98] sm:$0xff]
        %v3806 = vld [vmem:[%s4 + $0xa0] sm:$0xff]
        %v3807 = vld [vmem:[%s4 + $0xa8] sm:$0xff]
        %v3808 = vld [vmem:[%s4 + $0xb0] sm:$0xff]
        %v3809 = vld [vmem:[%s4 + $0xb8] sm:$0xff]
        %v3810 = vld [vmem:[%s4 + $0xc0] sm:$0xff]
        %v3811 = vld [vmem:[%s4 + $0xc8] sm:$0xff]
        %v3812 = vld [vmem:[%s4 + $0xd0] sm:$0xff]
        %v3813 = vld [vmem:[%s4 + $0xd8] sm:$0xff]
        %v3814 = vld [vmem:[%s4 + $0xe0] sm:$0xff]
        %v3815 = vld [vmem:[%s4 + $0xe8] sm:$0xff]
        %v3816 = vld [vmem:[%s4 + $0xf0] sm:$0xff]
        %v3817 = vld [vmem:[%s4 + $0xf8] sm:$0xff]
        %3819 = vset.pattern.permute.xlu0 0
        %3820 = vperm.xlu0 %3819, %v3786
        %v3821 = vpop.permute.xlu0 %3820
        %3824 = vset.pattern.permute.xlu0 0
        %3825 = vperm.xlu0 %3824, %v3787
        %v3826 = vpop.permute.xlu0 %3825
        %3829 = vset.pattern.permute.xlu0 0
        %3830 = vperm.xlu0 %3829, %v3788
        %v3831 = vpop.permute.xlu0 %3830
        %3834 = vset.pattern.permute.xlu0 0
        %3835 = vperm.xlu0 %3834, %v3789
        %v3836 = vpop.permute.xlu0 %3835
        %3839 = vset.pattern.permute.xlu0 0
        %3840 = vperm.xlu0 %3839, %v3790
        %v3841 = vpop.permute.xlu0 %3840
        %3844 = vset.pattern.permute.xlu0 0
        %3845 = vperm.xlu0 %3844, %v3791
        %v3846 = vpop.permute.xlu0 %3845
        %3849 = vset.pattern.permute.xlu0 0
        %3850 = vperm.xlu0 %3849, %v3792
        %v3851 = vpop.permute.xlu0 %3850
        %3854 = vset.pattern.permute.xlu0 0
        %3855 = vperm.xlu0 %3854, %v3793
        %v3856 = vpop.permute.xlu0 %3855
        %3859 = vset.pattern.permute.xlu0 0
        %3860 = vperm.xlu0 %3859, %v3794
        %v3861 = vpop.permute.xlu0 %3860
        %3864 = vset.pattern.permute.xlu0 0
        %3865 = vperm.xlu0 %3864, %v3795
        %v3866 = vpop.permute.xlu0 %3865
        %3869 = vset.pattern.permute.xlu0 0
        %3870 = vperm.xlu0 %3869, %v3796
        %v3871 = vpop.permute.xlu0 %3870
        %3874 = vset.pattern.permute.xlu0 0
        %3875 = vperm.xlu0 %3874, %v3797
        %v3876 = vpop.permute.xlu0 %3875
        %3879 = vset.pattern.permute.xlu0 0
        %3880 = vperm.xlu0 %3879, %v3798
        %v3881 = vpop.permute.xlu0 %3880
        %3884 = vset.pattern.permute.xlu0 0
        %3885 = vperm.xlu0 %3884, %v3799
        %v3886 = vpop.permute.xlu0 %3885
        %3889 = vset.pattern.permute.xlu0 0
        %3890 = vperm.xlu0 %3889, %v3800
        %v3891 = vpop.permute.xlu0 %3890
        %3894 = vset.pattern.permute.xlu0 0
        %3895 = vperm.xlu0 %3894, %v3801
        %v3896 = vpop.permute.xlu0 %3895
        %3899 = vset.pattern.permute.xlu0 0
        %3900 = vperm.xlu0 %3899, %v3802
        %v3901 = vpop.permute.xlu0 %3900
        %3904 = vset.pattern.permute.xlu0 0
        %3905 = vperm.xlu0 %3904, %v3803
        %v3906 = vpop.permute.xlu0 %3905
        %3909 = vset.pattern.permute.xlu0 0
        %3910 = vperm.xlu0 %3909, %v3804
        %v3911 = vpop.permute.xlu0 %3910
        %3914 = vset.pattern.permute.xlu0 0
        %3915 = vperm.xlu0 %3914, %v3805
        %v3916 = vpop.permute.xlu0 %3915
        %3919 = vset.pattern.permute.xlu0 0
        %3920 = vperm.xlu0 %3919, %v3806
        %v3921 = vpop.permute.xlu0 %3920
        %3924 = vset.pattern.permute.xlu0 0
        %3925 = vperm.xlu0 %3924, %v3807
        %v3926 = vpop.permute.xlu0 %3925
        %3929 = vset.pattern.permute.xlu0 0
        %3930 = vperm.xlu0 %3929, %v3808
        %v3931 = vpop.permute.xlu0 %3930
        %3934 = vset.pattern.permute.xlu0 0
        %3935 = vperm.xlu0 %3934, %v3809
        %v3936 = vpop.permute.xlu0 %3935
        %3939 = vset.pattern.permute.xlu0 0
        %3940 = vperm.xlu0 %3939, %v3810
        %v3941 = vpop.permute.xlu0 %3940
        %3944 = vset.pattern.permute.xlu0 0
        %3945 = vperm.xlu0 %3944, %v3811
        %v3946 = vpop.permute.xlu0 %3945
        %3949 = vset.pattern.permute.xlu0 0
        %3950 = vperm.xlu0 %3949, %v3812
        %v3951 = vpop.permute.xlu0 %3950
        %3954 = vset.pattern.permute.xlu0 0
        %3955 = vperm.xlu0 %3954, %v3813
        %v3956 = vpop.permute.xlu0 %3955
        %3959 = vset.pattern.permute.xlu0 0
        %3960 = vperm.xlu0 %3959, %v3814
        %v3961 = vpop.permute.xlu0 %3960
        %3964 = vset.pattern.permute.xlu0 0
        %3965 = vperm.xlu0 %3964, %v3815
        %v3966 = vpop.permute.xlu0 %3965
        %3969 = vset.pattern.permute.xlu0 0
        %3970 = vperm.xlu0 %3969, %v3816
        %v3971 = vpop.permute.xlu0 %3970
        %3974 = vset.pattern.permute.xlu0 0
        %3975 = vperm.xlu0 %3974, %v3817
        %v3976 = vpop.permute.xlu0 %3975
        %v3978 = vmul.f32 %v3821, %v3658
        %v3979 = vmul.f32 %v3821, %v3659
        %v3980 = vmul.f32 %v3821, %v3660
        %v3981 = vmul.f32 %v3821, %v3661
        %v3982 = vmul.f32 %v3826, %v3662
        %v3983 = vmul.f32 %v3826, %v3663
        %v3984 = vmul.f32 %v3826, %v3664
        %v3985 = vmul.f32 %v3826, %v3665
        %v3986 = vmul.f32 %v3831, %v3666
        %v3987 = vmul.f32 %v3831, %v3667
        %v3988 = vmul.f32 %v3831, %v3668
        %v3989 = vmul.f32 %v3831, %v3669
        %v3990 = vmul.f32 %v3836, %v3670
        %v3991 = vmul.f32 %v3836, %v3671
        %v3992 = vmul.f32 %v3836, %v3672
        %v3993 = vmul.f32 %v3836, %v3673
        %v3994 = vmul.f32 %v3841, %v3674
        %v3995 = vmul.f32 %v3841, %v3675
        %v3996 = vmul.f32 %v3841, %v3676
        %v3997 = vmul.f32 %v3841, %v3677
        %v3998 = vmul.f32 %v3846, %v3678
        %v3999 = vmul.f32 %v3846, %v3679
        %v4000 = vmul.f32 %v3846, %v3680
        %v4001 = vmul.f32 %v3846, %v3681
        %v4002 = vmul.f32 %v3851, %v3682
        %v4003 = vmul.f32 %v3851, %v3683
        %v4004 = vmul.f32 %v3851, %v3684
        %v4005 = vmul.f32 %v3851, %v3685
        %v4006 = vmul.f32 %v3856, %v3686
        %v4007 = vmul.f32 %v3856, %v3687
        %v4008 = vmul.f32 %v3856, %v3688
        %v4009 = vmul.f32 %v3856, %v3689
        %v4010 = vmul.f32 %v3861, %v3690
        %v4011 = vmul.f32 %v3861, %v3691
        %v4012 = vmul.f32 %v3861, %v3692
        %v4013 = vmul.f32 %v3861, %v3693
        %v4014 = vmul.f32 %v3866, %v3694
        %v4015 = vmul.f32 %v3866, %v3695
        %v4016 = vmul.f32 %v3866, %v3696
        %v4017 = vmul.f32 %v3866, %v3697
        %v4018 = vmul.f32 %v3871, %v3698
        %v4019 = vmul.f32 %v3871, %v3699
        %v4020 = vmul.f32 %v3871, %v3700
        %v4021 = vmul.f32 %v3871, %v3701
        %v4022 = vmul.f32 %v3876, %v3702
        %v4023 = vmul.f32 %v3876, %v3703
        %v4024 = vmul.f32 %v3876, %v3704
        %v4025 = vmul.f32 %v3876, %v3705
        %v4026 = vmul.f32 %v3881, %v3706
        %v4027 = vmul.f32 %v3881, %v3707
        %v4028 = vmul.f32 %v3881, %v3708
        %v4029 = vmul.f32 %v3881, %v3709
        %v4030 = vmul.f32 %v3886, %v3710
        %v4031 = vmul.f32 %v3886, %v3711
        %v4032 = vmul.f32 %v3886, %v3712
        %v4033 = vmul.f32 %v3886, %v3713
        %v4034 = vmul.f32 %v3891, %v3714
        %v4035 = vmul.f32 %v3891, %v3715
        %v4036 = vmul.f32 %v3891, %v3716
        %v4037 = vmul.f32 %v3891, %v3717
        %v4038 = vmul.f32 %v3896, %v3718
        %v4039 = vmul.f32 %v3896, %v3719
        %v4040 = vmul.f32 %v3896, %v3720
        %v4041 = vmul.f32 %v3896, %v3721
        %v4042 = vmul.f32 %v3901, %v3722
        %v4043 = vmul.f32 %v3901, %v3723
        %v4044 = vmul.f32 %v3901, %v3724
        %v4045 = vmul.f32 %v3901, %v3725
        %v4046 = vmul.f32 %v3906, %v3726
        %v4047 = vmul.f32 %v3906, %v3727
        %v4048 = vmul.f32 %v3906, %v3728
        %v4049 = vmul.f32 %v3906, %v3729
        %v4050 = vmul.f32 %v3911, %v3730
        %v4051 = vmul.f32 %v3911, %v3731
        %v4052 = vmul.f32 %v3911, %v3732
        %v4053 = vmul.f32 %v3911, %v3733
        %v4054 = vmul.f32 %v3916, %v3734
        %v4055 = vmul.f32 %v3916, %v3735
        %v4056 = vmul.f32 %v3916, %v3736
        %v4057 = vmul.f32 %v3916, %v3737
        %v4058 = vmul.f32 %v3921, %v3738
        %v4059 = vmul.f32 %v3921, %v3739
        %v4060 = vmul.f32 %v3921, %v3740
        %v4061 = vmul.f32 %v3921, %v3741
        %v4062 = vmul.f32 %v3926, %v3742
        %v4063 = vmul.f32 %v3926, %v3743
        %v4064 = vmul.f32 %v3926, %v3744
        %v4065 = vmul.f32 %v3926, %v3745
        %v4066 = vmul.f32 %v3931, %v3746
        %v4067 = vmul.f32 %v3931, %v3747
        %v4068 = vmul.f32 %v3931, %v3748
        %v4069 = vmul.f32 %v3931, %v3749
        %v4070 = vmul.f32 %v3936, %v3750
        %v4071 = vmul.f32 %v3936, %v3751
        %v4072 = vmul.f32 %v3936, %v3752
        %v4073 = vmul.f32 %v3936, %v3753
        %v4074 = vmul.f32 %v3941, %v3754
        %v4075 = vmul.f32 %v3941, %v3755
        %v4076 = vmul.f32 %v3941, %v3756
        %v4077 = vmul.f32 %v3941, %v3757
        %v4078 = vmul.f32 %v3946, %v3758
        %v4079 = vmul.f32 %v3946, %v3759
        %v4080 = vmul.f32 %v3946, %v3760
        %v4081 = vmul.f32 %v3946, %v3761
        %v4082 = vmul.f32 %v3951, %v3762
        %v4083 = vmul.f32 %v3951, %v3763
        %v4084 = vmul.f32 %v3951, %v3764
        %v4085 = vmul.f32 %v3951, %v3765
        %v4086 = vmul.f32 %v3956, %v3766
        %v4087 = vmul.f32 %v3956, %v3767
        %v4088 = vmul.f32 %v3956, %v3768
        %v4089 = vmul.f32 %v3956, %v3769
        %v4090 = vmul.f32 %v3961, %v3770
        %v4091 = vmul.f32 %v3961, %v3771
        %v4092 = vmul.f32 %v3961, %v3772
        %v4093 = vmul.f32 %v3961, %v3773
        %v4094 = vmul.f32 %v3966, %v3774
        %v4095 = vmul.f32 %v3966, %v3775
        %v4096 = vmul.f32 %v3966, %v3776
        %v4097 = vmul.f32 %v3966, %v3777
        %v4098 = vmul.f32 %v3971, %v3778
        %v4099 = vmul.f32 %v3971, %v3779
        %v4100 = vmul.f32 %v3971, %v3780
        %v4101 = vmul.f32 %v3971, %v3781
        %v4102 = vmul.f32 %v3976, %v3782
        %v4103 = vmul.f32 %v3976, %v3783
        %v4104 = vmul.f32 %v3976, %v3784
        %v4105 = vmul.f32 %v3976, %v3785
        %v4106 = vadd.f32 %v3978, %v3982
        %v4107 = vadd.f32 %v4106, %v3986
        %v4108 = vadd.f32 %v4107, %v3990
        %v4109 = vadd.f32 %v4108, %v3994
        %v4110 = vadd.f32 %v4109, %v3998
        %v4111 = vadd.f32 %v4110, %v4002
        %v4112 = vadd.f32 %v4111, %v4006
        %v4113 = vadd.f32 %v4112, %v4010
        %v4114 = vadd.f32 %v4113, %v4014
        %v4115 = vadd.f32 %v4114, %v4018
        %v4116 = vadd.f32 %v4115, %v4022
        %v4117 = vadd.f32 %v4116, %v4026
        %v4118 = vadd.f32 %v4117, %v4030
        %v4119 = vadd.f32 %v4118, %v4034
        %v4120 = vadd.f32 %v4119, %v4038
        %v4121 = vadd.f32 %v4120, %v4042
        %v4122 = vadd.f32 %v4121, %v4046
        %v4123 = vadd.f32 %v4122, %v4050
        %v4124 = vadd.f32 %v4123, %v4054
        %v4125 = vadd.f32 %v4124, %v4058
        %v4126 = vadd.f32 %v4125, %v4062
        %v4127 = vadd.f32 %v4126, %v4066
        %v4128 = vadd.f32 %v4127, %v4070
        %v4129 = vadd.f32 %v4128, %v4074
        %v4130 = vadd.f32 %v4129, %v4078
        %v4131 = vadd.f32 %v4130, %v4082
        %v4132 = vadd.f32 %v4131, %v4086
        %v4133 = vadd.f32 %v4132, %v4090
        %v4134 = vadd.f32 %v4133, %v4094
        %v4135 = vadd.f32 %v4134, %v4098
        %v4136 = vadd.f32 %v4135, %v4102
        %v4137 = vrot.slane %v4136, 4
        %v4138 = vadd.f32 %v4136, %v4137
        %v4139 = vrot.slane %v4138, 2
        %v4140 = vadd.f32 %v4138, %v4139
        %v4141 = vrot.slane %v4140, 1
        %v4142 = vadd.f32 %v4140, %v4141
        %v4143 = vadd.f32 %v3979, %v3983
        %v4144 = vadd.f32 %v4143, %v3987
        %v4145 = vadd.f32 %v4144, %v3991
        %v4146 = vadd.f32 %v4145, %v3995
        %v4147 = vadd.f32 %v4146, %v3999
        %v4148 = vadd.f32 %v4147, %v4003
        %v4149 = vadd.f32 %v4148, %v4007
        %v4150 = vadd.f32 %v4149, %v4011
        %v4151 = vadd.f32 %v4150, %v4015
        %v4152 = vadd.f32 %v4151, %v4019
        %v4153 = vadd.f32 %v4152, %v4023
        %v4154 = vadd.f32 %v4153, %v4027
        %v4155 = vadd.f32 %v4154, %v4031
        %v4156 = vadd.f32 %v4155, %v4035
        %v4157 = vadd.f32 %v4156, %v4039
        %v4158 = vadd.f32 %v4157, %v4043
        %v4159 = vadd.f32 %v4158, %v4047
        %v4160 = vadd.f32 %v4159, %v4051
        %v4161 = vadd.f32 %v4160, %v4055
        %v4162 = vadd.f32 %v4161, %v4059
        %v4163 = vadd.f32 %v4162, %v4063
        %v4164 = vadd.f32 %v4163, %v4067
        %v4165 = vadd.f32 %v4164, %v4071
        %v4166 = vadd.f32 %v4165, %v4075
        %v4167 = vadd.f32 %v4166, %v4079
        %v4168 = vadd.f32 %v4167, %v4083
        %v4169 = vadd.f32 %v4168, %v4087
        %v4170 = vadd.f32 %v4169, %v4091
        %v4171 = vadd.f32 %v4170, %v4095
        %v4172 = vadd.f32 %v4171, %v4099
        %v4173 = vadd.f32 %v4172, %v4103
        %v4174 = vrot.slane %v4173, 4
        %v4175 = vadd.f32 %v4173, %v4174
        %v4176 = vrot.slane %v4175, 2
        %v4177 = vadd.f32 %v4175, %v4176
        %v4178 = vrot.slane %v4177, 1
        %v4179 = vadd.f32 %v4177, %v4178
        %v4180 = vadd.f32 %v3980, %v3984
        %v4181 = vadd.f32 %v4180, %v3988
        %v4182 = vadd.f32 %v4181, %v3992
        %v4183 = vadd.f32 %v4182, %v3996
        %v4184 = vadd.f32 %v4183, %v4000
        %v4185 = vadd.f32 %v4184, %v4004
        %v4186 = vadd.f32 %v4185, %v4008
        %v4187 = vadd.f32 %v4186, %v4012
        %v4188 = vadd.f32 %v4187, %v4016
        %v4189 = vadd.f32 %v4188, %v4020
        %v4190 = vadd.f32 %v4189, %v4024
        %v4191 = vadd.f32 %v4190, %v4028
        %v4192 = vadd.f32 %v4191, %v4032
        %v4193 = vadd.f32 %v4192, %v4036
        %v4194 = vadd.f32 %v4193, %v4040
        %v4195 = vadd.f32 %v4194, %v4044
        %v4196 = vadd.f32 %v4195, %v4048
        %v4197 = vadd.f32 %v4196, %v4052
        %v4198 = vadd.f32 %v4197, %v4056
        %v4199 = vadd.f32 %v4198, %v4060
        %v4200 = vadd.f32 %v4199, %v4064
        %v4201 = vadd.f32 %v4200, %v4068
        %v4202 = vadd.f32 %v4201, %v4072
        %v4203 = vadd.f32 %v4202, %v4076
        %v4204 = vadd.f32 %v4203, %v4080
        %v4205 = vadd.f32 %v4204, %v4084
        %v4206 = vadd.f32 %v4205, %v4088
        %v4207 = vadd.f32 %v4206, %v4092
        %v4208 = vadd.f32 %v4207, %v4096
        %v4209 = vadd.f32 %v4208, %v4100
        %v4210 = vadd.f32 %v4209, %v4104
        %v4211 = vrot.slane %v4210, 4
        %v4212 = vadd.f32 %v4210, %v4211
        %v4213 = vrot.slane %v4212, 2
        %v4214 = vadd.f32 %v4212, %v4213
        %v4215 = vrot.slane %v4214, 1
        %v4216 = vadd.f32 %v4214, %v4215
        %v4217 = vadd.f32 %v3981, %v3985
        %v4218 = vadd.f32 %v4217, %v3989
        %v4219 = vadd.f32 %v4218, %v3993
        %v4220 = vadd.f32 %v4219, %v3997
        %v4221 = vadd.f32 %v4220, %v4001
        %v4222 = vadd.f32 %v4221, %v4005
        %v4223 = vadd.f32 %v4222, %v4009
        %v4224 = vadd.f32 %v4223, %v4013
        %v4225 = vadd.f32 %v4224, %v4017
        %v4226 = vadd.f32 %v4225, %v4021
        %v4227 = vadd.f32 %v4226, %v4025
        %v4228 = vadd.f32 %v4227, %v4029
        %v4229 = vadd.f32 %v4228, %v4033
        %v4230 = vadd.f32 %v4229, %v4037
        %v4231 = vadd.f32 %v4230, %v4041
        %v4232 = vadd.f32 %v4231, %v4045
        %v4233 = vadd.f32 %v4232, %v4049
        %v4234 = vadd.f32 %v4233, %v4053
        %v4235 = vadd.f32 %v4234, %v4057
        %v4236 = vadd.f32 %v4235, %v4061
        %v4237 = vadd.f32 %v4236, %v4065
        %v4238 = vadd.f32 %v4237, %v4069
        %v4239 = vadd.f32 %v4238, %v4073
        %v4240 = vadd.f32 %v4239, %v4077
        %v4241 = vadd.f32 %v4240, %v4081
        %v4242 = vadd.f32 %v4241, %v4085
        %v4243 = vadd.f32 %v4242, %v4089
        %v4244 = vadd.f32 %v4243, %v4093
        %v4245 = vadd.f32 %v4244, %v4097
        %v4246 = vadd.f32 %v4245, %v4101
        %v4247 = vadd.f32 %v4246, %v4105
        %v4248 = vrot.slane %v4247, 4
        %v4249 = vadd.f32 %v4247, %v4248
        %v4250 = vrot.slane %v4249, 2
        %v4251 = vadd.f32 %v4249, %v4250
        %v4252 = vrot.slane %v4251, 1
        %v4253 = vadd.f32 %v4251, %v4252
        %v4254 = vld [vmem:[%s340] sm:$0x1]
        %4256 = vset.pattern.permute.xlu0 0
        %4257 = vperm.xlu0 %4256, %v4254
        %v4258 = vpop.permute.xlu0 %4257
        %v4260 = vlaneseq
        %v4261 = vshrl.u32 %v4260, 7
        %v4262 = vsub.s32 0, %v4261
        %v4263 = vrot.slane %v4258, %v4262
        %v4264 = vadd.f32 %v4142, %v4263
        %v4265 = vadd.f32 %v4179, %v4263
        %v4266 = vadd.f32 %v4216, %v4263
        %v4267 = vadd.f32 %v4253, %v4263
        %v4268 = vmul.f32 %v4264, 1.7
        %v4269 = vmul.f32 %v4265, 1.7
        %v4270 = vmul.f32 %v4266, 1.7
        %v4271 = vmul.f32 %v4267, 1.7
        %v4276 = vcombine.low %v4268, %v4269
        %v4277 = vcombine.low %v4270, %v4271
        %v4279 = vunpack.c.l.s4 1966171168
        %v4280 = vunpack.c.0.s8 %v4279
        %v4281 = vlaneseq
        %v4282 = vshrl.u32 %v4281, 7
        %v4283 = vsub.s32 %v4280, %v4282
        %v4284 = vrot.slane %v4276, %v4283
        %v4286 = vunpack.c.l.s4 1966171168
        %v4287 = vunpack.c.0.s8 %v4286
        %v4288 = vlaneseq
        %v4289 = vshrl.u32 %v4288, 7
        %v4290 = vsub.s32 %v4287, %v4289
        %v4291 = vrot.slane %v4277, %v4290
        %v4292 = vcombine.low %v4284, %v4291
        %v4294 = vunpack.c.l.s4 1966171168
        %v4295 = vunpack.c.0.s8 %v4294
        %v4296 = vlaneseq
        %v4297 = vshrl.u32 %v4296, 7
        %v4298 = vsub.s32 %v4295, %v4297
        %v4299 = vrot.slane %v4292, %v4298
        %v4301 = vlaneseq
        %vm4302 = vcmp.ge.s32.totalorder %v4301, 0
        %vm4303 = vcmp.lt.s32.totalorder %v4301, 512
        %vm4304 = vmand %vm4302, %vm4303
        %4305 = vst.msk [vmem:[%s322] sm:$0xf] %vm4304, %v4299
        %s4306 = sand.u32 %s207, 1
        %s4307 = scalar_lea.sflag [#allocation3], %s4306
        %s4308 = sand.u32 %s207, 1
        %s4309 = smul.addr %s4308, 4
        %s4310 = scalar_lea.vmem [#allocation2], %s4309
        // Predicated region
        $region49: #{tpu_custom_call.1} parent=47 // pred_check
          %p4311 = pneg %p217
        $region50: #{tpu_custom_call.1} parent=47 // pred_check_branch
          %4313 = sbr.rel (%p4311) target = $region52
        $region51: #{tpu_custom_call.1} parent=47 // pred_region
          %s4314 = smul.u32 4, %s26
          %s4316 = ssub.s32 64, 64
          %4317 = vsyncadd %s4307, %s4316
          %s4318 = smul.addr %s25, 4
          %s4319 = sadd.s32 %s4314, %s4318
          %s4320 = smul.addr %s4319, 16
          %s4321 = scalar_lea.hbm %s7, %s4320
          %s4323 = sshll.u32 %s4310, 4
          %s4324 = int_to_ptr.vmem [resolvable:$true] %s4323
          %4326 = dma.vmem_to_hbm [thread:$0]  %s4324, 64, %s4321, %s4307
        $region52: #{tpu_custom_call.1} parent=47 // pred_fallthru
          _
      $region48: #{tpu_custom_call.1} parent=5 // pred_fallthru
        _
      %p4327 = scmp.le.s32.totalorder 2, %s16
      // Predicated region
      $region53: #{tpu_custom_call.1} parent=5 // pred_check
        %p4328 = pneg %p4327
      $region54: #{tpu_custom_call.1} parent=5 // pred_check_branch
        %4330 = sbr.rel (%p4328) target = $region56
      $region55: #{tpu_custom_call.1} parent=5 // pred_region
        %s4331 = ssub.s32 %s16, 2
        // Predicated region
        $region57: #{tpu_custom_call.1} parent=55 // pred_check
          %p4332 = pneg %p223
        $region58: #{tpu_custom_call.1} parent=55 // pred_check_branch
          %4334 = sbr.rel (%p4332) target = $region60
        $region59: #{tpu_custom_call.1} parent=55 // pred_region
          %s4335 = sand.u32 %s208, 1
          %s4336 = scalar_lea.sflag [#allocation3], %s4335
          %s4337 = sand.u32 %s208, 1
          %s4338 = smul.addr %s4337, 4
          %s4339 = scalar_lea.vmem [#allocation2], %s4338
          %4340 = dma.done %s4336, 64
        $region60: #{tpu_custom_call.1} parent=55 // pred_fallthru
          _
      $region56: #{tpu_custom_call.1} parent=5 // pred_fallthru
        _
    $region6: #{tpu_custom_call.1} parent=1 // loop_footer
      %s20 = sadd.s32 1, %s16
    $region7: #{tpu_custom_call.1} parent=1 // loop_footer_branch
      %15 = sbr.rel target = $region3
    $region8: #{tpu_custom_call.1} parent=1 // loop_exit
      _
    %4341 = vsyncpa [#allocation3], 1
    %s4342 = scalar_lea.sflag [#allocation3], 1
    %4343 = vsyncpa %s4342, 1

// kernel: tpu_custom_call.1
$region0: #{tpu_custom_call.1}
  #allocation0 [shape = 'u32[]', space=smem, size = 0x4, offset = 0x4, fixed_abs, tag = 'smem constant byte address 0x4 - core index']
  #allocation1 [shape = 'u32[144,128]{1,0:T(1,128)}', space=vmem, size = 0x12000, scoped, tag = 'internal scratch']
  %s0 = inlined_call_operand.vmem [shape: f32[2,3,512], index: 0, kind: input, shape index: {}]
  %s1 = inlined_call_operand.vmem [shape: f32[256,3], index: 1, kind: input, shape index: {}]
  %s2 = inlined_call_operand.vmem [shape: bf16[256,256], index: 2, kind: input, shape index: {}]
  %s3 = inlined_call_operand.vmem [shape: bf16[256,256], index: 3, kind: input, shape index: {}]
  %s4 = inlined_call_operand.vmem [shape: f32[256,1], index: 4, kind: input, shape index: {}]
  %s5 = inlined_call_operand.vmem [shape: f32[2,256,3], index: 5, kind: input, shape index: {}]
  %s6 = inlined_call_operand.vmem [shape: f32[2,1,1], index: 6, kind: input, shape index: {}]
  %s7 = inlined_call_operand.hbm [shape: f32[2,1,512], index: 7, kind: output, shape index: {}]
  %s8 = sld [smem:[#allocation0]]
  $region61: #{tpu_custom_call.1} parent=0
    _
  %s10 = ssub.s32 1, %s8
  %s11 = scalar_select 0, %s10, %s8
  $region1: #{tpu_custom_call.1} parent=0
    #allocation2 [shape = 'u8[4096]{0}', space=vmem, size = 0x1000, scoped, tag = 'output window, operand 0']
    #allocation3 [shape = 's32[2]{0}', space=sflag, size = 0x8, scoped, tag = 'scoped memory for tpu_custom_call.1']
    %12 = vsyncpa [#allocation3], 0
    %s13 = scalar_lea.sflag [#allocation3], 1
    %14 = vsyncpa %s13, 0
    loop: start=0, step=1, limit=4
    $region2: #{tpu_custom_call.1} parent=1 // loop_pre_header
      _
    $region3: #{tpu_custom_call.1} parent=1 // loop_header
      %s16 = sphi 0, %s20
      %p17 = scmp.ge.s32.totalorder %s16, 4
      %s23 = sphi 0, %s35
      %s24 = sphi 0, %s31
      %s25 = sphi 0, %s23
      %s26 = sphi 0, %s24
      %s27 = sphi 0, %s25
      %s28 = sphi 0, %s26
      %s40 = sphi 0, %s42
      %s43 = sphi 0, %s40
      %s44 = sphi 0, %s43
      %s60 = sphi 0, %s44
      %s64 = sphi 0, %s64
      %s66 = sphi 0, %s64
      %s67 = sphi 0, %s66
      %s81 = sphi 0, %s67
      %s85 = sphi 0, %s85
      %s87 = sphi 0, %s85
      %s88 = sphi 0, %s87
      %s102 = sphi 0, %s88
      %s106 = sphi 0, %s106
      %s108 = sphi 0, %s106
      %s109 = sphi 0, %s108
      %s123 = sphi 0, %s109
      %s127 = sphi 0, %s127
      %s129 = sphi 0, %s127
      %s130 = sphi 0, %s129
      %s144 = sphi 0, %s130
      %s150 = sphi 0, %s152
      %s153 = sphi 0, %s150
      %s154 = sphi 0, %s153
      %s170 = sphi 0, %s154
      %s176 = sphi 0, %s178
      %s179 = sphi 0, %s176
      %s180 = sphi 0, %s179
      %s196 = sphi 0, %s180
      %s204 = sphi 0, %s206
      %s207 = sphi 0, %s204
      %s208 = sphi 0, %s207
      %s224 = sphi 0, %s208
    $region4: #{tpu_custom_call.1} parent=1 // loop_header_branch
      %19 = sbr.rel (%p17) target = $region8
    $region5: #{tpu_custom_call.1} parent=1 // loop_body
      %s21 = ssub.s32 %s16, 1
      %s22 = ssub.s32 %s16, 2
      %s29 = sadd.s32 1, %s24
      %p30 = scmp.ge.s32.totalorder %s29, 1
      %s31 = scalar_select %p30, 0, %s29
      %s32 = sadd.s32 1, %s23
      %s33 = scalar_select %p30, %s32, %s23
      %p34 = scmp.ge.s32.totalorder %s33, 2
      %s35 = scalar_select %p34, 0, %s33
      %s36 = ssub.s32 %s23, %s35
      %s37 = ssub.s32 %s24, %s31
      %s38 = sor.u32 %s36, %s37
      %p39 = scmp.eq.s32.totalorder %s38, 0
      %s41 = sadd.s32 %s40, 1
      %s42 = scalar_select %p39, %s40, %s41
      %p45 = pneg %p39
      %p46 = scmp.eq.s32.totalorder %s16, 1
      %p47 = por %p45, %p46
      %p48 = scmp.ne.s32.totalorder %s40, %s43
      %p49 = scmp.eq.s32.totalorder %s16, 0
      %p50 = por %p48, %p49
      %p51 = scmp.ne.s32.totalorder %s40, %s43
      %p52 = scmp.eq.s32.totalorder %s21, 1
      %p53 = por %p51, %p52
      %p54 = scmp.ne.s32.totalorder %s43, %s44
      %p55 = scmp.eq.s32.totalorder %s21, 0
      %p56 = por %p54, %p55
      %p57 = scmp.ne.s32.totalorder %s43, %s44
      %p58 = scmp.eq.s32.totalorder %s22, 1
      %p59 = por %p57, %p58
      %p61 = scmp.ne.s32.totalorder %s44, %s60
      %p62 = scmp.eq.s32.totalorder %s22, 0
      %p63 = por %p61, %p62
      %s65 = sadd.s32 %s64, 1
      %p68 = scmp.eq.s32.totalorder %s16, 1
      %p69 = scmp.ne.s32.totalorder %s64, %s66
      %p70 = scmp.eq.s32.totalorder %s16, 0
      %p71 = por %p69, %p70
      %p72 = scmp.ne.s32.totalorder %s64, %s66
      %p73 = scmp.eq.s32.totalorder %s21, 1
      %p74 = por %p72, %p73
      %p75 = scmp.ne.s32.totalorder %s66, %s67
      %p76 = scmp.eq.s32.totalorder %s21, 0
      %p77 = por %p75, %p76
      %p78 = scmp.ne.s32.totalorder %s66, %s67
      %p79 = scmp.eq.s32.totalorder %s22, 1
      %p80 = por %p78, %p79
      %p82 = scmp.ne.s32.totalorder %s67, %s81
      %p83 = scmp.eq.s32.totalorder %s22, 0
      %p84 = por %p82, %p83
      %s86 = sadd.s32 %s85, 1
      %p89 = scmp.eq.s32.totalorder %s16, 1
      %p90 = scmp.ne.s32.totalorder %s85, %s87
      %p91 = scmp.eq.s32.totalorder %s16, 0
      %p92 = por %p90, %p91
      %p93 = scmp.ne.s32.totalorder %s85, %s87
      %p94 = scmp.eq.s32.totalorder %s21, 1
      %p95 = por %p93, %p94
      %p96 = scmp.ne.s32.totalorder %s87, %s88
      %p97 = scmp.eq.s32.totalorder %s21, 0
      %p98 = por %p96, %p97
      %p99 = scmp.ne.s32.totalorder %s87, %s88
      %p100 = scmp.eq.s32.totalorder %s22, 1
      %p101 = por %p99, %p100
      %p103 = scmp.ne.s32.totalorder %s88, %s102
      %p104 = scmp.eq.s32.totalorder %s22, 0
      %p105 = por %p103, %p104
      %s107 = sadd.s32 %s106, 1
      %p110 = scmp.eq.s32.totalorder %s16, 1
      %p111 = scmp.ne.s32.totalorder %s106, %s108
      %p112 = scmp.eq.s32.totalorder %s16, 0
      %p113 = por %p111, %p112
      %p114 = scmp.ne.s32.totalorder %s106, %s108
      %p115 = scmp.eq.s32.totalorder %s21, 1
      %p116 = por %p114, %p115
      %p117 = scmp.ne.s32.totalorder %s108, %s109
      %p118 = scmp.eq.s32.totalorder %s21, 0
      %p119 = por %p117, %p118
      %p120 = scmp.ne.s32.totalorder %s108, %s109
      %p121 = scmp.eq.s32.totalorder %s22, 1
      %p122 = por %p120, %p121
      %p124 = scmp.ne.s32.totalorder %s109, %s123
      %p125 = scmp.eq.s32.totalorder %s22, 0
      %p126 = por %p124, %p125
      %s128 = sadd.s32 %s127, 1
      %p131 = scmp.eq.s32.totalorder %s16, 1
      %p132 = scmp.ne.s32.totalorder %s127, %s129
      %p133 = scmp.eq.s32.totalorder %s16, 0
      %p134 = por %p132, %p133
      %p135 = scmp.ne.s32.totalorder %s127, %s129
      %p136 = scmp.eq.s32.totalorder %s21, 1
      %p137 = por %p135, %p136
      %p138 = scmp.ne.s32.totalorder %s129, %s130
      %p139 = scmp.eq.s32.totalorder %s21, 0
      %p140 = por %p138, %p139
      %p141 = scmp.ne.s32.totalorder %s129, %s130
      %p142 = scmp.eq.s32.totalorder %s22, 1
      %p143 = por %p141, %p142
      %p145 = scmp.ne.s32.totalorder %s130, %s144
      %p146 = scmp.eq.s32.totalorder %s22, 0
      %p147 = por %p145, %p146
      %s148 = ssub.s32 %s23, %s35
      %p149 = scmp.eq.s32.totalorder %s148, 0
      %s151 = sadd.s32 %s150, 1
      %s152 = scalar_select %p149, %s150, %s151
      %p155 = pneg %p149
      %p156 = scmp.eq.s32.totalorder %s16, 1
      %p157 = por %p155, %p156
      %p158 = scmp.ne.s32.totalorder %s150, %s153
      %p159 = scmp.eq.s32.totalorder %s16, 0
      %p160 = por %p158, %p159
      %p161 = scmp.ne.s32.totalorder %s150, %s153
      %p162 = scmp.eq.s32.totalorder %s21, 1
      %p163 = por %p161, %p162
      %p164 = scmp.ne.s32.totalorder %s153, %s154
      %p165 = scmp.eq.s32.totalorder %s21, 0
      %p166 = por %p164, %p165
      %p167 = scmp.ne.s32.totalorder %s153, %s154
      %p168 = scmp.eq.s32.totalorder %s22, 1
      %p169 = por %p167, %p168
      %p171 = scmp.ne.s32.totalorder %s154, %s170
      %p172 = scmp.eq.s32.totalorder %s22, 0
      %p173 = por %p171, %p172
      %s174 = ssub.s32 %s23, %s35
      %p175 = scmp.eq.s32.totalorder %s174, 0
      %s177 = sadd.s32 %s176, 1
      %s178 = scalar_select %p175, %s176, %s177
      %p181 = pneg %p175
      %p182 = scmp.eq.s32.totalorder %s16, 1
      %p183 = por %p181, %p182
      %p184 = scmp.ne.s32.totalorder %s176, %s179
      %p185 = scmp.eq.s32.totalorder %s16, 0
      %p186 = por %p184, %p185
      %p187 = scmp.ne.s32.totalorder %s176, %s179
      %p188 = scmp.eq.s32.totalorder %s21, 1
      %p189 = por %p187, %p188
      %p190 = scmp.ne.s32.totalorder %s179, %s180
      %p191 = scmp.eq.s32.totalorder %s21, 0
      %p192 = por %p190, %p191
      %p193 = scmp.ne.s32.totalorder %s179, %s180
      %p194 = scmp.eq.s32.totalorder %s22, 1
      %p195 = por %p193, %p194
      %p197 = scmp.ne.s32.totalorder %s180, %s196
      %p198 = scmp.eq.s32.totalorder %s22, 0
      %p199 = por %p197, %p198
      %s200 = ssub.s32 %s23, %s35
      %s201 = ssub.s32 %s24, %s31
      %s202 = sor.u32 %s200, %s201
      %p203 = scmp.eq.s32.totalorder %s202, 0
      %s205 = sadd.s32 %s204, 1
      %s206 = scalar_select %p203, %s204, %s205
      %p209 = pneg %p203
      %p210 = scmp.eq.s32.totalorder %s16, 1
      %p211 = por %p209, %p210
      %p212 = scmp.ne.s32.totalorder %s204, %s207
      %p213 = scmp.eq.s32.totalorder %s16, 0
      %p214 = por %p212, %p213
      %p215 = scmp.ne.s32.totalorder %s204, %s207
      %p216 = scmp.eq.s32.totalorder %s21, 1
      %p217 = por %p215, %p216
      %p218 = scmp.ne.s32.totalorder %s207, %s208
      %p219 = scmp.eq.s32.totalorder %s21, 0
      %p220 = por %p218, %p219
      %p221 = scmp.ne.s32.totalorder %s207, %s208
      %p222 = scmp.eq.s32.totalorder %s22, 1
      %p223 = por %p221, %p222
      %p225 = scmp.ne.s32.totalorder %s208, %s224
      %p226 = scmp.eq.s32.totalorder %s22, 0
      %p227 = por %p225, %p226
      %p228 = scmp.le.s32.totalorder 1, %s16
      %p229 = scmp.lt.s32.totalorder %s16, 3
      %p230 = pnand %p228, %p229
      %p231 = pneg %p230
      // Predicated region
      $region9: #{tpu_custom_call.1} parent=5 // pred_check
        _
      $region10: #{tpu_custom_call.1} parent=5 // pred_check_branch
        %233 = sbr.rel (%p230) target = $region12
      $region11: #{tpu_custom_call.1} parent=5 // pred_region
        %s234 = ssub.s32 %s16, 1
        // Predicated region
        $region13: #{tpu_custom_call.1} parent=11 // pred_check
          %p235 = pneg %p77
        $region14: #{tpu_custom_call.1} parent=11 // pred_check_branch
          %237 = sbr.rel (%p235) target = $region16
        $region15: #{tpu_custom_call.1} parent=11 // pred_region
          _
        $region16: #{tpu_custom_call.1} parent=11 // pred_fallthru
          _
        // Predicated region
        $region17: #{tpu_custom_call.1} parent=11 // pred_check
          %p238 = pneg %p98
        $region18: #{tpu_custom_call.1} parent=11 // pred_check_branch
          %240 = sbr.rel (%p238) target = $region20
        $region19: #{tpu_custom_call.1} parent=11 // pred_region
          _
        $region20: #{tpu_custom_call.1} parent=11 // pred_fallthru
          _
        // Predicated region
        $region21: #{tpu_custom_call.1} parent=11 // pred_check
          %p241 = pneg %p119
        $region22: #{tpu_custom_call.1} parent=11 // pred_check_branch
          %243 = sbr.rel (%p241) target = $region24
        $region23: #{tpu_custom_call.1} parent=11 // pred_region
          _
        $region24: #{tpu_custom_call.1} parent=11 // pred_fallthru
          _
        // Predicated region
        $region25: #{tpu_custom_call.1} parent=11 // pred_check
          %p244 = pneg %p140
        $region26: #{tpu_custom_call.1} parent=11 // pred_check_branch
          %246 = sbr.rel (%p244) target = $region28
        $region27: #{tpu_custom_call.1} parent=11 // pred_region
          _
        $region28: #{tpu_custom_call.1} parent=11 // pred_fallthru
          _
      $region12: #{tpu_custom_call.1} parent=5 // pred_fallthru
        _
      %p247 = scmp.lt.s32.totalorder %s16, 2
      // Predicated region
      $region29: #{tpu_custom_call.1} parent=5 // pred_check
        %p248 = pneg %p247
      $region30: #{tpu_custom_call.1} parent=5 // pred_check_branch
        %250 = sbr.rel (%p248) target = $region32
      $region31: #{tpu_custom_call.1} parent=5 // pred_region
        // Predicated region
        $region33: #{tpu_custom_call.1} parent=31 // pred_check
          %p251 = pneg %p50
        $region34: #{tpu_custom_call.1} parent=31 // pred_check_branch
          %253 = sbr.rel (%p251) target = $region36
        $region35: #{tpu_custom_call.1} parent=31 // pred_region
          %s254 = smul.u32 4, %s24
          %p255 = scmp.lt.s32.totalorder %s23, 1
          %s256 = scalar_select %p255, %s23, 1
          %p257 = scmp.lt.s32.totalorder %s254, 3
          %s258 = scalar_select %p257, %s254, 3
          %s259 = smul.addr %s256, 4
          %s260 = sadd.s32 %s258, %s259
          %s261 = smul.addr %s260, 4
          %s262 = scalar_lea.vmem %s0, %s261
          %s263 = smul.u32 4, %s24
        $region36: #{tpu_custom_call.1} parent=31 // pred_fallthru
          _
        // Predicated region
        $region37: #{tpu_custom_call.1} parent=31 // pred_check
          %p264 = pneg %p160
        $region38: #{tpu_custom_call.1} parent=31 // pred_check_branch
          %266 = sbr.rel (%p264) target = $region40
        $region39: #{tpu_custom_call.1} parent=31 // pred_region
          %p267 = scmp.lt.s32.totalorder %s23, 1
          %s268 = scalar_select %p267, %s23, 1
          %s269 = smul.addr %s268, 32
          %s270 = smul.addr %s269, 8
          %s271 = scalar_lea.vmem %s5, %s270
        $region40: #{tpu_custom_call.1} parent=31 // pred_fallthru
          _
        // Predicated region
        $region41: #{tpu_custom_call.1} parent=31 // pred_check
          %p272 = pneg %p186
        $region42: #{tpu_custom_call.1} parent=31 // pred_check_branch
          %274 = sbr.rel (%p272) target = $region44
        $region43: #{tpu_custom_call.1} parent=31 // pred_region
          %p275 = scmp.lt.s32.totalorder %s23, 1
          %s276 = scalar_select %p275, %s23, 1
          %s277 = scalar_lea.vmem %s6, %s276
        $region44: #{tpu_custom_call.1} parent=31 // pred_fallthru
          _
      $region32: #{tpu_custom_call.1} parent=5 // pred_fallthru
        _
      %p278 = scmp.le.s32.totalorder 1, %s16
      %p279 = scmp.lt.s32.totalorder %s16, 3
      %p280 = pnand %p278, %p279
      %p281 = pneg %p280
      // Predicated region
      $region45: #{tpu_custom_call.1} parent=5 // pred_check
        _
      $region46: #{tpu_custom_call.1} parent=5 // pred_check_branch
        %283 = sbr.rel (%p280) target = $region48
      $region47: #{tpu_custom_call.1} parent=5 // pred_region
        %s284 = ssub.s32 %s16, 1
        %s285 = smul.u32 4, %s26
        %p286 = scmp.lt.s32.totalorder %s25, 1
        %s287 = scalar_select %p286, %s25, 1
        %p288 = scmp.lt.s32.totalorder %s285, 3
        %s289 = scalar_select %p288, %s285, 3
        %s290 = smul.addr %s287, 4
        %s291 = sadd.s32 %s289, %s290
        %s292 = smul.addr %s291, 4
        %s293 = scalar_lea.vmem %s0, %s292
        %p294 = pneg %p56
        %p295 = pneg %p53
        %p296 = pneg %p77
        %p297 = pneg %p74
        %p298 = pneg %p98
        %p299 = pneg %p95
        %p300 = pneg %p119
        %p301 = pneg %p116
        %p302 = pneg %p140
        %p303 = pneg %p137
        %p304 = scmp.lt.s32.totalorder %s25, 1
        %s305 = scalar_select %p304, %s25, 1
        %s306 = smul.addr %s305, 32
        %s307 = smul.addr %s306, 8
        %s308 = scalar_lea.vmem %s5, %s307
        %p309 = pneg %p166
        %p310 = pneg %p163
        %p311 = scmp.lt.s32.totalorder %s25, 1
        %s312 = scalar_select %p311, %s25, 1
        %s313 = scalar_lea.vmem %s6, %s312
        %p314 = pneg %p192
        %p315 = pneg %p189
        %p316 = pneg %p220
        %p317 = pneg %p217
        %s318 = sand.u32 %s207, 1
        %s319 = scalar_lea.sflag [#allocation3], %s318
        %s320 = sand.u32 %s207, 1
        %s321 = smul.addr %s320, 4
        %s322 = scalar_lea.vmem [#allocation2], %s321
        %s323 = smul.u32 4, %s26
        %p324 = scmp.lt.s32.totalorder %s25, 1
        %s325 = scalar_select %p324, %s25, 1
        %p326 = scmp.lt.s32.totalorder %s323, 3
        %s327 = scalar_select %p326, %s323, 3
        %s328 = smul.addr %s325, 4
        %s329 = sadd.s32 %s327, %s328
        %s330 = smul.addr %s329, 4
        %s331 = scalar_lea.vmem %s0, %s330
        %s332 = smul.u32 4, %s26
        %p333 = scmp.lt.s32.totalorder %s25, 1
        %s334 = scalar_select %p333, %s25, 1
        %s335 = smul.addr %s334, 32
        %s336 = smul.addr %s335, 8
        %s337 = scalar_lea.vmem %s5, %s336
        %p338 = scmp.lt.s32.totalorder %s25, 1
        %s339 = scalar_select %p338, %s25, 1
        %s340 = scalar_lea.vmem %s6, %s339
        %s341 = smul.u32 4, %s26
        %v342 = vld [vmem:[%s331] sm:$0x77]
        %v343 = vld [vmem:[%s331 + $0x8] sm:$0x77]
        %v344 = vld [vmem:[%s1] sm:$0xff]
        %v345 = vld [vmem:[%s1 + $0x8] sm:$0xff]
        %v346 = vld [vmem:[%s1 + $0x10] sm:$0xff]
        %v347 = vld [vmem:[%s1 + $0x18] sm:$0xff]
        %v348 = vld [vmem:[%s1 + $0x20] sm:$0xff]
        %v349 = vld [vmem:[%s1 + $0x28] sm:$0xff]
        %v350 = vld [vmem:[%s1 + $0x30] sm:$0xff]
        %v351 = vld [vmem:[%s1 + $0x38] sm:$0xff]
        %v352 = vld [vmem:[%s1 + $0x40] sm:$0xff]
        %v353 = vld [vmem:[%s1 + $0x48] sm:$0xff]
        %v354 = vld [vmem:[%s1 + $0x50] sm:$0xff]
        %v355 = vld [vmem:[%s1 + $0x58] sm:$0xff]
        %v356 = vld [vmem:[%s1 + $0x60] sm:$0xff]
        %v357 = vld [vmem:[%s1 + $0x68] sm:$0xff]
        %v358 = vld [vmem:[%s1 + $0x70] sm:$0xff]
        %v359 = vld [vmem:[%s1 + $0x78] sm:$0xff]
        %v360 = vld [vmem:[%s1 + $0x80] sm:$0xff]
        %v361 = vld [vmem:[%s1 + $0x88] sm:$0xff]
        %v362 = vld [vmem:[%s1 + $0x90] sm:$0xff]
        %v363 = vld [vmem:[%s1 + $0x98] sm:$0xff]
        %v364 = vld [vmem:[%s1 + $0xa0] sm:$0xff]
        %v365 = vld [vmem:[%s1 + $0xa8] sm:$0xff]
        %v366 = vld [vmem:[%s1 + $0xb0] sm:$0xff]
        %v367 = vld [vmem:[%s1 + $0xb8] sm:$0xff]
        %v368 = vld [vmem:[%s1 + $0xc0] sm:$0xff]
        %v369 = vld [vmem:[%s1 + $0xc8] sm:$0xff]
        %v370 = vld [vmem:[%s1 + $0xd0] sm:$0xff]
        %v371 = vld [vmem:[%s1 + $0xd8] sm:$0xff]
        %v372 = vld [vmem:[%s1 + $0xe0] sm:$0xff]
        %v373 = vld [vmem:[%s1 + $0xe8] sm:$0xff]
        %v374 = vld [vmem:[%s1 + $0xf0] sm:$0xff]
        %v375 = vld [vmem:[%s1 + $0xf8] sm:$0xff]
        %377 = vset.pattern.permute.xlu0 0
        %378 = vperm.xlu0 %377, %v344
        %v379 = vpop.permute.xlu0 %378
        %382 = vset.pattern.permute.xlu0 0
        %383 = vperm.xlu0 %382, %v345
        %v384 = vpop.permute.xlu0 %383
        %387 = vset.pattern.permute.xlu0 0
        %388 = vperm.xlu0 %387, %v346
        %v389 = vpop.permute.xlu0 %388
        %392 = vset.pattern.permute.xlu0 0
        %393 = vperm.xlu0 %392, %v347
        %v394 = vpop.permute.xlu0 %393
        %397 = vset.pattern.permute.xlu0 0
        %398 = vperm.xlu0 %397, %v348
        %v399 = vpop.permute.xlu0 %398
        %402 = vset.pattern.permute.xlu0 0
        %403 = vperm.xlu0 %402, %v349
        %v404 = vpop.permute.xlu0 %403
        %407 = vset.pattern.permute.xlu0 0
        %408 = vperm.xlu0 %407, %v350
        %v409 = vpop.permute.xlu0 %408
        %412 = vset.pattern.permute.xlu0 0
        %413 = vperm.xlu0 %412, %v351
        %v414 = vpop.permute.xlu0 %413
        %417 = vset.pattern.permute.xlu0 0
        %418 = vperm.xlu0 %417, %v352
        %v419 = vpop.permute.xlu0 %418
        %422 = vset.pattern.permute.xlu0 0
        %423 = vperm.xlu0 %422, %v353
        %v424 = vpop.permute.xlu0 %423
        %427 = vset.pattern.permute.xlu0 0
        %428 = vperm.xlu0 %427, %v354
        %v429 = vpop.permute.xlu0 %428
        %432 = vset.pattern.permute.xlu0 0
        %433 = vperm.xlu0 %432, %v355
        %v434 = vpop.permute.xlu0 %433
        %437 = vset.pattern.permute.xlu0 0
        %438 = vperm.xlu0 %437, %v356
        %v439 = vpop.permute.xlu0 %438
        %442 = vset.pattern.permute.xlu0 0
        %443 = vperm.xlu0 %442, %v357
        %v444 = vpop.permute.xlu0 %443
        %447 = vset.pattern.permute.xlu0 0
        %448 = vperm.xlu0 %447, %v358
        %v449 = vpop.permute.xlu0 %448
        %452 = vset.pattern.permute.xlu0 0
        %453 = vperm.xlu0 %452, %v359
        %v454 = vpop.permute.xlu0 %453
        %457 = vset.pattern.permute.xlu0 0
        %458 = vperm.xlu0 %457, %v360
        %v459 = vpop.permute.xlu0 %458
        %462 = vset.pattern.permute.xlu0 0
        %463 = vperm.xlu0 %462, %v361
        %v464 = vpop.permute.xlu0 %463
        %467 = vset.pattern.permute.xlu0 0
        %468 = vperm.xlu0 %467, %v362
        %v469 = vpop.permute.xlu0 %468
        %472 = vset.pattern.permute.xlu0 0
        %473 = vperm.xlu0 %472, %v363
        %v474 = vpop.permute.xlu0 %473
        %477 = vset.pattern.permute.xlu0 0
        %478 = vperm.xlu0 %477, %v364
        %v479 = vpop.permute.xlu0 %478
        %482 = vset.pattern.permute.xlu0 0
        %483 = vperm.xlu0 %482, %v365
        %v484 = vpop.permute.xlu0 %483
        %487 = vset.pattern.permute.xlu0 0
        %488 = vperm.xlu0 %487, %v366
        %v489 = vpop.permute.xlu0 %488
        %492 = vset.pattern.permute.xlu0 0
        %493 = vperm.xlu0 %492, %v367
        %v494 = vpop.permute.xlu0 %493
        %497 = vset.pattern.permute.xlu0 0
        %498 = vperm.xlu0 %497, %v368
        %v499 = vpop.permute.xlu0 %498
        %502 = vset.pattern.permute.xlu0 0
        %503 = vperm.xlu0 %502, %v369
        %v504 = vpop.permute.xlu0 %503
        %507 = vset.pattern.permute.xlu0 0
        %508 = vperm.xlu0 %507, %v370
        %v509 = vpop.permute.xlu0 %508
        %512 = vset.pattern.permute.xlu0 0
        %513 = vperm.xlu0 %512, %v371
        %v514 = vpop.permute.xlu0 %513
        %517 = vset.pattern.permute.xlu0 0
        %518 = vperm.xlu0 %517, %v372
        %v519 = vpop.permute.xlu0 %518
        %522 = vset.pattern.permute.xlu0 0
        %523 = vperm.xlu0 %522, %v373
        %v524 = vpop.permute.xlu0 %523
        %527 = vset.pattern.permute.xlu0 0
        %528 = vperm.xlu0 %527, %v374
        %v529 = vpop.permute.xlu0 %528
        %532 = vset.pattern.permute.xlu0 0
        %533 = vperm.xlu0 %532, %v375
        %v534 = vpop.permute.xlu0 %533
        %v538 = vlaneseq
        %v539 = vshrl.u32 %v538, 7
        %v540 = vsub.s32 0, %v539
        %v541 = vrot.slane %v342, %v540
        %v542 = vlaneseq
        %v543 = vshrl.u32 %v542, 7
        %v544 = vsub.s32 4, %v543
        %v545 = vrot.slane %v342, %v544
        %v546 = vlaneseq
        %v547 = vshrl.u32 %v546, 7
        %v548 = vsub.s32 0, %v547
        %v549 = vrot.slane %v343, %v548
        %v550 = vlaneseq
        %v551 = vshrl.u32 %v550, 7
        %v552 = vsub.s32 4, %v551
        %v553 = vrot.slane %v343, %v552
        %v558 = vlaneseq
        %v559 = vshrl.u32 %v558, 7
        %v560 = vsub.s32 0, %v559
        %v561 = vrot.slane %v541, %v560
        %v562 = vlaneseq
        %v563 = vshrl.u32 %v562, 7
        %v564 = vsub.s32 0, %v563
        %v565 = vrot.slane %v545, %v564
        %v566 = vlaneseq
        %v567 = vshrl.u32 %v566, 7
        %v568 = vsub.s32 0, %v567
        %v569 = vrot.slane %v549, %v568
        %v570 = vlaneseq
        %v571 = vshrl.u32 %v570, 7
        %v572 = vsub.s32 0, %v571
        %v573 = vrot.slane %v553, %v572
        %v574 = vmul.f32 %v379, %v561
        %v575 = vmul.f32 %v379, %v565
        %v576 = vmul.f32 %v379, %v569
        %v577 = vmul.f32 %v379, %v573
        %v578 = vmul.f32 %v384, %v561
        %v579 = vmul.f32 %v384, %v565
        %v580 = vmul.f32 %v384, %v569
        %v581 = vmul.f32 %v384, %v573
        %v582 = vmul.f32 %v389, %v561
        %v583 = vmul.f32 %v389, %v565
        %v584 = vmul.f32 %v389, %v569
        %v585 = vmul.f32 %v389, %v573
        %v586 = vmul.f32 %v394, %v561
        %v587 = vmul.f32 %v394, %v565
        %v588 = vmul.f32 %v394, %v569
        %v589 = vmul.f32 %v394, %v573
        %v590 = vmul.f32 %v399, %v561
        %v591 = vmul.f32 %v399, %v565
        %v592 = vmul.f32 %v399, %v569
        %v593 = vmul.f32 %v399, %v573
        %v594 = vmul.f32 %v404, %v561
        %v595 = vmul.f32 %v404, %v565
        %v596 = vmul.f32 %v404, %v569
        %v597 = vmul.f32 %v404, %v573
        %v598 = vmul.f32 %v409, %v561
        %v599 = vmul.f32 %v409, %v565
        %v600 = vmul.f32 %v409, %v569
        %v601 = vmul.f32 %v409, %v573
        %v602 = vmul.f32 %v414, %v561
        %v603 = vmul.f32 %v414, %v565
        %v604 = vmul.f32 %v414, %v569
        %v605 = vmul.f32 %v414, %v573
        %v606 = vmul.f32 %v419, %v561
        %v607 = vmul.f32 %v419, %v565
        %v608 = vmul.f32 %v419, %v569
        %v609 = vmul.f32 %v419, %v573
        %v610 = vmul.f32 %v424, %v561
        %v611 = vmul.f32 %v424, %v565
        %v612 = vmul.f32 %v424, %v569
        %v613 = vmul.f32 %v424, %v573
        %v614 = vmul.f32 %v429, %v561
        %v615 = vmul.f32 %v429, %v565
        %v616 = vmul.f32 %v429, %v569
        %v617 = vmul.f32 %v429, %v573
        %v618 = vmul.f32 %v434, %v561
        %v619 = vmul.f32 %v434, %v565
        %v620 = vmul.f32 %v434, %v569
        %v621 = vmul.f32 %v434, %v573
        %v622 = vmul.f32 %v439, %v561
        %v623 = vmul.f32 %v439, %v565
        %v624 = vmul.f32 %v439, %v569
        %v625 = vmul.f32 %v439, %v573
        %v626 = vmul.f32 %v444, %v561
        %v627 = vmul.f32 %v444, %v565
        %v628 = vmul.f32 %v444, %v569
        %v629 = vmul.f32 %v444, %v573
        %v630 = vmul.f32 %v449, %v561
        %v631 = vmul.f32 %v449, %v565
        %v632 = vmul.f32 %v449, %v569
        %v633 = vmul.f32 %v449, %v573
        %v634 = vmul.f32 %v454, %v561
        %v635 = vmul.f32 %v454, %v565
        %v636 = vmul.f32 %v454, %v569
        %v637 = vmul.f32 %v454, %v573
        %v638 = vmul.f32 %v459, %v561
        %v639 = vmul.f32 %v459, %v565
        %v640 = vmul.f32 %v459, %v569
        %v641 = vmul.f32 %v459, %v573
        %v642 = vmul.f32 %v464, %v561
        %v643 = vmul.f32 %v464, %v565
        %v644 = vmul.f32 %v464, %v569
        %v645 = vmul.f32 %v464, %v573
        %v646 = vmul.f32 %v469, %v561
        %v647 = vmul.f32 %v469, %v565
        %v648 = vmul.f32 %v469, %v569
        %v649 = vmul.f32 %v469, %v573
        %v650 = vmul.f32 %v474, %v561
        %v651 = vmul.f32 %v474, %v565
        %v652 = vmul.f32 %v474, %v569
        %v653 = vmul.f32 %v474, %v573
        %v654 = vmul.f32 %v479, %v561
        %v655 = vmul.f32 %v479, %v565
        %v656 = vmul.f32 %v479, %v569
        %v657 = vmul.f32 %v479, %v573
        %v658 = vmul.f32 %v484, %v561
        %v659 = vmul.f32 %v484, %v565
        %v660 = vmul.f32 %v484, %v569
        %v661 = vmul.f32 %v484, %v573
        %v662 = vmul.f32 %v489, %v561
        %v663 = vmul.f32 %v489, %v565
        %v664 = vmul.f32 %v489, %v569
        %v665 = vmul.f32 %v489, %v573
        %v666 = vmul.f32 %v494, %v561
        %v667 = vmul.f32 %v494, %v565
        %v668 = vmul.f32 %v494, %v569
        %v669 = vmul.f32 %v494, %v573
        %v670 = vmul.f32 %v499, %v561
        %v671 = vmul.f32 %v499, %v565
        %v672 = vmul.f32 %v499, %v569
        %v673 = vmul.f32 %v499, %v573
        %v674 = vmul.f32 %v504, %v561
        %v675 = vmul.f32 %v504, %v565
        %v676 = vmul.f32 %v504, %v569
        %v677 = vmul.f32 %v504, %v573
        %v678 = vmul.f32 %v509, %v561
        %v679 = vmul.f32 %v509, %v565
        %v680 = vmul.f32 %v509, %v569
        %v681 = vmul.f32 %v509, %v573
        %v682 = vmul.f32 %v514, %v561
        %v683 = vmul.f32 %v514, %v565
        %v684 = vmul.f32 %v514, %v569
        %v685 = vmul.f32 %v514, %v573
        %v686 = vmul.f32 %v519, %v561
        %v687 = vmul.f32 %v519, %v565
        %v688 = vmul.f32 %v519, %v569
        %v689 = vmul.f32 %v519, %v573
        %v690 = vmul.f32 %v524, %v561
        %v691 = vmul.f32 %v524, %v565
        %v692 = vmul.f32 %v524, %v569
        %v693 = vmul.f32 %v524, %v573
        %v694 = vmul.f32 %v529, %v561
        %v695 = vmul.f32 %v529, %v565
        %v696 = vmul.f32 %v529, %v569
        %v697 = vmul.f32 %v529, %v573
        %v698 = vmul.f32 %v534, %v561
        %v699 = vmul.f32 %v534, %v565
        %v700 = vmul.f32 %v534, %v569
        %v701 = vmul.f32 %v534, %v573
        %702 = vset.pattern.permute.xlu0 1
        %703 = vperm.xlu0 %702, %v344
        %v704 = vpop.permute.xlu0 %703
        %706 = vset.pattern.permute.xlu0 1
        %707 = vperm.xlu0 %706, %v345
        %v708 = vpop.permute.xlu0 %707
        %710 = vset.pattern.permute.xlu0 1
        %711 = vperm.xlu0 %710, %v346
        %v712 = vpop.permute.xlu0 %711
        %714 = vset.pattern.permute.xlu0 1
        %715 = vperm.xlu0 %714, %v347
        %v716 = vpop.permute.xlu0 %715
        %718 = vset.pattern.permute.xlu0 1
        %719 = vperm.xlu0 %718, %v348
        %v720 = vpop.permute.xlu0 %719
        %722 = vset.pattern.permute.xlu0 1
        %723 = vperm.xlu0 %722, %v349
        %v724 = vpop.permute.xlu0 %723
        %726 = vset.pattern.permute.xlu0 1
        %727 = vperm.xlu0 %726, %v350
        %v728 = vpop.permute.xlu0 %727
        %730 = vset.pattern.permute.xlu0 1
        %731 = vperm.xlu0 %730, %v351
        %v732 = vpop.permute.xlu0 %731
        %734 = vset.pattern.permute.xlu0 1
        %735 = vperm.xlu0 %734, %v352
        %v736 = vpop.permute.xlu0 %735
        %738 = vset.pattern.permute.xlu0 1
        %739 = vperm.xlu0 %738, %v353
        %v740 = vpop.permute.xlu0 %739
        %742 = vset.pattern.permute.xlu0 1
        %743 = vperm.xlu0 %742, %v354
        %v744 = vpop.permute.xlu0 %743
        %746 = vset.pattern.permute.xlu0 1
        %747 = vperm.xlu0 %746, %v355
        %v748 = vpop.permute.xlu0 %747
        %750 = vset.pattern.permute.xlu0 1
        %751 = vperm.xlu0 %750, %v356
        %v752 = vpop.permute.xlu0 %751
        %754 = vset.pattern.permute.xlu0 1
        %755 = vperm.xlu0 %754, %v357
        %v756 = vpop.permute.xlu0 %755
        %758 = vset.pattern.permute.xlu0 1
        %759 = vperm.xlu0 %758, %v358
        %v760 = vpop.permute.xlu0 %759
        %762 = vset.pattern.permute.xlu0 1
        %763 = vperm.xlu0 %762, %v359
        %v764 = vpop.permute.xlu0 %763
        %766 = vset.pattern.permute.xlu0 1
        %767 = vperm.xlu0 %766, %v360
        %v768 = vpop.permute.xlu0 %767
        %770 = vset.pattern.permute.xlu0 1
        %771 = vperm.xlu0 %770, %v361
        %v772 = vpop.permute.xlu0 %771
        %774 = vset.pattern.permute.xlu0 1
        %775 = vperm.xlu0 %774, %v362
        %v776 = vpop.permute.xlu0 %775
        %778 = vset.pattern.permute.xlu0 1
        %779 = vperm.xlu0 %778, %v363
        %v780 = vpop.permute.xlu0 %779
        %782 = vset.pattern.permute.xlu0 1
        %783 = vperm.xlu0 %782, %v364
        %v784 = vpop.permute.xlu0 %783
        %786 = vset.pattern.permute.xlu0 1
        %787 = vperm.xlu0 %786, %v365
        %v788 = vpop.permute.xlu0 %787
        %790 = vset.pattern.permute.xlu0 1
        %791 = vperm.xlu0 %790, %v366
        %v792 = vpop.permute.xlu0 %791
        %794 = vset.pattern.permute.xlu0 1
        %795 = vperm.xlu0 %794, %v367
        %v796 = vpop.permute.xlu0 %795
        %798 = vset.pattern.permute.xlu0 1
        %799 = vperm.xlu0 %798, %v368
        %v800 = vpop.permute.xlu0 %799
        %802 = vset.pattern.permute.xlu0 1
        %803 = vperm.xlu0 %802, %v369
        %v804 = vpop.permute.xlu0 %803
        %806 = vset.pattern.permute.xlu0 1
        %807 = vperm.xlu0 %806, %v370
        %v808 = vpop.permute.xlu0 %807
        %810 = vset.pattern.permute.xlu0 1
        %811 = vperm.xlu0 %810, %v371
        %v812 = vpop.permute.xlu0 %811
        %814 = vset.pattern.permute.xlu0 1
        %815 = vperm.xlu0 %814, %v372
        %v816 = vpop.permute.xlu0 %815
        %818 = vset.pattern.permute.xlu0 1
        %819 = vperm.xlu0 %818, %v373
        %v820 = vpop.permute.xlu0 %819
        %822 = vset.pattern.permute.xlu0 1
        %823 = vperm.xlu0 %822, %v374
        %v824 = vpop.permute.xlu0 %823
        %826 = vset.pattern.permute.xlu0 1
        %827 = vperm.xlu0 %826, %v375
        %v828 = vpop.permute.xlu0 %827
        %v830 = vlaneseq
        %v831 = vshrl.u32 %v830, 7
        %v832 = vsub.s32 1, %v831
        %v833 = vrot.slane %v342, %v832
        %v834 = vlaneseq
        %v835 = vshrl.u32 %v834, 7
        %v836 = vsub.s32 5, %v835
        %v837 = vrot.slane %v342, %v836
        %v838 = vlaneseq
        %v839 = vshrl.u32 %v838, 7
        %v840 = vsub.s32 1, %v839
        %v841 = vrot.slane %v343, %v840
        %v842 = vlaneseq
        %v843 = vshrl.u32 %v842, 7
        %v844 = vsub.s32 5, %v843
        %v845 = vrot.slane %v343, %v844
        %v850 = vlaneseq
        %v851 = vshrl.u32 %v850, 7
        %v852 = vsub.s32 1, %v851
        %v853 = vrot.slane %v833, %v852
        %v854 = vlaneseq
        %v855 = vshrl.u32 %v854, 7
        %v856 = vsub.s32 1, %v855
        %v857 = vrot.slane %v837, %v856
        %v858 = vlaneseq
        %v859 = vshrl.u32 %v858, 7
        %v860 = vsub.s32 1, %v859
        %v861 = vrot.slane %v841, %v860
        %v862 = vlaneseq
        %v863 = vshrl.u32 %v862, 7
        %v864 = vsub.s32 1, %v863
        %v865 = vrot.slane %v845, %v864
        %v866 = vmul.f32 %v704, %v853
        %v867 = vmul.f32 %v704, %v857
        %v868 = vmul.f32 %v704, %v861
        %v869 = vmul.f32 %v704, %v865
        %v870 = vmul.f32 %v708, %v853
        %v871 = vmul.f32 %v708, %v857
        %v872 = vmul.f32 %v708, %v861
        %v873 = vmul.f32 %v708, %v865
        %v874 = vmul.f32 %v712, %v853
        %v875 = vmul.f32 %v712, %v857
        %v876 = vmul.f32 %v712, %v861
        %v877 = vmul.f32 %v712, %v865
        %v878 = vmul.f32 %v716, %v853
        %v879 = vmul.f32 %v716, %v857
        %v880 = vmul.f32 %v716, %v861
        %v881 = vmul.f32 %v716, %v865
        %v882 = vmul.f32 %v720, %v853
        %v883 = vmul.f32 %v720, %v857
        %v884 = vmul.f32 %v720, %v861
        %v885 = vmul.f32 %v720, %v865
        %v886 = vmul.f32 %v724, %v853
        %v887 = vmul.f32 %v724, %v857
        %v888 = vmul.f32 %v724, %v861
        %v889 = vmul.f32 %v724, %v865
        %v890 = vmul.f32 %v728, %v853
        %v891 = vmul.f32 %v728, %v857
        %v892 = vmul.f32 %v728, %v861
        %v893 = vmul.f32 %v728, %v865
        %v894 = vmul.f32 %v732, %v853
        %v895 = vmul.f32 %v732, %v857
        %v896 = vmul.f32 %v732, %v861
        %v897 = vmul.f32 %v732, %v865
        %v898 = vmul.f32 %v736, %v853
        %v899 = vmul.f32 %v736, %v857
        %v900 = vmul.f32 %v736, %v861
        %v901 = vmul.f32 %v736, %v865
        %v902 = vmul.f32 %v740, %v853
        %v903 = vmul.f32 %v740, %v857
        %v904 = vmul.f32 %v740, %v861
        %v905 = vmul.f32 %v740, %v865
        %v906 = vmul.f32 %v744, %v853
        %v907 = vmul.f32 %v744, %v857
        %v908 = vmul.f32 %v744, %v861
        %v909 = vmul.f32 %v744, %v865
        %v910 = vmul.f32 %v748, %v853
        %v911 = vmul.f32 %v748, %v857
        %v912 = vmul.f32 %v748, %v861
        %v913 = vmul.f32 %v748, %v865
        %v914 = vmul.f32 %v752, %v853
        %v915 = vmul.f32 %v752, %v857
        %v916 = vmul.f32 %v752, %v861
        %v917 = vmul.f32 %v752, %v865
        %v918 = vmul.f32 %v756, %v853
        %v919 = vmul.f32 %v756, %v857
        %v920 = vmul.f32 %v756, %v861
        %v921 = vmul.f32 %v756, %v865
        %v922 = vmul.f32 %v760, %v853
        %v923 = vmul.f32 %v760, %v857
        %v924 = vmul.f32 %v760, %v861
        %v925 = vmul.f32 %v760, %v865
        %v926 = vmul.f32 %v764, %v853
        %v927 = vmul.f32 %v764, %v857
        %v928 = vmul.f32 %v764, %v861
        %v929 = vmul.f32 %v764, %v865
        %v930 = vmul.f32 %v768, %v853
        %v931 = vmul.f32 %v768, %v857
        %v932 = vmul.f32 %v768, %v861
        %v933 = vmul.f32 %v768, %v865
        %v934 = vmul.f32 %v772, %v853
        %v935 = vmul.f32 %v772, %v857
        %v936 = vmul.f32 %v772, %v861
        %v937 = vmul.f32 %v772, %v865
        %v938 = vmul.f32 %v776, %v853
        %v939 = vmul.f32 %v776, %v857
        %v940 = vmul.f32 %v776, %v861
        %v941 = vmul.f32 %v776, %v865
        %v942 = vmul.f32 %v780, %v853
        %v943 = vmul.f32 %v780, %v857
        %v944 = vmul.f32 %v780, %v861
        %v945 = vmul.f32 %v780, %v865
        %v946 = vmul.f32 %v784, %v853
        %v947 = vmul.f32 %v784, %v857
        %v948 = vmul.f32 %v784, %v861
        %v949 = vmul.f32 %v784, %v865
        %v950 = vmul.f32 %v788, %v853
        %v951 = vmul.f32 %v788, %v857
        %v952 = vmul.f32 %v788, %v861
        %v953 = vmul.f32 %v788, %v865
        %v954 = vmul.f32 %v792, %v853
        %v955 = vmul.f32 %v792, %v857
        %v956 = vmul.f32 %v792, %v861
        %v957 = vmul.f32 %v792, %v865
        %v958 = vmul.f32 %v796, %v853
        %v959 = vmul.f32 %v796, %v857
        %v960 = vmul.f32 %v796, %v861
        %v961 = vmul.f32 %v796, %v865
        %v962 = vmul.f32 %v800, %v853
        %v963 = vmul.f32 %v800, %v857
        %v964 = vmul.f32 %v800, %v861
        %v965 = vmul.f32 %v800, %v865
        %v966 = vmul.f32 %v804, %v853
        %v967 = vmul.f32 %v804, %v857
        %v968 = vmul.f32 %v804, %v861
        %v969 = vmul.f32 %v804, %v865
        %v970 = vmul.f32 %v808, %v853
        %v971 = vmul.f32 %v808, %v857
        %v972 = vmul.f32 %v808, %v861
        %v973 = vmul.f32 %v808, %v865
        %v974 = vmul.f32 %v812, %v853
        %v975 = vmul.f32 %v812, %v857
        %v976 = vmul.f32 %v812, %v861
        %v977 = vmul.f32 %v812, %v865
        %v978 = vmul.f32 %v816, %v853
        %v979 = vmul.f32 %v816, %v857
        %v980 = vmul.f32 %v816, %v861
        %v981 = vmul.f32 %v816, %v865
        %v982 = vmul.f32 %v820, %v853
        %v983 = vmul.f32 %v820, %v857
        %v984 = vmul.f32 %v820, %v861
        %v985 = vmul.f32 %v820, %v865
        %v986 = vmul.f32 %v824, %v853
        %v987 = vmul.f32 %v824, %v857
        %v988 = vmul.f32 %v824, %v861
        %v989 = vmul.f32 %v824, %v865
        %v990 = vmul.f32 %v828, %v853
        %v991 = vmul.f32 %v828, %v857
        %v992 = vmul.f32 %v828, %v861
        %v993 = vmul.f32 %v828, %v865
        %v994 = vadd.f32 %v574, %v866
        %v995 = vadd.f32 %v575, %v867
        %v996 = vadd.f32 %v576, %v868
        %v997 = vadd.f32 %v577, %v869
        %v998 = vadd.f32 %v578, %v870
        %v999 = vadd.f32 %v579, %v871
        %v1000 = vadd.f32 %v580, %v872
        %v1001 = vadd.f32 %v581, %v873
        %v1002 = vadd.f32 %v582, %v874
        %v1003 = vadd.f32 %v583, %v875
        %v1004 = vadd.f32 %v584, %v876
        %v1005 = vadd.f32 %v585, %v877
        %v1006 = vadd.f32 %v586, %v878
        %v1007 = vadd.f32 %v587, %v879
        %v1008 = vadd.f32 %v588, %v880
        %v1009 = vadd.f32 %v589, %v881
        %v1010 = vadd.f32 %v590, %v882
        %v1011 = vadd.f32 %v591, %v883
        %v1012 = vadd.f32 %v592, %v884
        %v1013 = vadd.f32 %v593, %v885
        %v1014 = vadd.f32 %v594, %v886
        %v1015 = vadd.f32 %v595, %v887
        %v1016 = vadd.f32 %v596, %v888
        %v1017 = vadd.f32 %v597, %v889
        %v1018 = vadd.f32 %v598, %v890
        %v1019 = vadd.f32 %v599, %v891
        %v1020 = vadd.f32 %v600, %v892
        %v1021 = vadd.f32 %v601, %v893
        %v1022 = vadd.f32 %v602, %v894
        %v1023 = vadd.f32 %v603, %v895
        %v1024 = vadd.f32 %v604, %v896
        %v1025 = vadd.f32 %v605, %v897
        %v1026 = vadd.f32 %v606, %v898
        %v1027 = vadd.f32 %v607, %v899
        %v1028 = vadd.f32 %v608, %v900
        %v1029 = vadd.f32 %v609, %v901
        %v1030 = vadd.f32 %v610, %v902
        %v1031 = vadd.f32 %v611, %v903
        %v1032 = vadd.f32 %v612, %v904
        %v1033 = vadd.f32 %v613, %v905
        %v1034 = vadd.f32 %v614, %v906
        %v1035 = vadd.f32 %v615, %v907
        %v1036 = vadd.f32 %v616, %v908
        %v1037 = vadd.f32 %v617, %v909
        %v1038 = vadd.f32 %v618, %v910
        %v1039 = vadd.f32 %v619, %v911
        %v1040 = vadd.f32 %v620, %v912
        %v1041 = vadd.f32 %v621, %v913
        %v1042 = vadd.f32 %v622, %v914
        %v1043 = vadd.f32 %v623, %v915
        %v1044 = vadd.f32 %v624, %v916
        %v1045 = vadd.f32 %v625, %v917
        %v1046 = vadd.f32 %v626, %v918
        %v1047 = vadd.f32 %v627, %v919
        %v1048 = vadd.f32 %v628, %v920
        %v1049 = vadd.f32 %v629, %v921
        %v1050 = vadd.f32 %v630, %v922
        %v1051 = vadd.f32 %v631, %v923
        %v1052 = vadd.f32 %v632, %v924
        %v1053 = vadd.f32 %v633, %v925
        %v1054 = vadd.f32 %v634, %v926
        %v1055 = vadd.f32 %v635, %v927
        %v1056 = vadd.f32 %v636, %v928
        %v1057 = vadd.f32 %v637, %v929
        %v1058 = vadd.f32 %v638, %v930
        %v1059 = vadd.f32 %v639, %v931
        %v1060 = vadd.f32 %v640, %v932
        %v1061 = vadd.f32 %v641, %v933
        %v1062 = vadd.f32 %v642, %v934
        %v1063 = vadd.f32 %v643, %v935
        %v1064 = vadd.f32 %v644, %v936
        %v1065 = vadd.f32 %v645, %v937
        %v1066 = vadd.f32 %v646, %v938
        %v1067 = vadd.f32 %v647, %v939
        %v1068 = vadd.f32 %v648, %v940
        %v1069 = vadd.f32 %v649, %v941
        %v1070 = vadd.f32 %v650, %v942
        %v1071 = vadd.f32 %v651, %v943
        %v1072 = vadd.f32 %v652, %v944
        %v1073 = vadd.f32 %v653, %v945
        %v1074 = vadd.f32 %v654, %v946
        %v1075 = vadd.f32 %v655, %v947
        %v1076 = vadd.f32 %v656, %v948
        %v1077 = vadd.f32 %v657, %v949
        %v1078 = vadd.f32 %v658, %v950
        %v1079 = vadd.f32 %v659, %v951
        %v1080 = vadd.f32 %v660, %v952
        %v1081 = vadd.f32 %v661, %v953
        %v1082 = vadd.f32 %v662, %v954
        %v1083 = vadd.f32 %v663, %v955
        %v1084 = vadd.f32 %v664, %v956
        %v1085 = vadd.f32 %v665, %v957
        %v1086 = vadd.f32 %v666, %v958
        %v1087 = vadd.f32 %v667, %v959
        %v1088 = vadd.f32 %v668, %v960
        %v1089 = vadd.f32 %v669, %v961
        %v1090 = vadd.f32 %v670, %v962
        %v1091 = vadd.f32 %v671, %v963
        %v1092 = vadd.f32 %v672, %v964
        %v1093 = vadd.f32 %v673, %v965
        %v1094 = vadd.f32 %v674, %v966
        %v1095 = vadd.f32 %v675, %v967
        %v1096 = vadd.f32 %v676, %v968
        %v1097 = vadd.f32 %v677, %v969
        %v1098 = vadd.f32 %v678, %v970
        %v1099 = vadd.f32 %v679, %v971
        %v1100 = vadd.f32 %v680, %v972
        %v1101 = vadd.f32 %v681, %v973
        %v1102 = vadd.f32 %v682, %v974
        %v1103 = vadd.f32 %v683, %v975
        %v1104 = vadd.f32 %v684, %v976
        %v1105 = vadd.f32 %v685, %v977
        %v1106 = vadd.f32 %v686, %v978
        %v1107 = vadd.f32 %v687, %v979
        %v1108 = vadd.f32 %v688, %v980
        %v1109 = vadd.f32 %v689, %v981
        %v1110 = vadd.f32 %v690, %v982
        %v1111 = vadd.f32 %v691, %v983
        %v1112 = vadd.f32 %v692, %v984
        %v1113 = vadd.f32 %v693, %v985
        %v1114 = vadd.f32 %v694, %v986
        %v1115 = vadd.f32 %v695, %v987
        %v1116 = vadd.f32 %v696, %v988
        %v1117 = vadd.f32 %v697, %v989
        %v1118 = vadd.f32 %v698, %v990
        %v1119 = vadd.f32 %v699, %v991
        %v1120 = vadd.f32 %v700, %v992
        %v1121 = vadd.f32 %v701, %v993
        %1122 = vset.pattern.permute.xlu0 2
        %1123 = vperm.xlu0 %1122, %v344
        %v1124 = vpop.permute.xlu0 %1123
        %1126 = vset.pattern.permute.xlu0 2
        %1127 = vperm.xlu0 %1126, %v345
        %v1128 = vpop.permute.xlu0 %1127
        %1130 = vset.pattern.permute.xlu0 2
        %1131 = vperm.xlu0 %1130, %v346
        %v1132 = vpop.permute.xlu0 %1131
        %1134 = vset.pattern.permute.xlu0 2
        %1135 = vperm.xlu0 %1134, %v347
        %v1136 = vpop.permute.xlu0 %1135
        %1138 = vset.pattern.permute.xlu0 2
        %1139 = vperm.xlu0 %1138, %v348
        %v1140 = vpop.permute.xlu0 %1139
        %1142 = vset.pattern.permute.xlu0 2
        %1143 = vperm.xlu0 %1142, %v349
        %v1144 = vpop.permute.xlu0 %1143
        %1146 = vset.pattern.permute.xlu0 2
        %1147 = vperm.xlu0 %1146, %v350
        %v1148 = vpop.permute.xlu0 %1147
        %1150 = vset.pattern.permute.xlu0 2
        %1151 = vperm.xlu0 %1150, %v351
        %v1152 = vpop.permute.xlu0 %1151
        %1154 = vset.pattern.permute.xlu0 2
        %1155 = vperm.xlu0 %1154, %v352
        %v1156 = vpop.permute.xlu0 %1155
        %1158 = vset.pattern.permute.xlu0 2
        %1159 = vperm.xlu0 %1158, %v353
        %v1160 = vpop.permute.xlu0 %1159
        %1162 = vset.pattern.permute.xlu0 2
        %1163 = vperm.xlu0 %1162, %v354
        %v1164 = vpop.permute.xlu0 %1163
        %1166 = vset.pattern.permute.xlu0 2
        %1167 = vperm.xlu0 %1166, %v355
        %v1168 = vpop.permute.xlu0 %1167
        %1170 = vset.pattern.permute.xlu0 2
        %1171 = vperm.xlu0 %1170, %v356
        %v1172 = vpop.permute.xlu0 %1171
        %1174 = vset.pattern.permute.xlu0 2
        %1175 = vperm.xlu0 %1174, %v357
        %v1176 = vpop.permute.xlu0 %1175
        %1178 = vset.pattern.permute.xlu0 2
        %1179 = vperm.xlu0 %1178, %v358
        %v1180 = vpop.permute.xlu0 %1179
        %1182 = vset.pattern.permute.xlu0 2
        %1183 = vperm.xlu0 %1182, %v359
        %v1184 = vpop.permute.xlu0 %1183
        %1186 = vset.pattern.permute.xlu0 2
        %1187 = vperm.xlu0 %1186, %v360
        %v1188 = vpop.permute.xlu0 %1187
        %1190 = vset.pattern.permute.xlu0 2
        %1191 = vperm.xlu0 %1190, %v361
        %v1192 = vpop.permute.xlu0 %1191
        %1194 = vset.pattern.permute.xlu0 2
        %1195 = vperm.xlu0 %1194, %v362
        %v1196 = vpop.permute.xlu0 %1195
        %1198 = vset.pattern.permute.xlu0 2
        %1199 = vperm.xlu0 %1198, %v363
        %v1200 = vpop.permute.xlu0 %1199
        %1202 = vset.pattern.permute.xlu0 2
        %1203 = vperm.xlu0 %1202, %v364
        %v1204 = vpop.permute.xlu0 %1203
        %1206 = vset.pattern.permute.xlu0 2
        %1207 = vperm.xlu0 %1206, %v365
        %v1208 = vpop.permute.xlu0 %1207
        %1210 = vset.pattern.permute.xlu0 2
        %1211 = vperm.xlu0 %1210, %v366
        %v1212 = vpop.permute.xlu0 %1211
        %1214 = vset.pattern.permute.xlu0 2
        %1215 = vperm.xlu0 %1214, %v367
        %v1216 = vpop.permute.xlu0 %1215
        %1218 = vset.pattern.permute.xlu0 2
        %1219 = vperm.xlu0 %1218, %v368
        %v1220 = vpop.permute.xlu0 %1219
        %1222 = vset.pattern.permute.xlu0 2
        %1223 = vperm.xlu0 %1222, %v369
        %v1224 = vpop.permute.xlu0 %1223
        %1226 = vset.pattern.permute.xlu0 2
        %1227 = vperm.xlu0 %1226, %v370
        %v1228 = vpop.permute.xlu0 %1227
        %1230 = vset.pattern.permute.xlu0 2
        %1231 = vperm.xlu0 %1230, %v371
        %v1232 = vpop.permute.xlu0 %1231
        %1234 = vset.pattern.permute.xlu0 2
        %1235 = vperm.xlu0 %1234, %v372
        %v1236 = vpop.permute.xlu0 %1235
        %1238 = vset.pattern.permute.xlu0 2
        %1239 = vperm.xlu0 %1238, %v373
        %v1240 = vpop.permute.xlu0 %1239
        %1242 = vset.pattern.permute.xlu0 2
        %1243 = vperm.xlu0 %1242, %v374
        %v1244 = vpop.permute.xlu0 %1243
        %1246 = vset.pattern.permute.xlu0 2
        %1247 = vperm.xlu0 %1246, %v375
        %v1248 = vpop.permute.xlu0 %1247
        %v1250 = vlaneseq
        %v1251 = vshrl.u32 %v1250, 7
        %v1252 = vsub.s32 2, %v1251
        %v1253 = vrot.slane %v342, %v1252
        %v1254 = vlaneseq
        %v1255 = vshrl.u32 %v1254, 7
        %v1256 = vsub.s32 6, %v1255
        %v1257 = vrot.slane %v342, %v1256
        %v1258 = vlaneseq
        %v1259 = vshrl.u32 %v1258, 7
        %v1260 = vsub.s32 2, %v1259
        %v1261 = vrot.slane %v343, %v1260
        %v1262 = vlaneseq
        %v1263 = vshrl.u32 %v1262, 7
        %v1264 = vsub.s32 6, %v1263
        %v1265 = vrot.slane %v343, %v1264
        %v1270 = vlaneseq
        %v1271 = vshrl.u32 %v1270, 7
        %v1272 = vsub.s32 2, %v1271
        %v1273 = vrot.slane %v1253, %v1272
        %v1274 = vlaneseq
        %v1275 = vshrl.u32 %v1274, 7
        %v1276 = vsub.s32 2, %v1275
        %v1277 = vrot.slane %v1257, %v1276
        %v1278 = vlaneseq
        %v1279 = vshrl.u32 %v1278, 7
        %v1280 = vsub.s32 2, %v1279
        %v1281 = vrot.slane %v1261, %v1280
        %v1282 = vlaneseq
        %v1283 = vshrl.u32 %v1282, 7
        %v1284 = vsub.s32 2, %v1283
        %v1285 = vrot.slane %v1265, %v1284
        %v1286 = vmul.f32 %v1124, %v1273
        %v1287 = vmul.f32 %v1124, %v1277
        %v1288 = vmul.f32 %v1124, %v1281
        %v1289 = vmul.f32 %v1124, %v1285
        %v1290 = vmul.f32 %v1128, %v1273
        %v1291 = vmul.f32 %v1128, %v1277
        %v1292 = vmul.f32 %v1128, %v1281
        %v1293 = vmul.f32 %v1128, %v1285
        %v1294 = vmul.f32 %v1132, %v1273
        %v1295 = vmul.f32 %v1132, %v1277
        %v1296 = vmul.f32 %v1132, %v1281
        %v1297 = vmul.f32 %v1132, %v1285
        %v1298 = vmul.f32 %v1136, %v1273
        %v1299 = vmul.f32 %v1136, %v1277
        %v1300 = vmul.f32 %v1136, %v1281
        %v1301 = vmul.f32 %v1136, %v1285
        %v1302 = vmul.f32 %v1140, %v1273
        %v1303 = vmul.f32 %v1140, %v1277
        %v1304 = vmul.f32 %v1140, %v1281
        %v1305 = vmul.f32 %v1140, %v1285
        %v1306 = vmul.f32 %v1144, %v1273
        %v1307 = vmul.f32 %v1144, %v1277
        %v1308 = vmul.f32 %v1144, %v1281
        %v1309 = vmul.f32 %v1144, %v1285
        %v1310 = vmul.f32 %v1148, %v1273
        %v1311 = vmul.f32 %v1148, %v1277
        %v1312 = vmul.f32 %v1148, %v1281
        %v1313 = vmul.f32 %v1148, %v1285
        %v1314 = vmul.f32 %v1152, %v1273
        %v1315 = vmul.f32 %v1152, %v1277
        %v1316 = vmul.f32 %v1152, %v1281
        %v1317 = vmul.f32 %v1152, %v1285
        %v1318 = vmul.f32 %v1156, %v1273
        %v1319 = vmul.f32 %v1156, %v1277
        %v1320 = vmul.f32 %v1156, %v1281
        %v1321 = vmul.f32 %v1156, %v1285
        %v1322 = vmul.f32 %v1160, %v1273
        %v1323 = vmul.f32 %v1160, %v1277
        %v1324 = vmul.f32 %v1160, %v1281
        %v1325 = vmul.f32 %v1160, %v1285
        %v1326 = vmul.f32 %v1164, %v1273
        %v1327 = vmul.f32 %v1164, %v1277
        %v1328 = vmul.f32 %v1164, %v1281
        %v1329 = vmul.f32 %v1164, %v1285
        %v1330 = vmul.f32 %v1168, %v1273
        %v1331 = vmul.f32 %v1168, %v1277
        %v1332 = vmul.f32 %v1168, %v1281
        %v1333 = vmul.f32 %v1168, %v1285
        %v1334 = vmul.f32 %v1172, %v1273
        %v1335 = vmul.f32 %v1172, %v1277
        %v1336 = vmul.f32 %v1172, %v1281
        %v1337 = vmul.f32 %v1172, %v1285
        %v1338 = vmul.f32 %v1176, %v1273
        %v1339 = vmul.f32 %v1176, %v1277
        %v1340 = vmul.f32 %v1176, %v1281
        %v1341 = vmul.f32 %v1176, %v1285
        %v1342 = vmul.f32 %v1180, %v1273
        %v1343 = vmul.f32 %v1180, %v1277
        %v1344 = vmul.f32 %v1180, %v1281
        %v1345 = vmul.f32 %v1180, %v1285
        %v1346 = vmul.f32 %v1184, %v1273
        %v1347 = vmul.f32 %v1184, %v1277
        %v1348 = vmul.f32 %v1184, %v1281
        %v1349 = vmul.f32 %v1184, %v1285
        %v1350 = vmul.f32 %v1188, %v1273
        %v1351 = vmul.f32 %v1188, %v1277
        %v1352 = vmul.f32 %v1188, %v1281
        %v1353 = vmul.f32 %v1188, %v1285
        %v1354 = vmul.f32 %v1192, %v1273
        %v1355 = vmul.f32 %v1192, %v1277
        %v1356 = vmul.f32 %v1192, %v1281
        %v1357 = vmul.f32 %v1192, %v1285
        %v1358 = vmul.f32 %v1196, %v1273
        %v1359 = vmul.f32 %v1196, %v1277
        %v1360 = vmul.f32 %v1196, %v1281
        %v1361 = vmul.f32 %v1196, %v1285
        %v1362 = vmul.f32 %v1200, %v1273
        %v1363 = vmul.f32 %v1200, %v1277
        %v1364 = vmul.f32 %v1200, %v1281
        %v1365 = vmul.f32 %v1200, %v1285
        %v1366 = vmul.f32 %v1204, %v1273
        %v1367 = vmul.f32 %v1204, %v1277
        %v1368 = vmul.f32 %v1204, %v1281
        %v1369 = vmul.f32 %v1204, %v1285
        %v1370 = vmul.f32 %v1208, %v1273
        %v1371 = vmul.f32 %v1208, %v1277
        %v1372 = vmul.f32 %v1208, %v1281
        %v1373 = vmul.f32 %v1208, %v1285
        %v1374 = vmul.f32 %v1212, %v1273
        %v1375 = vmul.f32 %v1212, %v1277
        %v1376 = vmul.f32 %v1212, %v1281
        %v1377 = vmul.f32 %v1212, %v1285
        %v1378 = vmul.f32 %v1216, %v1273
        %v1379 = vmul.f32 %v1216, %v1277
        %v1380 = vmul.f32 %v1216, %v1281
        %v1381 = vmul.f32 %v1216, %v1285
        %v1382 = vmul.f32 %v1220, %v1273
        %v1383 = vmul.f32 %v1220, %v1277
        %v1384 = vmul.f32 %v1220, %v1281
        %v1385 = vmul.f32 %v1220, %v1285
        %v1386 = vmul.f32 %v1224, %v1273
        %v1387 = vmul.f32 %v1224, %v1277
        %v1388 = vmul.f32 %v1224, %v1281
        %v1389 = vmul.f32 %v1224, %v1285
        %v1390 = vmul.f32 %v1228, %v1273
        %v1391 = vmul.f32 %v1228, %v1277
        %v1392 = vmul.f32 %v1228, %v1281
        %v1393 = vmul.f32 %v1228, %v1285
        %v1394 = vmul.f32 %v1232, %v1273
        %v1395 = vmul.f32 %v1232, %v1277
        %v1396 = vmul.f32 %v1232, %v1281
        %v1397 = vmul.f32 %v1232, %v1285
        %v1398 = vmul.f32 %v1236, %v1273
        %v1399 = vmul.f32 %v1236, %v1277
        %v1400 = vmul.f32 %v1236, %v1281
        %v1401 = vmul.f32 %v1236, %v1285
        %v1402 = vmul.f32 %v1240, %v1273
        %v1403 = vmul.f32 %v1240, %v1277
        %v1404 = vmul.f32 %v1240, %v1281
        %v1405 = vmul.f32 %v1240, %v1285
        %v1406 = vmul.f32 %v1244, %v1273
        %v1407 = vmul.f32 %v1244, %v1277
        %v1408 = vmul.f32 %v1244, %v1281
        %v1409 = vmul.f32 %v1244, %v1285
        %v1410 = vmul.f32 %v1248, %v1273
        %v1411 = vmul.f32 %v1248, %v1277
        %v1412 = vmul.f32 %v1248, %v1281
        %v1413 = vmul.f32 %v1248, %v1285
        %v1414 = vadd.f32 %v994, %v1286
        %v1415 = vadd.f32 %v995, %v1287
        %v1416 = vadd.f32 %v996, %v1288
        %v1417 = vadd.f32 %v997, %v1289
        %v1418 = vadd.f32 %v998, %v1290
        %v1419 = vadd.f32 %v999, %v1291
        %v1420 = vadd.f32 %v1000, %v1292
        %v1421 = vadd.f32 %v1001, %v1293
        %v1422 = vadd.f32 %v1002, %v1294
        %v1423 = vadd.f32 %v1003, %v1295
        %v1424 = vadd.f32 %v1004, %v1296
        %v1425 = vadd.f32 %v1005, %v1297
        %v1426 = vadd.f32 %v1006, %v1298
        %v1427 = vadd.f32 %v1007, %v1299
        %v1428 = vadd.f32 %v1008, %v1300
        %v1429 = vadd.f32 %v1009, %v1301
        %v1430 = vadd.f32 %v1010, %v1302
        %v1431 = vadd.f32 %v1011, %v1303
        %v1432 = vadd.f32 %v1012, %v1304
        %v1433 = vadd.f32 %v1013, %v1305
        %v1434 = vadd.f32 %v1014, %v1306
        %v1435 = vadd.f32 %v1015, %v1307
        %v1436 = vadd.f32 %v1016, %v1308
        %v1437 = vadd.f32 %v1017, %v1309
        %v1438 = vadd.f32 %v1018, %v1310
        %v1439 = vadd.f32 %v1019, %v1311
        %v1440 = vadd.f32 %v1020, %v1312
        %v1441 = vadd.f32 %v1021, %v1313
        %v1442 = vadd.f32 %v1022, %v1314
        %v1443 = vadd.f32 %v1023, %v1315
        %v1444 = vadd.f32 %v1024, %v1316
        %v1445 = vadd.f32 %v1025, %v1317
        %v1446 = vadd.f32 %v1026, %v1318
        %v1447 = vadd.f32 %v1027, %v1319
        %v1448 = vadd.f32 %v1028, %v1320
        %v1449 = vadd.f32 %v1029, %v1321
        %v1450 = vadd.f32 %v1030, %v1322
        %v1451 = vadd.f32 %v1031, %v1323
        %v1452 = vadd.f32 %v1032, %v1324
        %v1453 = vadd.f32 %v1033, %v1325
        %v1454 = vadd.f32 %v1034, %v1326
        %v1455 = vadd.f32 %v1035, %v1327
        %v1456 = vadd.f32 %v1036, %v1328
        %v1457 = vadd.f32 %v1037, %v1329
        %v1458 = vadd.f32 %v1038, %v1330
        %v1459 = vadd.f32 %v1039, %v1331
        %v1460 = vadd.f32 %v1040, %v1332
        %v1461 = vadd.f32 %v1041, %v1333
        %v1462 = vadd.f32 %v1042, %v1334
        %v1463 = vadd.f32 %v1043, %v1335
        %v1464 = vadd.f32 %v1044, %v1336
        %v1465 = vadd.f32 %v1045, %v1337
        %v1466 = vadd.f32 %v1046, %v1338
        %v1467 = vadd.f32 %v1047, %v1339
        %v1468 = vadd.f32 %v1048, %v1340
        %v1469 = vadd.f32 %v1049, %v1341
        %v1470 = vadd.f32 %v1050, %v1342
        %v1471 = vadd.f32 %v1051, %v1343
        %v1472 = vadd.f32 %v1052, %v1344
        %v1473 = vadd.f32 %v1053, %v1345
        %v1474 = vadd.f32 %v1054, %v1346
        %v1475 = vadd.f32 %v1055, %v1347
        %v1476 = vadd.f32 %v1056, %v1348
        %v1477 = vadd.f32 %v1057, %v1349
        %v1478 = vadd.f32 %v1058, %v1350
        %v1479 = vadd.f32 %v1059, %v1351
        %v1480 = vadd.f32 %v1060, %v1352
        %v1481 = vadd.f32 %v1061, %v1353
        %v1482 = vadd.f32 %v1062, %v1354
        %v1483 = vadd.f32 %v1063, %v1355
        %v1484 = vadd.f32 %v1064, %v1356
        %v1485 = vadd.f32 %v1065, %v1357
        %v1486 = vadd.f32 %v1066, %v1358
        %v1487 = vadd.f32 %v1067, %v1359
        %v1488 = vadd.f32 %v1068, %v1360
        %v1489 = vadd.f32 %v1069, %v1361
        %v1490 = vadd.f32 %v1070, %v1362
        %v1491 = vadd.f32 %v1071, %v1363
        %v1492 = vadd.f32 %v1072, %v1364
        %v1493 = vadd.f32 %v1073, %v1365
        %v1494 = vadd.f32 %v1074, %v1366
        %v1495 = vadd.f32 %v1075, %v1367
        %v1496 = vadd.f32 %v1076, %v1368
        %v1497 = vadd.f32 %v1077, %v1369
        %v1498 = vadd.f32 %v1078, %v1370
        %v1499 = vadd.f32 %v1079, %v1371
        %v1500 = vadd.f32 %v1080, %v1372
        %v1501 = vadd.f32 %v1081, %v1373
        %v1502 = vadd.f32 %v1082, %v1374
        %v1503 = vadd.f32 %v1083, %v1375
        %v1504 = vadd.f32 %v1084, %v1376
        %v1505 = vadd.f32 %v1085, %v1377
        %v1506 = vadd.f32 %v1086, %v1378
        %v1507 = vadd.f32 %v1087, %v1379
        %v1508 = vadd.f32 %v1088, %v1380
        %v1509 = vadd.f32 %v1089, %v1381
        %v1510 = vadd.f32 %v1090, %v1382
        %v1511 = vadd.f32 %v1091, %v1383
        %v1512 = vadd.f32 %v1092, %v1384
        %v1513 = vadd.f32 %v1093, %v1385
        %v1514 = vadd.f32 %v1094, %v1386
        %v1515 = vadd.f32 %v1095, %v1387
        %v1516 = vadd.f32 %v1096, %v1388
        %v1517 = vadd.f32 %v1097, %v1389
        %v1518 = vadd.f32 %v1098, %v1390
        %v1519 = vadd.f32 %v1099, %v1391
        %v1520 = vadd.f32 %v1100, %v1392
        %v1521 = vadd.f32 %v1101, %v1393
        %v1522 = vadd.f32 %v1102, %v1394
        %v1523 = vadd.f32 %v1103, %v1395
        %v1524 = vadd.f32 %v1104, %v1396
        %v1525 = vadd.f32 %v1105, %v1397
        %v1526 = vadd.f32 %v1106, %v1398
        %v1527 = vadd.f32 %v1107, %v1399
        %v1528 = vadd.f32 %v1108, %v1400
        %v1529 = vadd.f32 %v1109, %v1401
        %v1530 = vadd.f32 %v1110, %v1402
        %v1531 = vadd.f32 %v1111, %v1403
        %v1532 = vadd.f32 %v1112, %v1404
        %v1533 = vadd.f32 %v1113, %v1405
        %v1534 = vadd.f32 %v1114, %v1406
        %v1535 = vadd.f32 %v1115, %v1407
        %v1536 = vadd.f32 %v1116, %v1408
        %v1537 = vadd.f32 %v1117, %v1409
        %v1538 = vadd.f32 %v1118, %v1410
        %v1539 = vadd.f32 %v1119, %v1411
        %v1540 = vadd.f32 %v1120, %v1412
        %v1541 = vadd.f32 %v1121, %v1413
        %v1542 = vld [vmem:[%s337] sm:$0xff]
        %v1543 = vld [vmem:[%s337 + $0x8] sm:$0xff]
        %v1544 = vld [vmem:[%s337 + $0x10] sm:$0xff]
        %v1545 = vld [vmem:[%s337 + $0x18] sm:$0xff]
        %v1546 = vld [vmem:[%s337 + $0x20] sm:$0xff]
        %v1547 = vld [vmem:[%s337 + $0x28] sm:$0xff]
        %v1548 = vld [vmem:[%s337 + $0x30] sm:$0xff]
        %v1549 = vld [vmem:[%s337 + $0x38] sm:$0xff]
        %v1550 = vld [vmem:[%s337 + $0x40] sm:$0xff]
        %v1551 = vld [vmem:[%s337 + $0x48] sm:$0xff]
        %v1552 = vld [vmem:[%s337 + $0x50] sm:$0xff]
        %v1553 = vld [vmem:[%s337 + $0x58] sm:$0xff]
        %v1554 = vld [vmem:[%s337 + $0x60] sm:$0xff]
        %v1555 = vld [vmem:[%s337 + $0x68] sm:$0xff]
        %v1556 = vld [vmem:[%s337 + $0x70] sm:$0xff]
        %v1557 = vld [vmem:[%s337 + $0x78] sm:$0xff]
        %v1558 = vld [vmem:[%s337 + $0x80] sm:$0xff]
        %v1559 = vld [vmem:[%s337 + $0x88] sm:$0xff]
        %v1560 = vld [vmem:[%s337 + $0x90] sm:$0xff]
        %v1561 = vld [vmem:[%s337 + $0x98] sm:$0xff]
        %v1562 = vld [vmem:[%s337 + $0xa0] sm:$0xff]
        %v1563 = vld [vmem:[%s337 + $0xa8] sm:$0xff]
        %v1564 = vld [vmem:[%s337 + $0xb0] sm:$0xff]
        %v1565 = vld [vmem:[%s337 + $0xb8] sm:$0xff]
        %v1566 = vld [vmem:[%s337 + $0xc0] sm:$0xff]
        %v1567 = vld [vmem:[%s337 + $0xc8] sm:$0xff]
        %v1568 = vld [vmem:[%s337 + $0xd0] sm:$0xff]
        %v1569 = vld [vmem:[%s337 + $0xd8] sm:$0xff]
        %v1570 = vld [vmem:[%s337 + $0xe0] sm:$0xff]
        %v1571 = vld [vmem:[%s337 + $0xe8] sm:$0xff]
        %v1572 = vld [vmem:[%s337 + $0xf0] sm:$0xff]
        %v1573 = vld [vmem:[%s337 + $0xf8] sm:$0xff]
        %1575 = vset.pattern.permute.xlu0 0
        %1576 = vperm.xlu0 %1575, %v1542
        %v1577 = vpop.permute.xlu0 %1576
        %1580 = vset.pattern.permute.xlu0 0
        %1581 = vperm.xlu0 %1580, %v1543
        %v1582 = vpop.permute.xlu0 %1581
        %1585 = vset.pattern.permute.xlu0 0
        %1586 = vperm.xlu0 %1585, %v1544
        %v1587 = vpop.permute.xlu0 %1586
        %1590 = vset.pattern.permute.xlu0 0
        %1591 = vperm.xlu0 %1590, %v1545
        %v1592 = vpop.permute.xlu0 %1591
        %1595 = vset.pattern.permute.xlu0 0
        %1596 = vperm.xlu0 %1595, %v1546
        %v1597 = vpop.permute.xlu0 %1596
        %1600 = vset.pattern.permute.xlu0 0
        %1601 = vperm.xlu0 %1600, %v1547
        %v1602 = vpop.permute.xlu0 %1601
        %1605 = vset.pattern.permute.xlu0 0
        %1606 = vperm.xlu0 %1605, %v1548
        %v1607 = vpop.permute.xlu0 %1606
        %1610 = vset.pattern.permute.xlu0 0
        %1611 = vperm.xlu0 %1610, %v1549
        %v1612 = vpop.permute.xlu0 %1611
        %1615 = vset.pattern.permute.xlu0 0
        %1616 = vperm.xlu0 %1615, %v1550
        %v1617 = vpop.permute.xlu0 %1616
        %1620 = vset.pattern.permute.xlu0 0
        %1621 = vperm.xlu0 %1620, %v1551
        %v1622 = vpop.permute.xlu0 %1621
        %1625 = vset.pattern.permute.xlu0 0
        %1626 = vperm.xlu0 %1625, %v1552
        %v1627 = vpop.permute.xlu0 %1626
        %1630 = vset.pattern.permute.xlu0 0
        %1631 = vperm.xlu0 %1630, %v1553
        %v1632 = vpop.permute.xlu0 %1631
        %1635 = vset.pattern.permute.xlu0 0
        %1636 = vperm.xlu0 %1635, %v1554
        %v1637 = vpop.permute.xlu0 %1636
        %1640 = vset.pattern.permute.xlu0 0
        %1641 = vperm.xlu0 %1640, %v1555
        %v1642 = vpop.permute.xlu0 %1641
        %1645 = vset.pattern.permute.xlu0 0
        %1646 = vperm.xlu0 %1645, %v1556
        %v1647 = vpop.permute.xlu0 %1646
        %1650 = vset.pattern.permute.xlu0 0
        %1651 = vperm.xlu0 %1650, %v1557
        %v1652 = vpop.permute.xlu0 %1651
        %1655 = vset.pattern.permute.xlu0 0
        %1656 = vperm.xlu0 %1655, %v1558
        %v1657 = vpop.permute.xlu0 %1656
        %1660 = vset.pattern.permute.xlu0 0
        %1661 = vperm.xlu0 %1660, %v1559
        %v1662 = vpop.permute.xlu0 %1661
        %1665 = vset.pattern.permute.xlu0 0
        %1666 = vperm.xlu0 %1665, %v1560
        %v1667 = vpop.permute.xlu0 %1666
        %1670 = vset.pattern.permute.xlu0 0
        %1671 = vperm.xlu0 %1670, %v1561
        %v1672 = vpop.permute.xlu0 %1671
        %1675 = vset.pattern.permute.xlu0 0
        %1676 = vperm.xlu0 %1675, %v1562
        %v1677 = vpop.permute.xlu0 %1676
        %1680 = vset.pattern.permute.xlu0 0
        %1681 = vperm.xlu0 %1680, %v1563
        %v1682 = vpop.permute.xlu0 %1681
        %1685 = vset.pattern.permute.xlu0 0
        %1686 = vperm.xlu0 %1685, %v1564
        %v1687 = vpop.permute.xlu0 %1686
        %1690 = vset.pattern.permute.xlu0 0
        %1691 = vperm.xlu0 %1690, %v1565
        %v1692 = vpop.permute.xlu0 %1691
        %1695 = vset.pattern.permute.xlu0 0
        %1696 = vperm.xlu0 %1695, %v1566
        %v1697 = vpop.permute.xlu0 %1696
        %1700 = vset.pattern.permute.xlu0 0
        %1701 = vperm.xlu0 %1700, %v1567
        %v1702 = vpop.permute.xlu0 %1701
        %1705 = vset.pattern.permute.xlu0 0
        %1706 = vperm.xlu0 %1705, %v1568
        %v1707 = vpop.permute.xlu0 %1706
        %1710 = vset.pattern.permute.xlu0 0
        %1711 = vperm.xlu0 %1710, %v1569
        %v1712 = vpop.permute.xlu0 %1711
        %1715 = vset.pattern.permute.xlu0 0
        %1716 = vperm.xlu0 %1715, %v1570
        %v1717 = vpop.permute.xlu0 %1716
        %1720 = vset.pattern.permute.xlu0 0
        %1721 = vperm.xlu0 %1720, %v1571
        %v1722 = vpop.permute.xlu0 %1721
        %1725 = vset.pattern.permute.xlu0 0
        %1726 = vperm.xlu0 %1725, %v1572
        %v1727 = vpop.permute.xlu0 %1726
        %1730 = vset.pattern.permute.xlu0 0
        %1731 = vperm.xlu0 %1730, %v1573
        %v1732 = vpop.permute.xlu0 %1731
        %v1734 = vadd.f32 %v1414, %v1577
        %v1735 = vadd.f32 %v1415, %v1577
        %v1736 = vadd.f32 %v1416, %v1577
        %v1737 = vadd.f32 %v1417, %v1577
        %v1738 = vadd.f32 %v1418, %v1582
        %v1739 = vadd.f32 %v1419, %v1582
        %v1740 = vadd.f32 %v1420, %v1582
        %v1741 = vadd.f32 %v1421, %v1582
        %v1742 = vadd.f32 %v1422, %v1587
        %v1743 = vadd.f32 %v1423, %v1587
        %v1744 = vadd.f32 %v1424, %v1587
        %v1745 = vadd.f32 %v1425, %v1587
        %v1746 = vadd.f32 %v1426, %v1592
        %v1747 = vadd.f32 %v1427, %v1592
        %v1748 = vadd.f32 %v1428, %v1592
        %v1749 = vadd.f32 %v1429, %v1592
        %v1750 = vadd.f32 %v1430, %v1597
        %v1751 = vadd.f32 %v1431, %v1597
        %v1752 = vadd.f32 %v1432, %v1597
        %v1753 = vadd.f32 %v1433, %v1597
        %v1754 = vadd.f32 %v1434, %v1602
        %v1755 = vadd.f32 %v1435, %v1602
        %v1756 = vadd.f32 %v1436, %v1602
        %v1757 = vadd.f32 %v1437, %v1602
        %v1758 = vadd.f32 %v1438, %v1607
        %v1759 = vadd.f32 %v1439, %v1607
        %v1760 = vadd.f32 %v1440, %v1607
        %v1761 = vadd.f32 %v1441, %v1607
        %v1762 = vadd.f32 %v1442, %v1612
        %v1763 = vadd.f32 %v1443, %v1612
        %v1764 = vadd.f32 %v1444, %v1612
        %v1765 = vadd.f32 %v1445, %v1612
        %v1766 = vadd.f32 %v1446, %v1617
        %v1767 = vadd.f32 %v1447, %v1617
        %v1768 = vadd.f32 %v1448, %v1617
        %v1769 = vadd.f32 %v1449, %v1617
        %v1770 = vadd.f32 %v1450, %v1622
        %v1771 = vadd.f32 %v1451, %v1622
        %v1772 = vadd.f32 %v1452, %v1622
        %v1773 = vadd.f32 %v1453, %v1622
        %v1774 = vadd.f32 %v1454, %v1627
        %v1775 = vadd.f32 %v1455, %v1627
        %v1776 = vadd.f32 %v1456, %v1627
        %v1777 = vadd.f32 %v1457, %v1627
        %v1778 = vadd.f32 %v1458, %v1632
        %v1779 = vadd.f32 %v1459, %v1632
        %v1780 = vadd.f32 %v1460, %v1632
        %v1781 = vadd.f32 %v1461, %v1632
        %v1782 = vadd.f32 %v1462, %v1637
        %v1783 = vadd.f32 %v1463, %v1637
        %v1784 = vadd.f32 %v1464, %v1637
        %v1785 = vadd.f32 %v1465, %v1637
        %v1786 = vadd.f32 %v1466, %v1642
        %v1787 = vadd.f32 %v1467, %v1642
        %v1788 = vadd.f32 %v1468, %v1642
        %v1789 = vadd.f32 %v1469, %v1642
        %v1790 = vadd.f32 %v1470, %v1647
        %v1791 = vadd.f32 %v1471, %v1647
        %v1792 = vadd.f32 %v1472, %v1647
        %v1793 = vadd.f32 %v1473, %v1647
        %v1794 = vadd.f32 %v1474, %v1652
        %v1795 = vadd.f32 %v1475, %v1652
        %v1796 = vadd.f32 %v1476, %v1652
        %v1797 = vadd.f32 %v1477, %v1652
        %v1798 = vadd.f32 %v1478, %v1657
        %v1799 = vadd.f32 %v1479, %v1657
        %v1800 = vadd.f32 %v1480, %v1657
        %v1801 = vadd.f32 %v1481, %v1657
        %v1802 = vadd.f32 %v1482, %v1662
        %v1803 = vadd.f32 %v1483, %v1662
        %v1804 = vadd.f32 %v1484, %v1662
        %v1805 = vadd.f32 %v1485, %v1662
        %v1806 = vadd.f32 %v1486, %v1667
        %v1807 = vadd.f32 %v1487, %v1667
        %v1808 = vadd.f32 %v1488, %v1667
        %v1809 = vadd.f32 %v1489, %v1667
        %v1810 = vadd.f32 %v1490, %v1672
        %v1811 = vadd.f32 %v1491, %v1672
        %v1812 = vadd.f32 %v1492, %v1672
        %v1813 = vadd.f32 %v1493, %v1672
        %v1814 = vadd.f32 %v1494, %v1677
        %v1815 = vadd.f32 %v1495, %v1677
        %v1816 = vadd.f32 %v1496, %v1677
        %v1817 = vadd.f32 %v1497, %v1677
        %v1818 = vadd.f32 %v1498, %v1682
        %v1819 = vadd.f32 %v1499, %v1682
        %v1820 = vadd.f32 %v1500, %v1682
        %v1821 = vadd.f32 %v1501, %v1682
        %v1822 = vadd.f32 %v1502, %v1687
        %v1823 = vadd.f32 %v1503, %v1687
        %v1824 = vadd.f32 %v1504, %v1687
        %v1825 = vadd.f32 %v1505, %v1687
        %v1826 = vadd.f32 %v1506, %v1692
        %v1827 = vadd.f32 %v1507, %v1692
        %v1828 = vadd.f32 %v1508, %v1692
        %v1829 = vadd.f32 %v1509, %v1692
        %v1830 = vadd.f32 %v1510, %v1697
        %v1831 = vadd.f32 %v1511, %v1697
        %v1832 = vadd.f32 %v1512, %v1697
        %v1833 = vadd.f32 %v1513, %v1697
        %v1834 = vadd.f32 %v1514, %v1702
        %v1835 = vadd.f32 %v1515, %v1702
        %v1836 = vadd.f32 %v1516, %v1702
        %v1837 = vadd.f32 %v1517, %v1702
        %v1838 = vadd.f32 %v1518, %v1707
        %v1839 = vadd.f32 %v1519, %v1707
        %v1840 = vadd.f32 %v1520, %v1707
        %v1841 = vadd.f32 %v1521, %v1707
        %v1842 = vadd.f32 %v1522, %v1712
        %v1843 = vadd.f32 %v1523, %v1712
        %v1844 = vadd.f32 %v1524, %v1712
        %v1845 = vadd.f32 %v1525, %v1712
        %v1846 = vadd.f32 %v1526, %v1717
        %v1847 = vadd.f32 %v1527, %v1717
        %v1848 = vadd.f32 %v1528, %v1717
        %v1849 = vadd.f32 %v1529, %v1717
        %v1850 = vadd.f32 %v1530, %v1722
        %v1851 = vadd.f32 %v1531, %v1722
        %v1852 = vadd.f32 %v1532, %v1722
        %v1853 = vadd.f32 %v1533, %v1722
        %v1854 = vadd.f32 %v1534, %v1727
        %v1855 = vadd.f32 %v1535, %v1727
        %v1856 = vadd.f32 %v1536, %v1727
        %v1857 = vadd.f32 %v1537, %v1727
        %v1858 = vadd.f32 %v1538, %v1732
        %v1859 = vadd.f32 %v1539, %v1732
        %v1860 = vadd.f32 %v1540, %v1732
        %v1861 = vadd.f32 %v1541, %v1732
        %v1862 = vmax.f32 %v1734, 0.0
        %v1863 = vmax.f32 %v1735, 0.0
        %v1864 = vmax.f32 %v1736, 0.0
        %v1865 = vmax.f32 %v1737, 0.0
        %v1866 = vmax.f32 %v1738, 0.0
        %v1867 = vmax.f32 %v1739, 0.0
        %v1868 = vmax.f32 %v1740, 0.0
        %v1869 = vmax.f32 %v1741, 0.0
        %v1870 = vmax.f32 %v1742, 0.0
        %v1871 = vmax.f32 %v1743, 0.0
        %v1872 = vmax.f32 %v1744, 0.0
        %v1873 = vmax.f32 %v1745, 0.0
        %v1874 = vmax.f32 %v1746, 0.0
        %v1875 = vmax.f32 %v1747, 0.0
        %v1876 = vmax.f32 %v1748, 0.0
        %v1877 = vmax.f32 %v1749, 0.0
        %v1878 = vmax.f32 %v1750, 0.0
        %v1879 = vmax.f32 %v1751, 0.0
        %v1880 = vmax.f32 %v1752, 0.0
        %v1881 = vmax.f32 %v1753, 0.0
        %v1882 = vmax.f32 %v1754, 0.0
        %v1883 = vmax.f32 %v1755, 0.0
        %v1884 = vmax.f32 %v1756, 0.0
        %v1885 = vmax.f32 %v1757, 0.0
        %v1886 = vmax.f32 %v1758, 0.0
        %v1887 = vmax.f32 %v1759, 0.0
        %v1888 = vmax.f32 %v1760, 0.0
        %v1889 = vmax.f32 %v1761, 0.0
        %v1890 = vmax.f32 %v1762, 0.0
        %v1891 = vmax.f32 %v1763, 0.0
        %v1892 = vmax.f32 %v1764, 0.0
        %v1893 = vmax.f32 %v1765, 0.0
        %v1894 = vmax.f32 %v1766, 0.0
        %v1895 = vmax.f32 %v1767, 0.0
        %v1896 = vmax.f32 %v1768, 0.0
        %v1897 = vmax.f32 %v1769, 0.0
        %v1898 = vmax.f32 %v1770, 0.0
        %v1899 = vmax.f32 %v1771, 0.0
        %v1900 = vmax.f32 %v1772, 0.0
        %v1901 = vmax.f32 %v1773, 0.0
        %v1902 = vmax.f32 %v1774, 0.0
        %v1903 = vmax.f32 %v1775, 0.0
        %v1904 = vmax.f32 %v1776, 0.0
        %v1905 = vmax.f32 %v1777, 0.0
        %v1906 = vmax.f32 %v1778, 0.0
        %v1907 = vmax.f32 %v1779, 0.0
        %v1908 = vmax.f32 %v1780, 0.0
        %v1909 = vmax.f32 %v1781, 0.0
        %v1910 = vmax.f32 %v1782, 0.0
        %v1911 = vmax.f32 %v1783, 0.0
        %v1912 = vmax.f32 %v1784, 0.0
        %v1913 = vmax.f32 %v1785, 0.0
        %v1914 = vmax.f32 %v1786, 0.0
        %v1915 = vmax.f32 %v1787, 0.0
        %v1916 = vmax.f32 %v1788, 0.0
        %v1917 = vmax.f32 %v1789, 0.0
        %v1918 = vmax.f32 %v1790, 0.0
        %v1919 = vmax.f32 %v1791, 0.0
        %v1920 = vmax.f32 %v1792, 0.0
        %v1921 = vmax.f32 %v1793, 0.0
        %v1922 = vmax.f32 %v1794, 0.0
        %v1923 = vmax.f32 %v1795, 0.0
        %v1924 = vmax.f32 %v1796, 0.0
        %v1925 = vmax.f32 %v1797, 0.0
        %v1926 = vmax.f32 %v1798, 0.0
        %v1927 = vmax.f32 %v1799, 0.0
        %v1928 = vmax.f32 %v1800, 0.0
        %v1929 = vmax.f32 %v1801, 0.0
        %v1930 = vmax.f32 %v1802, 0.0
        %v1931 = vmax.f32 %v1803, 0.0
        %v1932 = vmax.f32 %v1804, 0.0
        %v1933 = vmax.f32 %v1805, 0.0
        %v1934 = vmax.f32 %v1806, 0.0
        %v1935 = vmax.f32 %v1807, 0.0
        %v1936 = vmax.f32 %v1808, 0.0
        %v1937 = vmax.f32 %v1809, 0.0
        %v1938 = vmax.f32 %v1810, 0.0
        %v1939 = vmax.f32 %v1811, 0.0
        %v1940 = vmax.f32 %v1812, 0.0
        %v1941 = vmax.f32 %v1813, 0.0
        %v1942 = vmax.f32 %v1814, 0.0
        %v1943 = vmax.f32 %v1815, 0.0
        %v1944 = vmax.f32 %v1816, 0.0
        %v1945 = vmax.f32 %v1817, 0.0
        %v1946 = vmax.f32 %v1818, 0.0
        %v1947 = vmax.f32 %v1819, 0.0
        %v1948 = vmax.f32 %v1820, 0.0
        %v1949 = vmax.f32 %v1821, 0.0
        %v1950 = vmax.f32 %v1822, 0.0
        %v1951 = vmax.f32 %v1823, 0.0
        %v1952 = vmax.f32 %v1824, 0.0
        %v1953 = vmax.f32 %v1825, 0.0
        %v1954 = vmax.f32 %v1826, 0.0
        %v1955 = vmax.f32 %v1827, 0.0
        %v1956 = vmax.f32 %v1828, 0.0
        %v1957 = vmax.f32 %v1829, 0.0
        %v1958 = vmax.f32 %v1830, 0.0
        %v1959 = vmax.f32 %v1831, 0.0
        %v1960 = vmax.f32 %v1832, 0.0
        %v1961 = vmax.f32 %v1833, 0.0
        %v1962 = vmax.f32 %v1834, 0.0
        %v1963 = vmax.f32 %v1835, 0.0
        %v1964 = vmax.f32 %v1836, 0.0
        %v1965 = vmax.f32 %v1837, 0.0
        %v1966 = vmax.f32 %v1838, 0.0
        %v1967 = vmax.f32 %v1839, 0.0
        %v1968 = vmax.f32 %v1840, 0.0
        %v1969 = vmax.f32 %v1841, 0.0
        %v1970 = vmax.f32 %v1842, 0.0
        %v1971 = vmax.f32 %v1843, 0.0
        %v1972 = vmax.f32 %v1844, 0.0
        %v1973 = vmax.f32 %v1845, 0.0
        %v1974 = vmax.f32 %v1846, 0.0
        %v1975 = vmax.f32 %v1847, 0.0
        %v1976 = vmax.f32 %v1848, 0.0
        %v1977 = vmax.f32 %v1849, 0.0
        %v1978 = vmax.f32 %v1850, 0.0
        %v1979 = vmax.f32 %v1851, 0.0
        %v1980 = vmax.f32 %v1852, 0.0
        %v1981 = vmax.f32 %v1853, 0.0
        %v1982 = vmax.f32 %v1854, 0.0
        %v1983 = vmax.f32 %v1855, 0.0
        %v1984 = vmax.f32 %v1856, 0.0
        %v1985 = vmax.f32 %v1857, 0.0
        %v1986 = vmax.f32 %v1858, 0.0
        %v1987 = vmax.f32 %v1859, 0.0
        %v1988 = vmax.f32 %v1860, 0.0
        %v1989 = vmax.f32 %v1861, 0.0
        %v1990 = vld [vmem:[%s2] sm:$0xff]
        %v1991 = vld [vmem:[%s2 + $0x8] sm:$0xff]
        %v1992 = vld [vmem:[%s2 + $0x10] sm:$0xff]
        %v1993 = vld [vmem:[%s2 + $0x18] sm:$0xff]
        %v1994 = vld [vmem:[%s2 + $0x20] sm:$0xff]
        %v1995 = vld [vmem:[%s2 + $0x28] sm:$0xff]
        %v1996 = vld [vmem:[%s2 + $0x30] sm:$0xff]
        %v1997 = vld [vmem:[%s2 + $0x38] sm:$0xff]
        %v1998 = vld [vmem:[%s2 + $0x40] sm:$0xff]
        %v1999 = vld [vmem:[%s2 + $0x48] sm:$0xff]
        %v2000 = vld [vmem:[%s2 + $0x50] sm:$0xff]
        %v2001 = vld [vmem:[%s2 + $0x58] sm:$0xff]
        %v2002 = vld [vmem:[%s2 + $0x60] sm:$0xff]
        %v2003 = vld [vmem:[%s2 + $0x68] sm:$0xff]
        %v2004 = vld [vmem:[%s2 + $0x70] sm:$0xff]
        %v2005 = vld [vmem:[%s2 + $0x78] sm:$0xff]
        %v2006 = vld [vmem:[%s2 + $0x80] sm:$0xff]
        %v2007 = vld [vmem:[%s2 + $0x88] sm:$0xff]
        %v2008 = vld [vmem:[%s2 + $0x90] sm:$0xff]
        %v2009 = vld [vmem:[%s2 + $0x98] sm:$0xff]
        %v2010 = vld [vmem:[%s2 + $0xa0] sm:$0xff]
        %v2011 = vld [vmem:[%s2 + $0xa8] sm:$0xff]
        %v2012 = vld [vmem:[%s2 + $0xb0] sm:$0xff]
        %v2013 = vld [vmem:[%s2 + $0xb8] sm:$0xff]
        %v2014 = vld [vmem:[%s2 + $0xc0] sm:$0xff]
        %v2015 = vld [vmem:[%s2 + $0xc8] sm:$0xff]
        %v2016 = vld [vmem:[%s2 + $0xd0] sm:$0xff]
        %v2017 = vld [vmem:[%s2 + $0xd8] sm:$0xff]
        %v2018 = vld [vmem:[%s2 + $0xe0] sm:$0xff]
        %v2019 = vld [vmem:[%s2 + $0xe8] sm:$0xff]
        %v2020 = vld [vmem:[%s2 + $0xf0] sm:$0xff]
        %v2021 = vld [vmem:[%s2 + $0xf8] sm:$0xff]
        %v2022 = vpack.c.bf16 %v1866, %v1862
        %v2023 = vpack.c.bf16 %v1867, %v1863
        %v2024 = vpack.c.bf16 %v1868, %v1864
        %v2025 = vpack.c.bf16 %v1869, %v1865
        %v2026 = vpack.c.bf16 %v1874, %v1870
        %v2027 = vpack.c.bf16 %v1875, %v1871
        %v2028 = vpack.c.bf16 %v1876, %v1872
        %v2029 = vpack.c.bf16 %v1877, %v1873
        %v2030 = vpack.c.bf16 %v1882, %v1878
        %v2031 = vpack.c.bf16 %v1883, %v1879
        %v2032 = vpack.c.bf16 %v1884, %v1880
        %v2033 = vpack.c.bf16 %v1885, %v1881
        %v2034 = vpack.c.bf16 %v1890, %v1886
        %v2035 = vpack.c.bf16 %v1891, %v1887
        %v2036 = vpack.c.bf16 %v1892, %v1888
        %v2037 = vpack.c.bf16 %v1893, %v1889
        %v2038 = vpack.c.bf16 %v1898, %v1894
        %v2039 = vpack.c.bf16 %v1899, %v1895
        %v2040 = vpack.c.bf16 %v1900, %v1896
        %v2041 = vpack.c.bf16 %v1901, %v1897
        %v2042 = vpack.c.bf16 %v1906, %v1902
        %v2043 = vpack.c.bf16 %v1907, %v1903
        %v2044 = vpack.c.bf16 %v1908, %v1904
        %v2045 = vpack.c.bf16 %v1909, %v1905
        %v2046 = vpack.c.bf16 %v1914, %v1910
        %v2047 = vpack.c.bf16 %v1915, %v1911
        %v2048 = vpack.c.bf16 %v1916, %v1912
        %v2049 = vpack.c.bf16 %v1917, %v1913
        %v2050 = vpack.c.bf16 %v1922, %v1918
        %v2051 = vpack.c.bf16 %v1923, %v1919
        %v2052 = vpack.c.bf16 %v1924, %v1920
        %v2053 = vpack.c.bf16 %v1925, %v1921
        %v2054 = vpack.c.bf16 %v1930, %v1926
        %v2055 = vpack.c.bf16 %v1931, %v1927
        %v2056 = vpack.c.bf16 %v1932, %v1928
        %v2057 = vpack.c.bf16 %v1933, %v1929
        %v2058 = vpack.c.bf16 %v1938, %v1934
        %v2059 = vpack.c.bf16 %v1939, %v1935
        %v2060 = vpack.c.bf16 %v1940, %v1936
        %v2061 = vpack.c.bf16 %v1941, %v1937
        %v2062 = vpack.c.bf16 %v1946, %v1942
        %v2063 = vpack.c.bf16 %v1947, %v1943
        %v2064 = vpack.c.bf16 %v1948, %v1944
        %v2065 = vpack.c.bf16 %v1949, %v1945
        %v2066 = vpack.c.bf16 %v1954, %v1950
        %v2067 = vpack.c.bf16 %v1955, %v1951
        %v2068 = vpack.c.bf16 %v1956, %v1952
        %v2069 = vpack.c.bf16 %v1957, %v1953
        %v2070 = vpack.c.bf16 %v1962, %v1958
        %v2071 = vpack.c.bf16 %v1963, %v1959
        %v2072 = vpack.c.bf16 %v1964, %v1960
        %v2073 = vpack.c.bf16 %v1965, %v1961
        %v2074 = vpack.c.bf16 %v1970, %v1966
        %v2075 = vpack.c.bf16 %v1971, %v1967
        %v2076 = vpack.c.bf16 %v1972, %v1968
        %v2077 = vpack.c.bf16 %v1973, %v1969
        %v2078 = vpack.c.bf16 %v1978, %v1974
        %v2079 = vpack.c.bf16 %v1979, %v1975
        %v2080 = vpack.c.bf16 %v1980, %v1976
        %v2081 = vpack.c.bf16 %v1981, %v1977
        %v2082 = vpack.c.bf16 %v1986, %v1982
        %v2083 = vpack.c.bf16 %v1987, %v1983
        %v2084 = vpack.c.bf16 %v1988, %v1984
        %v2085 = vpack.c.bf16 %v1989, %v1985
        %2086 = vset.pattern.permute.xlu0 1
        %2087 = vperm.xlu0 %2086, %v1542
        %v2088 = vpop.permute.xlu0 %2087
        %2090 = vset.pattern.permute.xlu0 1
        %2091 = vperm.xlu0 %2090, %v1543
        %v2092 = vpop.permute.xlu0 %2091
        %2094 = vset.pattern.permute.xlu0 1
        %2095 = vperm.xlu0 %2094, %v1544
        %v2096 = vpop.permute.xlu0 %2095
        %2098 = vset.pattern.permute.xlu0 1
        %2099 = vperm.xlu0 %2098, %v1545
        %v2100 = vpop.permute.xlu0 %2099
        %2102 = vset.pattern.permute.xlu0 1
        %2103 = vperm.xlu0 %2102, %v1546
        %v2104 = vpop.permute.xlu0 %2103
        %2106 = vset.pattern.permute.xlu0 1
        %2107 = vperm.xlu0 %2106, %v1547
        %v2108 = vpop.permute.xlu0 %2107
        %2110 = vset.pattern.permute.xlu0 1
        %2111 = vperm.xlu0 %2110, %v1548
        %v2112 = vpop.permute.xlu0 %2111
        %2114 = vset.pattern.permute.xlu0 1
        %2115 = vperm.xlu0 %2114, %v1549
        %v2116 = vpop.permute.xlu0 %2115
        %2118 = vset.pattern.permute.xlu0 1
        %2119 = vperm.xlu0 %2118, %v1550
        %v2120 = vpop.permute.xlu0 %2119
        %2122 = vset.pattern.permute.xlu0 1
        %2123 = vperm.xlu0 %2122, %v1551
        %v2124 = vpop.permute.xlu0 %2123
        %2126 = vset.pattern.permute.xlu0 1
        %2127 = vperm.xlu0 %2126, %v1552
        %v2128 = vpop.permute.xlu0 %2127
        %2130 = vset.pattern.permute.xlu0 1
        %2131 = vperm.xlu0 %2130, %v1553
        %v2132 = vpop.permute.xlu0 %2131
        %2134 = vset.pattern.permute.xlu0 1
        %2135 = vperm.xlu0 %2134, %v1554
        %v2136 = vpop.permute.xlu0 %2135
        %2138 = vset.pattern.permute.xlu0 1
        %2139 = vperm.xlu0 %2138, %v1555
        %v2140 = vpop.permute.xlu0 %2139
        %2142 = vset.pattern.permute.xlu0 1
        %2143 = vperm.xlu0 %2142, %v1556
        %v2144 = vpop.permute.xlu0 %2143
        %2146 = vset.pattern.permute.xlu0 1
        %2147 = vperm.xlu0 %2146, %v1557
        %v2148 = vpop.permute.xlu0 %2147
        %2150 = vset.pattern.permute.xlu0 1
        %2151 = vperm.xlu0 %2150, %v1558
        %v2152 = vpop.permute.xlu0 %2151
        %2154 = vset.pattern.permute.xlu0 1
        %2155 = vperm.xlu0 %2154, %v1559
        %v2156 = vpop.permute.xlu0 %2155
        %2158 = vset.pattern.permute.xlu0 1
        %2159 = vperm.xlu0 %2158, %v1560
        %v2160 = vpop.permute.xlu0 %2159
        %2162 = vset.pattern.permute.xlu0 1
        %2163 = vperm.xlu0 %2162, %v1561
        %v2164 = vpop.permute.xlu0 %2163
        %2166 = vset.pattern.permute.xlu0 1
        %2167 = vperm.xlu0 %2166, %v1562
        %v2168 = vpop.permute.xlu0 %2167
        %2170 = vset.pattern.permute.xlu0 1
        %2171 = vperm.xlu0 %2170, %v1563
        %v2172 = vpop.permute.xlu0 %2171
        %2174 = vset.pattern.permute.xlu0 1
        %2175 = vperm.xlu0 %2174, %v1564
        %v2176 = vpop.permute.xlu0 %2175
        %2178 = vset.pattern.permute.xlu0 1
        %2179 = vperm.xlu0 %2178, %v1565
        %v2180 = vpop.permute.xlu0 %2179
        %2182 = vset.pattern.permute.xlu0 1
        %2183 = vperm.xlu0 %2182, %v1566
        %v2184 = vpop.permute.xlu0 %2183
        %2186 = vset.pattern.permute.xlu0 1
        %2187 = vperm.xlu0 %2186, %v1567
        %v2188 = vpop.permute.xlu0 %2187
        %2190 = vset.pattern.permute.xlu0 1
        %2191 = vperm.xlu0 %2190, %v1568
        %v2192 = vpop.permute.xlu0 %2191
        %2194 = vset.pattern.permute.xlu0 1
        %2195 = vperm.xlu0 %2194, %v1569
        %v2196 = vpop.permute.xlu0 %2195
        %2198 = vset.pattern.permute.xlu0 1
        %2199 = vperm.xlu0 %2198, %v1570
        %v2200 = vpop.permute.xlu0 %2199
        %2202 = vset.pattern.permute.xlu0 1
        %2203 = vperm.xlu0 %2202, %v1571
        %v2204 = vpop.permute.xlu0 %2203
        %2206 = vset.pattern.permute.xlu0 1
        %2207 = vperm.xlu0 %2206, %v1572
        %v2208 = vpop.permute.xlu0 %2207
        %2210 = vset.pattern.permute.xlu0 1
        %2211 = vperm.xlu0 %2210, %v1573
        %v2212 = vpop.permute.xlu0 %2211
        %v2246 = vunpack.c.l.b16 %v1990
        %v2247 = vunpack.c.h.b16 %v1990
        %v2248 = vunpack.c.l.b16 %v1991
        %v2249 = vunpack.c.h.b16 %v1991
        %v2250 = vunpack.c.l.b16 %v1992
        %v2251 = vunpack.c.h.b16 %v1992
        %v2252 = vunpack.c.l.b16 %v1993
        %v2253 = vunpack.c.h.b16 %v1993
        %v2254 = vunpack.c.l.b16 %v1994
        %v2255 = vunpack.c.h.b16 %v1994
        %v2256 = vunpack.c.l.b16 %v1995
        %v2257 = vunpack.c.h.b16 %v1995
        %v2258 = vunpack.c.l.b16 %v1996
        %v2259 = vunpack.c.h.b16 %v1996
        %v2260 = vunpack.c.l.b16 %v1997
        %v2261 = vunpack.c.h.b16 %v1997
        %v2262 = vunpack.c.l.b16 %v1998
        %v2263 = vunpack.c.h.b16 %v1998
        %v2264 = vunpack.c.l.b16 %v1999
        %v2265 = vunpack.c.h.b16 %v1999
        %v2266 = vunpack.c.l.b16 %v2000
        %v2267 = vunpack.c.h.b16 %v2000
        %v2268 = vunpack.c.l.b16 %v2001
        %v2269 = vunpack.c.h.b16 %v2001
        %v2270 = vunpack.c.l.b16 %v2002
        %v2271 = vunpack.c.h.b16 %v2002
        %v2272 = vunpack.c.l.b16 %v2003
        %v2273 = vunpack.c.h.b16 %v2003
        %v2274 = vunpack.c.l.b16 %v2004
        %v2275 = vunpack.c.h.b16 %v2004
        %v2276 = vunpack.c.l.b16 %v2005
        %v2277 = vunpack.c.h.b16 %v2005
        %v2278 = vunpack.c.l.b16 %v2006
        %v2279 = vunpack.c.h.b16 %v2006
        %v2280 = vunpack.c.l.b16 %v2007
        %v2281 = vunpack.c.h.b16 %v2007
        %v2282 = vunpack.c.l.b16 %v2008
        %v2283 = vunpack.c.h.b16 %v2008
        %v2284 = vunpack.c.l.b16 %v2009
        %v2285 = vunpack.c.h.b16 %v2009
        %v2286 = vunpack.c.l.b16 %v2010
        %v2287 = vunpack.c.h.b16 %v2010
        %v2288 = vunpack.c.l.b16 %v2011
        %v2289 = vunpack.c.h.b16 %v2011
        %v2290 = vunpack.c.l.b16 %v2012
        %v2291 = vunpack.c.h.b16 %v2012
        %v2292 = vunpack.c.l.b16 %v2013
        %v2293 = vunpack.c.h.b16 %v2013
        %v2294 = vunpack.c.l.b16 %v2014
        %v2295 = vunpack.c.h.b16 %v2014
        %v2296 = vunpack.c.l.b16 %v2015
        %v2297 = vunpack.c.h.b16 %v2015
        %v2298 = vunpack.c.l.b16 %v2016
        %v2299 = vunpack.c.h.b16 %v2016
        %v2300 = vunpack.c.l.b16 %v2017
        %v2301 = vunpack.c.h.b16 %v2017
        %v2302 = vunpack.c.l.b16 %v2018
        %v2303 = vunpack.c.h.b16 %v2018
        %v2304 = vunpack.c.l.b16 %v2019
        %v2305 = vunpack.c.h.b16 %v2019
        %v2306 = vunpack.c.l.b16 %v2020
        %v2307 = vunpack.c.h.b16 %v2020
        %v2308 = vunpack.c.l.b16 %v2021
        %v2309 = vunpack.c.h.b16 %v2021
        %v2310 = vpack.c.b16 %v2248, %v2246
        %v2311 = vpack.c.b16 %v2249, %v2247
        %v2312 = vpack.c.b16 %v2252, %v2250
        %v2313 = vpack.c.b16 %v2253, %v2251
        %v2314 = vpack.c.b16 %v2256, %v2254
        %v2315 = vpack.c.b16 %v2257, %v2255
        %v2316 = vpack.c.b16 %v2260, %v2258
        %v2317 = vpack.c.b16 %v2261, %v2259
        %v2318 = vpack.c.b16 %v2264, %v2262
        %v2319 = vpack.c.b16 %v2265, %v2263
        %v2320 = vpack.c.b16 %v2268, %v2266
        %v2321 = vpack.c.b16 %v2269, %v2267
        %v2322 = vpack.c.b16 %v2272, %v2270
        %v2323 = vpack.c.b16 %v2273, %v2271
        %v2324 = vpack.c.b16 %v2276, %v2274
        %v2325 = vpack.c.b16 %v2277, %v2275
        %v2326 = vpack.c.b16 %v2280, %v2278
        %v2327 = vpack.c.b16 %v2281, %v2279
        %v2328 = vpack.c.b16 %v2284, %v2282
        %v2329 = vpack.c.b16 %v2285, %v2283
        %v2330 = vpack.c.b16 %v2288, %v2286
        %v2331 = vpack.c.b16 %v2289, %v2287
        %v2332 = vpack.c.b16 %v2292, %v2290
        %v2333 = vpack.c.b16 %v2293, %v2291
        %v2334 = vpack.c.b16 %v2296, %v2294
        %v2335 = vpack.c.b16 %v2297, %v2295
        %v2336 = vpack.c.b16 %v2300, %v2298
        %v2337 = vpack.c.b16 %v2301, %v2299
        %v2338 = vpack.c.b16 %v2304, %v2302
        %v2339 = vpack.c.b16 %v2305, %v2303
        %v2340 = vpack.c.b16 %v2308, %v2306
        %v2341 = vpack.c.b16 %v2309, %v2307
        %2374 = vmatprep.subr.bf16.mxu0 %v2023
        %2375 = vmatpush1.bf16.msra.mxu0 %v2022
        %2376 = vmatprep.subr.bf16.mxu0 %v2027
        %2377 = vmatpush1.bf16.msra.mxu0 %v2026
        %2378 = vmatprep.subr.bf16.mxu0 %v2031
        %2379 = vmatpush1.bf16.msra.mxu0 %v2030
        %2380 = vmatprep.subr.bf16.mxu0 %v2035
        %2381 = vmatpush1.bf16.msra.mxu0 %v2034
        %2382 = vmatprep.subr.bf16.mxu0 %v2039
        %2383 = vmatpush1.bf16.msra.mxu0 %v2038
        %2384 = vmatprep.subr.bf16.mxu0 %v2043
        %2385 = vmatpush1.bf16.msra.mxu0 %v2042
        %2386 = vmatprep.subr.bf16.mxu0 %v2047
        %2387 = vmatpush1.bf16.msra.mxu0 %v2046
        %2388 = vmatprep.subr.bf16.mxu0 %v2051
        %2389 = vmatpush1.bf16.msra.mxu0 %v2050
        %2390 = vmatprep.subr.bf16.mxu0 %v2055
        %2391 = vmatpush1.bf16.msra.mxu0 %v2054
        %2392 = vmatprep.subr.bf16.mxu0 %v2059
        %2393 = vmatpush1.bf16.msra.mxu0 %v2058
        %2394 = vmatprep.subr.bf16.mxu0 %v2063
        %2395 = vmatpush1.bf16.msra.mxu0 %v2062
        %2396 = vmatprep.subr.bf16.mxu0 %v2067
        %2397 = vmatpush1.bf16.msra.mxu0 %v2066
        %2398 = vmatprep.subr.bf16.mxu0 %v2071
        %2399 = vmatpush1.bf16.msra.mxu0 %v2070
        %2400 = vmatprep.subr.bf16.mxu0 %v2075
        %2401 = vmatpush1.bf16.msra.mxu0 %v2074
        %2402 = vmatprep.subr.bf16.mxu0 %v2079
        %2403 = vmatpush1.bf16.msra.mxu0 %v2078
        %2404 = vmatprep.subr.bf16.mxu0 %v2083
        %2405 = vmatpush1.bf16.msra.mxu0 %v2082
        %2406 = vmatprep.mubr.bf16.mxu0 %v2311
        %2407 = vmatmul.mubr.bf16.gmra.mrb[0].mxu0 %v2310
        %v2408 = vpop.f32.mrb[0].mxu0
        %v2409 = vadd.f32 %v2088, %v2408
        %v2410 = vpop.f32.mrb[0].mxu0
        %v2411 = vadd.f32 %v2088, %v2410
        %v2412 = vpop.f32.mrb[0].mxu0
        %v2413 = vadd.f32 %v2092, %v2412
        %v2414 = vpop.f32.mrb[0].mxu0
        %v2415 = vadd.f32 %v2092, %v2414
        %2416 = vmatprep.mubr.bf16.mxu0 %v2313
        %2417 = vmatmul.mubr.bf16.gmra.mrb[0].mxu0 %v2312
        %v2418 = vpop.f32.mrb[0].mxu0
        %v2419 = vadd.f32 %v2096, %v2418
        %v2420 = vpop.f32.mrb[0].mxu0
        %v2421 = vadd.f32 %v2096, %v2420
        %v2422 = vpop.f32.mrb[0].mxu0
        %v2423 = vadd.f32 %v2100, %v2422
        %v2424 = vpop.f32.mrb[0].mxu0
        %v2425 = vadd.f32 %v2100, %v2424
        %2426 = vmatprep.mubr.bf16.mxu0 %v2315
        %2427 = vmatmul.mubr.bf16.gmra.mrb[0].mxu0 %v2314
        %v2428 = vpop.f32.mrb[0].mxu0
        %v2429 = vadd.f32 %v2104, %v2428
        %v2430 = vpop.f32.mrb[0].mxu0
        %v2431 = vadd.f32 %v2104, %v2430
        %v2432 = vpop.f32.mrb[0].mxu0
        %v2433 = vadd.f32 %v2108, %v2432
        %v2434 = vpop.f32.mrb[0].mxu0
        %v2435 = vadd.f32 %v2108, %v2434
        %2436 = vmatprep.mubr.bf16.mxu0 %v2317
        %2437 = vmatmul.mubr.bf16.gmra.mrb[0].mxu0 %v2316
        %v2438 = vpop.f32.mrb[0].mxu0
        %v2439 = vadd.f32 %v2112, %v2438
        %v2440 = vpop.f32.mrb[0].mxu0
        %v2441 = vadd.f32 %v2112, %v2440
        %v2442 = vpop.f32.mrb[0].mxu0
        %v2443 = vadd.f32 %v2116, %v2442
        %v2444 = vpop.f32.mrb[0].mxu0
        %v2445 = vadd.f32 %v2116, %v2444
        %2446 = vmatprep.mubr.bf16.mxu0 %v2319
        %2447 = vmatmul.mubr.bf16.gmra.mrb[0].mxu0 %v2318
        %v2448 = vpop.f32.mrb[0].mxu0
        %v2449 = vadd.f32 %v2120, %v2448
        %v2450 = vpop.f32.mrb[0].mxu0
        %v2451 = vadd.f32 %v2120, %v2450
        %v2452 = vpop.f32.mrb[0].mxu0
        %v2453 = vadd.f32 %v2124, %v2452
        %v2454 = vpop.f32.mrb[0].mxu0
        %v2455 = vadd.f32 %v2124, %v2454
        %2456 = vmatprep.mubr.bf16.mxu0 %v2321
        %2457 = vmatmul.mubr.bf16.gmra.mrb[0].mxu0 %v2320
        %v2458 = vpop.f32.mrb[0].mxu0
        %v2459 = vadd.f32 %v2128, %v2458
        %v2460 = vpop.f32.mrb[0].mxu0
        %v2461 = vadd.f32 %v2128, %v2460
        %v2462 = vpop.f32.mrb[0].mxu0
        %v2463 = vadd.f32 %v2132, %v2462
        %v2464 = vpop.f32.mrb[0].mxu0
        %v2465 = vadd.f32 %v2132, %v2464
        %2466 = vmatprep.mubr.bf16.mxu0 %v2323
        %2467 = vmatmul.mubr.bf16.gmra.mrb[0].mxu0 %v2322
        %v2468 = vpop.f32.mrb[0].mxu0
        %v2469 = vadd.f32 %v2136, %v2468
        %v2470 = vpop.f32.mrb[0].mxu0
        %v2471 = vadd.f32 %v2136, %v2470
        %v2472 = vpop.f32.mrb[0].mxu0
        %v2473 = vadd.f32 %v2140, %v2472
        %v2474 = vpop.f32.mrb[0].mxu0
        %v2475 = vadd.f32 %v2140, %v2474
        %2476 = vmatprep.mubr.bf16.mxu0 %v2325
        %2477 = vmatmul.mubr.bf16.gmra.mrb[0].mxu0 %v2324
        %v2478 = vpop.f32.mrb[0].mxu0
        %v2479 = vadd.f32 %v2144, %v2478
        %v2480 = vpop.f32.mrb[0].mxu0
        %v2481 = vadd.f32 %v2144, %v2480
        %v2482 = vpop.f32.mrb[0].mxu0
        %v2483 = vadd.f32 %v2148, %v2482
        %v2484 = vpop.f32.mrb[0].mxu0
        %v2485 = vadd.f32 %v2148, %v2484
        %2486 = vmatprep.mubr.bf16.mxu0 %v2327
        %2487 = vmatmul.mubr.bf16.gmra.mrb[0].mxu0 %v2326
        %v2488 = vpop.f32.mrb[0].mxu0
        %v2489 = vadd.f32 %v2152, %v2488
        %v2490 = vpop.f32.mrb[0].mxu0
        %v2491 = vadd.f32 %v2152, %v2490
        %v2492 = vpop.f32.mrb[0].mxu0
        %v2493 = vadd.f32 %v2156, %v2492
        %v2494 = vpop.f32.mrb[0].mxu0
        %v2495 = vadd.f32 %v2156, %v2494
        %2496 = vmatprep.mubr.bf16.mxu0 %v2329
        %2497 = vmatmul.mubr.bf16.gmra.mrb[0].mxu0 %v2328
        %v2498 = vpop.f32.mrb[0].mxu0
        %v2499 = vadd.f32 %v2160, %v2498
        %v2500 = vpop.f32.mrb[0].mxu0
        %v2501 = vadd.f32 %v2160, %v2500
        %v2502 = vpop.f32.mrb[0].mxu0
        %v2503 = vadd.f32 %v2164, %v2502
        %v2504 = vpop.f32.mrb[0].mxu0
        %v2505 = vadd.f32 %v2164, %v2504
        %2506 = vmatprep.mubr.bf16.mxu0 %v2331
        %2507 = vmatmul.mubr.bf16.gmra.mrb[0].mxu0 %v2330
        %v2508 = vpop.f32.mrb[0].mxu0
        %v2509 = vadd.f32 %v2168, %v2508
        %v2510 = vpop.f32.mrb[0].mxu0
        %v2511 = vadd.f32 %v2168, %v2510
        %v2512 = vpop.f32.mrb[0].mxu0
        %v2513 = vadd.f32 %v2172, %v2512
        %v2514 = vpop.f32.mrb[0].mxu0
        %v2515 = vadd.f32 %v2172, %v2514
        %2516 = vmatprep.mubr.bf16.mxu0 %v2333
        %2517 = vmatmul.mubr.bf16.gmra.mrb[0].mxu0 %v2332
        %v2518 = vpop.f32.mrb[0].mxu0
        %v2519 = vadd.f32 %v2176, %v2518
        %v2520 = vpop.f32.mrb[0].mxu0
        %v2521 = vadd.f32 %v2176, %v2520
        %v2522 = vpop.f32.mrb[0].mxu0
        %v2523 = vadd.f32 %v2180, %v2522
        %v2524 = vpop.f32.mrb[0].mxu0
        %v2525 = vadd.f32 %v2180, %v2524
        %2526 = vmatprep.mubr.bf16.mxu0 %v2335
        %2527 = vmatmul.mubr.bf16.gmra.mrb[0].mxu0 %v2334
        %v2528 = vpop.f32.mrb[0].mxu0
        %v2529 = vadd.f32 %v2184, %v2528
        %v2530 = vpop.f32.mrb[0].mxu0
        %v2531 = vadd.f32 %v2184, %v2530
        %v2532 = vpop.f32.mrb[0].mxu0
        %v2533 = vadd.f32 %v2188, %v2532
        %v2534 = vpop.f32.mrb[0].mxu0
        %v2535 = vadd.f32 %v2188, %v2534
        %2536 = vmatprep.mubr.bf16.mxu0 %v2337
        %2537 = vmatmul.mubr.bf16.gmra.mrb[0].mxu0 %v2336
        %v2538 = vpop.f32.mrb[0].mxu0
        %v2539 = vadd.f32 %v2192, %v2538
        %v2540 = vpop.f32.mrb[0].mxu0
        %v2541 = vadd.f32 %v2192, %v2540
        %v2542 = vpop.f32.mrb[0].mxu0
        %v2543 = vadd.f32 %v2196, %v2542
        %v2544 = vpop.f32.mrb[0].mxu0
        %v2545 = vadd.f32 %v2196, %v2544
        %2546 = vmatprep.mubr.bf16.mxu0 %v2339
        %2547 = vmatmul.mubr.bf16.gmra.mrb[0].mxu0 %v2338
        %v2548 = vpop.f32.mrb[0].mxu0
        %v2549 = vadd.f32 %v2200, %v2548
        %v2550 = vpop.f32.mrb[0].mxu0
        %v2551 = vadd.f32 %v2200, %v2550
        %v2552 = vpop.f32.mrb[0].mxu0
        %v2553 = vadd.f32 %v2204, %v2552
        %v2554 = vpop.f32.mrb[0].mxu0
        %v2555 = vadd.f32 %v2204, %v2554
        %2556 = vmatprep.mubr.bf16.mxu0 %v2341
        %2557 = vmatmul.mubr.bf16.gmra.mrb[0].mxu0 %v2340
        %v2558 = vpop.f32.mrb[0].mxu0
        %v2559 = vadd.f32 %v2208, %v2558
        %v2560 = vpop.f32.mrb[0].mxu0
        %v2561 = vadd.f32 %v2208, %v2560
        %v2562 = vpop.f32.mrb[0].mxu0
        %v2563 = vadd.f32 %v2212, %v2562
        %v2564 = vpop.f32.mrb[0].mxu0
        %v2565 = vadd.f32 %v2212, %v2564
        %2566 = vdwg.mxu0
        %2567 = vmatprep.subr.bf16.mxu0 %v2025
        %2568 = vmatpush1.bf16.msra.mxu0 %v2024
        %2569 = vmatprep.subr.bf16.mxu0 %v2029
        %2570 = vmatpush1.bf16.msra.mxu0 %v2028
        %2571 = vmatprep.subr.bf16.mxu0 %v2033
        %2572 = vmatpush1.bf16.msra.mxu0 %v2032
        %2573 = vmatprep.subr.bf16.mxu0 %v2037
        %2574 = vmatpush1.bf16.msra.mxu0 %v2036
        %2575 = vmatprep.subr.bf16.mxu0 %v2041
        %2576 = vmatpush1.bf16.msra.mxu0 %v2040
        %2577 = vmatprep.subr.bf16.mxu0 %v2045
        %2578 = vmatpush1.bf16.msra.mxu0 %v2044
        %2579 = vmatprep.subr.bf16.mxu0 %v2049
        %2580 = vmatpush1.bf16.msra.mxu0 %v2048
        %2581 = vmatprep.subr.bf16.mxu0 %v2053
        %2582 = vmatpush1.bf16.msra.mxu0 %v2052
        %2583 = vmatprep.subr.bf16.mxu0 %v2057
        %2584 = vmatpush1.bf16.msra.mxu0 %v2056
        %2585 = vmatprep.subr.bf16.mxu0 %v2061
        %2586 = vmatpush1.bf16.msra.mxu0 %v2060
        %2587 = vmatprep.subr.bf16.mxu0 %v2065
        %2588 = vmatpush1.bf16.msra.mxu0 %v2064
        %2589 = vmatprep.subr.bf16.mxu0 %v2069
        %2590 = vmatpush1.bf16.msra.mxu0 %v2068
        %2591 = vmatprep.subr.bf16.mxu0 %v2073
        %2592 = vmatpush1.bf16.msra.mxu0 %v2072
        %2593 = vmatprep.subr.bf16.mxu0 %v2077
        %2594 = vmatpush1.bf16.msra.mxu0 %v2076
        %2595 = vmatprep.subr.bf16.mxu0 %v2081
        %2596 = vmatpush1.bf16.msra.mxu0 %v2080
        %2597 = vmatprep.subr.bf16.mxu0 %v2085
        %2598 = vmatpush1.bf16.msra.mxu0 %v2084
        %2599 = vmatprep.mubr.bf16.mxu0 %v2311
        %2600 = vmatmul.mubr.bf16.gmra.mrb[0].mxu0 %v2310
        %v2601 = vpop.f32.mrb[0].mxu0
        %v2602 = vadd.f32 %v2088, %v2601
        %v2603 = vpop.f32.mrb[0].mxu0
        %v2604 = vadd.f32 %v2088, %v2603
        %v2605 = vpop.f32.mrb[0].mxu0
        %v2606 = vadd.f32 %v2092, %v2605
        %v2607 = vpop.f32.mrb[0].mxu0
        %v2608 = vadd.f32 %v2092, %v2607
        %2609 = vmatprep.mubr.bf16.mxu0 %v2313
        %2610 = vmatmul.mubr.bf16.gmra.mrb[0].mxu0 %v2312
        %v2611 = vpop.f32.mrb[0].mxu0
        %v2612 = vadd.f32 %v2096, %v2611
        %v2613 = vpop.f32.mrb[0].mxu0
        %v2614 = vadd.f32 %v2096, %v2613
        %v2615 = vpop.f32.mrb[0].mxu0
        %v2616 = vadd.f32 %v2100, %v2615
        %v2617 = vpop.f32.mrb[0].mxu0
        %v2618 = vadd.f32 %v2100, %v2617
        %2619 = vmatprep.mubr.bf16.mxu0 %v2315
        %2620 = vmatmul.mubr.bf16.gmra.mrb[0].mxu0 %v2314
        %v2621 = vpop.f32.mrb[0].mxu0
        %v2622 = vadd.f32 %v2104, %v2621
        %v2623 = vpop.f32.mrb[0].mxu0
        %v2624 = vadd.f32 %v2104, %v2623
        %v2625 = vpop.f32.mrb[0].mxu0
        %v2626 = vadd.f32 %v2108, %v2625
        %v2627 = vpop.f32.mrb[0].mxu0
        %v2628 = vadd.f32 %v2108, %v2627
        %2629 = vmatprep.mubr.bf16.mxu0 %v2317
        %2630 = vmatmul.mubr.bf16.gmra.mrb[0].mxu0 %v2316
        %v2631 = vpop.f32.mrb[0].mxu0
        %v2632 = vadd.f32 %v2112, %v2631
        %v2633 = vpop.f32.mrb[0].mxu0
        %v2634 = vadd.f32 %v2112, %v2633
        %v2635 = vpop.f32.mrb[0].mxu0
        %v2636 = vadd.f32 %v2116, %v2635
        %v2637 = vpop.f32.mrb[0].mxu0
        %v2638 = vadd.f32 %v2116, %v2637
        %2639 = vmatprep.mubr.bf16.mxu0 %v2319
        %2640 = vmatmul.mubr.bf16.gmra.mrb[0].mxu0 %v2318
        %v2641 = vpop.f32.mrb[0].mxu0
        %v2642 = vadd.f32 %v2120, %v2641
        %v2643 = vpop.f32.mrb[0].mxu0
        %v2644 = vadd.f32 %v2120, %v2643
        %v2645 = vpop.f32.mrb[0].mxu0
        %v2646 = vadd.f32 %v2124, %v2645
        %v2647 = vpop.f32.mrb[0].mxu0
        %v2648 = vadd.f32 %v2124, %v2647
        %2649 = vmatprep.mubr.bf16.mxu0 %v2321
        %2650 = vmatmul.mubr.bf16.gmra.mrb[0].mxu0 %v2320
        %v2651 = vpop.f32.mrb[0].mxu0
        %v2652 = vadd.f32 %v2128, %v2651
        %v2653 = vpop.f32.mrb[0].mxu0
        %v2654 = vadd.f32 %v2128, %v2653
        %v2655 = vpop.f32.mrb[0].mxu0
        %v2656 = vadd.f32 %v2132, %v2655
        %v2657 = vpop.f32.mrb[0].mxu0
        %v2658 = vadd.f32 %v2132, %v2657
        %2659 = vmatprep.mubr.bf16.mxu0 %v2323
        %2660 = vmatmul.mubr.bf16.gmra.mrb[0].mxu0 %v2322
        %v2661 = vpop.f32.mrb[0].mxu0
        %v2662 = vadd.f32 %v2136, %v2661
        %v2663 = vpop.f32.mrb[0].mxu0
        %v2664 = vadd.f32 %v2136, %v2663
        %v2665 = vpop.f32.mrb[0].mxu0
        %v2666 = vadd.f32 %v2140, %v2665
        %v2667 = vpop.f32.mrb[0].mxu0
        %v2668 = vadd.f32 %v2140, %v2667
        %2669 = vmatprep.mubr.bf16.mxu0 %v2325
        %2670 = vmatmul.mubr.bf16.gmra.mrb[0].mxu0 %v2324
        %v2671 = vpop.f32.mrb[0].mxu0
        %v2672 = vadd.f32 %v2144, %v2671
        %v2673 = vpop.f32.mrb[0].mxu0
        %v2674 = vadd.f32 %v2144, %v2673
        %v2675 = vpop.f32.mrb[0].mxu0
        %v2676 = vadd.f32 %v2148, %v2675
        %v2677 = vpop.f32.mrb[0].mxu0
        %v2678 = vadd.f32 %v2148, %v2677
        %2679 = vmatprep.mubr.bf16.mxu0 %v2327
        %2680 = vmatmul.mubr.bf16.gmra.mrb[0].mxu0 %v2326
        %v2681 = vpop.f32.mrb[0].mxu0
        %v2682 = vadd.f32 %v2152, %v2681
        %v2683 = vpop.f32.mrb[0].mxu0
        %v2684 = vadd.f32 %v2152, %v2683
        %v2685 = vpop.f32.mrb[0].mxu0
        %v2686 = vadd.f32 %v2156, %v2685
        %v2687 = vpop.f32.mrb[0].mxu0
        %v2688 = vadd.f32 %v2156, %v2687
        %2689 = vmatprep.mubr.bf16.mxu0 %v2329
        %2690 = vmatmul.mubr.bf16.gmra.mrb[0].mxu0 %v2328
        %v2691 = vpop.f32.mrb[0].mxu0
        %v2692 = vadd.f32 %v2160, %v2691
        %v2693 = vpop.f32.mrb[0].mxu0
        %v2694 = vadd.f32 %v2160, %v2693
        %v2695 = vpop.f32.mrb[0].mxu0
        %v2696 = vadd.f32 %v2164, %v2695
        %v2697 = vpop.f32.mrb[0].mxu0
        %v2698 = vadd.f32 %v2164, %v2697
        %2699 = vmatprep.mubr.bf16.mxu0 %v2331
        %2700 = vmatmul.mubr.bf16.gmra.mrb[0].mxu0 %v2330
        %v2701 = vpop.f32.mrb[0].mxu0
        %v2702 = vadd.f32 %v2168, %v2701
        %v2703 = vpop.f32.mrb[0].mxu0
        %v2704 = vadd.f32 %v2168, %v2703
        %v2705 = vpop.f32.mrb[0].mxu0
        %v2706 = vadd.f32 %v2172, %v2705
        %v2707 = vpop.f32.mrb[0].mxu0
        %v2708 = vadd.f32 %v2172, %v2707
        %2709 = vmatprep.mubr.bf16.mxu0 %v2333
        %2710 = vmatmul.mubr.bf16.gmra.mrb[0].mxu0 %v2332
        %v2711 = vpop.f32.mrb[0].mxu0
        %v2712 = vadd.f32 %v2176, %v2711
        %v2713 = vpop.f32.mrb[0].mxu0
        %v2714 = vadd.f32 %v2176, %v2713
        %v2715 = vpop.f32.mrb[0].mxu0
        %v2716 = vadd.f32 %v2180, %v2715
        %v2717 = vpop.f32.mrb[0].mxu0
        %v2718 = vadd.f32 %v2180, %v2717
        %2719 = vmatprep.mubr.bf16.mxu0 %v2335
        %2720 = vmatmul.mubr.bf16.gmra.mrb[0].mxu0 %v2334
        %v2721 = vpop.f32.mrb[0].mxu0
        %v2722 = vadd.f32 %v2184, %v2721
        %v2723 = vpop.f32.mrb[0].mxu0
        %v2724 = vadd.f32 %v2184, %v2723
        %v2725 = vpop.f32.mrb[0].mxu0
        %v2726 = vadd.f32 %v2188, %v2725
        %v2727 = vpop.f32.mrb[0].mxu0
        %v2728 = vadd.f32 %v2188, %v2727
        %2729 = vmatprep.mubr.bf16.mxu0 %v2337
        %2730 = vmatmul.mubr.bf16.gmra.mrb[0].mxu0 %v2336
        %v2731 = vpop.f32.mrb[0].mxu0
        %v2732 = vadd.f32 %v2192, %v2731
        %v2733 = vpop.f32.mrb[0].mxu0
        %v2734 = vadd.f32 %v2192, %v2733
        %v2735 = vpop.f32.mrb[0].mxu0
        %v2736 = vadd.f32 %v2196, %v2735
        %v2737 = vpop.f32.mrb[0].mxu0
        %v2738 = vadd.f32 %v2196, %v2737
        %2739 = vmatprep.mubr.bf16.mxu0 %v2339
        %2740 = vmatmul.mubr.bf16.gmra.mrb[0].mxu0 %v2338
        %v2741 = vpop.f32.mrb[0].mxu0
        %v2742 = vadd.f32 %v2200, %v2741
        %v2743 = vpop.f32.mrb[0].mxu0
        %v2744 = vadd.f32 %v2200, %v2743
        %v2745 = vpop.f32.mrb[0].mxu0
        %v2746 = vadd.f32 %v2204, %v2745
        %v2747 = vpop.f32.mrb[0].mxu0
        %v2748 = vadd.f32 %v2204, %v2747
        %2749 = vmatprep.mubr.bf16.mxu0 %v2341
        %2750 = vmatmul.mubr.bf16.gmra.mrb[0].mxu0 %v2340
        %v2751 = vpop.f32.mrb[0].mxu0
        %v2752 = vadd.f32 %v2208, %v2751
        %v2753 = vpop.f32.mrb[0].mxu0
        %v2754 = vadd.f32 %v2208, %v2753
        %v2755 = vpop.f32.mrb[0].mxu0
        %v2756 = vadd.f32 %v2212, %v2755
        %v2757 = vpop.f32.mrb[0].mxu0
        %v2758 = vadd.f32 %v2212, %v2757
        %2759 = vdwg.mxu0
        %v2760 = vmax.f32 %v2409, 0.0
        %v2761 = vmax.f32 %v2411, 0.0
        %v2762 = vmax.f32 %v2602, 0.0
        %v2763 = vmax.f32 %v2604, 0.0
        %v2764 = vmax.f32 %v2413, 0.0
        %v2765 = vmax.f32 %v2415, 0.0
        %v2766 = vmax.f32 %v2606, 0.0
        %v2767 = vmax.f32 %v2608, 0.0
        %v2768 = vmax.f32 %v2419, 0.0
        %v2769 = vmax.f32 %v2421, 0.0
        %v2770 = vmax.f32 %v2612, 0.0
        %v2771 = vmax.f32 %v2614, 0.0
        %v2772 = vmax.f32 %v2423, 0.0
        %v2773 = vmax.f32 %v2425, 0.0
        %v2774 = vmax.f32 %v2616, 0.0
        %v2775 = vmax.f32 %v2618, 0.0
        %v2776 = vmax.f32 %v2429, 0.0
        %v2777 = vmax.f32 %v2431, 0.0
        %v2778 = vmax.f32 %v2622, 0.0
        %v2779 = vmax.f32 %v2624, 0.0
        %v2780 = vmax.f32 %v2433, 0.0
        %v2781 = vmax.f32 %v2435, 0.0
        %v2782 = vmax.f32 %v2626, 0.0
        %v2783 = vmax.f32 %v2628, 0.0
        %v2784 = vmax.f32 %v2439, 0.0
        %v2785 = vmax.f32 %v2441, 0.0
        %v2786 = vmax.f32 %v2632, 0.0
        %v2787 = vmax.f32 %v2634, 0.0
        %v2788 = vmax.f32 %v2443, 0.0
        %v2789 = vmax.f32 %v2445, 0.0
        %v2790 = vmax.f32 %v2636, 0.0
        %v2791 = vmax.f32 %v2638, 0.0
        %v2792 = vmax.f32 %v2449, 0.0
        %v2793 = vmax.f32 %v2451, 0.0
        %v2794 = vmax.f32 %v2642, 0.0
        %v2795 = vmax.f32 %v2644, 0.0
        %v2796 = vmax.f32 %v2453, 0.0
        %v2797 = vmax.f32 %v2455, 0.0
        %v2798 = vmax.f32 %v2646, 0.0
        %v2799 = vmax.f32 %v2648, 0.0
        %v2800 = vmax.f32 %v2459, 0.0
        %v2801 = vmax.f32 %v2461, 0.0
        %v2802 = vmax.f32 %v2652, 0.0
        %v2803 = vmax.f32 %v2654, 0.0
        %v2804 = vmax.f32 %v2463, 0.0
        %v2805 = vmax.f32 %v2465, 0.0
        %v2806 = vmax.f32 %v2656, 0.0
        %v2807 = vmax.f32 %v2658, 0.0
        %v2808 = vmax.f32 %v2469, 0.0
        %v2809 = vmax.f32 %v2471, 0.0
        %v2810 = vmax.f32 %v2662, 0.0
        %v2811 = vmax.f32 %v2664, 0.0
        %v2812 = vmax.f32 %v2473, 0.0
        %v2813 = vmax.f32 %v2475, 0.0
        %v2814 = vmax.f32 %v2666, 0.0
        %v2815 = vmax.f32 %v2668, 0.0
        %v2816 = vmax.f32 %v2479, 0.0
        %v2817 = vmax.f32 %v2481, 0.0
        %v2818 = vmax.f32 %v2672, 0.0
        %v2819 = vmax.f32 %v2674, 0.0
        %v2820 = vmax.f32 %v2483, 0.0
        %v2821 = vmax.f32 %v2485, 0.0
        %v2822 = vmax.f32 %v2676, 0.0
        %v2823 = vmax.f32 %v2678, 0.0
        %v2824 = vmax.f32 %v2489, 0.0
        %v2825 = vmax.f32 %v2491, 0.0
        %v2826 = vmax.f32 %v2682, 0.0
        %v2827 = vmax.f32 %v2684, 0.0
        %v2828 = vmax.f32 %v2493, 0.0
        %v2829 = vmax.f32 %v2495, 0.0
        %v2830 = vmax.f32 %v2686, 0.0
        %v2831 = vmax.f32 %v2688, 0.0
        %v2832 = vmax.f32 %v2499, 0.0
        %v2833 = vmax.f32 %v2501, 0.0
        %v2834 = vmax.f32 %v2692, 0.0
        %v2835 = vmax.f32 %v2694, 0.0
        %v2836 = vmax.f32 %v2503, 0.0
        %v2837 = vmax.f32 %v2505, 0.0
        %v2838 = vmax.f32 %v2696, 0.0
        %v2839 = vmax.f32 %v2698, 0.0
        %v2840 = vmax.f32 %v2509, 0.0
        %v2841 = vmax.f32 %v2511, 0.0
        %v2842 = vmax.f32 %v2702, 0.0
        %v2843 = vmax.f32 %v2704, 0.0
        %v2844 = vmax.f32 %v2513, 0.0
        %v2845 = vmax.f32 %v2515, 0.0
        %v2846 = vmax.f32 %v2706, 0.0
        %v2847 = vmax.f32 %v2708, 0.0
        %v2848 = vmax.f32 %v2519, 0.0
        %v2849 = vmax.f32 %v2521, 0.0
        %v2850 = vmax.f32 %v2712, 0.0
        %v2851 = vmax.f32 %v2714, 0.0
        %v2852 = vmax.f32 %v2523, 0.0
        %v2853 = vmax.f32 %v2525, 0.0
        %v2854 = vmax.f32 %v2716, 0.0
        %v2855 = vmax.f32 %v2718, 0.0
        %v2856 = vmax.f32 %v2529, 0.0
        %v2857 = vmax.f32 %v2531, 0.0
        %v2858 = vmax.f32 %v2722, 0.0
        %v2859 = vmax.f32 %v2724, 0.0
        %v2860 = vmax.f32 %v2533, 0.0
        %v2861 = vmax.f32 %v2535, 0.0
        %v2862 = vmax.f32 %v2726, 0.0
        %v2863 = vmax.f32 %v2728, 0.0
        %v2864 = vmax.f32 %v2539, 0.0
        %v2865 = vmax.f32 %v2541, 0.0
        %v2866 = vmax.f32 %v2732, 0.0
        %v2867 = vmax.f32 %v2734, 0.0
        %v2868 = vmax.f32 %v2543, 0.0
        %v2869 = vmax.f32 %v2545, 0.0
        %v2870 = vmax.f32 %v2736, 0.0
        %v2871 = vmax.f32 %v2738, 0.0
        %v2872 = vmax.f32 %v2549, 0.0
        %v2873 = vmax.f32 %v2551, 0.0
        %v2874 = vmax.f32 %v2742, 0.0
        %v2875 = vmax.f32 %v2744, 0.0
        %v2876 = vmax.f32 %v2553, 0.0
        %v2877 = vmax.f32 %v2555, 0.0
        %v2878 = vmax.f32 %v2746, 0.0
        %v2879 = vmax.f32 %v2748, 0.0
        %v2880 = vmax.f32 %v2559, 0.0
        %v2881 = vmax.f32 %v2561, 0.0
        %v2882 = vmax.f32 %v2752, 0.0
        %v2883 = vmax.f32 %v2754, 0.0
        %v2884 = vmax.f32 %v2563, 0.0
        %v2885 = vmax.f32 %v2565, 0.0
        %v2886 = vmax.f32 %v2756, 0.0
        %v2887 = vmax.f32 %v2758, 0.0
        %v2888 = vld [vmem:[%s3] sm:$0xff]
        %v2889 = vld [vmem:[%s3 + $0x8] sm:$0xff]
        %v2890 = vld [vmem:[%s3 + $0x10] sm:$0xff]
        %v2891 = vld [vmem:[%s3 + $0x18] sm:$0xff]
        %v2892 = vld [vmem:[%s3 + $0x20] sm:$0xff]
        %v2893 = vld [vmem:[%s3 + $0x28] sm:$0xff]
        %v2894 = vld [vmem:[%s3 + $0x30] sm:$0xff]
        %v2895 = vld [vmem:[%s3 + $0x38] sm:$0xff]
        %v2896 = vld [vmem:[%s3 + $0x40] sm:$0xff]
        %v2897 = vld [vmem:[%s3 + $0x48] sm:$0xff]
        %v2898 = vld [vmem:[%s3 + $0x50] sm:$0xff]
        %v2899 = vld [vmem:[%s3 + $0x58] sm:$0xff]
        %v2900 = vld [vmem:[%s3 + $0x60] sm:$0xff]
        %v2901 = vld [vmem:[%s3 + $0x68] sm:$0xff]
        %v2902 = vld [vmem:[%s3 + $0x70] sm:$0xff]
        %v2903 = vld [vmem:[%s3 + $0x78] sm:$0xff]
        %v2904 = vld [vmem:[%s3 + $0x80] sm:$0xff]
        %v2905 = vld [vmem:[%s3 + $0x88] sm:$0xff]
        %v2906 = vld [vmem:[%s3 + $0x90] sm:$0xff]
        %v2907 = vld [vmem:[%s3 + $0x98] sm:$0xff]
        %v2908 = vld [vmem:[%s3 + $0xa0] sm:$0xff]
        %v2909 = vld [vmem:[%s3 + $0xa8] sm:$0xff]
        %v2910 = vld [vmem:[%s3 + $0xb0] sm:$0xff]
        %v2911 = vld [vmem:[%s3 + $0xb8] sm:$0xff]
        %v2912 = vld [vmem:[%s3 + $0xc0] sm:$0xff]
        %v2913 = vld [vmem:[%s3 + $0xc8] sm:$0xff]
        %v2914 = vld [vmem:[%s3 + $0xd0] sm:$0xff]
        %v2915 = vld [vmem:[%s3 + $0xd8] sm:$0xff]
        %v2916 = vld [vmem:[%s3 + $0xe0] sm:$0xff]
        %v2917 = vld [vmem:[%s3 + $0xe8] sm:$0xff]
        %v2918 = vld [vmem:[%s3 + $0xf0] sm:$0xff]
        %v2919 = vld [vmem:[%s3 + $0xf8] sm:$0xff]
        %v2920 = vpack.c.bf16 %v2764, %v2760
        %v2921 = vpack.c.bf16 %v2765, %v2761
        %v2922 = vpack.c.bf16 %v2766, %v2762
        %v2923 = vpack.c.bf16 %v2767, %v2763
        %v2924 = vpack.c.bf16 %v2772, %v2768
        %v2925 = vpack.c.bf16 %v2773, %v2769
        %v2926 = vpack.c.bf16 %v2774, %v2770
        %v2927 = vpack.c.bf16 %v2775, %v2771
        %v2928 = vpack.c.bf16 %v2780, %v2776
        %v2929 = vpack.c.bf16 %v2781, %v2777
        %v2930 = vpack.c.bf16 %v2782, %v2778
        %v2931 = vpack.c.bf16 %v2783, %v2779
        %v2932 = vpack.c.bf16 %v2788, %v2784
        %v2933 = vpack.c.bf16 %v2789, %v2785
        %v2934 = vpack.c.bf16 %v2790, %v2786
        %v2935 = vpack.c.bf16 %v2791, %v2787
        %v2936 = vpack.c.bf16 %v2796, %v2792
        %v2937 = vpack.c.bf16 %v2797, %v2793
        %v2938 = vpack.c.bf16 %v2798, %v2794
        %v2939 = vpack.c.bf16 %v2799, %v2795
        %v2940 = vpack.c.bf16 %v2804, %v2800
        %v2941 = vpack.c.bf16 %v2805, %v2801
        %v2942 = vpack.c.bf16 %v2806, %v2802
        %v2943 = vpack.c.bf16 %v2807, %v2803
        %v2944 = vpack.c.bf16 %v2812, %v2808
        %v2945 = vpack.c.bf16 %v2813, %v2809
        %v2946 = vpack.c.bf16 %v2814, %v2810
        %v2947 = vpack.c.bf16 %v2815, %v2811
        %v2948 = vpack.c.bf16 %v2820, %v2816
        %v2949 = vpack.c.bf16 %v2821, %v2817
        %v2950 = vpack.c.bf16 %v2822, %v2818
        %v2951 = vpack.c.bf16 %v2823, %v2819
        %v2952 = vpack.c.bf16 %v2828, %v2824
        %v2953 = vpack.c.bf16 %v2829, %v2825
        %v2954 = vpack.c.bf16 %v2830, %v2826
        %v2955 = vpack.c.bf16 %v2831, %v2827
        %v2956 = vpack.c.bf16 %v2836, %v2832
        %v2957 = vpack.c.bf16 %v2837, %v2833
        %v2958 = vpack.c.bf16 %v2838, %v2834
        %v2959 = vpack.c.bf16 %v2839, %v2835
        %v2960 = vpack.c.bf16 %v2844, %v2840
        %v2961 = vpack.c.bf16 %v2845, %v2841
        %v2962 = vpack.c.bf16 %v2846, %v2842
        %v2963 = vpack.c.bf16 %v2847, %v2843
        %v2964 = vpack.c.bf16 %v2852, %v2848
        %v2965 = vpack.c.bf16 %v2853, %v2849
        %v2966 = vpack.c.bf16 %v2854, %v2850
        %v2967 = vpack.c.bf16 %v2855, %v2851
        %v2968 = vpack.c.bf16 %v2860, %v2856
        %v2969 = vpack.c.bf16 %v2861, %v2857
        %v2970 = vpack.c.bf16 %v2862, %v2858
        %v2971 = vpack.c.bf16 %v2863, %v2859
        %v2972 = vpack.c.bf16 %v2868, %v2864
        %v2973 = vpack.c.bf16 %v2869, %v2865
        %v2974 = vpack.c.bf16 %v2870, %v2866
        %v2975 = vpack.c.bf16 %v2871, %v2867
        %v2976 = vpack.c.bf16 %v2876, %v2872
        %v2977 = vpack.c.bf16 %v2877, %v2873
        %v2978 = vpack.c.bf16 %v2878, %v2874
        %v2979 = vpack.c.bf16 %v2879, %v2875
        %v2980 = vpack.c.bf16 %v2884, %v2880
        %v2981 = vpack.c.bf16 %v2885, %v2881
        %v2982 = vpack.c.bf16 %v2886, %v2882
        %v2983 = vpack.c.bf16 %v2887, %v2883
        %2984 = vset.pattern.permute.xlu0 2
        %2985 = vperm.xlu0 %2984, %v1542
        %v2986 = vpop.permute.xlu0 %2985
        %2988 = vset.pattern.permute.xlu0 2
        %2989 = vperm.xlu0 %2988, %v1543
        %v2990 = vpop.permute.xlu0 %2989
        %2992 = vset.pattern.permute.xlu0 2
        %2993 = vperm.xlu0 %2992, %v1544
        %v2994 = vpop.permute.xlu0 %2993
        %2996 = vset.pattern.permute.xlu0 2
        %2997 = vperm.xlu0 %2996, %v1545
        %v2998 = vpop.permute.xlu0 %2997
        %3000 = vset.pattern.permute.xlu0 2
        %3001 = vperm.xlu0 %3000, %v1546
        %v3002 = vpop.permute.xlu0 %3001
        %3004 = vset.pattern.permute.xlu0 2
        %3005 = vperm.xlu0 %3004, %v1547
        %v3006 = vpop.permute.xlu0 %3005
        %3008 = vset.pattern.permute.xlu0 2
        %3009 = vperm.xlu0 %3008, %v1548
        %v3010 = vpop.permute.xlu0 %3009
        %3012 = vset.pattern.permute.xlu0 2
        %3013 = vperm.xlu0 %3012, %v1549
        %v3014 = vpop.permute.xlu0 %3013
        %3016 = vset.pattern.permute.xlu0 2
        %3017 = vperm.xlu0 %3016, %v1550
        %v3018 = vpop.permute.xlu0 %3017
        %3020 = vset.pattern.permute.xlu0 2
        %3021 = vperm.xlu0 %3020, %v1551
        %v3022 = vpop.permute.xlu0 %3021
        %3024 = vset.pattern.permute.xlu0 2
        %3025 = vperm.xlu0 %3024, %v1552
        %v3026 = vpop.permute.xlu0 %3025
        %3028 = vset.pattern.permute.xlu0 2
        %3029 = vperm.xlu0 %3028, %v1553
        %v3030 = vpop.permute.xlu0 %3029
        %3032 = vset.pattern.permute.xlu0 2
        %3033 = vperm.xlu0 %3032, %v1554
        %v3034 = vpop.permute.xlu0 %3033
        %3036 = vset.pattern.permute.xlu0 2
        %3037 = vperm.xlu0 %3036, %v1555
        %v3038 = vpop.permute.xlu0 %3037
        %3040 = vset.pattern.permute.xlu0 2
        %3041 = vperm.xlu0 %3040, %v1556
        %v3042 = vpop.permute.xlu0 %3041
        %3044 = vset.pattern.permute.xlu0 2
        %3045 = vperm.xlu0 %3044, %v1557
        %v3046 = vpop.permute.xlu0 %3045
        %3048 = vset.pattern.permute.xlu0 2
        %3049 = vperm.xlu0 %3048, %v1558
        %v3050 = vpop.permute.xlu0 %3049
        %3052 = vset.pattern.permute.xlu0 2
        %3053 = vperm.xlu0 %3052, %v1559
        %v3054 = vpop.permute.xlu0 %3053
        %3056 = vset.pattern.permute.xlu0 2
        %3057 = vperm.xlu0 %3056, %v1560
        %v3058 = vpop.permute.xlu0 %3057
        %3060 = vset.pattern.permute.xlu0 2
        %3061 = vperm.xlu0 %3060, %v1561
        %v3062 = vpop.permute.xlu0 %3061
        %3064 = vset.pattern.permute.xlu0 2
        %3065 = vperm.xlu0 %3064, %v1562
        %v3066 = vpop.permute.xlu0 %3065
        %3068 = vset.pattern.permute.xlu0 2
        %3069 = vperm.xlu0 %3068, %v1563
        %v3070 = vpop.permute.xlu0 %3069
        %3072 = vset.pattern.permute.xlu0 2
        %3073 = vperm.xlu0 %3072, %v1564
        %v3074 = vpop.permute.xlu0 %3073
        %3076 = vset.pattern.permute.xlu0 2
        %3077 = vperm.xlu0 %3076, %v1565
        %v3078 = vpop.permute.xlu0 %3077
        %3080 = vset.pattern.permute.xlu0 2
        %3081 = vperm.xlu0 %3080, %v1566
        %v3082 = vpop.permute.xlu0 %3081
        %3084 = vset.pattern.permute.xlu0 2
        %3085 = vperm.xlu0 %3084, %v1567
        %v3086 = vpop.permute.xlu0 %3085
        %3088 = vset.pattern.permute.xlu0 2
        %3089 = vperm.xlu0 %3088, %v1568
        %v3090 = vpop.permute.xlu0 %3089
        %3092 = vset.pattern.permute.xlu0 2
        %3093 = vperm.xlu0 %3092, %v1569
        %v3094 = vpop.permute.xlu0 %3093
        %3096 = vset.pattern.permute.xlu0 2
        %3097 = vperm.xlu0 %3096, %v1570
        %v3098 = vpop.permute.xlu0 %3097
        %3100 = vset.pattern.permute.xlu0 2
        %3101 = vperm.xlu0 %3100, %v1571
        %v3102 = vpop.permute.xlu0 %3101
        %3104 = vset.pattern.permute.xlu0 2
        %3105 = vperm.xlu0 %3104, %v1572
        %v3106 = vpop.permute.xlu0 %3105
        %3108 = vset.pattern.permute.xlu0 2
        %3109 = vperm.xlu0 %3108, %v1573
        %v3110 = vpop.permute.xlu0 %3109
        %v3144 = vunpack.c.l.b16 %v2888
        %v3145 = vunpack.c.h.b16 %v2888
        %v3146 = vunpack.c.l.b16 %v2889
        %v3147 = vunpack.c.h.b16 %v2889
        %v3148 = vunpack.c.l.b16 %v2890
        %v3149 = vunpack.c.h.b16 %v2890
        %v3150 = vunpack.c.l.b16 %v2891
        %v3151 = vunpack.c.h.b16 %v2891
        %v3152 = vunpack.c.l.b16 %v2892
        %v3153 = vunpack.c.h.b16 %v2892
        %v3154 = vunpack.c.l.b16 %v2893
        %v3155 = vunpack.c.h.b16 %v2893
        %v3156 = vunpack.c.l.b16 %v2894
        %v3157 = vunpack.c.h.b16 %v2894
        %v3158 = vunpack.c.l.b16 %v2895
        %v3159 = vunpack.c.h.b16 %v2895
        %v3160 = vunpack.c.l.b16 %v2896
        %v3161 = vunpack.c.h.b16 %v2896
        %v3162 = vunpack.c.l.b16 %v2897
        %v3163 = vunpack.c.h.b16 %v2897
        %v3164 = vunpack.c.l.b16 %v2898
        %v3165 = vunpack.c.h.b16 %v2898
        %v3166 = vunpack.c.l.b16 %v2899
        %v3167 = vunpack.c.h.b16 %v2899
        %v3168 = vunpack.c.l.b16 %v2900
        %v3169 = vunpack.c.h.b16 %v2900
        %v3170 = vunpack.c.l.b16 %v2901
        %v3171 = vunpack.c.h.b16 %v2901
        %v3172 = vunpack.c.l.b16 %v2902
        %v3173 = vunpack.c.h.b16 %v2902
        %v3174 = vunpack.c.l.b16 %v2903
        %v3175 = vunpack.c.h.b16 %v2903
        %v3176 = vunpack.c.l.b16 %v2904
        %v3177 = vunpack.c.h.b16 %v2904
        %v3178 = vunpack.c.l.b16 %v2905
        %v3179 = vunpack.c.h.b16 %v2905
        %v3180 = vunpack.c.l.b16 %v2906
        %v3181 = vunpack.c.h.b16 %v2906
        %v3182 = vunpack.c.l.b16 %v2907
        %v3183 = vunpack.c.h.b16 %v2907
        %v3184 = vunpack.c.l.b16 %v2908
        %v3185 = vunpack.c.h.b16 %v2908
        %v3186 = vunpack.c.l.b16 %v2909
        %v3187 = vunpack.c.h.b16 %v2909
        %v3188 = vunpack.c.l.b16 %v2910
        %v3189 = vunpack.c.h.b16 %v2910
        %v3190 = vunpack.c.l.b16 %v2911
        %v3191 = vunpack.c.h.b16 %v2911
        %v3192 = vunpack.c.l.b16 %v2912
        %v3193 = vunpack.c.h.b16 %v2912
        %v3194 = vunpack.c.l.b16 %v2913
        %v3195 = vunpack.c.h.b16 %v2913
        %v3196 = vunpack.c.l.b16 %v2914
        %v3197 = vunpack.c.h.b16 %v2914
        %v3198 = vunpack.c.l.b16 %v2915
        %v3199 = vunpack.c.h.b16 %v2915
        %v3200 = vunpack.c.l.b16 %v2916
        %v3201 = vunpack.c.h.b16 %v2916
        %v3202 = vunpack.c.l.b16 %v2917
        %v3203 = vunpack.c.h.b16 %v2917
        %v3204 = vunpack.c.l.b16 %v2918
        %v3205 = vunpack.c.h.b16 %v2918
        %v3206 = vunpack.c.l.b16 %v2919
        %v3207 = vunpack.c.h.b16 %v2919
        %v3208 = vpack.c.b16 %v3146, %v3144
        %v3209 = vpack.c.b16 %v3147, %v3145
        %v3210 = vpack.c.b16 %v3150, %v3148
        %v3211 = vpack.c.b16 %v3151, %v3149
        %v3212 = vpack.c.b16 %v3154, %v3152
        %v3213 = vpack.c.b16 %v3155, %v3153
        %v3214 = vpack.c.b16 %v3158, %v3156
        %v3215 = vpack.c.b16 %v3159, %v3157
        %v3216 = vpack.c.b16 %v3162, %v3160
        %v3217 = vpack.c.b16 %v3163, %v3161
        %v3218 = vpack.c.b16 %v3166, %v3164
        %v3219 = vpack.c.b16 %v3167, %v3165
        %v3220 = vpack.c.b16 %v3170, %v3168
        %v3221 = vpack.c.b16 %v3171, %v3169
        %v3222 = vpack.c.b16 %v3174, %v3172
        %v3223 = vpack.c.b16 %v3175, %v3173
        %v3224 = vpack.c.b16 %v3178, %v3176
        %v3225 = vpack.c.b16 %v3179, %v3177
        %v3226 = vpack.c.b16 %v3182, %v3180
        %v3227 = vpack.c.b16 %v3183, %v3181
        %v3228 = vpack.c.b16 %v3186, %v3184
        %v3229 = vpack.c.b16 %v3187, %v3185
        %v3230 = vpack.c.b16 %v3190, %v3188
        %v3231 = vpack.c.b16 %v3191, %v3189
        %v3232 = vpack.c.b16 %v3194, %v3192
        %v3233 = vpack.c.b16 %v3195, %v3193
        %v3234 = vpack.c.b16 %v3198, %v3196
        %v3235 = vpack.c.b16 %v3199, %v3197
        %v3236 = vpack.c.b16 %v3202, %v3200
        %v3237 = vpack.c.b16 %v3203, %v3201
        %v3238 = vpack.c.b16 %v3206, %v3204
        %v3239 = vpack.c.b16 %v3207, %v3205
        %3272 = vmatprep.subr.bf16.mxu0 %v2921
        %3273 = vmatpush1.bf16.msra.mxu0 %v2920
        %3274 = vmatprep.subr.bf16.mxu0 %v2925
        %3275 = vmatpush1.bf16.msra.mxu0 %v2924
        %3276 = vmatprep.subr.bf16.mxu0 %v2929
        %3277 = vmatpush1.bf16.msra.mxu0 %v2928
        %3278 = vmatprep.subr.bf16.mxu0 %v2933
        %3279 = vmatpush1.bf16.msra.mxu0 %v2932
        %3280 = vmatprep.subr.bf16.mxu0 %v2937
        %3281 = vmatpush1.bf16.msra.mxu0 %v2936
        %3282 = vmatprep.subr.bf16.mxu0 %v2941
        %3283 = vmatpush1.bf16.msra.mxu0 %v2940
        %3284 = vmatprep.subr.bf16.mxu0 %v2945
        %3285 = vmatpush1.bf16.msra.mxu0 %v2944
        %3286 = vmatprep.subr.bf16.mxu0 %v2949
        %3287 = vmatpush1.bf16.msra.mxu0 %v2948
        %3288 = vmatprep.subr.bf16.mxu0 %v2953
        %3289 = vmatpush1.bf16.msra.mxu0 %v2952
        %3290 = vmatprep.subr.bf16.mxu0 %v2957
        %3291 = vmatpush1.bf16.msra.mxu0 %v2956
        %3292 = vmatprep.subr.bf16.mxu0 %v2961
        %3293 = vmatpush1.bf16.msra.mxu0 %v2960
        %3294 = vmatprep.subr.bf16.mxu0 %v2965
        %3295 = vmatpush1.bf16.msra.mxu0 %v2964
        %3296 = vmatprep.subr.bf16.mxu0 %v2969
        %3297 = vmatpush1.bf16.msra.mxu0 %v2968
        %3298 = vmatprep.subr.bf16.mxu0 %v2973
        %3299 = vmatpush1.bf16.msra.mxu0 %v2972
        %3300 = vmatprep.subr.bf16.mxu0 %v2977
        %3301 = vmatpush1.bf16.msra.mxu0 %v2976
        %3302 = vmatprep.subr.bf16.mxu0 %v2981
        %3303 = vmatpush1.bf16.msra.mxu0 %v2980
        %3304 = vmatprep.mubr.bf16.mxu0 %v3209
        %3305 = vmatmul.mubr.bf16.gmra.mrb[0].mxu0 %v3208
        %v3306 = vpop.f32.mrb[0].mxu0
        %v3307 = vadd.f32 %v2986, %v3306
        %v3308 = vpop.f32.mrb[0].mxu0
        %v3309 = vadd.f32 %v2986, %v3308
        %v3310 = vpop.f32.mrb[0].mxu0
        %v3311 = vadd.f32 %v2990, %v3310
        %v3312 = vpop.f32.mrb[0].mxu0
        %v3313 = vadd.f32 %v2990, %v3312
        %3314 = vmatprep.mubr.bf16.mxu0 %v3211
        %3315 = vmatmul.mubr.bf16.gmra.mrb[0].mxu0 %v3210
        %v3316 = vpop.f32.mrb[0].mxu0
        %v3317 = vadd.f32 %v2994, %v3316
        %v3318 = vpop.f32.mrb[0].mxu0
        %v3319 = vadd.f32 %v2994, %v3318
        %v3320 = vpop.f32.mrb[0].mxu0
        %v3321 = vadd.f32 %v2998, %v3320
        %v3322 = vpop.f32.mrb[0].mxu0
        %v3323 = vadd.f32 %v2998, %v3322
        %3324 = vmatprep.mubr.bf16.mxu0 %v3213
        %3325 = vmatmul.mubr.bf16.gmra.mrb[0].mxu0 %v3212
        %v3326 = vpop.f32.mrb[0].mxu0
        %v3327 = vadd.f32 %v3002, %v3326
        %v3328 = vpop.f32.mrb[0].mxu0
        %v3329 = vadd.f32 %v3002, %v3328
        %v3330 = vpop.f32.mrb[0].mxu0
        %v3331 = vadd.f32 %v3006, %v3330
        %v3332 = vpop.f32.mrb[0].mxu0
        %v3333 = vadd.f32 %v3006, %v3332
        %3334 = vmatprep.mubr.bf16.mxu0 %v3215
        %3335 = vmatmul.mubr.bf16.gmra.mrb[0].mxu0 %v3214
        %v3336 = vpop.f32.mrb[0].mxu0
        %v3337 = vadd.f32 %v3010, %v3336
        %v3338 = vpop.f32.mrb[0].mxu0
        %v3339 = vadd.f32 %v3010, %v3338
        %v3340 = vpop.f32.mrb[0].mxu0
        %v3341 = vadd.f32 %v3014, %v3340
        %v3342 = vpop.f32.mrb[0].mxu0
        %v3343 = vadd.f32 %v3014, %v3342
        %3344 = vmatprep.mubr.bf16.mxu0 %v3217
        %3345 = vmatmul.mubr.bf16.gmra.mrb[0].mxu0 %v3216
        %v3346 = vpop.f32.mrb[0].mxu0
        %v3347 = vadd.f32 %v3018, %v3346
        %v3348 = vpop.f32.mrb[0].mxu0
        %v3349 = vadd.f32 %v3018, %v3348
        %v3350 = vpop.f32.mrb[0].mxu0
        %v3351 = vadd.f32 %v3022, %v3350
        %v3352 = vpop.f32.mrb[0].mxu0
        %v3353 = vadd.f32 %v3022, %v3352
        %3354 = vmatprep.mubr.bf16.mxu0 %v3219
        %3355 = vmatmul.mubr.bf16.gmra.mrb[0].mxu0 %v3218
        %v3356 = vpop.f32.mrb[0].mxu0
        %v3357 = vadd.f32 %v3026, %v3356
        %v3358 = vpop.f32.mrb[0].mxu0
        %v3359 = vadd.f32 %v3026, %v3358
        %v3360 = vpop.f32.mrb[0].mxu0
        %v3361 = vadd.f32 %v3030, %v3360
        %v3362 = vpop.f32.mrb[0].mxu0
        %v3363 = vadd.f32 %v3030, %v3362
        %3364 = vmatprep.mubr.bf16.mxu0 %v3221
        %3365 = vmatmul.mubr.bf16.gmra.mrb[0].mxu0 %v3220
        %v3366 = vpop.f32.mrb[0].mxu0
        %v3367 = vadd.f32 %v3034, %v3366
        %v3368 = vpop.f32.mrb[0].mxu0
        %v3369 = vadd.f32 %v3034, %v3368
        %v3370 = vpop.f32.mrb[0].mxu0
        %v3371 = vadd.f32 %v3038, %v3370
        %v3372 = vpop.f32.mrb[0].mxu0
        %v3373 = vadd.f32 %v3038, %v3372
        %3374 = vmatprep.mubr.bf16.mxu0 %v3223
        %3375 = vmatmul.mubr.bf16.gmra.mrb[0].mxu0 %v3222
        %v3376 = vpop.f32.mrb[0].mxu0
        %v3377 = vadd.f32 %v3042, %v3376
        %v3378 = vpop.f32.mrb[0].mxu0
        %v3379 = vadd.f32 %v3042, %v3378
        %v3380 = vpop.f32.mrb[0].mxu0
        %v3381 = vadd.f32 %v3046, %v3380
        %v3382 = vpop.f32.mrb[0].mxu0
        %v3383 = vadd.f32 %v3046, %v3382
        %3384 = vmatprep.mubr.bf16.mxu0 %v3225
        %3385 = vmatmul.mubr.bf16.gmra.mrb[0].mxu0 %v3224
        %v3386 = vpop.f32.mrb[0].mxu0
        %v3387 = vadd.f32 %v3050, %v3386
        %v3388 = vpop.f32.mrb[0].mxu0
        %v3389 = vadd.f32 %v3050, %v3388
        %v3390 = vpop.f32.mrb[0].mxu0
        %v3391 = vadd.f32 %v3054, %v3390
        %v3392 = vpop.f32.mrb[0].mxu0
        %v3393 = vadd.f32 %v3054, %v3392
        %3394 = vmatprep.mubr.bf16.mxu0 %v3227
        %3395 = vmatmul.mubr.bf16.gmra.mrb[0].mxu0 %v3226
        %v3396 = vpop.f32.mrb[0].mxu0
        %v3397 = vadd.f32 %v3058, %v3396
        %v3398 = vpop.f32.mrb[0].mxu0
        %v3399 = vadd.f32 %v3058, %v3398
        %v3400 = vpop.f32.mrb[0].mxu0
        %v3401 = vadd.f32 %v3062, %v3400
        %v3402 = vpop.f32.mrb[0].mxu0
        %v3403 = vadd.f32 %v3062, %v3402
        %3404 = vmatprep.mubr.bf16.mxu0 %v3229
        %3405 = vmatmul.mubr.bf16.gmra.mrb[0].mxu0 %v3228
        %v3406 = vpop.f32.mrb[0].mxu0
        %v3407 = vadd.f32 %v3066, %v3406
        %v3408 = vpop.f32.mrb[0].mxu0
        %v3409 = vadd.f32 %v3066, %v3408
        %v3410 = vpop.f32.mrb[0].mxu0
        %v3411 = vadd.f32 %v3070, %v3410
        %v3412 = vpop.f32.mrb[0].mxu0
        %v3413 = vadd.f32 %v3070, %v3412
        %3414 = vmatprep.mubr.bf16.mxu0 %v3231
        %3415 = vmatmul.mubr.bf16.gmra.mrb[0].mxu0 %v3230
        %v3416 = vpop.f32.mrb[0].mxu0
        %v3417 = vadd.f32 %v3074, %v3416
        %v3418 = vpop.f32.mrb[0].mxu0
        %v3419 = vadd.f32 %v3074, %v3418
        %v3420 = vpop.f32.mrb[0].mxu0
        %v3421 = vadd.f32 %v3078, %v3420
        %v3422 = vpop.f32.mrb[0].mxu0
        %v3423 = vadd.f32 %v3078, %v3422
        %3424 = vmatprep.mubr.bf16.mxu0 %v3233
        %3425 = vmatmul.mubr.bf16.gmra.mrb[0].mxu0 %v3232
        %v3426 = vpop.f32.mrb[0].mxu0
        %v3427 = vadd.f32 %v3082, %v3426
        %v3428 = vpop.f32.mrb[0].mxu0
        %v3429 = vadd.f32 %v3082, %v3428
        %v3430 = vpop.f32.mrb[0].mxu0
        %v3431 = vadd.f32 %v3086, %v3430
        %v3432 = vpop.f32.mrb[0].mxu0
        %v3433 = vadd.f32 %v3086, %v3432
        %3434 = vmatprep.mubr.bf16.mxu0 %v3235
        %3435 = vmatmul.mubr.bf16.gmra.mrb[0].mxu0 %v3234
        %v3436 = vpop.f32.mrb[0].mxu0
        %v3437 = vadd.f32 %v3090, %v3436
        %v3438 = vpop.f32.mrb[0].mxu0
        %v3439 = vadd.f32 %v3090, %v3438
        %v3440 = vpop.f32.mrb[0].mxu0
        %v3441 = vadd.f32 %v3094, %v3440
        %v3442 = vpop.f32.mrb[0].mxu0
        %v3443 = vadd.f32 %v3094, %v3442
        %3444 = vmatprep.mubr.bf16.mxu0 %v3237
        %3445 = vmatmul.mubr.bf16.gmra.mrb[0].mxu0 %v3236
        %v3446 = vpop.f32.mrb[0].mxu0
        %v3447 = vadd.f32 %v3098, %v3446
        %v3448 = vpop.f32.mrb[0].mxu0
        %v3449 = vadd.f32 %v3098, %v3448
        %v3450 = vpop.f32.mrb[0].mxu0
        %v3451 = vadd.f32 %v3102, %v3450
        %v3452 = vpop.f32.mrb[0].mxu0
        %v3453 = vadd.f32 %v3102, %v3452
        %3454 = vmatprep.mubr.bf16.mxu0 %v3239
        %3455 = vmatmul.mubr.bf16.gmra.mrb[0].mxu0 %v3238
        %v3456 = vpop.f32.mrb[0].mxu0
        %v3457 = vadd.f32 %v3106, %v3456
        %v3458 = vpop.f32.mrb[0].mxu0
        %v3459 = vadd.f32 %v3106, %v3458
        %v3460 = vpop.f32.mrb[0].mxu0
        %v3461 = vadd.f32 %v3110, %v3460
        %v3462 = vpop.f32.mrb[0].mxu0
        %v3463 = vadd.f32 %v3110, %v3462
        %3464 = vdwg.mxu0
        %3465 = vmatprep.subr.bf16.mxu0 %v2923
        %3466 = vmatpush1.bf16.msra.mxu0 %v2922
        %3467 = vmatprep.subr.bf16.mxu0 %v2927
        %3468 = vmatpush1.bf16.msra.mxu0 %v2926
        %3469 = vmatprep.subr.bf16.mxu0 %v2931
        %3470 = vmatpush1.bf16.msra.mxu0 %v2930
        %3471 = vmatprep.subr.bf16.mxu0 %v2935
        %3472 = vmatpush1.bf16.msra.mxu0 %v2934
        %3473 = vmatprep.subr.bf16.mxu0 %v2939
        %3474 = vmatpush1.bf16.msra.mxu0 %v2938
        %3475 = vmatprep.subr.bf16.mxu0 %v2943
        %3476 = vmatpush1.bf16.msra.mxu0 %v2942
        %3477 = vmatprep.subr.bf16.mxu0 %v2947
        %3478 = vmatpush1.bf16.msra.mxu0 %v2946
        %3479 = vmatprep.subr.bf16.mxu0 %v2951
        %3480 = vmatpush1.bf16.msra.mxu0 %v2950
        %3481 = vmatprep.subr.bf16.mxu0 %v2955
        %3482 = vmatpush1.bf16.msra.mxu0 %v2954
        %3483 = vmatprep.subr.bf16.mxu0 %v2959
        %3484 = vmatpush1.bf16.msra.mxu0 %v2958
        %3485 = vmatprep.subr.bf16.mxu0 %v2963
        %3486 = vmatpush1.bf16.msra.mxu0 %v2962
        %3487 = vmatprep.subr.bf16.mxu0 %v2967
        %3488 = vmatpush1.bf16.msra.mxu0 %v2966
        %3489 = vmatprep.subr.bf16.mxu0 %v2971
        %3490 = vmatpush1.bf16.msra.mxu0 %v2970
        %3491 = vmatprep.subr.bf16.mxu0 %v2975
        %3492 = vmatpush1.bf16.msra.mxu0 %v2974
        %3493 = vmatprep.subr.bf16.mxu0 %v2979
        %3494 = vmatpush1.bf16.msra.mxu0 %v2978
        %3495 = vmatprep.subr.bf16.mxu0 %v2983
        %3496 = vmatpush1.bf16.msra.mxu0 %v2982
        %3497 = vmatprep.mubr.bf16.mxu0 %v3209
        %3498 = vmatmul.mubr.bf16.gmra.mrb[0].mxu0 %v3208
        %v3499 = vpop.f32.mrb[0].mxu0
        %v3500 = vadd.f32 %v2986, %v3499
        %v3501 = vpop.f32.mrb[0].mxu0
        %v3502 = vadd.f32 %v2986, %v3501
        %v3503 = vpop.f32.mrb[0].mxu0
        %v3504 = vadd.f32 %v2990, %v3503
        %v3505 = vpop.f32.mrb[0].mxu0
        %v3506 = vadd.f32 %v2990, %v3505
        %3507 = vmatprep.mubr.bf16.mxu0 %v3211
        %3508 = vmatmul.mubr.bf16.gmra.mrb[0].mxu0 %v3210
        %v3509 = vpop.f32.mrb[0].mxu0
        %v3510 = vadd.f32 %v2994, %v3509
        %v3511 = vpop.f32.mrb[0].mxu0
        %v3512 = vadd.f32 %v2994, %v3511
        %v3513 = vpop.f32.mrb[0].mxu0
        %v3514 = vadd.f32 %v2998, %v3513
        %v3515 = vpop.f32.mrb[0].mxu0
        %v3516 = vadd.f32 %v2998, %v3515
        %3517 = vmatprep.mubr.bf16.mxu0 %v3213
        %3518 = vmatmul.mubr.bf16.gmra.mrb[0].mxu0 %v3212
        %v3519 = vpop.f32.mrb[0].mxu0
        %v3520 = vadd.f32 %v3002, %v3519
        %v3521 = vpop.f32.mrb[0].mxu0
        %v3522 = vadd.f32 %v3002, %v3521
        %v3523 = vpop.f32.mrb[0].mxu0
        %v3524 = vadd.f32 %v3006, %v3523
        %v3525 = vpop.f32.mrb[0].mxu0
        %v3526 = vadd.f32 %v3006, %v3525
        %3527 = vmatprep.mubr.bf16.mxu0 %v3215
        %3528 = vmatmul.mubr.bf16.gmra.mrb[0].mxu0 %v3214
        %v3529 = vpop.f32.mrb[0].mxu0
        %v3530 = vadd.f32 %v3010, %v3529
        %v3531 = vpop.f32.mrb[0].mxu0
        %v3532 = vadd.f32 %v3010, %v3531
        %v3533 = vpop.f32.mrb[0].mxu0
        %v3534 = vadd.f32 %v3014, %v3533
        %v3535 = vpop.f32.mrb[0].mxu0
        %v3536 = vadd.f32 %v3014, %v3535
        %3537 = vmatprep.mubr.bf16.mxu0 %v3217
        %3538 = vmatmul.mubr.bf16.gmra.mrb[0].mxu0 %v3216
        %v3539 = vpop.f32.mrb[0].mxu0
        %v3540 = vadd.f32 %v3018, %v3539
        %v3541 = vpop.f32.mrb[0].mxu0
        %v3542 = vadd.f32 %v3018, %v3541
        %v3543 = vpop.f32.mrb[0].mxu0
        %v3544 = vadd.f32 %v3022, %v3543
        %v3545 = vpop.f32.mrb[0].mxu0
        %v3546 = vadd.f32 %v3022, %v3545
        %3547 = vmatprep.mubr.bf16.mxu0 %v3219
        %3548 = vmatmul.mubr.bf16.gmra.mrb[0].mxu0 %v3218
        %v3549 = vpop.f32.mrb[0].mxu0
        %v3550 = vadd.f32 %v3026, %v3549
        %v3551 = vpop.f32.mrb[0].mxu0
        %v3552 = vadd.f32 %v3026, %v3551
        %v3553 = vpop.f32.mrb[0].mxu0
        %v3554 = vadd.f32 %v3030, %v3553
        %v3555 = vpop.f32.mrb[0].mxu0
        %v3556 = vadd.f32 %v3030, %v3555
        %3557 = vmatprep.mubr.bf16.mxu0 %v3221
        %3558 = vmatmul.mubr.bf16.gmra.mrb[0].mxu0 %v3220
        %v3559 = vpop.f32.mrb[0].mxu0
        %v3560 = vadd.f32 %v3034, %v3559
        %v3561 = vpop.f32.mrb[0].mxu0
        %v3562 = vadd.f32 %v3034, %v3561
        %v3563 = vpop.f32.mrb[0].mxu0
        %v3564 = vadd.f32 %v3038, %v3563
        %v3565 = vpop.f32.mrb[0].mxu0
        %v3566 = vadd.f32 %v3038, %v3565
        %3567 = vmatprep.mubr.bf16.mxu0 %v3223
        %3568 = vmatmul.mubr.bf16.gmra.mrb[0].mxu0 %v3222
        %v3569 = vpop.f32.mrb[0].mxu0
        %v3570 = vadd.f32 %v3042, %v3569
        %v3571 = vpop.f32.mrb[0].mxu0
        %v3572 = vadd.f32 %v3042, %v3571
        %v3573 = vpop.f32.mrb[0].mxu0
        %v3574 = vadd.f32 %v3046, %v3573
        %v3575 = vpop.f32.mrb[0].mxu0
        %v3576 = vadd.f32 %v3046, %v3575
        %3577 = vmatprep.mubr.bf16.mxu0 %v3225
        %3578 = vmatmul.mubr.bf16.gmra.mrb[0].mxu0 %v3224
        %v3579 = vpop.f32.mrb[0].mxu0
        %v3580 = vadd.f32 %v3050, %v3579
        %v3581 = vpop.f32.mrb[0].mxu0
        %v3582 = vadd.f32 %v3050, %v3581
        %v3583 = vpop.f32.mrb[0].mxu0
        %v3584 = vadd.f32 %v3054, %v3583
        %v3585 = vpop.f32.mrb[0].mxu0
        %v3586 = vadd.f32 %v3054, %v3585
        %3587 = vmatprep.mubr.bf16.mxu0 %v3227
        %3588 = vmatmul.mubr.bf16.gmra.mrb[0].mxu0 %v3226
        %v3589 = vpop.f32.mrb[0].mxu0
        %v3590 = vadd.f32 %v3058, %v3589
        %v3591 = vpop.f32.mrb[0].mxu0
        %v3592 = vadd.f32 %v3058, %v3591
        %v3593 = vpop.f32.mrb[0].mxu0
        %v3594 = vadd.f32 %v3062, %v3593
        %v3595 = vpop.f32.mrb[0].mxu0
        %v3596 = vadd.f32 %v3062, %v3595
        %3597 = vmatprep.mubr.bf16.mxu0 %v3229
        %3598 = vmatmul.mubr.bf16.gmra.mrb[0].mxu0 %v3228
        %v3599 = vpop.f32.mrb[0].mxu0
        %v3600 = vadd.f32 %v3066, %v3599
        %v3601 = vpop.f32.mrb[0].mxu0
        %v3602 = vadd.f32 %v3066, %v3601
        %v3603 = vpop.f32.mrb[0].mxu0
        %v3604 = vadd.f32 %v3070, %v3603
        %v3605 = vpop.f32.mrb[0].mxu0
        %v3606 = vadd.f32 %v3070, %v3605
        %3607 = vmatprep.mubr.bf16.mxu0 %v3231
        %3608 = vmatmul.mubr.bf16.gmra.mrb[0].mxu0 %v3230
        %v3609 = vpop.f32.mrb[0].mxu0
        %v3610 = vadd.f32 %v3074, %v3609
        %v3611 = vpop.f32.mrb[0].mxu0
        %v3612 = vadd.f32 %v3074, %v3611
        %v3613 = vpop.f32.mrb[0].mxu0
        %v3614 = vadd.f32 %v3078, %v3613
        %v3615 = vpop.f32.mrb[0].mxu0
        %v3616 = vadd.f32 %v3078, %v3615
        %3617 = vmatprep.mubr.bf16.mxu0 %v3233
        %3618 = vmatmul.mubr.bf16.gmra.mrb[0].mxu0 %v3232
        %v3619 = vpop.f32.mrb[0].mxu0
        %v3620 = vadd.f32 %v3082, %v3619
        %v3621 = vpop.f32.mrb[0].mxu0
        %v3622 = vadd.f32 %v3082, %v3621
        %v3623 = vpop.f32.mrb[0].mxu0
        %v3624 = vadd.f32 %v3086, %v3623
        %v3625 = vpop.f32.mrb[0].mxu0
        %v3626 = vadd.f32 %v3086, %v3625
        %3627 = vmatprep.mubr.bf16.mxu0 %v3235
        %3628 = vmatmul.mubr.bf16.gmra.mrb[0].mxu0 %v3234
        %v3629 = vpop.f32.mrb[0].mxu0
        %v3630 = vadd.f32 %v3090, %v3629
        %v3631 = vpop.f32.mrb[0].mxu0
        %v3632 = vadd.f32 %v3090, %v3631
        %v3633 = vpop.f32.mrb[0].mxu0
        %v3634 = vadd.f32 %v3094, %v3633
        %v3635 = vpop.f32.mrb[0].mxu0
        %v3636 = vadd.f32 %v3094, %v3635
        %3637 = vmatprep.mubr.bf16.mxu0 %v3237
        %3638 = vmatmul.mubr.bf16.gmra.mrb[0].mxu0 %v3236
        %v3639 = vpop.f32.mrb[0].mxu0
        %v3640 = vadd.f32 %v3098, %v3639
        %v3641 = vpop.f32.mrb[0].mxu0
        %v3642 = vadd.f32 %v3098, %v3641
        %v3643 = vpop.f32.mrb[0].mxu0
        %v3644 = vadd.f32 %v3102, %v3643
        %v3645 = vpop.f32.mrb[0].mxu0
        %v3646 = vadd.f32 %v3102, %v3645
        %3647 = vmatprep.mubr.bf16.mxu0 %v3239
        %3648 = vmatmul.mubr.bf16.gmra.mrb[0].mxu0 %v3238
        %v3649 = vpop.f32.mrb[0].mxu0
        %v3650 = vadd.f32 %v3106, %v3649
        %v3651 = vpop.f32.mrb[0].mxu0
        %v3652 = vadd.f32 %v3106, %v3651
        %v3653 = vpop.f32.mrb[0].mxu0
        %v3654 = vadd.f32 %v3110, %v3653
        %v3655 = vpop.f32.mrb[0].mxu0
        %v3656 = vadd.f32 %v3110, %v3655
        %3657 = vdwg.mxu0
        %v3658 = vmax.f32 %v3307, 0.0
        %v3659 = vmax.f32 %v3309, 0.0
        %v3660 = vmax.f32 %v3500, 0.0
        %v3661 = vmax.f32 %v3502, 0.0
        %v3662 = vmax.f32 %v3311, 0.0
        %v3663 = vmax.f32 %v3313, 0.0
        %v3664 = vmax.f32 %v3504, 0.0
        %v3665 = vmax.f32 %v3506, 0.0
        %v3666 = vmax.f32 %v3317, 0.0
        %v3667 = vmax.f32 %v3319, 0.0
        %v3668 = vmax.f32 %v3510, 0.0
        %v3669 = vmax.f32 %v3512, 0.0
        %v3670 = vmax.f32 %v3321, 0.0
        %v3671 = vmax.f32 %v3323, 0.0
        %v3672 = vmax.f32 %v3514, 0.0
        %v3673 = vmax.f32 %v3516, 0.0
        %v3674 = vmax.f32 %v3327, 0.0
        %v3675 = vmax.f32 %v3329, 0.0
        %v3676 = vmax.f32 %v3520, 0.0
        %v3677 = vmax.f32 %v3522, 0.0
        %v3678 = vmax.f32 %v3331, 0.0
        %v3679 = vmax.f32 %v3333, 0.0
        %v3680 = vmax.f32 %v3524, 0.0
        %v3681 = vmax.f32 %v3526, 0.0
        %v3682 = vmax.f32 %v3337, 0.0
        %v3683 = vmax.f32 %v3339, 0.0
        %v3684 = vmax.f32 %v3530, 0.0
        %v3685 = vmax.f32 %v3532, 0.0
        %v3686 = vmax.f32 %v3341, 0.0
        %v3687 = vmax.f32 %v3343, 0.0
        %v3688 = vmax.f32 %v3534, 0.0
        %v3689 = vmax.f32 %v3536, 0.0
        %v3690 = vmax.f32 %v3347, 0.0
        %v3691 = vmax.f32 %v3349, 0.0
        %v3692 = vmax.f32 %v3540, 0.0
        %v3693 = vmax.f32 %v3542, 0.0
        %v3694 = vmax.f32 %v3351, 0.0
        %v3695 = vmax.f32 %v3353, 0.0
        %v3696 = vmax.f32 %v3544, 0.0
        %v3697 = vmax.f32 %v3546, 0.0
        %v3698 = vmax.f32 %v3357, 0.0
        %v3699 = vmax.f32 %v3359, 0.0
        %v3700 = vmax.f32 %v3550, 0.0
        %v3701 = vmax.f32 %v3552, 0.0
        %v3702 = vmax.f32 %v3361, 0.0
        %v3703 = vmax.f32 %v3363, 0.0
        %v3704 = vmax.f32 %v3554, 0.0
        %v3705 = vmax.f32 %v3556, 0.0
        %v3706 = vmax.f32 %v3367, 0.0
        %v3707 = vmax.f32 %v3369, 0.0
        %v3708 = vmax.f32 %v3560, 0.0
        %v3709 = vmax.f32 %v3562, 0.0
        %v3710 = vmax.f32 %v3371, 0.0
        %v3711 = vmax.f32 %v3373, 0.0
        %v3712 = vmax.f32 %v3564, 0.0
        %v3713 = vmax.f32 %v3566, 0.0
        %v3714 = vmax.f32 %v3377, 0.0
        %v3715 = vmax.f32 %v3379, 0.0
        %v3716 = vmax.f32 %v3570, 0.0
        %v3717 = vmax.f32 %v3572, 0.0
        %v3718 = vmax.f32 %v3381, 0.0
        %v3719 = vmax.f32 %v3383, 0.0
        %v3720 = vmax.f32 %v3574, 0.0
        %v3721 = vmax.f32 %v3576, 0.0
        %v3722 = vmax.f32 %v3387, 0.0
        %v3723 = vmax.f32 %v3389, 0.0
        %v3724 = vmax.f32 %v3580, 0.0
        %v3725 = vmax.f32 %v3582, 0.0
        %v3726 = vmax.f32 %v3391, 0.0
        %v3727 = vmax.f32 %v3393, 0.0
        %v3728 = vmax.f32 %v3584, 0.0
        %v3729 = vmax.f32 %v3586, 0.0
        %v3730 = vmax.f32 %v3397, 0.0
        %v3731 = vmax.f32 %v3399, 0.0
        %v3732 = vmax.f32 %v3590, 0.0
        %v3733 = vmax.f32 %v3592, 0.0
        %v3734 = vmax.f32 %v3401, 0.0
        %v3735 = vmax.f32 %v3403, 0.0
        %v3736 = vmax.f32 %v3594, 0.0
        %v3737 = vmax.f32 %v3596, 0.0
        %v3738 = vmax.f32 %v3407, 0.0
        %v3739 = vmax.f32 %v3409, 0.0
        %v3740 = vmax.f32 %v3600, 0.0
        %v3741 = vmax.f32 %v3602, 0.0
        %v3742 = vmax.f32 %v3411, 0.0
        %v3743 = vmax.f32 %v3413, 0.0
        %v3744 = vmax.f32 %v3604, 0.0
        %v3745 = vmax.f32 %v3606, 0.0
        %v3746 = vmax.f32 %v3417, 0.0
        %v3747 = vmax.f32 %v3419, 0.0
        %v3748 = vmax.f32 %v3610, 0.0
        %v3749 = vmax.f32 %v3612, 0.0
        %v3750 = vmax.f32 %v3421, 0.0
        %v3751 = vmax.f32 %v3423, 0.0
        %v3752 = vmax.f32 %v3614, 0.0
        %v3753 = vmax.f32 %v3616, 0.0
        %v3754 = vmax.f32 %v3427, 0.0
        %v3755 = vmax.f32 %v3429, 0.0
        %v3756 = vmax.f32 %v3620, 0.0
        %v3757 = vmax.f32 %v3622, 0.0
        %v3758 = vmax.f32 %v3431, 0.0
        %v3759 = vmax.f32 %v3433, 0.0
        %v3760 = vmax.f32 %v3624, 0.0
        %v3761 = vmax.f32 %v3626, 0.0
        %v3762 = vmax.f32 %v3437, 0.0
        %v3763 = vmax.f32 %v3439, 0.0
        %v3764 = vmax.f32 %v3630, 0.0
        %v3765 = vmax.f32 %v3632, 0.0
        %v3766 = vmax.f32 %v3441, 0.0
        %v3767 = vmax.f32 %v3443, 0.0
        %v3768 = vmax.f32 %v3634, 0.0
        %v3769 = vmax.f32 %v3636, 0.0
        %v3770 = vmax.f32 %v3447, 0.0
        %v3771 = vmax.f32 %v3449, 0.0
        %v3772 = vmax.f32 %v3640, 0.0
        %v3773 = vmax.f32 %v3642, 0.0
        %v3774 = vmax.f32 %v3451, 0.0
        %v3775 = vmax.f32 %v3453, 0.0
        %v3776 = vmax.f32 %v3644, 0.0
        %v3777 = vmax.f32 %v3646, 0.0
        %v3778 = vmax.f32 %v3457, 0.0
        %v3779 = vmax.f32 %v3459, 0.0
        %v3780 = vmax.f32 %v3650, 0.0
        %v3781 = vmax.f32 %v3652, 0.0
        %v3782 = vmax.f32 %v3461, 0.0
        %v3783 = vmax.f32 %v3463, 0.0
        %v3784 = vmax.f32 %v3654, 0.0
        %v3785 = vmax.f32 %v3656, 0.0
        %v3786 = vld [vmem:[%s4] sm:$0xff]
        %v3787 = vld [vmem:[%s4 + $0x8] sm:$0xff]
        %v3788 = vld [vmem:[%s4 + $0x10] sm:$0xff]
        %v3789 = vld [vmem:[%s4 + $0x18] sm:$0xff]
        %v3790 = vld [vmem:[%s4 + $0x20] sm:$0xff]
        %v3791 = vld [vmem:[%s4 + $0x28] sm:$0xff]
        %v3792 = vld [vmem:[%s4 + $0x30] sm:$0xff]
        %v3793 = vld [vmem:[%s4 + $0x38] sm:$0xff]
        %v3794 = vld [vmem:[%s4 + $0x40] sm:$0xff]
        %v3795 = vld [vmem:[%s4 + $0x48] sm:$0xff]
        %v3796 = vld [vmem:[%s4 + $0x50] sm:$0xff]
        %v3797 = vld [vmem:[%s4 + $0x58] sm:$0xff]
        %v3798 = vld [vmem:[%s4 + $0x60] sm:$0xff]
        %v3799 = vld [vmem:[%s4 + $0x68] sm:$0xff]
        %v3800 = vld [vmem:[%s4 + $0x70] sm:$0xff]
        %v3801 = vld [vmem:[%s4 + $0x78] sm:$0xff]
        %v3802 = vld [vmem:[%s4 + $0x80] sm:$0xff]
        %v3803 = vld [vmem:[%s4 + $0x88] sm:$0xff]
        %v3804 = vld [vmem:[%s4 + $0x90] sm:$0xff]
        %v3805 = vld [vmem:[%s4 + $0x98] sm:$0xff]
        %v3806 = vld [vmem:[%s4 + $0xa0] sm:$0xff]
        %v3807 = vld [vmem:[%s4 + $0xa8] sm:$0xff]
        %v3808 = vld [vmem:[%s4 + $0xb0] sm:$0xff]
        %v3809 = vld [vmem:[%s4 + $0xb8] sm:$0xff]
        %v3810 = vld [vmem:[%s4 + $0xc0] sm:$0xff]
        %v3811 = vld [vmem:[%s4 + $0xc8] sm:$0xff]
        %v3812 = vld [vmem:[%s4 + $0xd0] sm:$0xff]
        %v3813 = vld [vmem:[%s4 + $0xd8] sm:$0xff]
        %v3814 = vld [vmem:[%s4 + $0xe0] sm:$0xff]
        %v3815 = vld [vmem:[%s4 + $0xe8] sm:$0xff]
        %v3816 = vld [vmem:[%s4 + $0xf0] sm:$0xff]
        %v3817 = vld [vmem:[%s4 + $0xf8] sm:$0xff]
        %3819 = vset.pattern.permute.xlu0 0
        %3820 = vperm.xlu0 %3819, %v3786
        %v3821 = vpop.permute.xlu0 %3820
        %3824 = vset.pattern.permute.xlu0 0
        %3825 = vperm.xlu0 %3824, %v3787
        %v3826 = vpop.permute.xlu0 %3825
        %3829 = vset.pattern.permute.xlu0 0
        %3830 = vperm.xlu0 %3829, %v3788
        %v3831 = vpop.permute.xlu0 %3830
        %3834 = vset.pattern.permute.xlu0 0
        %3835 = vperm.xlu0 %3834, %v3789
        %v3836 = vpop.permute.xlu0 %3835
        %3839 = vset.pattern.permute.xlu0 0
        %3840 = vperm.xlu0 %3839, %v3790
        %v3841 = vpop.permute.xlu0 %3840
        %3844 = vset.pattern.permute.xlu0 0
        %3845 = vperm.xlu0 %3844, %v3791
        %v3846 = vpop.permute.xlu0 %3845
        %3849 = vset.pattern.permute.xlu0 0
        %3850 = vperm.xlu0 %3849, %v3792
        %v3851 = vpop.permute.xlu0 %3850
        %3854 = vset.pattern.permute.xlu0 0
        %3855 = vperm.xlu0 %3854, %v3793
        %v3856 = vpop.permute.xlu0 %3855
        %3859 = vset.pattern.permute.xlu0 0
        %3860 = vperm.xlu0 %3859, %v3794
        %v3861 = vpop.permute.xlu0 %3860
        %3864 = vset.pattern.permute.xlu0 0
        %3865 = vperm.xlu0 %3864, %v3795
        %v3866 = vpop.permute.xlu0 %3865
        %3869 = vset.pattern.permute.xlu0 0
        %3870 = vperm.xlu0 %3869, %v3796
        %v3871 = vpop.permute.xlu0 %3870
        %3874 = vset.pattern.permute.xlu0 0
        %3875 = vperm.xlu0 %3874, %v3797
        %v3876 = vpop.permute.xlu0 %3875
        %3879 = vset.pattern.permute.xlu0 0
        %3880 = vperm.xlu0 %3879, %v3798
        %v3881 = vpop.permute.xlu0 %3880
        %3884 = vset.pattern.permute.xlu0 0
        %3885 = vperm.xlu0 %3884, %v3799
        %v3886 = vpop.permute.xlu0 %3885
        %3889 = vset.pattern.permute.xlu0 0
        %3890 = vperm.xlu0 %3889, %v3800
        %v3891 = vpop.permute.xlu0 %3890
        %3894 = vset.pattern.permute.xlu0 0
        %3895 = vperm.xlu0 %3894, %v3801
        %v3896 = vpop.permute.xlu0 %3895
        %3899 = vset.pattern.permute.xlu0 0
        %3900 = vperm.xlu0 %3899, %v3802
        %v3901 = vpop.permute.xlu0 %3900
        %3904 = vset.pattern.permute.xlu0 0
        %3905 = vperm.xlu0 %3904, %v3803
        %v3906 = vpop.permute.xlu0 %3905
        %3909 = vset.pattern.permute.xlu0 0
        %3910 = vperm.xlu0 %3909, %v3804
        %v3911 = vpop.permute.xlu0 %3910
        %3914 = vset.pattern.permute.xlu0 0
        %3915 = vperm.xlu0 %3914, %v3805
        %v3916 = vpop.permute.xlu0 %3915
        %3919 = vset.pattern.permute.xlu0 0
        %3920 = vperm.xlu0 %3919, %v3806
        %v3921 = vpop.permute.xlu0 %3920
        %3924 = vset.pattern.permute.xlu0 0
        %3925 = vperm.xlu0 %3924, %v3807
        %v3926 = vpop.permute.xlu0 %3925
        %3929 = vset.pattern.permute.xlu0 0
        %3930 = vperm.xlu0 %3929, %v3808
        %v3931 = vpop.permute.xlu0 %3930
        %3934 = vset.pattern.permute.xlu0 0
        %3935 = vperm.xlu0 %3934, %v3809
        %v3936 = vpop.permute.xlu0 %3935
        %3939 = vset.pattern.permute.xlu0 0
        %3940 = vperm.xlu0 %3939, %v3810
        %v3941 = vpop.permute.xlu0 %3940
        %3944 = vset.pattern.permute.xlu0 0
        %3945 = vperm.xlu0 %3944, %v3811
        %v3946 = vpop.permute.xlu0 %3945
        %3949 = vset.pattern.permute.xlu0 0
        %3950 = vperm.xlu0 %3949, %v3812
        %v3951 = vpop.permute.xlu0 %3950
        %3954 = vset.pattern.permute.xlu0 0
        %3955 = vperm.xlu0 %3954, %v3813
        %v3956 = vpop.permute.xlu0 %3955
        %3959 = vset.pattern.permute.xlu0 0
        %3960 = vperm.xlu0 %3959, %v3814
        %v3961 = vpop.permute.xlu0 %3960
        %3964 = vset.pattern.permute.xlu0 0
        %3965 = vperm.xlu0 %3964, %v3815
        %v3966 = vpop.permute.xlu0 %3965
        %3969 = vset.pattern.permute.xlu0 0
        %3970 = vperm.xlu0 %3969, %v3816
        %v3971 = vpop.permute.xlu0 %3970
        %3974 = vset.pattern.permute.xlu0 0
        %3975 = vperm.xlu0 %3974, %v3817
        %v3976 = vpop.permute.xlu0 %3975
        %v3978 = vmul.f32 %v3821, %v3658
        %v3979 = vmul.f32 %v3821, %v3659
        %v3980 = vmul.f32 %v3821, %v3660
        %v3981 = vmul.f32 %v3821, %v3661
        %v3982 = vmul.f32 %v3826, %v3662
        %v3983 = vmul.f32 %v3826, %v3663
        %v3984 = vmul.f32 %v3826, %v3664
        %v3985 = vmul.f32 %v3826, %v3665
        %v3986 = vmul.f32 %v3831, %v3666
        %v3987 = vmul.f32 %v3831, %v3667
        %v3988 = vmul.f32 %v3831, %v3668
        %v3989 = vmul.f32 %v3831, %v3669
        %v3990 = vmul.f32 %v3836, %v3670
        %v3991 = vmul.f32 %v3836, %v3671
        %v3992 = vmul.f32 %v3836, %v3672
        %v3993 = vmul.f32 %v3836, %v3673
        %v3994 = vmul.f32 %v3841, %v3674
        %v3995 = vmul.f32 %v3841, %v3675
        %v3996 = vmul.f32 %v3841, %v3676
        %v3997 = vmul.f32 %v3841, %v3677
        %v3998 = vmul.f32 %v3846, %v3678
        %v3999 = vmul.f32 %v3846, %v3679
        %v4000 = vmul.f32 %v3846, %v3680
        %v4001 = vmul.f32 %v3846, %v3681
        %v4002 = vmul.f32 %v3851, %v3682
        %v4003 = vmul.f32 %v3851, %v3683
        %v4004 = vmul.f32 %v3851, %v3684
        %v4005 = vmul.f32 %v3851, %v3685
        %v4006 = vmul.f32 %v3856, %v3686
        %v4007 = vmul.f32 %v3856, %v3687
        %v4008 = vmul.f32 %v3856, %v3688
        %v4009 = vmul.f32 %v3856, %v3689
        %v4010 = vmul.f32 %v3861, %v3690
        %v4011 = vmul.f32 %v3861, %v3691
        %v4012 = vmul.f32 %v3861, %v3692
        %v4013 = vmul.f32 %v3861, %v3693
        %v4014 = vmul.f32 %v3866, %v3694
        %v4015 = vmul.f32 %v3866, %v3695
        %v4016 = vmul.f32 %v3866, %v3696
        %v4017 = vmul.f32 %v3866, %v3697
        %v4018 = vmul.f32 %v3871, %v3698
        %v4019 = vmul.f32 %v3871, %v3699
        %v4020 = vmul.f32 %v3871, %v3700
        %v4021 = vmul.f32 %v3871, %v3701
        %v4022 = vmul.f32 %v3876, %v3702
        %v4023 = vmul.f32 %v3876, %v3703
        %v4024 = vmul.f32 %v3876, %v3704
        %v4025 = vmul.f32 %v3876, %v3705
        %v4026 = vmul.f32 %v3881, %v3706
        %v4027 = vmul.f32 %v3881, %v3707
        %v4028 = vmul.f32 %v3881, %v3708
        %v4029 = vmul.f32 %v3881, %v3709
        %v4030 = vmul.f32 %v3886, %v3710
        %v4031 = vmul.f32 %v3886, %v3711
        %v4032 = vmul.f32 %v3886, %v3712
        %v4033 = vmul.f32 %v3886, %v3713
        %v4034 = vmul.f32 %v3891, %v3714
        %v4035 = vmul.f32 %v3891, %v3715
        %v4036 = vmul.f32 %v3891, %v3716
        %v4037 = vmul.f32 %v3891, %v3717
        %v4038 = vmul.f32 %v3896, %v3718
        %v4039 = vmul.f32 %v3896, %v3719
        %v4040 = vmul.f32 %v3896, %v3720
        %v4041 = vmul.f32 %v3896, %v3721
        %v4042 = vmul.f32 %v3901, %v3722
        %v4043 = vmul.f32 %v3901, %v3723
        %v4044 = vmul.f32 %v3901, %v3724
        %v4045 = vmul.f32 %v3901, %v3725
        %v4046 = vmul.f32 %v3906, %v3726
        %v4047 = vmul.f32 %v3906, %v3727
        %v4048 = vmul.f32 %v3906, %v3728
        %v4049 = vmul.f32 %v3906, %v3729
        %v4050 = vmul.f32 %v3911, %v3730
        %v4051 = vmul.f32 %v3911, %v3731
        %v4052 = vmul.f32 %v3911, %v3732
        %v4053 = vmul.f32 %v3911, %v3733
        %v4054 = vmul.f32 %v3916, %v3734
        %v4055 = vmul.f32 %v3916, %v3735
        %v4056 = vmul.f32 %v3916, %v3736
        %v4057 = vmul.f32 %v3916, %v3737
        %v4058 = vmul.f32 %v3921, %v3738
        %v4059 = vmul.f32 %v3921, %v3739
        %v4060 = vmul.f32 %v3921, %v3740
        %v4061 = vmul.f32 %v3921, %v3741
        %v4062 = vmul.f32 %v3926, %v3742
        %v4063 = vmul.f32 %v3926, %v3743
        %v4064 = vmul.f32 %v3926, %v3744
        %v4065 = vmul.f32 %v3926, %v3745
        %v4066 = vmul.f32 %v3931, %v3746
        %v4067 = vmul.f32 %v3931, %v3747
        %v4068 = vmul.f32 %v3931, %v3748
        %v4069 = vmul.f32 %v3931, %v3749
        %v4070 = vmul.f32 %v3936, %v3750
        %v4071 = vmul.f32 %v3936, %v3751
        %v4072 = vmul.f32 %v3936, %v3752
        %v4073 = vmul.f32 %v3936, %v3753
        %v4074 = vmul.f32 %v3941, %v3754
        %v4075 = vmul.f32 %v3941, %v3755
        %v4076 = vmul.f32 %v3941, %v3756
        %v4077 = vmul.f32 %v3941, %v3757
        %v4078 = vmul.f32 %v3946, %v3758
        %v4079 = vmul.f32 %v3946, %v3759
        %v4080 = vmul.f32 %v3946, %v3760
        %v4081 = vmul.f32 %v3946, %v3761
        %v4082 = vmul.f32 %v3951, %v3762
        %v4083 = vmul.f32 %v3951, %v3763
        %v4084 = vmul.f32 %v3951, %v3764
        %v4085 = vmul.f32 %v3951, %v3765
        %v4086 = vmul.f32 %v3956, %v3766
        %v4087 = vmul.f32 %v3956, %v3767
        %v4088 = vmul.f32 %v3956, %v3768
        %v4089 = vmul.f32 %v3956, %v3769
        %v4090 = vmul.f32 %v3961, %v3770
        %v4091 = vmul.f32 %v3961, %v3771
        %v4092 = vmul.f32 %v3961, %v3772
        %v4093 = vmul.f32 %v3961, %v3773
        %v4094 = vmul.f32 %v3966, %v3774
        %v4095 = vmul.f32 %v3966, %v3775
        %v4096 = vmul.f32 %v3966, %v3776
        %v4097 = vmul.f32 %v3966, %v3777
        %v4098 = vmul.f32 %v3971, %v3778
        %v4099 = vmul.f32 %v3971, %v3779
        %v4100 = vmul.f32 %v3971, %v3780
        %v4101 = vmul.f32 %v3971, %v3781
        %v4102 = vmul.f32 %v3976, %v3782
        %v4103 = vmul.f32 %v3976, %v3783
        %v4104 = vmul.f32 %v3976, %v3784
        %v4105 = vmul.f32 %v3976, %v3785
        %v4106 = vadd.f32 %v3978, %v3982
        %v4107 = vadd.f32 %v4106, %v3986
        %v4108 = vadd.f32 %v4107, %v3990
        %v4109 = vadd.f32 %v4108, %v3994
        %v4110 = vadd.f32 %v4109, %v3998
        %v4111 = vadd.f32 %v4110, %v4002
        %v4112 = vadd.f32 %v4111, %v4006
        %v4113 = vadd.f32 %v4112, %v4010
        %v4114 = vadd.f32 %v4113, %v4014
        %v4115 = vadd.f32 %v4114, %v4018
        %v4116 = vadd.f32 %v4115, %v4022
        %v4117 = vadd.f32 %v4116, %v4026
        %v4118 = vadd.f32 %v4117, %v4030
        %v4119 = vadd.f32 %v4118, %v4034
        %v4120 = vadd.f32 %v4119, %v4038
        %v4121 = vadd.f32 %v4120, %v4042
        %v4122 = vadd.f32 %v4121, %v4046
        %v4123 = vadd.f32 %v4122, %v4050
        %v4124 = vadd.f32 %v4123, %v4054
        %v4125 = vadd.f32 %v4124, %v4058
        %v4126 = vadd.f32 %v4125, %v4062
        %v4127 = vadd.f32 %v4126, %v4066
        %v4128 = vadd.f32 %v4127, %v4070
        %v4129 = vadd.f32 %v4128, %v4074
        %v4130 = vadd.f32 %v4129, %v4078
        %v4131 = vadd.f32 %v4130, %v4082
        %v4132 = vadd.f32 %v4131, %v4086
        %v4133 = vadd.f32 %v4132, %v4090
        %v4134 = vadd.f32 %v4133, %v4094
        %v4135 = vadd.f32 %v4134, %v4098
        %v4136 = vadd.f32 %v4135, %v4102
        %v4137 = vrot.slane %v4136, 4
        %v4138 = vadd.f32 %v4136, %v4137
        %v4139 = vrot.slane %v4138, 2
        %v4140 = vadd.f32 %v4138, %v4139
        %v4141 = vrot.slane %v4140, 1
        %v4142 = vadd.f32 %v4140, %v4141
        %v4143 = vadd.f32 %v3979, %v3983
        %v4144 = vadd.f32 %v4143, %v3987
        %v4145 = vadd.f32 %v4144, %v3991
        %v4146 = vadd.f32 %v4145, %v3995
        %v4147 = vadd.f32 %v4146, %v3999
        %v4148 = vadd.f32 %v4147, %v4003
        %v4149 = vadd.f32 %v4148, %v4007
        %v4150 = vadd.f32 %v4149, %v4011
        %v4151 = vadd.f32 %v4150, %v4015
        %v4152 = vadd.f32 %v4151, %v4019
        %v4153 = vadd.f32 %v4152, %v4023
        %v4154 = vadd.f32 %v4153, %v4027
        %v4155 = vadd.f32 %v4154, %v4031
        %v4156 = vadd.f32 %v4155, %v4035
        %v4157 = vadd.f32 %v4156, %v4039
        %v4158 = vadd.f32 %v4157, %v4043
        %v4159 = vadd.f32 %v4158, %v4047
        %v4160 = vadd.f32 %v4159, %v4051
        %v4161 = vadd.f32 %v4160, %v4055
        %v4162 = vadd.f32 %v4161, %v4059
        %v4163 = vadd.f32 %v4162, %v4063
        %v4164 = vadd.f32 %v4163, %v4067
        %v4165 = vadd.f32 %v4164, %v4071
        %v4166 = vadd.f32 %v4165, %v4075
        %v4167 = vadd.f32 %v4166, %v4079
        %v4168 = vadd.f32 %v4167, %v4083
        %v4169 = vadd.f32 %v4168, %v4087
        %v4170 = vadd.f32 %v4169, %v4091
        %v4171 = vadd.f32 %v4170, %v4095
        %v4172 = vadd.f32 %v4171, %v4099
        %v4173 = vadd.f32 %v4172, %v4103
        %v4174 = vrot.slane %v4173, 4
        %v4175 = vadd.f32 %v4173, %v4174
        %v4176 = vrot.slane %v4175, 2
        %v4177 = vadd.f32 %v4175, %v4176
        %v4178 = vrot.slane %v4177, 1
        %v4179 = vadd.f32 %v4177, %v4178
        %v4180 = vadd.f32 %v3980, %v3984
        %v4181 = vadd.f32 %v4180, %v3988
        %v4182 = vadd.f32 %v4181, %v3992
        %v4183 = vadd.f32 %v4182, %v3996
        %v4184 = vadd.f32 %v4183, %v4000
        %v4185 = vadd.f32 %v4184, %v4004
        %v4186 = vadd.f32 %v4185, %v4008
        %v4187 = vadd.f32 %v4186, %v4012
        %v4188 = vadd.f32 %v4187, %v4016
        %v4189 = vadd.f32 %v4188, %v4020
        %v4190 = vadd.f32 %v4189, %v4024
        %v4191 = vadd.f32 %v4190, %v4028
        %v4192 = vadd.f32 %v4191, %v4032
        %v4193 = vadd.f32 %v4192, %v4036
        %v4194 = vadd.f32 %v4193, %v4040
        %v4195 = vadd.f32 %v4194, %v4044
        %v4196 = vadd.f32 %v4195, %v4048
        %v4197 = vadd.f32 %v4196, %v4052
        %v4198 = vadd.f32 %v4197, %v4056
        %v4199 = vadd.f32 %v4198, %v4060
        %v4200 = vadd.f32 %v4199, %v4064
        %v4201 = vadd.f32 %v4200, %v4068
        %v4202 = vadd.f32 %v4201, %v4072
        %v4203 = vadd.f32 %v4202, %v4076
        %v4204 = vadd.f32 %v4203, %v4080
        %v4205 = vadd.f32 %v4204, %v4084
        %v4206 = vadd.f32 %v4205, %v4088
        %v4207 = vadd.f32 %v4206, %v4092
        %v4208 = vadd.f32 %v4207, %v4096
        %v4209 = vadd.f32 %v4208, %v4100
        %v4210 = vadd.f32 %v4209, %v4104
        %v4211 = vrot.slane %v4210, 4
        %v4212 = vadd.f32 %v4210, %v4211
        %v4213 = vrot.slane %v4212, 2
        %v4214 = vadd.f32 %v4212, %v4213
        %v4215 = vrot.slane %v4214, 1
        %v4216 = vadd.f32 %v4214, %v4215
        %v4217 = vadd.f32 %v3981, %v3985
        %v4218 = vadd.f32 %v4217, %v3989
        %v4219 = vadd.f32 %v4218, %v3993
        %v4220 = vadd.f32 %v4219, %v3997
        %v4221 = vadd.f32 %v4220, %v4001
        %v4222 = vadd.f32 %v4221, %v4005
        %v4223 = vadd.f32 %v4222, %v4009
        %v4224 = vadd.f32 %v4223, %v4013
        %v4225 = vadd.f32 %v4224, %v4017
        %v4226 = vadd.f32 %v4225, %v4021
        %v4227 = vadd.f32 %v4226, %v4025
        %v4228 = vadd.f32 %v4227, %v4029
        %v4229 = vadd.f32 %v4228, %v4033
        %v4230 = vadd.f32 %v4229, %v4037
        %v4231 = vadd.f32 %v4230, %v4041
        %v4232 = vadd.f32 %v4231, %v4045
        %v4233 = vadd.f32 %v4232, %v4049
        %v4234 = vadd.f32 %v4233, %v4053
        %v4235 = vadd.f32 %v4234, %v4057
        %v4236 = vadd.f32 %v4235, %v4061
        %v4237 = vadd.f32 %v4236, %v4065
        %v4238 = vadd.f32 %v4237, %v4069
        %v4239 = vadd.f32 %v4238, %v4073
        %v4240 = vadd.f32 %v4239, %v4077
        %v4241 = vadd.f32 %v4240, %v4081
        %v4242 = vadd.f32 %v4241, %v4085
        %v4243 = vadd.f32 %v4242, %v4089
        %v4244 = vadd.f32 %v4243, %v4093
        %v4245 = vadd.f32 %v4244, %v4097
        %v4246 = vadd.f32 %v4245, %v4101
        %v4247 = vadd.f32 %v4246, %v4105
        %v4248 = vrot.slane %v4247, 4
        %v4249 = vadd.f32 %v4247, %v4248
        %v4250 = vrot.slane %v4249, 2
        %v4251 = vadd.f32 %v4249, %v4250
        %v4252 = vrot.slane %v4251, 1
        %v4253 = vadd.f32 %v4251, %v4252
        %v4254 = vld [vmem:[%s340] sm:$0x1]
        %4256 = vset.pattern.permute.xlu0 0
        %4257 = vperm.xlu0 %4256, %v4254
        %v4258 = vpop.permute.xlu0 %4257
        %v4260 = vlaneseq
        %v4261 = vshrl.u32 %v4260, 7
        %v4262 = vsub.s32 0, %v4261
        %v4263 = vrot.slane %v4258, %v4262
        %v4264 = vadd.f32 %v4142, %v4263
        %v4265 = vadd.f32 %v4179, %v4263
        %v4266 = vadd.f32 %v4216, %v4263
        %v4267 = vadd.f32 %v4253, %v4263
        %v4268 = vmul.f32 %v4264, 1.7
        %v4269 = vmul.f32 %v4265, 1.7
        %v4270 = vmul.f32 %v4266, 1.7
        %v4271 = vmul.f32 %v4267, 1.7
        %v4276 = vcombine.low %v4268, %v4269
        %v4277 = vcombine.low %v4270, %v4271
        %v4279 = vunpack.c.l.s4 1966171168
        %v4280 = vunpack.c.0.s8 %v4279
        %v4281 = vlaneseq
        %v4282 = vshrl.u32 %v4281, 7
        %v4283 = vsub.s32 %v4280, %v4282
        %v4284 = vrot.slane %v4276, %v4283
        %v4286 = vunpack.c.l.s4 1966171168
        %v4287 = vunpack.c.0.s8 %v4286
        %v4288 = vlaneseq
        %v4289 = vshrl.u32 %v4288, 7
        %v4290 = vsub.s32 %v4287, %v4289
        %v4291 = vrot.slane %v4277, %v4290
        %v4292 = vcombine.low %v4284, %v4291
        %v4294 = vunpack.c.l.s4 1966171168
        %v4295 = vunpack.c.0.s8 %v4294
        %v4296 = vlaneseq
        %v4297 = vshrl.u32 %v4296, 7
        %v4298 = vsub.s32 %v4295, %v4297
        %v4299 = vrot.slane %v4292, %v4298
        %v4301 = vlaneseq
        %vm4302 = vcmp.ge.s32.totalorder %v4301, 0
        %vm4303 = vcmp.lt.s32.totalorder %v4301, 512
        %vm4304 = vmand %vm4302, %vm4303
        %4305 = vst.msk [vmem:[%s322] sm:$0xf] %vm4304, %v4299
        %s4306 = sand.u32 %s207, 1
        %s4307 = scalar_lea.sflag [#allocation3], %s4306
        %s4308 = sand.u32 %s207, 1
        %s4309 = smul.addr %s4308, 4
        %s4310 = scalar_lea.vmem [#allocation2], %s4309
        // Predicated region
        $region49: #{tpu_custom_call.1} parent=47 // pred_check
          %p4311 = pneg %p217
        $region50: #{tpu_custom_call.1} parent=47 // pred_check_branch
          %4313 = sbr.rel (%p4311) target = $region52
        $region51: #{tpu_custom_call.1} parent=47 // pred_region
          %s4314 = smul.u32 4, %s26
          %s4316 = ssub.s32 64, 64
          %4317 = vsyncadd %s4307, %s4316
          %s4318 = smul.addr %s25, 4
          %s4319 = sadd.s32 %s4314, %s4318
          %s4320 = smul.addr %s4319, 16
          %s4321 = scalar_lea.hbm %s7, %s4320
          %s4323 = sshll.u32 %s4310, 4
          %s4324 = int_to_ptr.vmem [resolvable:$true] %s4323
          %4326 = dma.vmem_to_hbm [thread:$0]  %s4324, 64, %s4321, %s4307
        $region52: #{tpu_custom_call.1} parent=47 // pred_fallthru
          _
      $region48: #{tpu_custom_call.1} parent=5 // pred_fallthru
        _
      %p4327 = scmp.le.s32.totalorder 2, %s16
      // Predicated region
      $region53: #{tpu_custom_call.1} parent=5 // pred_check
        %p4328 = pneg %p4327
      $region54: #{tpu_custom_call.1} parent=5 // pred_check_branch
        %4330 = sbr.rel (%p4328) target = $region56
      $region55: #{tpu_custom_call.1} parent=5 // pred_region
        %s4331 = ssub.s32 %s16, 2
        // Predicated region
        $region57: #{tpu_custom_call.1} parent=55 // pred_check
          %p4332 = pneg %p223
        $region58: #{tpu_custom_call.1} parent=55 // pred_check_branch
          %4334 = sbr.rel (%p4332) target = $region60
        $region59: #{tpu_custom_call.1} parent=55 // pred_region
          %s4335 = sand.u32 %s208, 1
          %s4336 = scalar_lea.sflag [#allocation3], %s4335
          %s4337 = sand.u32 %s208, 1
          %s4338 = smul.addr %s4337, 4
          %s4339 = scalar_lea.vmem [#allocation2], %s4338
          %4340 = dma.done %s4336, 64
        $region60: #{tpu_custom_call.1} parent=55 // pred_fallthru
          _
      $region56: #{tpu_custom_call.1} parent=5 // pred_fallthru
        _
    $region6: #{tpu_custom_call.1} parent=1 // loop_footer
      %s20 = sadd.s32 1, %s16
    $region7: #{tpu_custom_call.1} parent=1 // loop_footer_branch
      %15 = sbr.rel target = $region3
    $region8: #{tpu_custom_call.1} parent=1 // loop_exit
      _
    %4341 = vsyncpa [#allocation3], 1
    %s4342 = scalar_lea.sflag [#allocation3], 1
    %4343 = vsyncpa %s4342, 1

</llo_original>
